<compile_context>
chip_gen: v6e
topology: v6e:2x2x1
jax: 0.10.0
libtpu: 0.0.40
codegen_flags: <defaults>
</compile_context>

<pallas_src>
import functools
import math

import jax
import jax.numpy as jnp
from jax.experimental import pallas as pl
from jax.experimental.pallas import tpu as pltpu

LN_EPS = 1e-5
NEG_INF = -1e30
# Set to jnp.bfloat16 on v6e/v7x for full-rate MXU (accumulation stays f32).
MATMUL_INPUT_DTYPE = jnp.float32


def _layer_norm(x, w, b):
    mu = jnp.mean(x, axis=-1, keepdims=True)
    var = jnp.mean((x - mu) ** 2, axis=-1, keepdims=True)
    return (x - mu) * jax.lax.rsqrt(var + LN_EPS) * w + b


# ----------------------------------------------------------------------------
# Fused kernel: one grid step == one batch element, full forward pass.
# ----------------------------------------------------------------------------
def _fused_decoder_kernel(
    x_ref,            # (1, 1, latent_dim)
    latw_ref,         # (n_lat, latent_dim, D)   latent_proj weight per output token
    latb_ref,         # (n_lat, 1, D)
    queries_ref,      # (max(n_q, 1), D)         learned queries actually used
    kv_mask_ref,      # (H*L, D)   0/1: sublane block h keeps only lane block h
    attn_bias_ref,    # (H*L, H*L) 0 / -1e30 block-diagonal attention mask
    wq_ref, wk_ref, wv_ref,                    # (NL, D, D)
    bq_ref, bk_ref, bv_ref,                    # (NL, 1, D)
    wo_ref, bo_ref,                            # (NL, D, D), (NL, 1, D)
    w1_ref, b1_ref,                            # (NL, D, Dff), (NL, 1, Dff)
    w2_ref, b2_ref,                            # (NL, Dff, D), (NL, 1, D)
    ln1w_ref, ln1b_ref, ln2w_ref, ln2b_ref,    # (NL, 1, D)
    outw_ref, outb_ref,                        # (D, V), (1, V)
    o_ref,            # (1, L, V)
    *, num_layers, num_heads, n_lat, n_q, seq_len,
):
    f32 = jnp.float32
    cdt = MATMUL_INPUT_DTYPE
    D = wq_ref.shape[-1]
    hd = D // num_heads
    L = seq_len
    scale = 1.0 / math.sqrt(hd)

    x_row = x_ref[0].astype(f32)                     # (1, latent_dim)

    # -- decoder input: 8 latent tokens followed by the learned queries -------
    rows = [
        jnp.dot(x_row.astype(cdt), latw_ref[r].astype(cdt),
                preferred_element_type=f32) + latb_ref[r].astype(f32)
        for r in range(n_lat)
    ]
    if n_q > 0:
        rows.append(queries_ref[...].astype(f32))
    h = jnp.concatenate(rows, axis=0)                # (L, D) residual stream

    # -- num_layers post-LN TransformerEncoderLayers, fully unrolled ----------
    for l in range(num_layers):
        hc = h.astype(cdt)
        q = jnp.dot(hc, wq_ref[l].astype(cdt), preferred_element_type=f32) + bq_ref[l]
        k = jnp.dot(hc, wk_ref[l].astype(cdt), preferred_element_type=f32) + bk_ref[l]
        v = jnp.dot(hc, wv_ref[l].astype(cdt), preferred_element_type=f32) + bv_ref[l]

        # Head-stacked, block-masked K/V: sublane block hh holds only head hh's
        # lanes (everything else zero), so a single matmul gives all heads'
        # scores / outputs with no per-head slicing or lane concatenation.
        kv_mask = kv_mask_ref[...]
        ks = jnp.concatenate([k] * num_heads, axis=0) * kv_mask      # (H*L, D)
        vs = jnp.concatenate([v] * num_heads, axis=0) * kv_mask      # (H*L, D)

        # scores: column hh*L + j == head hh, key j   -> (L, H*L)
        s_small = jax.lax.dot_general(
            (q * scale).astype(cdt), ks.astype(cdt),
            (((1,), (1,)), ((), ())), preferred_element_type=f32)
        # tile query rows per head; keep only each head's own key block
        s = jnp.concatenate([s_small] * num_heads, axis=0) + attn_bias_ref[...]

        s = s - jnp.max(s, axis=-1, keepdims=True)
        p = jnp.exp(s)                                               # off-block -> 0
        p = p * pl.reciprocal(jnp.sum(p, axis=-1, keepdims=True), approx=True)

        # (H*L, D) block-sparse head outputs; summing sublane blocks == concat.
        o_heads = jnp.dot(p.astype(cdt), vs.astype(cdt), preferred_element_type=f32)
        attn = o_heads[0:L]
        for hh in range(1, num_heads):
            attn = attn + o_heads[hh * L:(hh + 1) * L]               # (L, D)

        attn = jnp.dot(attn.astype(cdt), wo_ref[l].astype(cdt),
                       preferred_element_type=f32) + bo_ref[l]

        y = _layer_norm(h + attn, ln1w_ref[l], ln1b_ref[l])

        f1 = jnp.maximum(
            jnp.dot(y.astype(cdt), w1_ref[l].astype(cdt),
                    preferred_element_type=f32) + b1_ref[l], 0.0)
        f2 = jnp.dot(f1.astype(cdt), w2_ref[l].astype(cdt),
                     preferred_element_type=f32) + b2_ref[l]

        h = _layer_norm(y + f2, ln2w_ref[l], ln2b_ref[l])

    # -- out_proj: lane-dense (L, V) store -------------------------------------
    logits = jnp.dot(h.astype(cdt), outw_ref[...].astype(cdt),
                     preferred_element_type=f32) + outb_ref[...].astype(f32)
    o_ref[0] = logits.astype(o_ref.dtype)


# ----------------------------------------------------------------------------
# JAX wrapper: parameter packing (layout only) + single pallas_call.
# ----------------------------------------------------------------------------
def transformer_text_decoder_forward(x, params, *, embed_dim, max_len, vocab_size,
                                     num_heads=8):
    """x: (B, latent_dim) -> logits (B, max_len, vocab_size)."""
    B, latent_dim = x.shape
    D, L, V = embed_dim, max_len, vocab_size
    layers = params["layers"]
    NL = len(layers)
    Dff = layers[0]["w1_t"].shape[1]
    hd = D // num_heads
    HL = num_heads * L
    n_lat = min(8, L)
    n_q = L - n_lat
    f32 = jnp.float32

    # ---- parameter packing (pure layout, constant-folded under jit) --------
    latw = params["latent_proj_w"]                           # torch (out=8D, in)
    latw_blocks = jnp.stack([latw[r * D:(r + 1) * D, :].T for r in range(n_lat)])
    latb_blocks = params["latent_proj_b"].reshape(8, 1, D)[:n_lat]
    queries_in = (params["queries"][0, :n_q, :] if n_q > 0
                  else jnp.zeros((1, D), f32))

    stack = lambda key: jnp.stack([lp[key] for lp in layers])
    stack_row = lambda key: jnp.stack([lp[key].reshape(1, -1) for lp in layers])

    wq, wk, wv, wo = stack("wq_t"), stack("wk_t"), stack("wv_t"), stack("wo_t")
    w1, w2 = stack("w1_t"), stack("w2_t")
    bq, bk, bv, bo = stack_row("bq"), stack_row("bk"), stack_row("bv"), stack_row("bo")
    b1, b2 = stack_row("b1"), stack_row("b2")
    ln1w, ln1b = stack_row("ln1_w"), stack_row("ln1_b")
    ln2w, ln2b = stack_row("ln2_w"), stack_row("ln2_b")

    # Block-diagonal head masks (static shapes -> folded at compile time).
    kv_mask = (jnp.arange(HL)[:, None] // L
               == jnp.arange(D)[None, :] // hd).astype(f32)              # (HL, D)
    attn_bias = jnp.where(
        jnp.arange(HL)[:, None] // L == jnp.arange(HL)[None, :] // L,
        0.0, NEG_INF).astype(f32)                                        # (HL, HL)

    x3 = x.reshape(B, 1, latent_dim)

    def const_spec(shape):
        zeros = (0,) * len(shape)
        return pl.BlockSpec(shape, lambda b: zeros)

    kernel = functools.partial(
        _fused_decoder_kernel,
        num_layers=NL, num_heads=num_heads, n_lat=n_lat, n_q=n_q, seq_len=L)

    logits = pl.pallas_call(
        kernel,
        out_shape=jax.ShapeDtypeStruct((B, L, V), x.dtype),
        grid=(B,),
        in_specs=[
            pl.BlockSpec((1, 1, latent_dim), lambda b: (b, 0, 0)),
            const_spec((n_lat, latent_dim, D)),
            const_spec((n_lat, 1, D)),
            const_spec((max(n_q, 1), D)),
            const_spec((HL, D)),
            const_spec((HL, HL)),
            const_spec((NL, D, D)), const_spec((NL, D, D)), const_spec((NL, D, D)),
            const_spec((NL, 1, D)), const_spec((NL, 1, D)), const_spec((NL, 1, D)),
            const_spec((NL, D, D)), const_spec((NL, 1, D)),
            const_spec((NL, D, Dff)), const_spec((NL, 1, Dff)),
            const_spec((NL, Dff, D)), const_spec((NL, 1, D)),
            const_spec((NL, 1, D)), const_spec((NL, 1, D)),
            const_spec((NL, 1, D)), const_spec((NL, 1, D)),
            const_spec((D, V)), const_spec((1, V)),
        ],
        out_specs=pl.BlockSpec((1, L, V), lambda b: (b, 0, 0)),
        compiler_params=pltpu.CompilerParams(dimension_semantics=("parallel",)),
    )(x3, latw_blocks, latb_blocks, queries_in, kv_mask, attn_bias,
      wq, wk, wv, bq, bk, bv, wo, bo, w1, b1, w2, b2,
      ln1w, ln1b, ln2w, ln2b,
      params["out_proj_w"].T, params["out_proj_b"].reshape(1, V))
    return logits


# ----------------------------------------------------------------------------
# Pure-JAX reference (same math, XLA ops) for a correctness cross-check.
# ----------------------------------------------------------------------------
def reference_forward(x, params, *, embed_dim, max_len, vocab_size, num_heads=8):
    B = x.shape[0]
    D, L = embed_dim, max_len
    hd = D // num_heads
    lat = x @ params["latent_proj_w"].T + params["latent_proj_b"]
    h = jnp.concatenate(
        [lat.reshape(B, 8, D), jnp.broadcast_to(params["queries"], (B, L, D))],
        axis=1)[:, :L]
    for lp in params["layers"]:
        q = h @ lp["wq_t"] + lp["bq"]
        k = h @ lp["wk_t"] + lp["bk"]
        v = h @ lp["wv_t"] + lp["bv"]
        qh = q.reshape(B, L, num_heads, hd).transpose(0, 2, 1, 3)
        kh = k.reshape(B, L, num_heads, hd).transpose(0, 2, 1, 3)
        vh = v.reshape(B, L, num_heads, hd).transpose(0, 2, 1, 3)
        s = jnp.einsum("bhqd,bhkd->bhqk", qh, kh) / math.sqrt(hd)
        p = jax.nn.softmax(s, axis=-1)
        o = jnp.einsum("bhqk,bhkd->bhqd", p, vh).transpose(0, 2, 1, 3).reshape(B, L, D)
        attn = o @ lp["wo_t"] + lp["bo"]
        y = _layer_norm(h + attn, lp["ln1_w"], lp["ln1_b"])
        f = jax.nn.relu(y @ lp["w1_t"] + lp["b1"]) @ lp["w2_t"] + lp["b2"]
        h = _layer_norm(y + f, lp["ln2_w"], lp["ln2_b"])
    return h @ params["out_proj_w"].T + params["out_proj_b"]


# ----------------------------------------------------------------------------
# Deterministic synthetic parameters (PyTorch-style layout).
# ----------------------------------------------------------------------------
def init_params(key, latent_dim, embed_dim, max_len, vocab_size, num_layers=4):
    D, Dff = embed_dim, embed_dim * 4
    keys = iter(jax.random.split(key, 64))
    nrm = lambda shape, s=0.02: (s * jax.random.normal(next(keys), shape)).astype(jnp.float32)

    params = {
        "latent_proj_w": nrm((D * 8, latent_dim)),   # PyTorch (out, in)
        "latent_proj_b": nrm((D * 8,)),
        "queries": jax.random.normal(next(keys), (1, max_len, D)).astype(jnp.float32),
        "out_proj_w": nrm((vocab_size, D)),
        "out_proj_b": nrm((vocab_size,)),
        "layers": [],
    }
    for _ in range(num_layers):
        in_proj_w = nrm((3 * D, D))     # torch MultiheadAttention in_proj_weight
        in_proj_b = nrm((3 * D,))
        params["layers"].append({
            # pre-transposed to (in, out) for the kernel
            "wq_t": in_proj_w[:D].T, "wk_t": in_proj_w[D:2 * D].T, "wv_t": in_proj_w[2 * D:].T,
            "bq": in_proj_b[:D], "bk": in_proj_b[D:2 * D], "bv": in_proj_b[2 * D:],
            "wo_t": nrm((D, D)).T, "bo": nrm((D,)),
            "w1_t": nrm((Dff, D)).T, "b1": nrm((Dff,)),
            "w2_t": nrm((D, Dff)).T, "b2": nrm((D,)),
            "ln1_w": jnp.ones((D,), jnp.float32), "ln1_b": jnp.zeros((D,), jnp.float32),
            "ln2_w": jnp.ones((D,), jnp.float32), "ln2_b": jnp.zeros((D,), jnp.float32),
        })
    return params


if __name__ == "__main__":
    # config.input_shape = (max_len,), embed_dim = 64 (divisible by nhead=8).
    B, LATENT_DIM, EMBED_DIM, MAX_LEN, VOCAB = 2, 32, 64, 16, 256

    key = jax.random.PRNGKey(0)
    k_param, k_x = jax.random.split(key)
    params = init_params(k_param, LATENT_DIM, EMBED_DIM, MAX_LEN, VOCAB, num_layers=4)
    x = jax.random.normal(k_x, (B, LATENT_DIM), dtype=jnp.float32)

    fwd = jax.jit(functools.partial(
        transformer_text_decoder_forward,
        embed_dim=EMBED_DIM, max_len=MAX_LEN, vocab_size=VOCAB))
    out = fwd(x, params)
    jax.block_until_ready(out)

    # cross-check against a pure-JAX reference (full-precision matmuls)
    with jax.default_matmul_precision("highest"):
        ref = jax.jit(functools.partial(
            reference_forward,
            embed_dim=EMBED_DIM, max_len=MAX_LEN, vocab_size=VOCAB))(x, params)
    jax.block_until_ready(ref)

    assert out.shape == (B, MAX_LEN, VOCAB), out.shape
    assert bool(jnp.all(jnp.isfinite(out))), "non-finite output"
    max_err = float(jnp.max(jnp.abs(out - ref)))
    assert bool(jnp.allclose(out, ref, atol=5e-2, rtol=5e-2)), f"max abs diff {max_err}"
    print("KERNEL_OK")
</pallas_src>

<mosaic_0001>
module attributes {stable_mosaic.version = 11 : i64} {
  func.func @_fused_decoder_kernel(%arg0: i32, %arg1: memref<1x1x32xf32, #tpu.memory_space<vmem>>, %arg2: memref<8x32x64xf32, #tpu.memory_space<vmem>>, %arg3: memref<8x1x64xf32, #tpu.memory_space<vmem>>, %arg4: memref<8x64xf32, #tpu.memory_space<vmem>>, %arg5: memref<128x64xf32, #tpu.memory_space<vmem>>, %arg6: memref<128x128xf32, #tpu.memory_space<vmem>>, %arg7: memref<4x64x64xf32, #tpu.memory_space<vmem>>, %arg8: memref<4x64x64xf32, #tpu.memory_space<vmem>>, %arg9: memref<4x64x64xf32, #tpu.memory_space<vmem>>, %arg10: memref<4x1x64xf32, #tpu.memory_space<vmem>>, %arg11: memref<4x1x64xf32, #tpu.memory_space<vmem>>, %arg12: memref<4x1x64xf32, #tpu.memory_space<vmem>>, %arg13: memref<4x64x64xf32, #tpu.memory_space<vmem>>, %arg14: memref<4x1x64xf32, #tpu.memory_space<vmem>>, %arg15: memref<4x64x256xf32, #tpu.memory_space<vmem>>, %arg16: memref<4x1x256xf32, #tpu.memory_space<vmem>>, %arg17: memref<4x256x64xf32, #tpu.memory_space<vmem>>, %arg18: memref<4x1x64xf32, #tpu.memory_space<vmem>>, %arg19: memref<4x1x64xf32, #tpu.memory_space<vmem>>, %arg20: memref<4x1x64xf32, #tpu.memory_space<vmem>>, %arg21: memref<4x1x64xf32, #tpu.memory_space<vmem>>, %arg22: memref<4x1x64xf32, #tpu.memory_space<vmem>>, %arg23: memref<64x256xf32, #tpu.memory_space<vmem>>, %arg24: memref<1x256xf32, #tpu.memory_space<vmem>>, %arg25: memref<1x16x256xf32, #tpu.memory_space<vmem>>) attributes {dimension_semantics = [#tpu.dimension_semantics<parallel>], iteration_bounds = array<i64: 2>, scalar_prefetch = 0 : i64, scratch_operands = 0 : i64, tpu.core_type = #tpu.core_type<tc>, window_params = [{transform_indices = @transform_0, window_bounds = array<i64: 1, 1, 32>}, {pipeline_mode = #tpu.pipeline_mode<synchronous>, transform_indices = @transform_1, window_bounds = array<i64: 8, 32, 64>}, {pipeline_mode = #tpu.pipeline_mode<synchronous>, transform_indices = @transform_2, window_bounds = array<i64: 8, 1, 64>}, {pipeline_mode = #tpu.pipeline_mode<synchronous>, transform_indices = @transform_3, window_bounds = array<i64: 8, 64>}, {pipeline_mode = #tpu.pipeline_mode<synchronous>, transform_indices = @transform_4, window_bounds = array<i64: 128, 64>}, {pipeline_mode = #tpu.pipeline_mode<synchronous>, transform_indices = @transform_5, window_bounds = array<i64: 128, 128>}, {pipeline_mode = #tpu.pipeline_mode<synchronous>, transform_indices = @transform_6, window_bounds = array<i64: 4, 64, 64>}, {pipeline_mode = #tpu.pipeline_mode<synchronous>, transform_indices = @transform_7, window_bounds = array<i64: 4, 64, 64>}, {pipeline_mode = #tpu.pipeline_mode<synchronous>, transform_indices = @transform_8, window_bounds = array<i64: 4, 64, 64>}, {pipeline_mode = #tpu.pipeline_mode<synchronous>, transform_indices = @transform_9, window_bounds = array<i64: 4, 1, 64>}, {pipeline_mode = #tpu.pipeline_mode<synchronous>, transform_indices = @transform_10, window_bounds = array<i64: 4, 1, 64>}, {pipeline_mode = #tpu.pipeline_mode<synchronous>, transform_indices = @transform_11, window_bounds = array<i64: 4, 1, 64>}, {pipeline_mode = #tpu.pipeline_mode<synchronous>, transform_indices = @transform_12, window_bounds = array<i64: 4, 64, 64>}, {pipeline_mode = #tpu.pipeline_mode<synchronous>, transform_indices = @transform_13, window_bounds = array<i64: 4, 1, 64>}, {pipeline_mode = #tpu.pipeline_mode<synchronous>, transform_indices = @transform_14, window_bounds = array<i64: 4, 64, 256>}, {pipeline_mode = #tpu.pipeline_mode<synchronous>, transform_indices = @transform_15, window_bounds = array<i64: 4, 1, 256>}, {pipeline_mode = #tpu.pipeline_mode<synchronous>, transform_indices = @transform_16, window_bounds = array<i64: 4, 256, 64>}, {pipeline_mode = #tpu.pipeline_mode<synchronous>, transform_indices = @transform_17, window_bounds = array<i64: 4, 1, 64>}, {pipeline_mode = #tpu.pipeline_mode<synchronous>, transform_indices = @transform_18, window_bounds = array<i64: 4, 1, 64>}, {pipeline_mode = #tpu.pipeline_mode<synchronous>, transform_indices = @transform_19, window_bounds = array<i64: 4, 1, 64>}, {pipeline_mode = #tpu.pipeline_mode<synchronous>, transform_indices = @transform_20, window_bounds = array<i64: 4, 1, 64>}, {pipeline_mode = #tpu.pipeline_mode<synchronous>, transform_indices = @transform_21, window_bounds = array<i64: 4, 1, 64>}, {pipeline_mode = #tpu.pipeline_mode<synchronous>, transform_indices = @transform_22, window_bounds = array<i64: 64, 256>}, {pipeline_mode = #tpu.pipeline_mode<synchronous>, transform_indices = @transform_23, window_bounds = array<i64: 1, 256>}, {transform_indices = @transform_24, window_bounds = array<i64: 1, 16, 256>}]} {
    %c0 = arith.constant 0 : index
    %c0_0 = arith.constant 0 : index
    %c0_1 = arith.constant 0 : index
    %0 = vector.load %arg1[%c0, %c0_0, %c0_1] : memref<1x1x32xf32, #tpu.memory_space<vmem>>, vector<1x1x32xf32>
    %1 = vector.shape_cast %0 : vector<1x1x32xf32> to vector<1x32xf32>
    %c0_2 = arith.constant 0 : index
    %c0_3 = arith.constant 0 : index
    %c0_4 = arith.constant 0 : index
    %2 = vector.load %arg2[%c0_2, %c0_3, %c0_4] : memref<8x32x64xf32, #tpu.memory_space<vmem>>, vector<1x32x64xf32>
    %3 = vector.shape_cast %2 : vector<1x32x64xf32> to vector<32x64xf32>
    %cst = arith.constant dense<0.000000e+00> : vector<1x64xf32>
    %4 = tpu.matmul %1, %3, %cst {dimension_numbers = #tpu.dot_dimension_numbers<[1], [0], [0], [1], [0, 0, 1, 1], [], []>} : vector<1x32xf32>, vector<32x64xf32>, vector<1x64xf32> -> vector<1x64xf32>
    %c0_5 = arith.constant 0 : index
    %c0_6 = arith.constant 0 : index
    %c0_7 = arith.constant 0 : index
    %5 = vector.load %arg3[%c0_5, %c0_6, %c0_7] : memref<8x1x64xf32, #tpu.memory_space<vmem>>, vector<1x1x64xf32>
    %6 = vector.shape_cast %5 : vector<1x1x64xf32> to vector<1x64xf32>
    %7 = arith.addf %4, %6 : vector<1x64xf32>
    %c1 = arith.constant 1 : index
    %c0_8 = arith.constant 0 : index
    %c0_9 = arith.constant 0 : index
    %8 = vector.load %arg2[%c1, %c0_8, %c0_9] : memref<8x32x64xf32, #tpu.memory_space<vmem>>, vector<1x32x64xf32>
    %9 = vector.shape_cast %8 : vector<1x32x64xf32> to vector<32x64xf32>
    %cst_10 = arith.constant dense<0.000000e+00> : vector<1x64xf32>
    %10 = tpu.matmul %1, %9, %cst_10 {dimension_numbers = #tpu.dot_dimension_numbers<[1], [0], [0], [1], [0, 0, 1, 1], [], []>} : vector<1x32xf32>, vector<32x64xf32>, vector<1x64xf32> -> vector<1x64xf32>
    %c1_11 = arith.constant 1 : index
    %c0_12 = arith.constant 0 : index
    %c0_13 = arith.constant 0 : index
    %11 = vector.load %arg3[%c1_11, %c0_12, %c0_13] : memref<8x1x64xf32, #tpu.memory_space<vmem>>, vector<1x1x64xf32>
    %12 = vector.shape_cast %11 : vector<1x1x64xf32> to vector<1x64xf32>
    %13 = arith.addf %10, %12 : vector<1x64xf32>
    %c2 = arith.constant 2 : index
    %c0_14 = arith.constant 0 : index
    %c0_15 = arith.constant 0 : index
    %14 = vector.load %arg2[%c2, %c0_14, %c0_15] : memref<8x32x64xf32, #tpu.memory_space<vmem>>, vector<1x32x64xf32>
    %15 = vector.shape_cast %14 : vector<1x32x64xf32> to vector<32x64xf32>
    %cst_16 = arith.constant dense<0.000000e+00> : vector<1x64xf32>
    %16 = tpu.matmul %1, %15, %cst_16 {dimension_numbers = #tpu.dot_dimension_numbers<[1], [0], [0], [1], [0, 0, 1, 1], [], []>} : vector<1x32xf32>, vector<32x64xf32>, vector<1x64xf32> -> vector<1x64xf32>
    %c2_17 = arith.constant 2 : index
    %c0_18 = arith.constant 0 : index
    %c0_19 = arith.constant 0 : index
    %17 = vector.load %arg3[%c2_17, %c0_18, %c0_19] : memref<8x1x64xf32, #tpu.memory_space<vmem>>, vector<1x1x64xf32>
    %18 = vector.shape_cast %17 : vector<1x1x64xf32> to vector<1x64xf32>
    %19 = arith.addf %16, %18 : vector<1x64xf32>
    %c3 = arith.constant 3 : index
    %c0_20 = arith.constant 0 : index
    %c0_21 = arith.constant 0 : index
    %20 = vector.load %arg2[%c3, %c0_20, %c0_21] : memref<8x32x64xf32, #tpu.memory_space<vmem>>, vector<1x32x64xf32>
    %21 = vector.shape_cast %20 : vector<1x32x64xf32> to vector<32x64xf32>
    %cst_22 = arith.constant dense<0.000000e+00> : vector<1x64xf32>
    %22 = tpu.matmul %1, %21, %cst_22 {dimension_numbers = #tpu.dot_dimension_numbers<[1], [0], [0], [1], [0, 0, 1, 1], [], []>} : vector<1x32xf32>, vector<32x64xf32>, vector<1x64xf32> -> vector<1x64xf32>
    %c3_23 = arith.constant 3 : index
    %c0_24 = arith.constant 0 : index
    %c0_25 = arith.constant 0 : index
    %23 = vector.load %arg3[%c3_23, %c0_24, %c0_25] : memref<8x1x64xf32, #tpu.memory_space<vmem>>, vector<1x1x64xf32>
    %24 = vector.shape_cast %23 : vector<1x1x64xf32> to vector<1x64xf32>
    %25 = arith.addf %22, %24 : vector<1x64xf32>
    %c4 = arith.constant 4 : index
    %c0_26 = arith.constant 0 : index
    %c0_27 = arith.constant 0 : index
    %26 = vector.load %arg2[%c4, %c0_26, %c0_27] : memref<8x32x64xf32, #tpu.memory_space<vmem>>, vector<1x32x64xf32>
    %27 = vector.shape_cast %26 : vector<1x32x64xf32> to vector<32x64xf32>
    %cst_28 = arith.constant dense<0.000000e+00> : vector<1x64xf32>
    %28 = tpu.matmul %1, %27, %cst_28 {dimension_numbers = #tpu.dot_dimension_numbers<[1], [0], [0], [1], [0, 0, 1, 1], [], []>} : vector<1x32xf32>, vector<32x64xf32>, vector<1x64xf32> -> vector<1x64xf32>
    %c4_29 = arith.constant 4 : index
    %c0_30 = arith.constant 0 : index
    %c0_31 = arith.constant 0 : index
    %29 = vector.load %arg3[%c4_29, %c0_30, %c0_31] : memref<8x1x64xf32, #tpu.memory_space<vmem>>, vector<1x1x64xf32>
    %30 = vector.shape_cast %29 : vector<1x1x64xf32> to vector<1x64xf32>
    %31 = arith.addf %28, %30 : vector<1x64xf32>
    %c5 = arith.constant 5 : index
    %c0_32 = arith.constant 0 : index
    %c0_33 = arith.constant 0 : index
    %32 = vector.load %arg2[%c5, %c0_32, %c0_33] : memref<8x32x64xf32, #tpu.memory_space<vmem>>, vector<1x32x64xf32>
    %33 = vector.shape_cast %32 : vector<1x32x64xf32> to vector<32x64xf32>
    %cst_34 = arith.constant dense<0.000000e+00> : vector<1x64xf32>
    %34 = tpu.matmul %1, %33, %cst_34 {dimension_numbers = #tpu.dot_dimension_numbers<[1], [0], [0], [1], [0, 0, 1, 1], [], []>} : vector<1x32xf32>, vector<32x64xf32>, vector<1x64xf32> -> vector<1x64xf32>
    %c5_35 = arith.constant 5 : index
    %c0_36 = arith.constant 0 : index
    %c0_37 = arith.constant 0 : index
    %35 = vector.load %arg3[%c5_35, %c0_36, %c0_37] : memref<8x1x64xf32, #tpu.memory_space<vmem>>, vector<1x1x64xf32>
    %36 = vector.shape_cast %35 : vector<1x1x64xf32> to vector<1x64xf32>
    %37 = arith.addf %34, %36 : vector<1x64xf32>
    %c6 = arith.constant 6 : index
    %c0_38 = arith.constant 0 : index
    %c0_39 = arith.constant 0 : index
    %38 = vector.load %arg2[%c6, %c0_38, %c0_39] : memref<8x32x64xf32, #tpu.memory_space<vmem>>, vector<1x32x64xf32>
    %39 = vector.shape_cast %38 : vector<1x32x64xf32> to vector<32x64xf32>
    %cst_40 = arith.constant dense<0.000000e+00> : vector<1x64xf32>
    %40 = tpu.matmul %1, %39, %cst_40 {dimension_numbers = #tpu.dot_dimension_numbers<[1], [0], [0], [1], [0, 0, 1, 1], [], []>} : vector<1x32xf32>, vector<32x64xf32>, vector<1x64xf32> -> vector<1x64xf32>
    %c6_41 = arith.constant 6 : index
    %c0_42 = arith.constant 0 : index
    %c0_43 = arith.constant 0 : index
    %41 = vector.load %arg3[%c6_41, %c0_42, %c0_43] : memref<8x1x64xf32, #tpu.memory_space<vmem>>, vector<1x1x64xf32>
    %42 = vector.shape_cast %41 : vector<1x1x64xf32> to vector<1x64xf32>
    %43 = arith.addf %40, %42 : vector<1x64xf32>
    %c7 = arith.constant 7 : index
    %c0_44 = arith.constant 0 : index
    %c0_45 = arith.constant 0 : index
    %44 = vector.load %arg2[%c7, %c0_44, %c0_45] : memref<8x32x64xf32, #tpu.memory_space<vmem>>, vector<1x32x64xf32>
    %45 = vector.shape_cast %44 : vector<1x32x64xf32> to vector<32x64xf32>
    %cst_46 = arith.constant dense<0.000000e+00> : vector<1x64xf32>
    %46 = tpu.matmul %1, %45, %cst_46 {dimension_numbers = #tpu.dot_dimension_numbers<[1], [0], [0], [1], [0, 0, 1, 1], [], []>} : vector<1x32xf32>, vector<32x64xf32>, vector<1x64xf32> -> vector<1x64xf32>
    %c7_47 = arith.constant 7 : index
    %c0_48 = arith.constant 0 : index
    %c0_49 = arith.constant 0 : index
    %47 = vector.load %arg3[%c7_47, %c0_48, %c0_49] : memref<8x1x64xf32, #tpu.memory_space<vmem>>, vector<1x1x64xf32>
    %48 = vector.shape_cast %47 : vector<1x1x64xf32> to vector<1x64xf32>
    %49 = arith.addf %46, %48 : vector<1x64xf32>
    %c0_50 = arith.constant 0 : index
    %c0_51 = arith.constant 0 : index
    %50 = vector.load %arg4[%c0_50, %c0_51] : memref<8x64xf32, #tpu.memory_space<vmem>>, vector<8x64xf32>
    %51 = tpu.concatenate %7, %13, %19, %25, %31, %37, %43, %49, %50 in 0 : vector<1x64xf32>, vector<1x64xf32>, vector<1x64xf32>, vector<1x64xf32>, vector<1x64xf32>, vector<1x64xf32>, vector<1x64xf32>, vector<1x64xf32>, vector<8x64xf32> -> vector<16x64xf32>
    %c0_52 = arith.constant 0 : index
    %c0_53 = arith.constant 0 : index
    %c0_54 = arith.constant 0 : index
    %52 = vector.load %arg7[%c0_52, %c0_53, %c0_54] : memref<4x64x64xf32, #tpu.memory_space<vmem>>, vector<1x64x64xf32>
    %53 = vector.shape_cast %52 : vector<1x64x64xf32> to vector<64x64xf32>
    %cst_55 = arith.constant dense<0.000000e+00> : vector<16x64xf32>
    %54 = tpu.matmul %51, %53, %cst_55 {dimension_numbers = #tpu.dot_dimension_numbers<[1], [0], [0], [1], [0, 0, 1, 1], [], []>} : vector<16x64xf32>, vector<64x64xf32>, vector<16x64xf32> -> vector<16x64xf32>
    %c0_56 = arith.constant 0 : index
    %c0_57 = arith.constant 0 : index
    %c0_58 = arith.constant 0 : index
    %55 = vector.load %arg10[%c0_56, %c0_57, %c0_58] : memref<4x1x64xf32, #tpu.memory_space<vmem>>, vector<1x1x64xf32>
    %56 = vector.shape_cast %55 : vector<1x1x64xf32> to vector<1x64xf32>
    %57 = vector.broadcast %56 : vector<1x64xf32> to vector<16x64xf32>
    %58 = arith.addf %54, %57 : vector<16x64xf32>
    %c0_59 = arith.constant 0 : index
    %c0_60 = arith.constant 0 : index
    %c0_61 = arith.constant 0 : index
    %59 = vector.load %arg8[%c0_59, %c0_60, %c0_61] : memref<4x64x64xf32, #tpu.memory_space<vmem>>, vector<1x64x64xf32>
    %60 = vector.shape_cast %59 : vector<1x64x64xf32> to vector<64x64xf32>
    %cst_62 = arith.constant dense<0.000000e+00> : vector<16x64xf32>
    %61 = tpu.matmul %51, %60, %cst_62 {dimension_numbers = #tpu.dot_dimension_numbers<[1], [0], [0], [1], [0, 0, 1, 1], [], []>} : vector<16x64xf32>, vector<64x64xf32>, vector<16x64xf32> -> vector<16x64xf32>
    %c0_63 = arith.constant 0 : index
    %c0_64 = arith.constant 0 : index
    %c0_65 = arith.constant 0 : index
    %62 = vector.load %arg11[%c0_63, %c0_64, %c0_65] : memref<4x1x64xf32, #tpu.memory_space<vmem>>, vector<1x1x64xf32>
    %63 = vector.shape_cast %62 : vector<1x1x64xf32> to vector<1x64xf32>
    %64 = vector.broadcast %63 : vector<1x64xf32> to vector<16x64xf32>
    %65 = arith.addf %61, %64 : vector<16x64xf32>
    %c0_66 = arith.constant 0 : index
    %c0_67 = arith.constant 0 : index
    %c0_68 = arith.constant 0 : index
    %66 = vector.load %arg9[%c0_66, %c0_67, %c0_68] : memref<4x64x64xf32, #tpu.memory_space<vmem>>, vector<1x64x64xf32>
    %67 = vector.shape_cast %66 : vector<1x64x64xf32> to vector<64x64xf32>
    %cst_69 = arith.constant dense<0.000000e+00> : vector<16x64xf32>
    %68 = tpu.matmul %51, %67, %cst_69 {dimension_numbers = #tpu.dot_dimension_numbers<[1], [0], [0], [1], [0, 0, 1, 1], [], []>} : vector<16x64xf32>, vector<64x64xf32>, vector<16x64xf32> -> vector<16x64xf32>
    %c0_70 = arith.constant 0 : index
    %c0_71 = arith.constant 0 : index
    %c0_72 = arith.constant 0 : index
    %69 = vector.load %arg12[%c0_70, %c0_71, %c0_72] : memref<4x1x64xf32, #tpu.memory_space<vmem>>, vector<1x1x64xf32>
    %70 = vector.shape_cast %69 : vector<1x1x64xf32> to vector<1x64xf32>
    %71 = vector.broadcast %70 : vector<1x64xf32> to vector<16x64xf32>
    %72 = arith.addf %68, %71 : vector<16x64xf32>
    %c0_73 = arith.constant 0 : index
    %c0_74 = arith.constant 0 : index
    %73 = vector.load %arg5[%c0_73, %c0_74] : memref<128x64xf32, #tpu.memory_space<vmem>>, vector<128x64xf32>
    %74 = tpu.concatenate %65, %65, %65, %65, %65, %65, %65, %65 in 0 : vector<16x64xf32>, vector<16x64xf32>, vector<16x64xf32>, vector<16x64xf32>, vector<16x64xf32>, vector<16x64xf32>, vector<16x64xf32>, vector<16x64xf32> -> vector<128x64xf32>
    %75 = arith.mulf %74, %73 : vector<128x64xf32>
    %76 = tpu.concatenate %72, %72, %72, %72, %72, %72, %72, %72 in 0 : vector<16x64xf32>, vector<16x64xf32>, vector<16x64xf32>, vector<16x64xf32>, vector<16x64xf32>, vector<16x64xf32>, vector<16x64xf32>, vector<16x64xf32> -> vector<128x64xf32>
    %77 = arith.mulf %76, %73 : vector<128x64xf32>
    %cst_75 = arith.constant 0.353553385 : f32
    %78 = vector.broadcast %cst_75 : f32 to vector<16x64xf32>
    %79 = arith.mulf %58, %78 : vector<16x64xf32>
    %cst_76 = arith.constant dense<0.000000e+00> : vector<16x128xf32>
    %80 = tpu.matmul %79, %75, %cst_76 {dimension_numbers = #tpu.dot_dimension_numbers<[1], [1], [0], [0], [0, 0, 1, 0], [], []>} : vector<16x64xf32>, vector<128x64xf32>, vector<16x128xf32> -> vector<16x128xf32>
    %81 = tpu.concatenate %80, %80, %80, %80, %80, %80, %80, %80 in 0 : vector<16x128xf32>, vector<16x128xf32>, vector<16x128xf32>, vector<16x128xf32>, vector<16x128xf32>, vector<16x128xf32>, vector<16x128xf32>, vector<16x128xf32> -> vector<128x128xf32>
    %c0_77 = arith.constant 0 : index
    %c0_78 = arith.constant 0 : index
    %82 = vector.load %arg6[%c0_77, %c0_78] : memref<128x128xf32, #tpu.memory_space<vmem>>, vector<128x128xf32>
    %83 = arith.addf %81, %82 : vector<128x128xf32>
    %cst_79 = arith.constant dense<0xFF800000> : vector<128xf32>
    %84 = vector.multi_reduction <maximumf>, %83, %cst_79 [1] : vector<128x128xf32> to vector<128xf32>
    %85 = vector.shape_cast %84 : vector<128xf32> to vector<128x1xf32>
    %86 = vector.broadcast %85 : vector<128x1xf32> to vector<128x128xf32>
    %87 = arith.subf %83, %86 : vector<128x128xf32>
    %88 = math.exp %87 : vector<128x128xf32>
    %cst_80 = arith.constant dense<0.000000e+00> : vector<128xf32>
    %89 = vector.multi_reduction <add>, %88, %cst_80 [1] : vector<128x128xf32> to vector<128xf32>
    %90 = vector.shape_cast %89 : vector<128xf32> to vector<128x1xf32>
    %91 = tpu.reciprocal %90 {approx = true} : vector<128x1xf32> -> vector<128x1xf32>
    %92 = vector.broadcast %91 : vector<128x1xf32> to vector<128x128xf32>
    %93 = arith.mulf %88, %92 : vector<128x128xf32>
    %cst_81 = arith.constant dense<0.000000e+00> : vector<128x64xf32>
    %94 = tpu.matmul %93, %77, %cst_81 {dimension_numbers = #tpu.dot_dimension_numbers<[1], [0], [0], [1], [0, 0, 1, 1], [], []>} : vector<128x128xf32>, vector<128x64xf32>, vector<128x64xf32> -> vector<128x64xf32>
    %95 = vector.extract_strided_slice %94 {offsets = [0, 0], sizes = [16, 64], strides = [1, 1]} : vector<128x64xf32> to vector<16x64xf32>
    %96 = vector.extract_strided_slice %94 {offsets = [16, 0], sizes = [16, 64], strides = [1, 1]} : vector<128x64xf32> to vector<16x64xf32>
    %97 = arith.addf %95, %96 : vector<16x64xf32>
    %98 = vector.extract_strided_slice %94 {offsets = [32, 0], sizes = [16, 64], strides = [1, 1]} : vector<128x64xf32> to vector<16x64xf32>
    %99 = arith.addf %97, %98 : vector<16x64xf32>
    %100 = vector.extract_strided_slice %94 {offsets = [48, 0], sizes = [16, 64], strides = [1, 1]} : vector<128x64xf32> to vector<16x64xf32>
    %101 = arith.addf %99, %100 : vector<16x64xf32>
    %102 = vector.extract_strided_slice %94 {offsets = [64, 0], sizes = [16, 64], strides = [1, 1]} : vector<128x64xf32> to vector<16x64xf32>
    %103 = arith.addf %101, %102 : vector<16x64xf32>
    %104 = vector.extract_strided_slice %94 {offsets = [80, 0], sizes = [16, 64], strides = [1, 1]} : vector<128x64xf32> to vector<16x64xf32>
    %105 = arith.addf %103, %104 : vector<16x64xf32>
    %106 = vector.extract_strided_slice %94 {offsets = [96, 0], sizes = [16, 64], strides = [1, 1]} : vector<128x64xf32> to vector<16x64xf32>
    %107 = arith.addf %105, %106 : vector<16x64xf32>
    %108 = vector.extract_strided_slice %94 {offsets = [112, 0], sizes = [16, 64], strides = [1, 1]} : vector<128x64xf32> to vector<16x64xf32>
    %109 = arith.addf %107, %108 : vector<16x64xf32>
    %c0_82 = arith.constant 0 : index
    %c0_83 = arith.constant 0 : index
    %c0_84 = arith.constant 0 : index
    %110 = vector.load %arg13[%c0_82, %c0_83, %c0_84] : memref<4x64x64xf32, #tpu.memory_space<vmem>>, vector<1x64x64xf32>
    %111 = vector.shape_cast %110 : vector<1x64x64xf32> to vector<64x64xf32>
    %cst_85 = arith.constant dense<0.000000e+00> : vector<16x64xf32>
    %112 = tpu.matmul %109, %111, %cst_85 {dimension_numbers = #tpu.dot_dimension_numbers<[1], [0], [0], [1], [0, 0, 1, 1], [], []>} : vector<16x64xf32>, vector<64x64xf32>, vector<16x64xf32> -> vector<16x64xf32>
    %c0_86 = arith.constant 0 : index
    %c0_87 = arith.constant 0 : index
    %c0_88 = arith.constant 0 : index
    %113 = vector.load %arg14[%c0_86, %c0_87, %c0_88] : memref<4x1x64xf32, #tpu.memory_space<vmem>>, vector<1x1x64xf32>
    %114 = vector.shape_cast %113 : vector<1x1x64xf32> to vector<1x64xf32>
    %115 = vector.broadcast %114 : vector<1x64xf32> to vector<16x64xf32>
    %116 = arith.addf %112, %115 : vector<16x64xf32>
    %117 = arith.addf %51, %116 : vector<16x64xf32>
    %c0_89 = arith.constant 0 : index
    %c0_90 = arith.constant 0 : index
    %c0_91 = arith.constant 0 : index
    %118 = vector.load %arg19[%c0_89, %c0_90, %c0_91] : memref<4x1x64xf32, #tpu.memory_space<vmem>>, vector<1x1x64xf32>
    %119 = vector.shape_cast %118 : vector<1x1x64xf32> to vector<1x64xf32>
    %c0_92 = arith.constant 0 : index
    %c0_93 = arith.constant 0 : index
    %c0_94 = arith.constant 0 : index
    %120 = vector.load %arg20[%c0_92, %c0_93, %c0_94] : memref<4x1x64xf32, #tpu.memory_space<vmem>>, vector<1x1x64xf32>
    %121 = vector.shape_cast %120 : vector<1x1x64xf32> to vector<1x64xf32>
    %cst_95 = arith.constant dense<0.000000e+00> : vector<16xf32>
    %122 = vector.multi_reduction <add>, %117, %cst_95 [1] : vector<16x64xf32> to vector<16xf32>
    %123 = vector.shape_cast %122 : vector<16xf32> to vector<16x1xf32>
    %cst_96 = arith.constant 6.400000e+01 : f32
    %124 = vector.broadcast %cst_96 : f32 to vector<16x1xf32>
    %125 = arith.divf %123, %124 : vector<16x1xf32>
    %126 = vector.broadcast %125 : vector<16x1xf32> to vector<16x64xf32>
    %127 = arith.subf %117, %126 : vector<16x64xf32>
    %128 = arith.mulf %127, %127 : vector<16x64xf32>
    %cst_97 = arith.constant dense<0.000000e+00> : vector<16xf32>
    %129 = vector.multi_reduction <add>, %128, %cst_97 [1] : vector<16x64xf32> to vector<16xf32>
    %130 = vector.shape_cast %129 : vector<16xf32> to vector<16x1xf32>
    %cst_98 = arith.constant 6.400000e+01 : f32
    %131 = vector.broadcast %cst_98 : f32 to vector<16x1xf32>
    %132 = arith.divf %130, %131 : vector<16x1xf32>
    %133 = vector.broadcast %125 : vector<16x1xf32> to vector<16x64xf32>
    %134 = arith.subf %117, %133 : vector<16x64xf32>
    %cst_99 = arith.constant 9.99999974E-6 : f32
    %135 = vector.broadcast %cst_99 : f32 to vector<16x1xf32>
    %136 = arith.addf %132, %135 : vector<16x1xf32>
    %137 = math.rsqrt %136 : vector<16x1xf32>
    %138 = vector.broadcast %137 : vector<16x1xf32> to vector<16x64xf32>
    %139 = arith.mulf %134, %138 : vector<16x64xf32>
    %140 = vector.broadcast %119 : vector<1x64xf32> to vector<16x64xf32>
    %141 = arith.mulf %139, %140 : vector<16x64xf32>
    %142 = vector.broadcast %121 : vector<1x64xf32> to vector<16x64xf32>
    %143 = arith.addf %141, %142 : vector<16x64xf32>
    %c0_100 = arith.constant 0 : index
    %c0_101 = arith.constant 0 : index
    %c0_102 = arith.constant 0 : index
    %144 = vector.load %arg15[%c0_100, %c0_101, %c0_102] : memref<4x64x256xf32, #tpu.memory_space<vmem>>, vector<1x64x256xf32>
    %145 = vector.shape_cast %144 : vector<1x64x256xf32> to vector<64x256xf32>
    %cst_103 = arith.constant dense<0.000000e+00> : vector<16x256xf32>
    %146 = tpu.matmul %143, %145, %cst_103 {dimension_numbers = #tpu.dot_dimension_numbers<[1], [0], [0], [1], [0, 0, 1, 1], [], []>} : vector<16x64xf32>, vector<64x256xf32>, vector<16x256xf32> -> vector<16x256xf32>
    %c0_104 = arith.constant 0 : index
    %c0_105 = arith.constant 0 : index
    %c0_106 = arith.constant 0 : index
    %147 = vector.load %arg16[%c0_104, %c0_105, %c0_106] : memref<4x1x256xf32, #tpu.memory_space<vmem>>, vector<1x1x256xf32>
    %148 = vector.shape_cast %147 : vector<1x1x256xf32> to vector<1x256xf32>
    %149 = vector.broadcast %148 : vector<1x256xf32> to vector<16x256xf32>
    %150 = arith.addf %146, %149 : vector<16x256xf32>
    %cst_107 = arith.constant 0.000000e+00 : f32
    %151 = vector.broadcast %cst_107 : f32 to vector<16x256xf32>
    %152 = arith.maximumf %150, %151 : vector<16x256xf32>
    %c0_108 = arith.constant 0 : index
    %c0_109 = arith.constant 0 : index
    %c0_110 = arith.constant 0 : index
    %153 = vector.load %arg17[%c0_108, %c0_109, %c0_110] : memref<4x256x64xf32, #tpu.memory_space<vmem>>, vector<1x256x64xf32>
    %154 = vector.shape_cast %153 : vector<1x256x64xf32> to vector<256x64xf32>
    %cst_111 = arith.constant dense<0.000000e+00> : vector<16x64xf32>
    %155 = tpu.matmul %152, %154, %cst_111 {dimension_numbers = #tpu.dot_dimension_numbers<[1], [0], [0], [1], [0, 0, 1, 1], [], []>} : vector<16x256xf32>, vector<256x64xf32>, vector<16x64xf32> -> vector<16x64xf32>
    %c0_112 = arith.constant 0 : index
    %c0_113 = arith.constant 0 : index
    %c0_114 = arith.constant 0 : index
    %156 = vector.load %arg18[%c0_112, %c0_113, %c0_114] : memref<4x1x64xf32, #tpu.memory_space<vmem>>, vector<1x1x64xf32>
    %157 = vector.shape_cast %156 : vector<1x1x64xf32> to vector<1x64xf32>
    %158 = vector.broadcast %157 : vector<1x64xf32> to vector<16x64xf32>
    %159 = arith.addf %155, %158 : vector<16x64xf32>
    %160 = arith.addf %143, %159 : vector<16x64xf32>
    %c0_115 = arith.constant 0 : index
    %c0_116 = arith.constant 0 : index
    %c0_117 = arith.constant 0 : index
    %161 = vector.load %arg21[%c0_115, %c0_116, %c0_117] : memref<4x1x64xf32, #tpu.memory_space<vmem>>, vector<1x1x64xf32>
    %162 = vector.shape_cast %161 : vector<1x1x64xf32> to vector<1x64xf32>
    %c0_118 = arith.constant 0 : index
    %c0_119 = arith.constant 0 : index
    %c0_120 = arith.constant 0 : index
    %163 = vector.load %arg22[%c0_118, %c0_119, %c0_120] : memref<4x1x64xf32, #tpu.memory_space<vmem>>, vector<1x1x64xf32>
    %164 = vector.shape_cast %163 : vector<1x1x64xf32> to vector<1x64xf32>
    %cst_121 = arith.constant dense<0.000000e+00> : vector<16xf32>
    %165 = vector.multi_reduction <add>, %160, %cst_121 [1] : vector<16x64xf32> to vector<16xf32>
    %166 = vector.shape_cast %165 : vector<16xf32> to vector<16x1xf32>
    %cst_122 = arith.constant 6.400000e+01 : f32
    %167 = vector.broadcast %cst_122 : f32 to vector<16x1xf32>
    %168 = arith.divf %166, %167 : vector<16x1xf32>
    %169 = vector.broadcast %168 : vector<16x1xf32> to vector<16x64xf32>
    %170 = arith.subf %160, %169 : vector<16x64xf32>
    %171 = arith.mulf %170, %170 : vector<16x64xf32>
    %cst_123 = arith.constant dense<0.000000e+00> : vector<16xf32>
    %172 = vector.multi_reduction <add>, %171, %cst_123 [1] : vector<16x64xf32> to vector<16xf32>
    %173 = vector.shape_cast %172 : vector<16xf32> to vector<16x1xf32>
    %cst_124 = arith.constant 6.400000e+01 : f32
    %174 = vector.broadcast %cst_124 : f32 to vector<16x1xf32>
    %175 = arith.divf %173, %174 : vector<16x1xf32>
    %176 = vector.broadcast %168 : vector<16x1xf32> to vector<16x64xf32>
    %177 = arith.subf %160, %176 : vector<16x64xf32>
    %cst_125 = arith.constant 9.99999974E-6 : f32
    %178 = vector.broadcast %cst_125 : f32 to vector<16x1xf32>
    %179 = arith.addf %175, %178 : vector<16x1xf32>
    %180 = math.rsqrt %179 : vector<16x1xf32>
    %181 = vector.broadcast %180 : vector<16x1xf32> to vector<16x64xf32>
    %182 = arith.mulf %177, %181 : vector<16x64xf32>
    %183 = vector.broadcast %162 : vector<1x64xf32> to vector<16x64xf32>
    %184 = arith.mulf %182, %183 : vector<16x64xf32>
    %185 = vector.broadcast %164 : vector<1x64xf32> to vector<16x64xf32>
    %186 = arith.addf %184, %185 : vector<16x64xf32>
    %c1_126 = arith.constant 1 : index
    %c0_127 = arith.constant 0 : index
    %c0_128 = arith.constant 0 : index
    %187 = vector.load %arg7[%c1_126, %c0_127, %c0_128] : memref<4x64x64xf32, #tpu.memory_space<vmem>>, vector<1x64x64xf32>
    %188 = vector.shape_cast %187 : vector<1x64x64xf32> to vector<64x64xf32>
    %cst_129 = arith.constant dense<0.000000e+00> : vector<16x64xf32>
    %189 = tpu.matmul %186, %188, %cst_129 {dimension_numbers = #tpu.dot_dimension_numbers<[1], [0], [0], [1], [0, 0, 1, 1], [], []>} : vector<16x64xf32>, vector<64x64xf32>, vector<16x64xf32> -> vector<16x64xf32>
    %c1_130 = arith.constant 1 : index
    %c0_131 = arith.constant 0 : index
    %c0_132 = arith.constant 0 : index
    %190 = vector.load %arg10[%c1_130, %c0_131, %c0_132] : memref<4x1x64xf32, #tpu.memory_space<vmem>>, vector<1x1x64xf32>
    %191 = vector.shape_cast %190 : vector<1x1x64xf32> to vector<1x64xf32>
    %192 = vector.broadcast %191 : vector<1x64xf32> to vector<16x64xf32>
    %193 = arith.addf %189, %192 : vector<16x64xf32>
    %c1_133 = arith.constant 1 : index
    %c0_134 = arith.constant 0 : index
    %c0_135 = arith.constant 0 : index
    %194 = vector.load %arg8[%c1_133, %c0_134, %c0_135] : memref<4x64x64xf32, #tpu.memory_space<vmem>>, vector<1x64x64xf32>
    %195 = vector.shape_cast %194 : vector<1x64x64xf32> to vector<64x64xf32>
    %cst_136 = arith.constant dense<0.000000e+00> : vector<16x64xf32>
    %196 = tpu.matmul %186, %195, %cst_136 {dimension_numbers = #tpu.dot_dimension_numbers<[1], [0], [0], [1], [0, 0, 1, 1], [], []>} : vector<16x64xf32>, vector<64x64xf32>, vector<16x64xf32> -> vector<16x64xf32>
    %c1_137 = arith.constant 1 : index
    %c0_138 = arith.constant 0 : index
    %c0_139 = arith.constant 0 : index
    %197 = vector.load %arg11[%c1_137, %c0_138, %c0_139] : memref<4x1x64xf32, #tpu.memory_space<vmem>>, vector<1x1x64xf32>
    %198 = vector.shape_cast %197 : vector<1x1x64xf32> to vector<1x64xf32>
    %199 = vector.broadcast %198 : vector<1x64xf32> to vector<16x64xf32>
    %200 = arith.addf %196, %199 : vector<16x64xf32>
    %c1_140 = arith.constant 1 : index
    %c0_141 = arith.constant 0 : index
    %c0_142 = arith.constant 0 : index
    %201 = vector.load %arg9[%c1_140, %c0_141, %c0_142] : memref<4x64x64xf32, #tpu.memory_space<vmem>>, vector<1x64x64xf32>
    %202 = vector.shape_cast %201 : vector<1x64x64xf32> to vector<64x64xf32>
    %cst_143 = arith.constant dense<0.000000e+00> : vector<16x64xf32>
    %203 = tpu.matmul %186, %202, %cst_143 {dimension_numbers = #tpu.dot_dimension_numbers<[1], [0], [0], [1], [0, 0, 1, 1], [], []>} : vector<16x64xf32>, vector<64x64xf32>, vector<16x64xf32> -> vector<16x64xf32>
    %c1_144 = arith.constant 1 : index
    %c0_145 = arith.constant 0 : index
    %c0_146 = arith.constant 0 : index
    %204 = vector.load %arg12[%c1_144, %c0_145, %c0_146] : memref<4x1x64xf32, #tpu.memory_space<vmem>>, vector<1x1x64xf32>
    %205 = vector.shape_cast %204 : vector<1x1x64xf32> to vector<1x64xf32>
    %206 = vector.broadcast %205 : vector<1x64xf32> to vector<16x64xf32>
    %207 = arith.addf %203, %206 : vector<16x64xf32>
    %c0_147 = arith.constant 0 : index
    %c0_148 = arith.constant 0 : index
    %208 = vector.load %arg5[%c0_147, %c0_148] : memref<128x64xf32, #tpu.memory_space<vmem>>, vector<128x64xf32>
    %209 = tpu.concatenate %200, %200, %200, %200, %200, %200, %200, %200 in 0 : vector<16x64xf32>, vector<16x64xf32>, vector<16x64xf32>, vector<16x64xf32>, vector<16x64xf32>, vector<16x64xf32>, vector<16x64xf32>, vector<16x64xf32> -> vector<128x64xf32>
    %210 = arith.mulf %209, %208 : vector<128x64xf32>
    %211 = tpu.concatenate %207, %207, %207, %207, %207, %207, %207, %207 in 0 : vector<16x64xf32>, vector<16x64xf32>, vector<16x64xf32>, vector<16x64xf32>, vector<16x64xf32>, vector<16x64xf32>, vector<16x64xf32>, vector<16x64xf32> -> vector<128x64xf32>
    %212 = arith.mulf %211, %208 : vector<128x64xf32>
    %cst_149 = arith.constant 0.353553385 : f32
    %213 = vector.broadcast %cst_149 : f32 to vector<16x64xf32>
    %214 = arith.mulf %193, %213 : vector<16x64xf32>
    %cst_150 = arith.constant dense<0.000000e+00> : vector<16x128xf32>
    %215 = tpu.matmul %214, %210, %cst_150 {dimension_numbers = #tpu.dot_dimension_numbers<[1], [1], [0], [0], [0, 0, 1, 0], [], []>} : vector<16x64xf32>, vector<128x64xf32>, vector<16x128xf32> -> vector<16x128xf32>
    %216 = tpu.concatenate %215, %215, %215, %215, %215, %215, %215, %215 in 0 : vector<16x128xf32>, vector<16x128xf32>, vector<16x128xf32>, vector<16x128xf32>, vector<16x128xf32>, vector<16x128xf32>, vector<16x128xf32>, vector<16x128xf32> -> vector<128x128xf32>
    %c0_151 = arith.constant 0 : index
    %c0_152 = arith.constant 0 : index
    %217 = vector.load %arg6[%c0_151, %c0_152] : memref<128x128xf32, #tpu.memory_space<vmem>>, vector<128x128xf32>
    %218 = arith.addf %216, %217 : vector<128x128xf32>
    %cst_153 = arith.constant dense<0xFF800000> : vector<128xf32>
    %219 = vector.multi_reduction <maximumf>, %218, %cst_153 [1] : vector<128x128xf32> to vector<128xf32>
    %220 = vector.shape_cast %219 : vector<128xf32> to vector<128x1xf32>
    %221 = vector.broadcast %220 : vector<128x1xf32> to vector<128x128xf32>
    %222 = arith.subf %218, %221 : vector<128x128xf32>
    %223 = math.exp %222 : vector<128x128xf32>
    %cst_154 = arith.constant dense<0.000000e+00> : vector<128xf32>
    %224 = vector.multi_reduction <add>, %223, %cst_154 [1] : vector<128x128xf32> to vector<128xf32>
    %225 = vector.shape_cast %224 : vector<128xf32> to vector<128x1xf32>
    %226 = tpu.reciprocal %225 {approx = true} : vector<128x1xf32> -> vector<128x1xf32>
    %227 = vector.broadcast %226 : vector<128x1xf32> to vector<128x128xf32>
    %228 = arith.mulf %223, %227 : vector<128x128xf32>
    %cst_155 = arith.constant dense<0.000000e+00> : vector<128x64xf32>
    %229 = tpu.matmul %228, %212, %cst_155 {dimension_numbers = #tpu.dot_dimension_numbers<[1], [0], [0], [1], [0, 0, 1, 1], [], []>} : vector<128x128xf32>, vector<128x64xf32>, vector<128x64xf32> -> vector<128x64xf32>
    %230 = vector.extract_strided_slice %229 {offsets = [0, 0], sizes = [16, 64], strides = [1, 1]} : vector<128x64xf32> to vector<16x64xf32>
    %231 = vector.extract_strided_slice %229 {offsets = [16, 0], sizes = [16, 64], strides = [1, 1]} : vector<128x64xf32> to vector<16x64xf32>
    %232 = arith.addf %230, %231 : vector<16x64xf32>
    %233 = vector.extract_strided_slice %229 {offsets = [32, 0], sizes = [16, 64], strides = [1, 1]} : vector<128x64xf32> to vector<16x64xf32>
    %234 = arith.addf %232, %233 : vector<16x64xf32>
    %235 = vector.extract_strided_slice %229 {offsets = [48, 0], sizes = [16, 64], strides = [1, 1]} : vector<128x64xf32> to vector<16x64xf32>
    %236 = arith.addf %234, %235 : vector<16x64xf32>
    %237 = vector.extract_strided_slice %229 {offsets = [64, 0], sizes = [16, 64], strides = [1, 1]} : vector<128x64xf32> to vector<16x64xf32>
    %238 = arith.addf %236, %237 : vector<16x64xf32>
    %239 = vector.extract_strided_slice %229 {offsets = [80, 0], sizes = [16, 64], strides = [1, 1]} : vector<128x64xf32> to vector<16x64xf32>
    %240 = arith.addf %238, %239 : vector<16x64xf32>
    %241 = vector.extract_strided_slice %229 {offsets = [96, 0], sizes = [16, 64], strides = [1, 1]} : vector<128x64xf32> to vector<16x64xf32>
    %242 = arith.addf %240, %241 : vector<16x64xf32>
    %243 = vector.extract_strided_slice %229 {offsets = [112, 0], sizes = [16, 64], strides = [1, 1]} : vector<128x64xf32> to vector<16x64xf32>
    %244 = arith.addf %242, %243 : vector<16x64xf32>
    %c1_156 = arith.constant 1 : index
    %c0_157 = arith.constant 0 : index
    %c0_158 = arith.constant 0 : index
    %245 = vector.load %arg13[%c1_156, %c0_157, %c0_158] : memref<4x64x64xf32, #tpu.memory_space<vmem>>, vector<1x64x64xf32>
    %246 = vector.shape_cast %245 : vector<1x64x64xf32> to vector<64x64xf32>
    %cst_159 = arith.constant dense<0.000000e+00> : vector<16x64xf32>
    %247 = tpu.matmul %244, %246, %cst_159 {dimension_numbers = #tpu.dot_dimension_numbers<[1], [0], [0], [1], [0, 0, 1, 1], [], []>} : vector<16x64xf32>, vector<64x64xf32>, vector<16x64xf32> -> vector<16x64xf32>
    %c1_160 = arith.constant 1 : index
    %c0_161 = arith.constant 0 : index
    %c0_162 = arith.constant 0 : index
    %248 = vector.load %arg14[%c1_160, %c0_161, %c0_162] : memref<4x1x64xf32, #tpu.memory_space<vmem>>, vector<1x1x64xf32>
    %249 = vector.shape_cast %248 : vector<1x1x64xf32> to vector<1x64xf32>
    %250 = vector.broadcast %249 : vector<1x64xf32> to vector<16x64xf32>
    %251 = arith.addf %247, %250 : vector<16x64xf32>
    %252 = arith.addf %186, %251 : vector<16x64xf32>
    %c1_163 = arith.constant 1 : index
    %c0_164 = arith.constant 0 : index
    %c0_165 = arith.constant 0 : index
    %253 = vector.load %arg19[%c1_163, %c0_164, %c0_165] : memref<4x1x64xf32, #tpu.memory_space<vmem>>, vector<1x1x64xf32>
    %254 = vector.shape_cast %253 : vector<1x1x64xf32> to vector<1x64xf32>
    %c1_166 = arith.constant 1 : index
    %c0_167 = arith.constant 0 : index
    %c0_168 = arith.constant 0 : index
    %255 = vector.load %arg20[%c1_166, %c0_167, %c0_168] : memref<4x1x64xf32, #tpu.memory_space<vmem>>, vector<1x1x64xf32>
    %256 = vector.shape_cast %255 : vector<1x1x64xf32> to vector<1x64xf32>
    %cst_169 = arith.constant dense<0.000000e+00> : vector<16xf32>
    %257 = vector.multi_reduction <add>, %252, %cst_169 [1] : vector<16x64xf32> to vector<16xf32>
    %258 = vector.shape_cast %257 : vector<16xf32> to vector<16x1xf32>
    %cst_170 = arith.constant 6.400000e+01 : f32
    %259 = vector.broadcast %cst_170 : f32 to vector<16x1xf32>
    %260 = arith.divf %258, %259 : vector<16x1xf32>
    %261 = vector.broadcast %260 : vector<16x1xf32> to vector<16x64xf32>
    %262 = arith.subf %252, %261 : vector<16x64xf32>
    %263 = arith.mulf %262, %262 : vector<16x64xf32>
    %cst_171 = arith.constant dense<0.000000e+00> : vector<16xf32>
    %264 = vector.multi_reduction <add>, %263, %cst_171 [1] : vector<16x64xf32> to vector<16xf32>
    %265 = vector.shape_cast %264 : vector<16xf32> to vector<16x1xf32>
    %cst_172 = arith.constant 6.400000e+01 : f32
    %266 = vector.broadcast %cst_172 : f32 to vector<16x1xf32>
    %267 = arith.divf %265, %266 : vector<16x1xf32>
    %268 = vector.broadcast %260 : vector<16x1xf32> to vector<16x64xf32>
    %269 = arith.subf %252, %268 : vector<16x64xf32>
    %cst_173 = arith.constant 9.99999974E-6 : f32
    %270 = vector.broadcast %cst_173 : f32 to vector<16x1xf32>
    %271 = arith.addf %267, %270 : vector<16x1xf32>
    %272 = math.rsqrt %271 : vector<16x1xf32>
    %273 = vector.broadcast %272 : vector<16x1xf32> to vector<16x64xf32>
    %274 = arith.mulf %269, %273 : vector<16x64xf32>
    %275 = vector.broadcast %254 : vector<1x64xf32> to vector<16x64xf32>
    %276 = arith.mulf %274, %275 : vector<16x64xf32>
    %277 = vector.broadcast %256 : vector<1x64xf32> to vector<16x64xf32>
    %278 = arith.addf %276, %277 : vector<16x64xf32>
    %c1_174 = arith.constant 1 : index
    %c0_175 = arith.constant 0 : index
    %c0_176 = arith.constant 0 : index
    %279 = vector.load %arg15[%c1_174, %c0_175, %c0_176] : memref<4x64x256xf32, #tpu.memory_space<vmem>>, vector<1x64x256xf32>
    %280 = vector.shape_cast %279 : vector<1x64x256xf32> to vector<64x256xf32>
    %cst_177 = arith.constant dense<0.000000e+00> : vector<16x256xf32>
    %281 = tpu.matmul %278, %280, %cst_177 {dimension_numbers = #tpu.dot_dimension_numbers<[1], [0], [0], [1], [0, 0, 1, 1], [], []>} : vector<16x64xf32>, vector<64x256xf32>, vector<16x256xf32> -> vector<16x256xf32>
    %c1_178 = arith.constant 1 : index
    %c0_179 = arith.constant 0 : index
    %c0_180 = arith.constant 0 : index
    %282 = vector.load %arg16[%c1_178, %c0_179, %c0_180] : memref<4x1x256xf32, #tpu.memory_space<vmem>>, vector<1x1x256xf32>
    %283 = vector.shape_cast %282 : vector<1x1x256xf32> to vector<1x256xf32>
    %284 = vector.broadcast %283 : vector<1x256xf32> to vector<16x256xf32>
    %285 = arith.addf %281, %284 : vector<16x256xf32>
    %cst_181 = arith.constant 0.000000e+00 : f32
    %286 = vector.broadcast %cst_181 : f32 to vector<16x256xf32>
    %287 = arith.maximumf %285, %286 : vector<16x256xf32>
    %c1_182 = arith.constant 1 : index
    %c0_183 = arith.constant 0 : index
    %c0_184 = arith.constant 0 : index
    %288 = vector.load %arg17[%c1_182, %c0_183, %c0_184] : memref<4x256x64xf32, #tpu.memory_space<vmem>>, vector<1x256x64xf32>
    %289 = vector.shape_cast %288 : vector<1x256x64xf32> to vector<256x64xf32>
    %cst_185 = arith.constant dense<0.000000e+00> : vector<16x64xf32>
    %290 = tpu.matmul %287, %289, %cst_185 {dimension_numbers = #tpu.dot_dimension_numbers<[1], [0], [0], [1], [0, 0, 1, 1], [], []>} : vector<16x256xf32>, vector<256x64xf32>, vector<16x64xf32> -> vector<16x64xf32>
    %c1_186 = arith.constant 1 : index
    %c0_187 = arith.constant 0 : index
    %c0_188 = arith.constant 0 : index
    %291 = vector.load %arg18[%c1_186, %c0_187, %c0_188] : memref<4x1x64xf32, #tpu.memory_space<vmem>>, vector<1x1x64xf32>
    %292 = vector.shape_cast %291 : vector<1x1x64xf32> to vector<1x64xf32>
    %293 = vector.broadcast %292 : vector<1x64xf32> to vector<16x64xf32>
    %294 = arith.addf %290, %293 : vector<16x64xf32>
    %295 = arith.addf %278, %294 : vector<16x64xf32>
    %c1_189 = arith.constant 1 : index
    %c0_190 = arith.constant 0 : index
    %c0_191 = arith.constant 0 : index
    %296 = vector.load %arg21[%c1_189, %c0_190, %c0_191] : memref<4x1x64xf32, #tpu.memory_space<vmem>>, vector<1x1x64xf32>
    %297 = vector.shape_cast %296 : vector<1x1x64xf32> to vector<1x64xf32>
    %c1_192 = arith.constant 1 : index
    %c0_193 = arith.constant 0 : index
    %c0_194 = arith.constant 0 : index
    %298 = vector.load %arg22[%c1_192, %c0_193, %c0_194] : memref<4x1x64xf32, #tpu.memory_space<vmem>>, vector<1x1x64xf32>
    %299 = vector.shape_cast %298 : vector<1x1x64xf32> to vector<1x64xf32>
    %cst_195 = arith.constant dense<0.000000e+00> : vector<16xf32>
    %300 = vector.multi_reduction <add>, %295, %cst_195 [1] : vector<16x64xf32> to vector<16xf32>
    %301 = vector.shape_cast %300 : vector<16xf32> to vector<16x1xf32>
    %cst_196 = arith.constant 6.400000e+01 : f32
    %302 = vector.broadcast %cst_196 : f32 to vector<16x1xf32>
    %303 = arith.divf %301, %302 : vector<16x1xf32>
    %304 = vector.broadcast %303 : vector<16x1xf32> to vector<16x64xf32>
    %305 = arith.subf %295, %304 : vector<16x64xf32>
    %306 = arith.mulf %305, %305 : vector<16x64xf32>
    %cst_197 = arith.constant dense<0.000000e+00> : vector<16xf32>
    %307 = vector.multi_reduction <add>, %306, %cst_197 [1] : vector<16x64xf32> to vector<16xf32>
    %308 = vector.shape_cast %307 : vector<16xf32> to vector<16x1xf32>
    %cst_198 = arith.constant 6.400000e+01 : f32
    %309 = vector.broadcast %cst_198 : f32 to vector<16x1xf32>
    %310 = arith.divf %308, %309 : vector<16x1xf32>
    %311 = vector.broadcast %303 : vector<16x1xf32> to vector<16x64xf32>
    %312 = arith.subf %295, %311 : vector<16x64xf32>
    %cst_199 = arith.constant 9.99999974E-6 : f32
    %313 = vector.broadcast %cst_199 : f32 to vector<16x1xf32>
    %314 = arith.addf %310, %313 : vector<16x1xf32>
    %315 = math.rsqrt %314 : vector<16x1xf32>
    %316 = vector.broadcast %315 : vector<16x1xf32> to vector<16x64xf32>
    %317 = arith.mulf %312, %316 : vector<16x64xf32>
    %318 = vector.broadcast %297 : vector<1x64xf32> to vector<16x64xf32>
    %319 = arith.mulf %317, %318 : vector<16x64xf32>
    %320 = vector.broadcast %299 : vector<1x64xf32> to vector<16x64xf32>
    %321 = arith.addf %319, %320 : vector<16x64xf32>
    %c2_200 = arith.constant 2 : index
    %c0_201 = arith.constant 0 : index
    %c0_202 = arith.constant 0 : index
    %322 = vector.load %arg7[%c2_200, %c0_201, %c0_202] : memref<4x64x64xf32, #tpu.memory_space<vmem>>, vector<1x64x64xf32>
    %323 = vector.shape_cast %322 : vector<1x64x64xf32> to vector<64x64xf32>
    %cst_203 = arith.constant dense<0.000000e+00> : vector<16x64xf32>
    %324 = tpu.matmul %321, %323, %cst_203 {dimension_numbers = #tpu.dot_dimension_numbers<[1], [0], [0], [1], [0, 0, 1, 1], [], []>} : vector<16x64xf32>, vector<64x64xf32>, vector<16x64xf32> -> vector<16x64xf32>
    %c2_204 = arith.constant 2 : index
    %c0_205 = arith.constant 0 : index
    %c0_206 = arith.constant 0 : index
    %325 = vector.load %arg10[%c2_204, %c0_205, %c0_206] : memref<4x1x64xf32, #tpu.memory_space<vmem>>, vector<1x1x64xf32>
    %326 = vector.shape_cast %325 : vector<1x1x64xf32> to vector<1x64xf32>
    %327 = vector.broadcast %326 : vector<1x64xf32> to vector<16x64xf32>
    %328 = arith.addf %324, %327 : vector<16x64xf32>
    %c2_207 = arith.constant 2 : index
    %c0_208 = arith.constant 0 : index
    %c0_209 = arith.constant 0 : index
    %329 = vector.load %arg8[%c2_207, %c0_208, %c0_209] : memref<4x64x64xf32, #tpu.memory_space<vmem>>, vector<1x64x64xf32>
    %330 = vector.shape_cast %329 : vector<1x64x64xf32> to vector<64x64xf32>
    %cst_210 = arith.constant dense<0.000000e+00> : vector<16x64xf32>
    %331 = tpu.matmul %321, %330, %cst_210 {dimension_numbers = #tpu.dot_dimension_numbers<[1], [0], [0], [1], [0, 0, 1, 1], [], []>} : vector<16x64xf32>, vector<64x64xf32>, vector<16x64xf32> -> vector<16x64xf32>
    %c2_211 = arith.constant 2 : index
    %c0_212 = arith.constant 0 : index
    %c0_213 = arith.constant 0 : index
    %332 = vector.load %arg11[%c2_211, %c0_212, %c0_213] : memref<4x1x64xf32, #tpu.memory_space<vmem>>, vector<1x1x64xf32>
    %333 = vector.shape_cast %332 : vector<1x1x64xf32> to vector<1x64xf32>
    %334 = vector.broadcast %333 : vector<1x64xf32> to vector<16x64xf32>
    %335 = arith.addf %331, %334 : vector<16x64xf32>
    %c2_214 = arith.constant 2 : index
    %c0_215 = arith.constant 0 : index
    %c0_216 = arith.constant 0 : index
    %336 = vector.load %arg9[%c2_214, %c0_215, %c0_216] : memref<4x64x64xf32, #tpu.memory_space<vmem>>, vector<1x64x64xf32>
    %337 = vector.shape_cast %336 : vector<1x64x64xf32> to vector<64x64xf32>
    %cst_217 = arith.constant dense<0.000000e+00> : vector<16x64xf32>
    %338 = tpu.matmul %321, %337, %cst_217 {dimension_numbers = #tpu.dot_dimension_numbers<[1], [0], [0], [1], [0, 0, 1, 1], [], []>} : vector<16x64xf32>, vector<64x64xf32>, vector<16x64xf32> -> vector<16x64xf32>
    %c2_218 = arith.constant 2 : index
    %c0_219 = arith.constant 0 : index
    %c0_220 = arith.constant 0 : index
    %339 = vector.load %arg12[%c2_218, %c0_219, %c0_220] : memref<4x1x64xf32, #tpu.memory_space<vmem>>, vector<1x1x64xf32>
    %340 = vector.shape_cast %339 : vector<1x1x64xf32> to vector<1x64xf32>
    %341 = vector.broadcast %340 : vector<1x64xf32> to vector<16x64xf32>
    %342 = arith.addf %338, %341 : vector<16x64xf32>
    %c0_221 = arith.constant 0 : index
    %c0_222 = arith.constant 0 : index
    %343 = vector.load %arg5[%c0_221, %c0_222] : memref<128x64xf32, #tpu.memory_space<vmem>>, vector<128x64xf32>
    %344 = tpu.concatenate %335, %335, %335, %335, %335, %335, %335, %335 in 0 : vector<16x64xf32>, vector<16x64xf32>, vector<16x64xf32>, vector<16x64xf32>, vector<16x64xf32>, vector<16x64xf32>, vector<16x64xf32>, vector<16x64xf32> -> vector<128x64xf32>
    %345 = arith.mulf %344, %343 : vector<128x64xf32>
    %346 = tpu.concatenate %342, %342, %342, %342, %342, %342, %342, %342 in 0 : vector<16x64xf32>, vector<16x64xf32>, vector<16x64xf32>, vector<16x64xf32>, vector<16x64xf32>, vector<16x64xf32>, vector<16x64xf32>, vector<16x64xf32> -> vector<128x64xf32>
    %347 = arith.mulf %346, %343 : vector<128x64xf32>
    %cst_223 = arith.constant 0.353553385 : f32
    %348 = vector.broadcast %cst_223 : f32 to vector<16x64xf32>
    %349 = arith.mulf %328, %348 : vector<16x64xf32>
    %cst_224 = arith.constant dense<0.000000e+00> : vector<16x128xf32>
    %350 = tpu.matmul %349, %345, %cst_224 {dimension_numbers = #tpu.dot_dimension_numbers<[1], [1], [0], [0], [0, 0, 1, 0], [], []>} : vector<16x64xf32>, vector<128x64xf32>, vector<16x128xf32> -> vector<16x128xf32>
    %351 = tpu.concatenate %350, %350, %350, %350, %350, %350, %350, %350 in 0 : vector<16x128xf32>, vector<16x128xf32>, vector<16x128xf32>, vector<16x128xf32>, vector<16x128xf32>, vector<16x128xf32>, vector<16x128xf32>, vector<16x128xf32> -> vector<128x128xf32>
    %c0_225 = arith.constant 0 : index
    %c0_226 = arith.constant 0 : index
    %352 = vector.load %arg6[%c0_225, %c0_226] : memref<128x128xf32, #tpu.memory_space<vmem>>, vector<128x128xf32>
    %353 = arith.addf %351, %352 : vector<128x128xf32>
    %cst_227 = arith.constant dense<0xFF800000> : vector<128xf32>
    %354 = vector.multi_reduction <maximumf>, %353, %cst_227 [1] : vector<128x128xf32> to vector<128xf32>
    %355 = vector.shape_cast %354 : vector<128xf32> to vector<128x1xf32>
    %356 = vector.broadcast %355 : vector<128x1xf32> to vector<128x128xf32>
    %357 = arith.subf %353, %356 : vector<128x128xf32>
    %358 = math.exp %357 : vector<128x128xf32>
    %cst_228 = arith.constant dense<0.000000e+00> : vector<128xf32>
    %359 = vector.multi_reduction <add>, %358, %cst_228 [1] : vector<128x128xf32> to vector<128xf32>
    %360 = vector.shape_cast %359 : vector<128xf32> to vector<128x1xf32>
    %361 = tpu.reciprocal %360 {approx = true} : vector<128x1xf32> -> vector<128x1xf32>
    %362 = vector.broadcast %361 : vector<128x1xf32> to vector<128x128xf32>
    %363 = arith.mulf %358, %362 : vector<128x128xf32>
    %cst_229 = arith.constant dense<0.000000e+00> : vector<128x64xf32>
    %364 = tpu.matmul %363, %347, %cst_229 {dimension_numbers = #tpu.dot_dimension_numbers<[1], [0], [0], [1], [0, 0, 1, 1], [], []>} : vector<128x128xf32>, vector<128x64xf32>, vector<128x64xf32> -> vector<128x64xf32>
    %365 = vector.extract_strided_slice %364 {offsets = [0, 0], sizes = [16, 64], strides = [1, 1]} : vector<128x64xf32> to vector<16x64xf32>
    %366 = vector.extract_strided_slice %364 {offsets = [16, 0], sizes = [16, 64], strides = [1, 1]} : vector<128x64xf32> to vector<16x64xf32>
    %367 = arith.addf %365, %366 : vector<16x64xf32>
    %368 = vector.extract_strided_slice %364 {offsets = [32, 0], sizes = [16, 64], strides = [1, 1]} : vector<128x64xf32> to vector<16x64xf32>
    %369 = arith.addf %367, %368 : vector<16x64xf32>
    %370 = vector.extract_strided_slice %364 {offsets = [48, 0], sizes = [16, 64], strides = [1, 1]} : vector<128x64xf32> to vector<16x64xf32>
    %371 = arith.addf %369, %370 : vector<16x64xf32>
    %372 = vector.extract_strided_slice %364 {offsets = [64, 0], sizes = [16, 64], strides = [1, 1]} : vector<128x64xf32> to vector<16x64xf32>
    %373 = arith.addf %371, %372 : vector<16x64xf32>
    %374 = vector.extract_strided_slice %364 {offsets = [80, 0], sizes = [16, 64], strides = [1, 1]} : vector<128x64xf32> to vector<16x64xf32>
    %375 = arith.addf %373, %374 : vector<16x64xf32>
    %376 = vector.extract_strided_slice %364 {offsets = [96, 0], sizes = [16, 64], strides = [1, 1]} : vector<128x64xf32> to vector<16x64xf32>
    %377 = arith.addf %375, %376 : vector<16x64xf32>
    %378 = vector.extract_strided_slice %364 {offsets = [112, 0], sizes = [16, 64], strides = [1, 1]} : vector<128x64xf32> to vector<16x64xf32>
    %379 = arith.addf %377, %378 : vector<16x64xf32>
    %c2_230 = arith.constant 2 : index
    %c0_231 = arith.constant 0 : index
    %c0_232 = arith.constant 0 : index
    %380 = vector.load %arg13[%c2_230, %c0_231, %c0_232] : memref<4x64x64xf32, #tpu.memory_space<vmem>>, vector<1x64x64xf32>
    %381 = vector.shape_cast %380 : vector<1x64x64xf32> to vector<64x64xf32>
    %cst_233 = arith.constant dense<0.000000e+00> : vector<16x64xf32>
    %382 = tpu.matmul %379, %381, %cst_233 {dimension_numbers = #tpu.dot_dimension_numbers<[1], [0], [0], [1], [0, 0, 1, 1], [], []>} : vector<16x64xf32>, vector<64x64xf32>, vector<16x64xf32> -> vector<16x64xf32>
    %c2_234 = arith.constant 2 : index
    %c0_235 = arith.constant 0 : index
    %c0_236 = arith.constant 0 : index
    %383 = vector.load %arg14[%c2_234, %c0_235, %c0_236] : memref<4x1x64xf32, #tpu.memory_space<vmem>>, vector<1x1x64xf32>
    %384 = vector.shape_cast %383 : vector<1x1x64xf32> to vector<1x64xf32>
    %385 = vector.broadcast %384 : vector<1x64xf32> to vector<16x64xf32>
    %386 = arith.addf %382, %385 : vector<16x64xf32>
    %387 = arith.addf %321, %386 : vector<16x64xf32>
    %c2_237 = arith.constant 2 : index
    %c0_238 = arith.constant 0 : index
    %c0_239 = arith.constant 0 : index
    %388 = vector.load %arg19[%c2_237, %c0_238, %c0_239] : memref<4x1x64xf32, #tpu.memory_space<vmem>>, vector<1x1x64xf32>
    %389 = vector.shape_cast %388 : vector<1x1x64xf32> to vector<1x64xf32>
    %c2_240 = arith.constant 2 : index
    %c0_241 = arith.constant 0 : index
    %c0_242 = arith.constant 0 : index
    %390 = vector.load %arg20[%c2_240, %c0_241, %c0_242] : memref<4x1x64xf32, #tpu.memory_space<vmem>>, vector<1x1x64xf32>
    %391 = vector.shape_cast %390 : vector<1x1x64xf32> to vector<1x64xf32>
    %cst_243 = arith.constant dense<0.000000e+00> : vector<16xf32>
    %392 = vector.multi_reduction <add>, %387, %cst_243 [1] : vector<16x64xf32> to vector<16xf32>
    %393 = vector.shape_cast %392 : vector<16xf32> to vector<16x1xf32>
    %cst_244 = arith.constant 6.400000e+01 : f32
    %394 = vector.broadcast %cst_244 : f32 to vector<16x1xf32>
    %395 = arith.divf %393, %394 : vector<16x1xf32>
    %396 = vector.broadcast %395 : vector<16x1xf32> to vector<16x64xf32>
    %397 = arith.subf %387, %396 : vector<16x64xf32>
    %398 = arith.mulf %397, %397 : vector<16x64xf32>
    %cst_245 = arith.constant dense<0.000000e+00> : vector<16xf32>
    %399 = vector.multi_reduction <add>, %398, %cst_245 [1] : vector<16x64xf32> to vector<16xf32>
    %400 = vector.shape_cast %399 : vector<16xf32> to vector<16x1xf32>
    %cst_246 = arith.constant 6.400000e+01 : f32
    %401 = vector.broadcast %cst_246 : f32 to vector<16x1xf32>
    %402 = arith.divf %400, %401 : vector<16x1xf32>
    %403 = vector.broadcast %395 : vector<16x1xf32> to vector<16x64xf32>
    %404 = arith.subf %387, %403 : vector<16x64xf32>
    %cst_247 = arith.constant 9.99999974E-6 : f32
    %405 = vector.broadcast %cst_247 : f32 to vector<16x1xf32>
    %406 = arith.addf %402, %405 : vector<16x1xf32>
    %407 = math.rsqrt %406 : vector<16x1xf32>
    %408 = vector.broadcast %407 : vector<16x1xf32> to vector<16x64xf32>
    %409 = arith.mulf %404, %408 : vector<16x64xf32>
    %410 = vector.broadcast %389 : vector<1x64xf32> to vector<16x64xf32>
    %411 = arith.mulf %409, %410 : vector<16x64xf32>
    %412 = vector.broadcast %391 : vector<1x64xf32> to vector<16x64xf32>
    %413 = arith.addf %411, %412 : vector<16x64xf32>
    %c2_248 = arith.constant 2 : index
    %c0_249 = arith.constant 0 : index
    %c0_250 = arith.constant 0 : index
    %414 = vector.load %arg15[%c2_248, %c0_249, %c0_250] : memref<4x64x256xf32, #tpu.memory_space<vmem>>, vector<1x64x256xf32>
    %415 = vector.shape_cast %414 : vector<1x64x256xf32> to vector<64x256xf32>
    %cst_251 = arith.constant dense<0.000000e+00> : vector<16x256xf32>
    %416 = tpu.matmul %413, %415, %cst_251 {dimension_numbers = #tpu.dot_dimension_numbers<[1], [0], [0], [1], [0, 0, 1, 1], [], []>} : vector<16x64xf32>, vector<64x256xf32>, vector<16x256xf32> -> vector<16x256xf32>
    %c2_252 = arith.constant 2 : index
    %c0_253 = arith.constant 0 : index
    %c0_254 = arith.constant 0 : index
    %417 = vector.load %arg16[%c2_252, %c0_253, %c0_254] : memref<4x1x256xf32, #tpu.memory_space<vmem>>, vector<1x1x256xf32>
    %418 = vector.shape_cast %417 : vector<1x1x256xf32> to vector<1x256xf32>
    %419 = vector.broadcast %418 : vector<1x256xf32> to vector<16x256xf32>
    %420 = arith.addf %416, %419 : vector<16x256xf32>
    %cst_255 = arith.constant 0.000000e+00 : f32
    %421 = vector.broadcast %cst_255 : f32 to vector<16x256xf32>
    %422 = arith.maximumf %420, %421 : vector<16x256xf32>
    %c2_256 = arith.constant 2 : index
    %c0_257 = arith.constant 0 : index
    %c0_258 = arith.constant 0 : index
    %423 = vector.load %arg17[%c2_256, %c0_257, %c0_258] : memref<4x256x64xf32, #tpu.memory_space<vmem>>, vector<1x256x64xf32>
    %424 = vector.shape_cast %423 : vector<1x256x64xf32> to vector<256x64xf32>
    %cst_259 = arith.constant dense<0.000000e+00> : vector<16x64xf32>
    %425 = tpu.matmul %422, %424, %cst_259 {dimension_numbers = #tpu.dot_dimension_numbers<[1], [0], [0], [1], [0, 0, 1, 1], [], []>} : vector<16x256xf32>, vector<256x64xf32>, vector<16x64xf32> -> vector<16x64xf32>
    %c2_260 = arith.constant 2 : index
    %c0_261 = arith.constant 0 : index
    %c0_262 = arith.constant 0 : index
    %426 = vector.load %arg18[%c2_260, %c0_261, %c0_262] : memref<4x1x64xf32, #tpu.memory_space<vmem>>, vector<1x1x64xf32>
    %427 = vector.shape_cast %426 : vector<1x1x64xf32> to vector<1x64xf32>
    %428 = vector.broadcast %427 : vector<1x64xf32> to vector<16x64xf32>
    %429 = arith.addf %425, %428 : vector<16x64xf32>
    %430 = arith.addf %413, %429 : vector<16x64xf32>
    %c2_263 = arith.constant 2 : index
    %c0_264 = arith.constant 0 : index
    %c0_265 = arith.constant 0 : index
    %431 = vector.load %arg21[%c2_263, %c0_264, %c0_265] : memref<4x1x64xf32, #tpu.memory_space<vmem>>, vector<1x1x64xf32>
    %432 = vector.shape_cast %431 : vector<1x1x64xf32> to vector<1x64xf32>
    %c2_266 = arith.constant 2 : index
    %c0_267 = arith.constant 0 : index
    %c0_268 = arith.constant 0 : index
    %433 = vector.load %arg22[%c2_266, %c0_267, %c0_268] : memref<4x1x64xf32, #tpu.memory_space<vmem>>, vector<1x1x64xf32>
    %434 = vector.shape_cast %433 : vector<1x1x64xf32> to vector<1x64xf32>
    %cst_269 = arith.constant dense<0.000000e+00> : vector<16xf32>
    %435 = vector.multi_reduction <add>, %430, %cst_269 [1] : vector<16x64xf32> to vector<16xf32>
    %436 = vector.shape_cast %435 : vector<16xf32> to vector<16x1xf32>
    %cst_270 = arith.constant 6.400000e+01 : f32
    %437 = vector.broadcast %cst_270 : f32 to vector<16x1xf32>
    %438 = arith.divf %436, %437 : vector<16x1xf32>
    %439 = vector.broadcast %438 : vector<16x1xf32> to vector<16x64xf32>
    %440 = arith.subf %430, %439 : vector<16x64xf32>
    %441 = arith.mulf %440, %440 : vector<16x64xf32>
    %cst_271 = arith.constant dense<0.000000e+00> : vector<16xf32>
    %442 = vector.multi_reduction <add>, %441, %cst_271 [1] : vector<16x64xf32> to vector<16xf32>
    %443 = vector.shape_cast %442 : vector<16xf32> to vector<16x1xf32>
    %cst_272 = arith.constant 6.400000e+01 : f32
    %444 = vector.broadcast %cst_272 : f32 to vector<16x1xf32>
    %445 = arith.divf %443, %444 : vector<16x1xf32>
    %446 = vector.broadcast %438 : vector<16x1xf32> to vector<16x64xf32>
    %447 = arith.subf %430, %446 : vector<16x64xf32>
    %cst_273 = arith.constant 9.99999974E-6 : f32
    %448 = vector.broadcast %cst_273 : f32 to vector<16x1xf32>
    %449 = arith.addf %445, %448 : vector<16x1xf32>
    %450 = math.rsqrt %449 : vector<16x1xf32>
    %451 = vector.broadcast %450 : vector<16x1xf32> to vector<16x64xf32>
    %452 = arith.mulf %447, %451 : vector<16x64xf32>
    %453 = vector.broadcast %432 : vector<1x64xf32> to vector<16x64xf32>
    %454 = arith.mulf %452, %453 : vector<16x64xf32>
    %455 = vector.broadcast %434 : vector<1x64xf32> to vector<16x64xf32>
    %456 = arith.addf %454, %455 : vector<16x64xf32>
    %c3_274 = arith.constant 3 : index
    %c0_275 = arith.constant 0 : index
    %c0_276 = arith.constant 0 : index
    %457 = vector.load %arg7[%c3_274, %c0_275, %c0_276] : memref<4x64x64xf32, #tpu.memory_space<vmem>>, vector<1x64x64xf32>
    %458 = vector.shape_cast %457 : vector<1x64x64xf32> to vector<64x64xf32>
    %cst_277 = arith.constant dense<0.000000e+00> : vector<16x64xf32>
    %459 = tpu.matmul %456, %458, %cst_277 {dimension_numbers = #tpu.dot_dimension_numbers<[1], [0], [0], [1], [0, 0, 1, 1], [], []>} : vector<16x64xf32>, vector<64x64xf32>, vector<16x64xf32> -> vector<16x64xf32>
    %c3_278 = arith.constant 3 : index
    %c0_279 = arith.constant 0 : index
    %c0_280 = arith.constant 0 : index
    %460 = vector.load %arg10[%c3_278, %c0_279, %c0_280] : memref<4x1x64xf32, #tpu.memory_space<vmem>>, vector<1x1x64xf32>
    %461 = vector.shape_cast %460 : vector<1x1x64xf32> to vector<1x64xf32>
    %462 = vector.broadcast %461 : vector<1x64xf32> to vector<16x64xf32>
    %463 = arith.addf %459, %462 : vector<16x64xf32>
    %c3_281 = arith.constant 3 : index
    %c0_282 = arith.constant 0 : index
    %c0_283 = arith.constant 0 : index
    %464 = vector.load %arg8[%c3_281, %c0_282, %c0_283] : memref<4x64x64xf32, #tpu.memory_space<vmem>>, vector<1x64x64xf32>
    %465 = vector.shape_cast %464 : vector<1x64x64xf32> to vector<64x64xf32>
    %cst_284 = arith.constant dense<0.000000e+00> : vector<16x64xf32>
    %466 = tpu.matmul %456, %465, %cst_284 {dimension_numbers = #tpu.dot_dimension_numbers<[1], [0], [0], [1], [0, 0, 1, 1], [], []>} : vector<16x64xf32>, vector<64x64xf32>, vector<16x64xf32> -> vector<16x64xf32>
    %c3_285 = arith.constant 3 : index
    %c0_286 = arith.constant 0 : index
    %c0_287 = arith.constant 0 : index
    %467 = vector.load %arg11[%c3_285, %c0_286, %c0_287] : memref<4x1x64xf32, #tpu.memory_space<vmem>>, vector<1x1x64xf32>
    %468 = vector.shape_cast %467 : vector<1x1x64xf32> to vector<1x64xf32>
    %469 = vector.broadcast %468 : vector<1x64xf32> to vector<16x64xf32>
    %470 = arith.addf %466, %469 : vector<16x64xf32>
    %c3_288 = arith.constant 3 : index
    %c0_289 = arith.constant 0 : index
    %c0_290 = arith.constant 0 : index
    %471 = vector.load %arg9[%c3_288, %c0_289, %c0_290] : memref<4x64x64xf32, #tpu.memory_space<vmem>>, vector<1x64x64xf32>
    %472 = vector.shape_cast %471 : vector<1x64x64xf32> to vector<64x64xf32>
    %cst_291 = arith.constant dense<0.000000e+00> : vector<16x64xf32>
    %473 = tpu.matmul %456, %472, %cst_291 {dimension_numbers = #tpu.dot_dimension_numbers<[1], [0], [0], [1], [0, 0, 1, 1], [], []>} : vector<16x64xf32>, vector<64x64xf32>, vector<16x64xf32> -> vector<16x64xf32>
    %c3_292 = arith.constant 3 : index
    %c0_293 = arith.constant 0 : index
    %c0_294 = arith.constant 0 : index
    %474 = vector.load %arg12[%c3_292, %c0_293, %c0_294] : memref<4x1x64xf32, #tpu.memory_space<vmem>>, vector<1x1x64xf32>
    %475 = vector.shape_cast %474 : vector<1x1x64xf32> to vector<1x64xf32>
    %476 = vector.broadcast %475 : vector<1x64xf32> to vector<16x64xf32>
    %477 = arith.addf %473, %476 : vector<16x64xf32>
    %c0_295 = arith.constant 0 : index
    %c0_296 = arith.constant 0 : index
    %478 = vector.load %arg5[%c0_295, %c0_296] : memref<128x64xf32, #tpu.memory_space<vmem>>, vector<128x64xf32>
    %479 = tpu.concatenate %470, %470, %470, %470, %470, %470, %470, %470 in 0 : vector<16x64xf32>, vector<16x64xf32>, vector<16x64xf32>, vector<16x64xf32>, vector<16x64xf32>, vector<16x64xf32>, vector<16x64xf32>, vector<16x64xf32> -> vector<128x64xf32>
    %480 = arith.mulf %479, %478 : vector<128x64xf32>
    %481 = tpu.concatenate %477, %477, %477, %477, %477, %477, %477, %477 in 0 : vector<16x64xf32>, vector<16x64xf32>, vector<16x64xf32>, vector<16x64xf32>, vector<16x64xf32>, vector<16x64xf32>, vector<16x64xf32>, vector<16x64xf32> -> vector<128x64xf32>
    %482 = arith.mulf %481, %478 : vector<128x64xf32>
    %cst_297 = arith.constant 0.353553385 : f32
    %483 = vector.broadcast %cst_297 : f32 to vector<16x64xf32>
    %484 = arith.mulf %463, %483 : vector<16x64xf32>
    %cst_298 = arith.constant dense<0.000000e+00> : vector<16x128xf32>
    %485 = tpu.matmul %484, %480, %cst_298 {dimension_numbers = #tpu.dot_dimension_numbers<[1], [1], [0], [0], [0, 0, 1, 0], [], []>} : vector<16x64xf32>, vector<128x64xf32>, vector<16x128xf32> -> vector<16x128xf32>
    %486 = tpu.concatenate %485, %485, %485, %485, %485, %485, %485, %485 in 0 : vector<16x128xf32>, vector<16x128xf32>, vector<16x128xf32>, vector<16x128xf32>, vector<16x128xf32>, vector<16x128xf32>, vector<16x128xf32>, vector<16x128xf32> -> vector<128x128xf32>
    %c0_299 = arith.constant 0 : index
    %c0_300 = arith.constant 0 : index
    %487 = vector.load %arg6[%c0_299, %c0_300] : memref<128x128xf32, #tpu.memory_space<vmem>>, vector<128x128xf32>
    %488 = arith.addf %486, %487 : vector<128x128xf32>
    %cst_301 = arith.constant dense<0xFF800000> : vector<128xf32>
    %489 = vector.multi_reduction <maximumf>, %488, %cst_301 [1] : vector<128x128xf32> to vector<128xf32>
    %490 = vector.shape_cast %489 : vector<128xf32> to vector<128x1xf32>
    %491 = vector.broadcast %490 : vector<128x1xf32> to vector<128x128xf32>
    %492 = arith.subf %488, %491 : vector<128x128xf32>
    %493 = math.exp %492 : vector<128x128xf32>
    %cst_302 = arith.constant dense<0.000000e+00> : vector<128xf32>
    %494 = vector.multi_reduction <add>, %493, %cst_302 [1] : vector<128x128xf32> to vector<128xf32>
    %495 = vector.shape_cast %494 : vector<128xf32> to vector<128x1xf32>
    %496 = tpu.reciprocal %495 {approx = true} : vector<128x1xf32> -> vector<128x1xf32>
    %497 = vector.broadcast %496 : vector<128x1xf32> to vector<128x128xf32>
    %498 = arith.mulf %493, %497 : vector<128x128xf32>
    %cst_303 = arith.constant dense<0.000000e+00> : vector<128x64xf32>
    %499 = tpu.matmul %498, %482, %cst_303 {dimension_numbers = #tpu.dot_dimension_numbers<[1], [0], [0], [1], [0, 0, 1, 1], [], []>} : vector<128x128xf32>, vector<128x64xf32>, vector<128x64xf32> -> vector<128x64xf32>
    %500 = vector.extract_strided_slice %499 {offsets = [0, 0], sizes = [16, 64], strides = [1, 1]} : vector<128x64xf32> to vector<16x64xf32>
    %501 = vector.extract_strided_slice %499 {offsets = [16, 0], sizes = [16, 64], strides = [1, 1]} : vector<128x64xf32> to vector<16x64xf32>
    %502 = arith.addf %500, %501 : vector<16x64xf32>
    %503 = vector.extract_strided_slice %499 {offsets = [32, 0], sizes = [16, 64], strides = [1, 1]} : vector<128x64xf32> to vector<16x64xf32>
    %504 = arith.addf %502, %503 : vector<16x64xf32>
    %505 = vector.extract_strided_slice %499 {offsets = [48, 0], sizes = [16, 64], strides = [1, 1]} : vector<128x64xf32> to vector<16x64xf32>
    %506 = arith.addf %504, %505 : vector<16x64xf32>
    %507 = vector.extract_strided_slice %499 {offsets = [64, 0], sizes = [16, 64], strides = [1, 1]} : vector<128x64xf32> to vector<16x64xf32>
    %508 = arith.addf %506, %507 : vector<16x64xf32>
    %509 = vector.extract_strided_slice %499 {offsets = [80, 0], sizes = [16, 64], strides = [1, 1]} : vector<128x64xf32> to vector<16x64xf32>
    %510 = arith.addf %508, %509 : vector<16x64xf32>
    %511 = vector.extract_strided_slice %499 {offsets = [96, 0], sizes = [16, 64], strides = [1, 1]} : vector<128x64xf32> to vector<16x64xf32>
    %512 = arith.addf %510, %511 : vector<16x64xf32>
    %513 = vector.extract_strided_slice %499 {offsets = [112, 0], sizes = [16, 64], strides = [1, 1]} : vector<128x64xf32> to vector<16x64xf32>
    %514 = arith.addf %512, %513 : vector<16x64xf32>
    %c3_304 = arith.constant 3 : index
    %c0_305 = arith.constant 0 : index
    %c0_306 = arith.constant 0 : index
    %515 = vector.load %arg13[%c3_304, %c0_305, %c0_306] : memref<4x64x64xf32, #tpu.memory_space<vmem>>, vector<1x64x64xf32>
    %516 = vector.shape_cast %515 : vector<1x64x64xf32> to vector<64x64xf32>
    %cst_307 = arith.constant dense<0.000000e+00> : vector<16x64xf32>
    %517 = tpu.matmul %514, %516, %cst_307 {dimension_numbers = #tpu.dot_dimension_numbers<[1], [0], [0], [1], [0, 0, 1, 1], [], []>} : vector<16x64xf32>, vector<64x64xf32>, vector<16x64xf32> -> vector<16x64xf32>
    %c3_308 = arith.constant 3 : index
    %c0_309 = arith.constant 0 : index
    %c0_310 = arith.constant 0 : index
    %518 = vector.load %arg14[%c3_308, %c0_309, %c0_310] : memref<4x1x64xf32, #tpu.memory_space<vmem>>, vector<1x1x64xf32>
    %519 = vector.shape_cast %518 : vector<1x1x64xf32> to vector<1x64xf32>
    %520 = vector.broadcast %519 : vector<1x64xf32> to vector<16x64xf32>
    %521 = arith.addf %517, %520 : vector<16x64xf32>
    %522 = arith.addf %456, %521 : vector<16x64xf32>
    %c3_311 = arith.constant 3 : index
    %c0_312 = arith.constant 0 : index
    %c0_313 = arith.constant 0 : index
    %523 = vector.load %arg19[%c3_311, %c0_312, %c0_313] : memref<4x1x64xf32, #tpu.memory_space<vmem>>, vector<1x1x64xf32>
    %524 = vector.shape_cast %523 : vector<1x1x64xf32> to vector<1x64xf32>
    %c3_314 = arith.constant 3 : index
    %c0_315 = arith.constant 0 : index
    %c0_316 = arith.constant 0 : index
    %525 = vector.load %arg20[%c3_314, %c0_315, %c0_316] : memref<4x1x64xf32, #tpu.memory_space<vmem>>, vector<1x1x64xf32>
    %526 = vector.shape_cast %525 : vector<1x1x64xf32> to vector<1x64xf32>
    %cst_317 = arith.constant dense<0.000000e+00> : vector<16xf32>
    %527 = vector.multi_reduction <add>, %522, %cst_317 [1] : vector<16x64xf32> to vector<16xf32>
    %528 = vector.shape_cast %527 : vector<16xf32> to vector<16x1xf32>
    %cst_318 = arith.constant 6.400000e+01 : f32
    %529 = vector.broadcast %cst_318 : f32 to vector<16x1xf32>
    %530 = arith.divf %528, %529 : vector<16x1xf32>
    %531 = vector.broadcast %530 : vector<16x1xf32> to vector<16x64xf32>
    %532 = arith.subf %522, %531 : vector<16x64xf32>
    %533 = arith.mulf %532, %532 : vector<16x64xf32>
    %cst_319 = arith.constant dense<0.000000e+00> : vector<16xf32>
    %534 = vector.multi_reduction <add>, %533, %cst_319 [1] : vector<16x64xf32> to vector<16xf32>
    %535 = vector.shape_cast %534 : vector<16xf32> to vector<16x1xf32>
    %cst_320 = arith.constant 6.400000e+01 : f32
    %536 = vector.broadcast %cst_320 : f32 to vector<16x1xf32>
    %537 = arith.divf %535, %536 : vector<16x1xf32>
    %538 = vector.broadcast %530 : vector<16x1xf32> to vector<16x64xf32>
    %539 = arith.subf %522, %538 : vector<16x64xf32>
    %cst_321 = arith.constant 9.99999974E-6 : f32
    %540 = vector.broadcast %cst_321 : f32 to vector<16x1xf32>
    %541 = arith.addf %537, %540 : vector<16x1xf32>
    %542 = math.rsqrt %541 : vector<16x1xf32>
    %543 = vector.broadcast %542 : vector<16x1xf32> to vector<16x64xf32>
    %544 = arith.mulf %539, %543 : vector<16x64xf32>
    %545 = vector.broadcast %524 : vector<1x64xf32> to vector<16x64xf32>
    %546 = arith.mulf %544, %545 : vector<16x64xf32>
    %547 = vector.broadcast %526 : vector<1x64xf32> to vector<16x64xf32>
    %548 = arith.addf %546, %547 : vector<16x64xf32>
    %c3_322 = arith.constant 3 : index
    %c0_323 = arith.constant 0 : index
    %c0_324 = arith.constant 0 : index
    %549 = vector.load %arg15[%c3_322, %c0_323, %c0_324] : memref<4x64x256xf32, #tpu.memory_space<vmem>>, vector<1x64x256xf32>
    %550 = vector.shape_cast %549 : vector<1x64x256xf32> to vector<64x256xf32>
    %cst_325 = arith.constant dense<0.000000e+00> : vector<16x256xf32>
    %551 = tpu.matmul %548, %550, %cst_325 {dimension_numbers = #tpu.dot_dimension_numbers<[1], [0], [0], [1], [0, 0, 1, 1], [], []>} : vector<16x64xf32>, vector<64x256xf32>, vector<16x256xf32> -> vector<16x256xf32>
    %c3_326 = arith.constant 3 : index
    %c0_327 = arith.constant 0 : index
    %c0_328 = arith.constant 0 : index
    %552 = vector.load %arg16[%c3_326, %c0_327, %c0_328] : memref<4x1x256xf32, #tpu.memory_space<vmem>>, vector<1x1x256xf32>
    %553 = vector.shape_cast %552 : vector<1x1x256xf32> to vector<1x256xf32>
    %554 = vector.broadcast %553 : vector<1x256xf32> to vector<16x256xf32>
    %555 = arith.addf %551, %554 : vector<16x256xf32>
    %cst_329 = arith.constant 0.000000e+00 : f32
    %556 = vector.broadcast %cst_329 : f32 to vector<16x256xf32>
    %557 = arith.maximumf %555, %556 : vector<16x256xf32>
    %c3_330 = arith.constant 3 : index
    %c0_331 = arith.constant 0 : index
    %c0_332 = arith.constant 0 : index
    %558 = vector.load %arg17[%c3_330, %c0_331, %c0_332] : memref<4x256x64xf32, #tpu.memory_space<vmem>>, vector<1x256x64xf32>
    %559 = vector.shape_cast %558 : vector<1x256x64xf32> to vector<256x64xf32>
    %cst_333 = arith.constant dense<0.000000e+00> : vector<16x64xf32>
    %560 = tpu.matmul %557, %559, %cst_333 {dimension_numbers = #tpu.dot_dimension_numbers<[1], [0], [0], [1], [0, 0, 1, 1], [], []>} : vector<16x256xf32>, vector<256x64xf32>, vector<16x64xf32> -> vector<16x64xf32>
    %c3_334 = arith.constant 3 : index
    %c0_335 = arith.constant 0 : index
    %c0_336 = arith.constant 0 : index
    %561 = vector.load %arg18[%c3_334, %c0_335, %c0_336] : memref<4x1x64xf32, #tpu.memory_space<vmem>>, vector<1x1x64xf32>
    %562 = vector.shape_cast %561 : vector<1x1x64xf32> to vector<1x64xf32>
    %563 = vector.broadcast %562 : vector<1x64xf32> to vector<16x64xf32>
    %564 = arith.addf %560, %563 : vector<16x64xf32>
    %565 = arith.addf %548, %564 : vector<16x64xf32>
    %c3_337 = arith.constant 3 : index
    %c0_338 = arith.constant 0 : index
    %c0_339 = arith.constant 0 : index
    %566 = vector.load %arg21[%c3_337, %c0_338, %c0_339] : memref<4x1x64xf32, #tpu.memory_space<vmem>>, vector<1x1x64xf32>
    %567 = vector.shape_cast %566 : vector<1x1x64xf32> to vector<1x64xf32>
    %c3_340 = arith.constant 3 : index
    %c0_341 = arith.constant 0 : index
    %c0_342 = arith.constant 0 : index
    %568 = vector.load %arg22[%c3_340, %c0_341, %c0_342] : memref<4x1x64xf32, #tpu.memory_space<vmem>>, vector<1x1x64xf32>
    %569 = vector.shape_cast %568 : vector<1x1x64xf32> to vector<1x64xf32>
    %cst_343 = arith.constant dense<0.000000e+00> : vector<16xf32>
    %570 = vector.multi_reduction <add>, %565, %cst_343 [1] : vector<16x64xf32> to vector<16xf32>
    %571 = vector.shape_cast %570 : vector<16xf32> to vector<16x1xf32>
    %cst_344 = arith.constant 6.400000e+01 : f32
    %572 = vector.broadcast %cst_344 : f32 to vector<16x1xf32>
    %573 = arith.divf %571, %572 : vector<16x1xf32>
    %574 = vector.broadcast %573 : vector<16x1xf32> to vector<16x64xf32>
    %575 = arith.subf %565, %574 : vector<16x64xf32>
    %576 = arith.mulf %575, %575 : vector<16x64xf32>
    %cst_345 = arith.constant dense<0.000000e+00> : vector<16xf32>
    %577 = vector.multi_reduction <add>, %576, %cst_345 [1] : vector<16x64xf32> to vector<16xf32>
    %578 = vector.shape_cast %577 : vector<16xf32> to vector<16x1xf32>
    %cst_346 = arith.constant 6.400000e+01 : f32
    %579 = vector.broadcast %cst_346 : f32 to vector<16x1xf32>
    %580 = arith.divf %578, %579 : vector<16x1xf32>
    %581 = vector.broadcast %573 : vector<16x1xf32> to vector<16x64xf32>
    %582 = arith.subf %565, %581 : vector<16x64xf32>
    %cst_347 = arith.constant 9.99999974E-6 : f32
    %583 = vector.broadcast %cst_347 : f32 to vector<16x1xf32>
    %584 = arith.addf %580, %583 : vector<16x1xf32>
    %585 = math.rsqrt %584 : vector<16x1xf32>
    %586 = vector.broadcast %585 : vector<16x1xf32> to vector<16x64xf32>
    %587 = arith.mulf %582, %586 : vector<16x64xf32>
    %588 = vector.broadcast %567 : vector<1x64xf32> to vector<16x64xf32>
    %589 = arith.mulf %587, %588 : vector<16x64xf32>
    %590 = vector.broadcast %569 : vector<1x64xf32> to vector<16x64xf32>
    %591 = arith.addf %589, %590 : vector<16x64xf32>
    %c0_348 = arith.constant 0 : index
    %c0_349 = arith.constant 0 : index
    %592 = vector.load %arg23[%c0_348, %c0_349] : memref<64x256xf32, #tpu.memory_space<vmem>>, vector<64x256xf32>
    %cst_350 = arith.constant dense<0.000000e+00> : vector<16x256xf32>
    %593 = tpu.matmul %591, %592, %cst_350 {dimension_numbers = #tpu.dot_dimension_numbers<[1], [0], [0], [1], [0, 0, 1, 1], [], []>} : vector<16x64xf32>, vector<64x256xf32>, vector<16x256xf32> -> vector<16x256xf32>
    %c0_351 = arith.constant 0 : index
    %c0_352 = arith.constant 0 : index
    %594 = vector.load %arg24[%c0_351, %c0_352] : memref<1x256xf32, #tpu.memory_space<vmem>>, vector<1x256xf32>
    %595 = vector.broadcast %594 : vector<1x256xf32> to vector<16x256xf32>
    %596 = arith.addf %593, %595 : vector<16x256xf32>
    %c0_353 = arith.constant 0 : index
    %c0_354 = arith.constant 0 : index
    %c0_355 = arith.constant 0 : index
    %597 = vector.load %arg25[%c0_353, %c0_354, %c0_355] : memref<1x16x256xf32, #tpu.memory_space<vmem>>, vector<1x16x256xf32>
    %598 = vector.shape_cast %597 : vector<1x16x256xf32> to vector<16x256xf32>
    %599 = vector.shape_cast %596 : vector<16x256xf32> to vector<1x16x256xf32>
    tpu.vector_store %arg25[%c0_353, %c0_354, %c0_355], %599 {strides = array<i32>} : memref<1x16x256xf32, #tpu.memory_space<vmem>>, vector<1x16x256xf32>,
    return
  }
  func.func @transform_0(%arg0: i32) -> (i32, i32, i32) {
    %c0_i32 = arith.constant 0 : i32
    %c0_i32_0 = arith.constant 0 : i32
    %c0_i32_1 = arith.constant 0 : i32
    return %arg0, %c0_i32, %c0_i32_0 : i32, i32, i32
  }
  func.func @transform_1(%arg0: i32) -> (i32, i32, i32) {
    %c0_i32 = arith.constant 0 : i32
    %c0_i32_0 = arith.constant 0 : i32
    %c0_i32_1 = arith.constant 0 : i32
    %c0_i32_2 = arith.constant 0 : i32
    return %c0_i32, %c0_i32_0, %c0_i32_1 : i32, i32, i32
  }
  func.func @transform_2(%arg0: i32) -> (i32, i32, i32) {
    %c0_i32 = arith.constant 0 : i32
    %c0_i32_0 = arith.constant 0 : i32
    %c0_i32_1 = arith.constant 0 : i32
    %c0_i32_2 = arith.constant 0 : i32
    return %c0_i32, %c0_i32_0, %c0_i32_1 : i32, i32, i32
  }
  func.func @transform_3(%arg0: i32) -> (i32, i32) {
    %c0_i32 = arith.constant 0 : i32
    %c0_i32_0 = arith.constant 0 : i32
    %c0_i32_1 = arith.constant 0 : i32
    return %c0_i32, %c0_i32_0 : i32, i32
  }
  func.func @transform_4(%arg0: i32) -> (i32, i32) {
    %c0_i32 = arith.constant 0 : i32
    %c0_i32_0 = arith.constant 0 : i32
    %c0_i32_1 = arith.constant 0 : i32
    return %c0_i32, %c0_i32_0 : i32, i32
  }
  func.func @transform_5(%arg0: i32) -> (i32, i32) {
    %c0_i32 = arith.constant 0 : i32
    %c0_i32_0 = arith.constant 0 : i32
    %c0_i32_1 = arith.constant 0 : i32
    return %c0_i32, %c0_i32_0 : i32, i32
  }
  func.func @transform_6(%arg0: i32) -> (i32, i32, i32) {
    %c0_i32 = arith.constant 0 : i32
    %c0_i32_0 = arith.constant 0 : i32
    %c0_i32_1 = arith.constant 0 : i32
    %c0_i32_2 = arith.constant 0 : i32
    return %c0_i32, %c0_i32_0, %c0_i32_1 : i32, i32, i32
  }
  func.func @transform_7(%arg0: i32) -> (i32, i32, i32) {
    %c0_i32 = arith.constant 0 : i32
    %c0_i32_0 = arith.constant 0 : i32
    %c0_i32_1 = arith.constant 0 : i32
    %c0_i32_2 = arith.constant 0 : i32
    return %c0_i32, %c0_i32_0, %c0_i32_1 : i32, i32, i32
  }
  func.func @transform_8(%arg0: i32) -> (i32, i32, i32) {
    %c0_i32 = arith.constant 0 : i32
    %c0_i32_0 = arith.constant 0 : i32
    %c0_i32_1 = arith.constant 0 : i32
    %c0_i32_2 = arith.constant 0 : i32
    return %c0_i32, %c0_i32_0, %c0_i32_1 : i32, i32, i32
  }
  func.func @transform_9(%arg0: i32) -> (i32, i32, i32) {
    %c0_i32 = arith.constant 0 : i32
    %c0_i32_0 = arith.constant 0 : i32
    %c0_i32_1 = arith.constant 0 : i32
    %c0_i32_2 = arith.constant 0 : i32
    return %c0_i32, %c0_i32_0, %c0_i32_1 : i32, i32, i32
  }
  func.func @transform_10(%arg0: i32) -> (i32, i32, i32) {
    %c0_i32 = arith.constant 0 : i32
    %c0_i32_0 = arith.constant 0 : i32
    %c0_i32_1 = arith.constant 0 : i32
    %c0_i32_2 = arith.constant 0 : i32
    return %c0_i32, %c0_i32_0, %c0_i32_1 : i32, i32, i32
  }
  func.func @transform_11(%arg0: i32) -> (i32, i32, i32) {
    %c0_i32 = arith.constant 0 : i32
    %c0_i32_0 = arith.constant 0 : i32
    %c0_i32_1 = arith.constant 0 : i32
    %c0_i32_2 = arith.constant 0 : i32
    return %c0_i32, %c0_i32_0, %c0_i32_1 : i32, i32, i32
  }
  func.func @transform_12(%arg0: i32) -> (i32, i32, i32) {
    %c0_i32 = arith.constant 0 : i32
    %c0_i32_0 = arith.constant 0 : i32
    %c0_i32_1 = arith.constant 0 : i32
    %c0_i32_2 = arith.constant 0 : i32
    return %c0_i32, %c0_i32_0, %c0_i32_1 : i32, i32, i32
  }
  func.func @transform_13(%arg0: i32) -> (i32, i32, i32) {
    %c0_i32 = arith.constant 0 : i32
    %c0_i32_0 = arith.constant 0 : i32
    %c0_i32_1 = arith.constant 0 : i32
    %c0_i32_2 = arith.constant 0 : i32
    return %c0_i32, %c0_i32_0, %c0_i32_1 : i32, i32, i32
  }
  func.func @transform_14(%arg0: i32) -> (i32, i32, i32) {
    %c0_i32 = arith.constant 0 : i32
    %c0_i32_0 = arith.constant 0 : i32
    %c0_i32_1 = arith.constant 0 : i32
    %c0_i32_2 = arith.constant 0 : i32
    return %c0_i32, %c0_i32_0, %c0_i32_1 : i32, i32, i32
  }
  func.func @transform_15(%arg0: i32) -> (i32, i32, i32) {
    %c0_i32 = arith.constant 0 : i32
    %c0_i32_0 = arith.constant 0 : i32
    %c0_i32_1 = arith.constant 0 : i32
    %c0_i32_2 = arith.constant 0 : i32
    return %c0_i32, %c0_i32_0, %c0_i32_1 : i32, i32, i32
  }
  func.func @transform_16(%arg0: i32) -> (i32, i32, i32) {
    %c0_i32 = arith.constant 0 : i32
    %c0_i32_0 = arith.constant 0 : i32
    %c0_i32_1 = arith.constant 0 : i32
    %c0_i32_2 = arith.constant 0 : i32
    return %c0_i32, %c0_i32_0, %c0_i32_1 : i32, i32, i32
  }
  func.func @transform_17(%arg0: i32) -> (i32, i32, i32) {
    %c0_i32 = arith.constant 0 : i32
    %c0_i32_0 = arith.constant 0 : i32
    %c0_i32_1 = arith.constant 0 : i32
    %c0_i32_2 = arith.constant 0 : i32
    return %c0_i32, %c0_i32_0, %c0_i32_1 : i32, i32, i32
  }
  func.func @transform_18(%arg0: i32) -> (i32, i32, i32) {
    %c0_i32 = arith.constant 0 : i32
    %c0_i32_0 = arith.constant 0 : i32
    %c0_i32_1 = arith.constant 0 : i32
    %c0_i32_2 = arith.constant 0 : i32
    return %c0_i32, %c0_i32_0, %c0_i32_1 : i32, i32, i32
  }
  func.func @transform_19(%arg0: i32) -> (i32, i32, i32) {
    %c0_i32 = arith.constant 0 : i32
    %c0_i32_0 = arith.constant 0 : i32
    %c0_i32_1 = arith.constant 0 : i32
    %c0_i32_2 = arith.constant 0 : i32
    return %c0_i32, %c0_i32_0, %c0_i32_1 : i32, i32, i32
  }
  func.func @transform_20(%arg0: i32) -> (i32, i32, i32) {
    %c0_i32 = arith.constant 0 : i32
    %c0_i32_0 = arith.constant 0 : i32
    %c0_i32_1 = arith.constant 0 : i32
    %c0_i32_2 = arith.constant 0 : i32
    return %c0_i32, %c0_i32_0, %c0_i32_1 : i32, i32, i32
  }
  func.func @transform_21(%arg0: i32) -> (i32, i32, i32) {
    %c0_i32 = arith.constant 0 : i32
    %c0_i32_0 = arith.constant 0 : i32
    %c0_i32_1 = arith.constant 0 : i32
    %c0_i32_2 = arith.constant 0 : i32
    return %c0_i32, %c0_i32_0, %c0_i32_1 : i32, i32, i32
  }
  func.func @transform_22(%arg0: i32) -> (i32, i32) {
    %c0_i32 = arith.constant 0 : i32
    %c0_i32_0 = arith.constant 0 : i32
    %c0_i32_1 = arith.constant 0 : i32
    return %c0_i32, %c0_i32_0 : i32, i32
  }
  func.func @transform_23(%arg0: i32) -> (i32, i32) {
    %c0_i32 = arith.constant 0 : i32
    %c0_i32_0 = arith.constant 0 : i32
    %c0_i32_1 = arith.constant 0 : i32
    return %c0_i32, %c0_i32_0 : i32, i32
  }
  func.func @transform_24(%arg0: i32) -> (i32, i32, i32) {
    %c0_i32 = arith.constant 0 : i32
    %c0_i32_0 = arith.constant 0 : i32
    %c0_i32_1 = arith.constant 0 : i32
    return %arg0, %c0_i32, %c0_i32_0 : i32, i32, i32
  }
}

</mosaic_0001>

<llo_original>
// kernel: transformer_text_decoder_forward.1
$region0: #{transformer_text_decoder_forward.1}
  #allocation0 [shape = 'u32[]', space=smem, size = 0x4, offset = 0x4, fixed_abs, tag = 'smem constant byte address 0x4 - core index']
  #allocation1 [shape = 'u32[144,128]{1,0:T(1,128)}', space=vmem, size = 0x12000, scoped, tag = 'internal scratch']
  %s0 = inlined_call_operand.vmem [shape: f32[2,1,32], index: 0, kind: input, shape index: {}]
  %s1 = inlined_call_operand.vmem [shape: f32[8,32,64], index: 1, kind: input, shape index: {}]
  %s2 = inlined_call_operand.vmem [shape: f32[8,1,64], index: 2, kind: input, shape index: {}]
  %s3 = inlined_call_operand.vmem [shape: f32[8,64], index: 3, kind: input, shape index: {}]
  %s4 = inlined_call_operand.vmem [shape: f32[128,64], index: 4, kind: input, shape index: {}]
  %s5 = inlined_call_operand.vmem [shape: f32[128,128], index: 5, kind: input, shape index: {}]
  %s6 = inlined_call_operand.vmem [shape: f32[4,64,64], index: 6, kind: input, shape index: {}]
  %s7 = inlined_call_operand.vmem [shape: f32[4,64,64], index: 7, kind: input, shape index: {}]
  %s8 = inlined_call_operand.vmem [shape: f32[4,64,64], index: 8, kind: input, shape index: {}]
  %s9 = inlined_call_operand.vmem [shape: f32[4,1,64], index: 9, kind: input, shape index: {}]
  %s10 = inlined_call_operand.vmem [shape: f32[4,1,64], index: 10, kind: input, shape index: {}]
  %s11 = inlined_call_operand.vmem [shape: f32[4,1,64], index: 11, kind: input, shape index: {}]
  %s12 = inlined_call_operand.vmem [shape: f32[4,64,64], index: 12, kind: input, shape index: {}]
  %s13 = inlined_call_operand.vmem [shape: f32[4,1,64], index: 13, kind: input, shape index: {}]
  %s14 = inlined_call_operand.vmem [shape: f32[4,64,256], index: 14, kind: input, shape index: {}]
  %s15 = inlined_call_operand.vmem [shape: f32[4,1,256], index: 15, kind: input, shape index: {}]
  %s16 = inlined_call_operand.vmem [shape: f32[4,256,64], index: 16, kind: input, shape index: {}]
  %s17 = inlined_call_operand.vmem [shape: f32[4,1,64], index: 17, kind: input, shape index: {}]
  %s18 = inlined_call_operand.vmem [shape: f32[4,1,64], index: 18, kind: input, shape index: {}]
  %s19 = inlined_call_operand.vmem [shape: f32[4,1,64], index: 19, kind: input, shape index: {}]
  %s20 = inlined_call_operand.vmem [shape: f32[4,1,64], index: 20, kind: input, shape index: {}]
  %s21 = inlined_call_operand.vmem [shape: f32[4,1,64], index: 21, kind: input, shape index: {}]
  %s22 = inlined_call_operand.vmem [shape: f32[64,256], index: 22, kind: input, shape index: {}]
  %s23 = inlined_call_operand.vmem [shape: f32[1,256], index: 23, kind: input, shape index: {}]
  %s24 = inlined_call_operand.hbm [shape: f32[2,16,256], index: 24, kind: output, shape index: {}]
  %s25 = sld [smem:[#allocation0]]
  $region129: #{transformer_text_decoder_forward.1} parent=0
    _
  %s27 = ssub.s32 1, %s25
  %s28 = scalar_select 0, %s27, %s25
  $region1: #{transformer_text_decoder_forward.1} parent=0
    #allocation2 [shape = 'u8[32768]{0}', space=vmem, size = 0x8000, scoped, tag = 'output window, operand 0']
    #allocation3 [shape = 's32[2]{0}', space=sflag, size = 0x8, scoped, tag = 'scoped memory for transformer_text_decoder_forward.1']
    %29 = vsyncpa [#allocation3], 0
    %s30 = scalar_lea.sflag [#allocation3], 1
    %31 = vsyncpa %s30, 0
    loop: start=0, step=1, limit=4
    $region2: #{transformer_text_decoder_forward.1} parent=1 // loop_pre_header
      _
    $region3: #{transformer_text_decoder_forward.1} parent=1 // loop_header
      %s33 = sphi 0, %s37
      %p34 = scmp.ge.s32.totalorder %s33, 4
      %s43 = sphi 0, %s45
      %s46 = sphi 0, %s43
      %s47 = sphi 0, %s46
      %s63 = sphi 0, %s47
      %s67 = sphi 0, %s67
      %s69 = sphi 0, %s67
      %s70 = sphi 0, %s69
      %s84 = sphi 0, %s70
      %s88 = sphi 0, %s88
      %s90 = sphi 0, %s88
      %s91 = sphi 0, %s90
      %s105 = sphi 0, %s91
      %s109 = sphi 0, %s109
      %s111 = sphi 0, %s109
      %s112 = sphi 0, %s111
      %s126 = sphi 0, %s112
      %s130 = sphi 0, %s130
      %s132 = sphi 0, %s130
      %s133 = sphi 0, %s132
      %s147 = sphi 0, %s133
      %s151 = sphi 0, %s151
      %s153 = sphi 0, %s151
      %s154 = sphi 0, %s153
      %s168 = sphi 0, %s154
      %s172 = sphi 0, %s172
      %s174 = sphi 0, %s172
      %s175 = sphi 0, %s174
      %s189 = sphi 0, %s175
      %s193 = sphi 0, %s193
      %s195 = sphi 0, %s193
      %s196 = sphi 0, %s195
      %s210 = sphi 0, %s196
      %s214 = sphi 0, %s214
      %s216 = sphi 0, %s214
      %s217 = sphi 0, %s216
      %s231 = sphi 0, %s217
      %s235 = sphi 0, %s235
      %s237 = sphi 0, %s235
      %s238 = sphi 0, %s237
      %s252 = sphi 0, %s238
      %s256 = sphi 0, %s256
      %s258 = sphi 0, %s256
      %s259 = sphi 0, %s258
      %s273 = sphi 0, %s259
      %s277 = sphi 0, %s277
      %s279 = sphi 0, %s277
      %s280 = sphi 0, %s279
      %s294 = sphi 0, %s280
      %s298 = sphi 0, %s298
      %s300 = sphi 0, %s298
      %s301 = sphi 0, %s300
      %s315 = sphi 0, %s301
      %s319 = sphi 0, %s319
      %s321 = sphi 0, %s319
      %s322 = sphi 0, %s321
      %s336 = sphi 0, %s322
      %s340 = sphi 0, %s340
      %s342 = sphi 0, %s340
      %s343 = sphi 0, %s342
      %s357 = sphi 0, %s343
      %s361 = sphi 0, %s361
      %s363 = sphi 0, %s361
      %s364 = sphi 0, %s363
      %s378 = sphi 0, %s364
      %s382 = sphi 0, %s382
      %s384 = sphi 0, %s382
      %s385 = sphi 0, %s384
      %s399 = sphi 0, %s385
      %s403 = sphi 0, %s403
      %s405 = sphi 0, %s403
      %s406 = sphi 0, %s405
      %s420 = sphi 0, %s406
      %s424 = sphi 0, %s424
      %s426 = sphi 0, %s424
      %s427 = sphi 0, %s426
      %s441 = sphi 0, %s427
      %s445 = sphi 0, %s445
      %s447 = sphi 0, %s445
      %s448 = sphi 0, %s447
      %s462 = sphi 0, %s448
      %s466 = sphi 0, %s466
      %s468 = sphi 0, %s466
      %s469 = sphi 0, %s468
      %s483 = sphi 0, %s469
      %s487 = sphi 0, %s487
      %s489 = sphi 0, %s487
      %s490 = sphi 0, %s489
      %s504 = sphi 0, %s490
      %s508 = sphi 0, %s508
      %s510 = sphi 0, %s508
      %s511 = sphi 0, %s510
      %s525 = sphi 0, %s511
      %s529 = sphi 0, %s529
      %s531 = sphi 0, %s529
      %s532 = sphi 0, %s531
      %s546 = sphi 0, %s532
      %s552 = sphi 0, %s554
      %s555 = sphi 0, %s552
      %s556 = sphi 0, %s555
      %s572 = sphi 0, %s556
    $region4: #{transformer_text_decoder_forward.1} parent=1 // loop_header_branch
      %36 = sbr.rel (%p34) target = $region8
    $region5: #{transformer_text_decoder_forward.1} parent=1 // loop_body
      %s38 = ssub.s32 %s33, 1
      %s39 = ssub.s32 %s33, 2
      %s40 = sadd.s32 %s33, 1
      %s41 = ssub.s32 %s33, %s40
      %p42 = scmp.eq.s32.totalorder %s41, 0
      %s44 = sadd.s32 %s43, 1
      %s45 = scalar_select %p42, %s43, %s44
      %p48 = pneg %p42
      %p49 = scmp.eq.s32.totalorder %s33, 1
      %p50 = por %p48, %p49
      %p51 = scmp.ne.s32.totalorder %s43, %s46
      %p52 = scmp.eq.s32.totalorder %s33, 0
      %p53 = por %p51, %p52
      %p54 = scmp.ne.s32.totalorder %s43, %s46
      %p55 = scmp.eq.s32.totalorder %s38, 1
      %p56 = por %p54, %p55
      %p57 = scmp.ne.s32.totalorder %s46, %s47
      %p58 = scmp.eq.s32.totalorder %s38, 0
      %p59 = por %p57, %p58
      %p60 = scmp.ne.s32.totalorder %s46, %s47
      %p61 = scmp.eq.s32.totalorder %s39, 1
      %p62 = por %p60, %p61
      %p64 = scmp.ne.s32.totalorder %s47, %s63
      %p65 = scmp.eq.s32.totalorder %s39, 0
      %p66 = por %p64, %p65
      %s68 = sadd.s32 %s67, 1
      %p71 = scmp.eq.s32.totalorder %s33, 1
      %p72 = scmp.ne.s32.totalorder %s67, %s69
      %p73 = scmp.eq.s32.totalorder %s33, 0
      %p74 = por %p72, %p73
      %p75 = scmp.ne.s32.totalorder %s67, %s69
      %p76 = scmp.eq.s32.totalorder %s38, 1
      %p77 = por %p75, %p76
      %p78 = scmp.ne.s32.totalorder %s69, %s70
      %p79 = scmp.eq.s32.totalorder %s38, 0
      %p80 = por %p78, %p79
      %p81 = scmp.ne.s32.totalorder %s69, %s70
      %p82 = scmp.eq.s32.totalorder %s39, 1
      %p83 = por %p81, %p82
      %p85 = scmp.ne.s32.totalorder %s70, %s84
      %p86 = scmp.eq.s32.totalorder %s39, 0
      %p87 = por %p85, %p86
      %s89 = sadd.s32 %s88, 1
      %p92 = scmp.eq.s32.totalorder %s33, 1
      %p93 = scmp.ne.s32.totalorder %s88, %s90
      %p94 = scmp.eq.s32.totalorder %s33, 0
      %p95 = por %p93, %p94
      %p96 = scmp.ne.s32.totalorder %s88, %s90
      %p97 = scmp.eq.s32.totalorder %s38, 1
      %p98 = por %p96, %p97
      %p99 = scmp.ne.s32.totalorder %s90, %s91
      %p100 = scmp.eq.s32.totalorder %s38, 0
      %p101 = por %p99, %p100
      %p102 = scmp.ne.s32.totalorder %s90, %s91
      %p103 = scmp.eq.s32.totalorder %s39, 1
      %p104 = por %p102, %p103
      %p106 = scmp.ne.s32.totalorder %s91, %s105
      %p107 = scmp.eq.s32.totalorder %s39, 0
      %p108 = por %p106, %p107
      %s110 = sadd.s32 %s109, 1
      %p113 = scmp.eq.s32.totalorder %s33, 1
      %p114 = scmp.ne.s32.totalorder %s109, %s111
      %p115 = scmp.eq.s32.totalorder %s33, 0
      %p116 = por %p114, %p115
      %p117 = scmp.ne.s32.totalorder %s109, %s111
      %p118 = scmp.eq.s32.totalorder %s38, 1
      %p119 = por %p117, %p118
      %p120 = scmp.ne.s32.totalorder %s111, %s112
      %p121 = scmp.eq.s32.totalorder %s38, 0
      %p122 = por %p120, %p121
      %p123 = scmp.ne.s32.totalorder %s111, %s112
      %p124 = scmp.eq.s32.totalorder %s39, 1
      %p125 = por %p123, %p124
      %p127 = scmp.ne.s32.totalorder %s112, %s126
      %p128 = scmp.eq.s32.totalorder %s39, 0
      %p129 = por %p127, %p128
      %s131 = sadd.s32 %s130, 1
      %p134 = scmp.eq.s32.totalorder %s33, 1
      %p135 = scmp.ne.s32.totalorder %s130, %s132
      %p136 = scmp.eq.s32.totalorder %s33, 0
      %p137 = por %p135, %p136
      %p138 = scmp.ne.s32.totalorder %s130, %s132
      %p139 = scmp.eq.s32.totalorder %s38, 1
      %p140 = por %p138, %p139
      %p141 = scmp.ne.s32.totalorder %s132, %s133
      %p142 = scmp.eq.s32.totalorder %s38, 0
      %p143 = por %p141, %p142
      %p144 = scmp.ne.s32.totalorder %s132, %s133
      %p145 = scmp.eq.s32.totalorder %s39, 1
      %p146 = por %p144, %p145
      %p148 = scmp.ne.s32.totalorder %s133, %s147
      %p149 = scmp.eq.s32.totalorder %s39, 0
      %p150 = por %p148, %p149
      %s152 = sadd.s32 %s151, 1
      %p155 = scmp.eq.s32.totalorder %s33, 1
      %p156 = scmp.ne.s32.totalorder %s151, %s153
      %p157 = scmp.eq.s32.totalorder %s33, 0
      %p158 = por %p156, %p157
      %p159 = scmp.ne.s32.totalorder %s151, %s153
      %p160 = scmp.eq.s32.totalorder %s38, 1
      %p161 = por %p159, %p160
      %p162 = scmp.ne.s32.totalorder %s153, %s154
      %p163 = scmp.eq.s32.totalorder %s38, 0
      %p164 = por %p162, %p163
      %p165 = scmp.ne.s32.totalorder %s153, %s154
      %p166 = scmp.eq.s32.totalorder %s39, 1
      %p167 = por %p165, %p166
      %p169 = scmp.ne.s32.totalorder %s154, %s168
      %p170 = scmp.eq.s32.totalorder %s39, 0
      %p171 = por %p169, %p170
      %s173 = sadd.s32 %s172, 1
      %p176 = scmp.eq.s32.totalorder %s33, 1
      %p177 = scmp.ne.s32.totalorder %s172, %s174
      %p178 = scmp.eq.s32.totalorder %s33, 0
      %p179 = por %p177, %p178
      %p180 = scmp.ne.s32.totalorder %s172, %s174
      %p181 = scmp.eq.s32.totalorder %s38, 1
      %p182 = por %p180, %p181
      %p183 = scmp.ne.s32.totalorder %s174, %s175
      %p184 = scmp.eq.s32.totalorder %s38, 0
      %p185 = por %p183, %p184
      %p186 = scmp.ne.s32.totalorder %s174, %s175
      %p187 = scmp.eq.s32.totalorder %s39, 1
      %p188 = por %p186, %p187
      %p190 = scmp.ne.s32.totalorder %s175, %s189
      %p191 = scmp.eq.s32.totalorder %s39, 0
      %p192 = por %p190, %p191
      %s194 = sadd.s32 %s193, 1
      %p197 = scmp.eq.s32.totalorder %s33, 1
      %p198 = scmp.ne.s32.totalorder %s193, %s195
      %p199 = scmp.eq.s32.totalorder %s33, 0
      %p200 = por %p198, %p199
      %p201 = scmp.ne.s32.totalorder %s193, %s195
      %p202 = scmp.eq.s32.totalorder %s38, 1
      %p203 = por %p201, %p202
      %p204 = scmp.ne.s32.totalorder %s195, %s196
      %p205 = scmp.eq.s32.totalorder %s38, 0
      %p206 = por %p204, %p205
      %p207 = scmp.ne.s32.totalorder %s195, %s196
      %p208 = scmp.eq.s32.totalorder %s39, 1
      %p209 = por %p207, %p208
      %p211 = scmp.ne.s32.totalorder %s196, %s210
      %p212 = scmp.eq.s32.totalorder %s39, 0
      %p213 = por %p211, %p212
      %s215 = sadd.s32 %s214, 1
      %p218 = scmp.eq.s32.totalorder %s33, 1
      %p219 = scmp.ne.s32.totalorder %s214, %s216
      %p220 = scmp.eq.s32.totalorder %s33, 0
      %p221 = por %p219, %p220
      %p222 = scmp.ne.s32.totalorder %s214, %s216
      %p223 = scmp.eq.s32.totalorder %s38, 1
      %p224 = por %p222, %p223
      %p225 = scmp.ne.s32.totalorder %s216, %s217
      %p226 = scmp.eq.s32.totalorder %s38, 0
      %p227 = por %p225, %p226
      %p228 = scmp.ne.s32.totalorder %s216, %s217
      %p229 = scmp.eq.s32.totalorder %s39, 1
      %p230 = por %p228, %p229
      %p232 = scmp.ne.s32.totalorder %s217, %s231
      %p233 = scmp.eq.s32.totalorder %s39, 0
      %p234 = por %p232, %p233
      %s236 = sadd.s32 %s235, 1
      %p239 = scmp.eq.s32.totalorder %s33, 1
      %p240 = scmp.ne.s32.totalorder %s235, %s237
      %p241 = scmp.eq.s32.totalorder %s33, 0
      %p242 = por %p240, %p241
      %p243 = scmp.ne.s32.totalorder %s235, %s237
      %p244 = scmp.eq.s32.totalorder %s38, 1
      %p245 = por %p243, %p244
      %p246 = scmp.ne.s32.totalorder %s237, %s238
      %p247 = scmp.eq.s32.totalorder %s38, 0
      %p248 = por %p246, %p247
      %p249 = scmp.ne.s32.totalorder %s237, %s238
      %p250 = scmp.eq.s32.totalorder %s39, 1
      %p251 = por %p249, %p250
      %p253 = scmp.ne.s32.totalorder %s238, %s252
      %p254 = scmp.eq.s32.totalorder %s39, 0
      %p255 = por %p253, %p254
      %s257 = sadd.s32 %s256, 1
      %p260 = scmp.eq.s32.totalorder %s33, 1
      %p261 = scmp.ne.s32.totalorder %s256, %s258
      %p262 = scmp.eq.s32.totalorder %s33, 0
      %p263 = por %p261, %p262
      %p264 = scmp.ne.s32.totalorder %s256, %s258
      %p265 = scmp.eq.s32.totalorder %s38, 1
      %p266 = por %p264, %p265
      %p267 = scmp.ne.s32.totalorder %s258, %s259
      %p268 = scmp.eq.s32.totalorder %s38, 0
      %p269 = por %p267, %p268
      %p270 = scmp.ne.s32.totalorder %s258, %s259
      %p271 = scmp.eq.s32.totalorder %s39, 1
      %p272 = por %p270, %p271
      %p274 = scmp.ne.s32.totalorder %s259, %s273
      %p275 = scmp.eq.s32.totalorder %s39, 0
      %p276 = por %p274, %p275
      %s278 = sadd.s32 %s277, 1
      %p281 = scmp.eq.s32.totalorder %s33, 1
      %p282 = scmp.ne.s32.totalorder %s277, %s279
      %p283 = scmp.eq.s32.totalorder %s33, 0
      %p284 = por %p282, %p283
      %p285 = scmp.ne.s32.totalorder %s277, %s279
      %p286 = scmp.eq.s32.totalorder %s38, 1
      %p287 = por %p285, %p286
      %p288 = scmp.ne.s32.totalorder %s279, %s280
      %p289 = scmp.eq.s32.totalorder %s38, 0
      %p290 = por %p288, %p289
      %p291 = scmp.ne.s32.totalorder %s279, %s280
      %p292 = scmp.eq.s32.totalorder %s39, 1
      %p293 = por %p291, %p292
      %p295 = scmp.ne.s32.totalorder %s280, %s294
      %p296 = scmp.eq.s32.totalorder %s39, 0
      %p297 = por %p295, %p296
      %s299 = sadd.s32 %s298, 1
      %p302 = scmp.eq.s32.totalorder %s33, 1
      %p303 = scmp.ne.s32.totalorder %s298, %s300
      %p304 = scmp.eq.s32.totalorder %s33, 0
      %p305 = por %p303, %p304
      %p306 = scmp.ne.s32.totalorder %s298, %s300
      %p307 = scmp.eq.s32.totalorder %s38, 1
      %p308 = por %p306, %p307
      %p309 = scmp.ne.s32.totalorder %s300, %s301
      %p310 = scmp.eq.s32.totalorder %s38, 0
      %p311 = por %p309, %p310
      %p312 = scmp.ne.s32.totalorder %s300, %s301
      %p313 = scmp.eq.s32.totalorder %s39, 1
      %p314 = por %p312, %p313
      %p316 = scmp.ne.s32.totalorder %s301, %s315
      %p317 = scmp.eq.s32.totalorder %s39, 0
      %p318 = por %p316, %p317
      %s320 = sadd.s32 %s319, 1
      %p323 = scmp.eq.s32.totalorder %s33, 1
      %p324 = scmp.ne.s32.totalorder %s319, %s321
      %p325 = scmp.eq.s32.totalorder %s33, 0
      %p326 = por %p324, %p325
      %p327 = scmp.ne.s32.totalorder %s319, %s321
      %p328 = scmp.eq.s32.totalorder %s38, 1
      %p329 = por %p327, %p328
      %p330 = scmp.ne.s32.totalorder %s321, %s322
      %p331 = scmp.eq.s32.totalorder %s38, 0
      %p332 = por %p330, %p331
      %p333 = scmp.ne.s32.totalorder %s321, %s322
      %p334 = scmp.eq.s32.totalorder %s39, 1
      %p335 = por %p333, %p334
      %p337 = scmp.ne.s32.totalorder %s322, %s336
      %p338 = scmp.eq.s32.totalorder %s39, 0
      %p339 = por %p337, %p338
      %s341 = sadd.s32 %s340, 1
      %p344 = scmp.eq.s32.totalorder %s33, 1
      %p345 = scmp.ne.s32.totalorder %s340, %s342
      %p346 = scmp.eq.s32.totalorder %s33, 0
      %p347 = por %p345, %p346
      %p348 = scmp.ne.s32.totalorder %s340, %s342
      %p349 = scmp.eq.s32.totalorder %s38, 1
      %p350 = por %p348, %p349
      %p351 = scmp.ne.s32.totalorder %s342, %s343
      %p352 = scmp.eq.s32.totalorder %s38, 0
      %p353 = por %p351, %p352
      %p354 = scmp.ne.s32.totalorder %s342, %s343
      %p355 = scmp.eq.s32.totalorder %s39, 1
      %p356 = por %p354, %p355
      %p358 = scmp.ne.s32.totalorder %s343, %s357
      %p359 = scmp.eq.s32.totalorder %s39, 0
      %p360 = por %p358, %p359
      %s362 = sadd.s32 %s361, 1
      %p365 = scmp.eq.s32.totalorder %s33, 1
      %p366 = scmp.ne.s32.totalorder %s361, %s363
      %p367 = scmp.eq.s32.totalorder %s33, 0
      %p368 = por %p366, %p367
      %p369 = scmp.ne.s32.totalorder %s361, %s363
      %p370 = scmp.eq.s32.totalorder %s38, 1
      %p371 = por %p369, %p370
      %p372 = scmp.ne.s32.totalorder %s363, %s364
      %p373 = scmp.eq.s32.totalorder %s38, 0
      %p374 = por %p372, %p373
      %p375 = scmp.ne.s32.totalorder %s363, %s364
      %p376 = scmp.eq.s32.totalorder %s39, 1
      %p377 = por %p375, %p376
      %p379 = scmp.ne.s32.totalorder %s364, %s378
      %p380 = scmp.eq.s32.totalorder %s39, 0
      %p381 = por %p379, %p380
      %s383 = sadd.s32 %s382, 1
      %p386 = scmp.eq.s32.totalorder %s33, 1
      %p387 = scmp.ne.s32.totalorder %s382, %s384
      %p388 = scmp.eq.s32.totalorder %s33, 0
      %p389 = por %p387, %p388
      %p390 = scmp.ne.s32.totalorder %s382, %s384
      %p391 = scmp.eq.s32.totalorder %s38, 1
      %p392 = por %p390, %p391
      %p393 = scmp.ne.s32.totalorder %s384, %s385
      %p394 = scmp.eq.s32.totalorder %s38, 0
      %p395 = por %p393, %p394
      %p396 = scmp.ne.s32.totalorder %s384, %s385
      %p397 = scmp.eq.s32.totalorder %s39, 1
      %p398 = por %p396, %p397
      %p400 = scmp.ne.s32.totalorder %s385, %s399
      %p401 = scmp.eq.s32.totalorder %s39, 0
      %p402 = por %p400, %p401
      %s404 = sadd.s32 %s403, 1
      %p407 = scmp.eq.s32.totalorder %s33, 1
      %p408 = scmp.ne.s32.totalorder %s403, %s405
      %p409 = scmp.eq.s32.totalorder %s33, 0
      %p410 = por %p408, %p409
      %p411 = scmp.ne.s32.totalorder %s403, %s405
      %p412 = scmp.eq.s32.totalorder %s38, 1
      %p413 = por %p411, %p412
      %p414 = scmp.ne.s32.totalorder %s405, %s406
      %p415 = scmp.eq.s32.totalorder %s38, 0
      %p416 = por %p414, %p415
      %p417 = scmp.ne.s32.totalorder %s405, %s406
      %p418 = scmp.eq.s32.totalorder %s39, 1
      %p419 = por %p417, %p418
      %p421 = scmp.ne.s32.totalorder %s406, %s420
      %p422 = scmp.eq.s32.totalorder %s39, 0
      %p423 = por %p421, %p422
      %s425 = sadd.s32 %s424, 1
      %p428 = scmp.eq.s32.totalorder %s33, 1
      %p429 = scmp.ne.s32.totalorder %s424, %s426
      %p430 = scmp.eq.s32.totalorder %s33, 0
      %p431 = por %p429, %p430
      %p432 = scmp.ne.s32.totalorder %s424, %s426
      %p433 = scmp.eq.s32.totalorder %s38, 1
      %p434 = por %p432, %p433
      %p435 = scmp.ne.s32.totalorder %s426, %s427
      %p436 = scmp.eq.s32.totalorder %s38, 0
      %p437 = por %p435, %p436
      %p438 = scmp.ne.s32.totalorder %s426, %s427
      %p439 = scmp.eq.s32.totalorder %s39, 1
      %p440 = por %p438, %p439
      %p442 = scmp.ne.s32.totalorder %s427, %s441
      %p443 = scmp.eq.s32.totalorder %s39, 0
      %p444 = por %p442, %p443
      %s446 = sadd.s32 %s445, 1
      %p449 = scmp.eq.s32.totalorder %s33, 1
      %p450 = scmp.ne.s32.totalorder %s445, %s447
      %p451 = scmp.eq.s32.totalorder %s33, 0
      %p452 = por %p450, %p451
      %p453 = scmp.ne.s32.totalorder %s445, %s447
      %p454 = scmp.eq.s32.totalorder %s38, 1
      %p455 = por %p453, %p454
      %p456 = scmp.ne.s32.totalorder %s447, %s448
      %p457 = scmp.eq.s32.totalorder %s38, 0
      %p458 = por %p456, %p457
      %p459 = scmp.ne.s32.totalorder %s447, %s448
      %p460 = scmp.eq.s32.totalorder %s39, 1
      %p461 = por %p459, %p460
      %p463 = scmp.ne.s32.totalorder %s448, %s462
      %p464 = scmp.eq.s32.totalorder %s39, 0
      %p465 = por %p463, %p464
      %s467 = sadd.s32 %s466, 1
      %p470 = scmp.eq.s32.totalorder %s33, 1
      %p471 = scmp.ne.s32.totalorder %s466, %s468
      %p472 = scmp.eq.s32.totalorder %s33, 0
      %p473 = por %p471, %p472
      %p474 = scmp.ne.s32.totalorder %s466, %s468
      %p475 = scmp.eq.s32.totalorder %s38, 1
      %p476 = por %p474, %p475
      %p477 = scmp.ne.s32.totalorder %s468, %s469
      %p478 = scmp.eq.s32.totalorder %s38, 0
      %p479 = por %p477, %p478
      %p480 = scmp.ne.s32.totalorder %s468, %s469
      %p481 = scmp.eq.s32.totalorder %s39, 1
      %p482 = por %p480, %p481
      %p484 = scmp.ne.s32.totalorder %s469, %s483
      %p485 = scmp.eq.s32.totalorder %s39, 0
      %p486 = por %p484, %p485
      %s488 = sadd.s32 %s487, 1
      %p491 = scmp.eq.s32.totalorder %s33, 1
      %p492 = scmp.ne.s32.totalorder %s487, %s489
      %p493 = scmp.eq.s32.totalorder %s33, 0
      %p494 = por %p492, %p493
      %p495 = scmp.ne.s32.totalorder %s487, %s489
      %p496 = scmp.eq.s32.totalorder %s38, 1
      %p497 = por %p495, %p496
      %p498 = scmp.ne.s32.totalorder %s489, %s490
      %p499 = scmp.eq.s32.totalorder %s38, 0
      %p500 = por %p498, %p499
      %p501 = scmp.ne.s32.totalorder %s489, %s490
      %p502 = scmp.eq.s32.totalorder %s39, 1
      %p503 = por %p501, %p502
      %p505 = scmp.ne.s32.totalorder %s490, %s504
      %p506 = scmp.eq.s32.totalorder %s39, 0
      %p507 = por %p505, %p506
      %s509 = sadd.s32 %s508, 1
      %p512 = scmp.eq.s32.totalorder %s33, 1
      %p513 = scmp.ne.s32.totalorder %s508, %s510
      %p514 = scmp.eq.s32.totalorder %s33, 0
      %p515 = por %p513, %p514
      %p516 = scmp.ne.s32.totalorder %s508, %s510
      %p517 = scmp.eq.s32.totalorder %s38, 1
      %p518 = por %p516, %p517
      %p519 = scmp.ne.s32.totalorder %s510, %s511
      %p520 = scmp.eq.s32.totalorder %s38, 0
      %p521 = por %p519, %p520
      %p522 = scmp.ne.s32.totalorder %s510, %s511
      %p523 = scmp.eq.s32.totalorder %s39, 1
      %p524 = por %p522, %p523
      %p526 = scmp.ne.s32.totalorder %s511, %s525
      %p527 = scmp.eq.s32.totalorder %s39, 0
      %p528 = por %p526, %p527
      %s530 = sadd.s32 %s529, 1
      %p533 = scmp.eq.s32.totalorder %s33, 1
      %p534 = scmp.ne.s32.totalorder %s529, %s531
      %p535 = scmp.eq.s32.totalorder %s33, 0
      %p536 = por %p534, %p535
      %p537 = scmp.ne.s32.totalorder %s529, %s531
      %p538 = scmp.eq.s32.totalorder %s38, 1
      %p539 = por %p537, %p538
      %p540 = scmp.ne.s32.totalorder %s531, %s532
      %p541 = scmp.eq.s32.totalorder %s38, 0
      %p542 = por %p540, %p541
      %p543 = scmp.ne.s32.totalorder %s531, %s532
      %p544 = scmp.eq.s32.totalorder %s39, 1
      %p545 = por %p543, %p544
      %p547 = scmp.ne.s32.totalorder %s532, %s546
      %p548 = scmp.eq.s32.totalorder %s39, 0
      %p549 = por %p547, %p548
      %s550 = ssub.s32 %s33, %s40
      %p551 = scmp.eq.s32.totalorder %s550, 0
      %s553 = sadd.s32 %s552, 1
      %s554 = scalar_select %p551, %s552, %s553
      %p557 = pneg %p551
      %p558 = scmp.eq.s32.totalorder %s33, 1
      %p559 = por %p557, %p558
      %p560 = scmp.ne.s32.totalorder %s552, %s555
      %p561 = scmp.eq.s32.totalorder %s33, 0
      %p562 = por %p560, %p561
      %p563 = scmp.ne.s32.totalorder %s552, %s555
      %p564 = scmp.eq.s32.totalorder %s38, 1
      %p565 = por %p563, %p564
      %p566 = scmp.ne.s32.totalorder %s555, %s556
      %p567 = scmp.eq.s32.totalorder %s38, 0
      %p568 = por %p566, %p567
      %p569 = scmp.ne.s32.totalorder %s555, %s556
      %p570 = scmp.eq.s32.totalorder %s39, 1
      %p571 = por %p569, %p570
      %p573 = scmp.ne.s32.totalorder %s556, %s572
      %p574 = scmp.eq.s32.totalorder %s39, 0
      %p575 = por %p573, %p574
      %p576 = scmp.le.s32.totalorder 1, %s33
      %p577 = scmp.lt.s32.totalorder %s33, 3
      %p578 = pnand %p576, %p577
      %p579 = pneg %p578
      // Predicated region
      $region9: #{transformer_text_decoder_forward.1} parent=5 // pred_check
        _
      $region10: #{transformer_text_decoder_forward.1} parent=5 // pred_check_branch
        %581 = sbr.rel (%p578) target = $region12
      $region11: #{transformer_text_decoder_forward.1} parent=5 // pred_region
        %s582 = ssub.s32 %s33, 1
        // Predicated region
        $region13: #{transformer_text_decoder_forward.1} parent=11 // pred_check
          %p583 = pneg %p80
        $region14: #{transformer_text_decoder_forward.1} parent=11 // pred_check_branch
          %585 = sbr.rel (%p583) target = $region16
        $region15: #{transformer_text_decoder_forward.1} parent=11 // pred_region
          _
        $region16: #{transformer_text_decoder_forward.1} parent=11 // pred_fallthru
          _
        // Predicated region
        $region17: #{transformer_text_decoder_forward.1} parent=11 // pred_check
          %p586 = pneg %p101
        $region18: #{transformer_text_decoder_forward.1} parent=11 // pred_check_branch
          %588 = sbr.rel (%p586) target = $region20
        $region19: #{transformer_text_decoder_forward.1} parent=11 // pred_region
          _
        $region20: #{transformer_text_decoder_forward.1} parent=11 // pred_fallthru
          _
        // Predicated region
        $region21: #{transformer_text_decoder_forward.1} parent=11 // pred_check
          %p589 = pneg %p122
        $region22: #{transformer_text_decoder_forward.1} parent=11 // pred_check_branch
          %591 = sbr.rel (%p589) target = $region24
        $region23: #{transformer_text_decoder_forward.1} parent=11 // pred_region
          _
        $region24: #{transformer_text_decoder_forward.1} parent=11 // pred_fallthru
          _
        // Predicated region
        $region25: #{transformer_text_decoder_forward.1} parent=11 // pred_check
          %p592 = pneg %p143
        $region26: #{transformer_text_decoder_forward.1} parent=11 // pred_check_branch
          %594 = sbr.rel (%p592) target = $region28
        $region27: #{transformer_text_decoder_forward.1} parent=11 // pred_region
          _
        $region28: #{transformer_text_decoder_forward.1} parent=11 // pred_fallthru
          _
        // Predicated region
        $region29: #{transformer_text_decoder_forward.1} parent=11 // pred_check
          %p595 = pneg %p164
        $region30: #{transformer_text_decoder_forward.1} parent=11 // pred_check_branch
          %597 = sbr.rel (%p595) target = $region32
        $region31: #{transformer_text_decoder_forward.1} parent=11 // pred_region
          _
        $region32: #{transformer_text_decoder_forward.1} parent=11 // pred_fallthru
          _
        // Predicated region
        $region33: #{transformer_text_decoder_forward.1} parent=11 // pred_check
          %p598 = pneg %p185
        $region34: #{transformer_text_decoder_forward.1} parent=11 // pred_check_branch
          %600 = sbr.rel (%p598) target = $region36
        $region35: #{transformer_text_decoder_forward.1} parent=11 // pred_region
          _
        $region36: #{transformer_text_decoder_forward.1} parent=11 // pred_fallthru
          _
        // Predicated region
        $region37: #{transformer_text_decoder_forward.1} parent=11 // pred_check
          %p601 = pneg %p206
        $region38: #{transformer_text_decoder_forward.1} parent=11 // pred_check_branch
          %603 = sbr.rel (%p601) target = $region40
        $region39: #{transformer_text_decoder_forward.1} parent=11 // pred_region
          _
        $region40: #{transformer_text_decoder_forward.1} parent=11 // pred_fallthru
          _
        // Predicated region
        $region41: #{transformer_text_decoder_forward.1} parent=11 // pred_check
          %p604 = pneg %p227
        $region42: #{transformer_text_decoder_forward.1} parent=11 // pred_check_branch
          %606 = sbr.rel (%p604) target = $region44
        $region43: #{transformer_text_decoder_forward.1} parent=11 // pred_region
          _
        $region44: #{transformer_text_decoder_forward.1} parent=11 // pred_fallthru
          _
        // Predicated region
        $region45: #{transformer_text_decoder_forward.1} parent=11 // pred_check
          %p607 = pneg %p248
        $region46: #{transformer_text_decoder_forward.1} parent=11 // pred_check_branch
          %609 = sbr.rel (%p607) target = $region48
        $region47: #{transformer_text_decoder_forward.1} parent=11 // pred_region
          _
        $region48: #{transformer_text_decoder_forward.1} parent=11 // pred_fallthru
          _
        // Predicated region
        $region49: #{transformer_text_decoder_forward.1} parent=11 // pred_check
          %p610 = pneg %p269
        $region50: #{transformer_text_decoder_forward.1} parent=11 // pred_check_branch
          %612 = sbr.rel (%p610) target = $region52
        $region51: #{transformer_text_decoder_forward.1} parent=11 // pred_region
          _
        $region52: #{transformer_text_decoder_forward.1} parent=11 // pred_fallthru
          _
        // Predicated region
        $region53: #{transformer_text_decoder_forward.1} parent=11 // pred_check
          %p613 = pneg %p290
        $region54: #{transformer_text_decoder_forward.1} parent=11 // pred_check_branch
          %615 = sbr.rel (%p613) target = $region56
        $region55: #{transformer_text_decoder_forward.1} parent=11 // pred_region
          _
        $region56: #{transformer_text_decoder_forward.1} parent=11 // pred_fallthru
          _
        // Predicated region
        $region57: #{transformer_text_decoder_forward.1} parent=11 // pred_check
          %p616 = pneg %p311
        $region58: #{transformer_text_decoder_forward.1} parent=11 // pred_check_branch
          %618 = sbr.rel (%p616) target = $region60
        $region59: #{transformer_text_decoder_forward.1} parent=11 // pred_region
          _
        $region60: #{transformer_text_decoder_forward.1} parent=11 // pred_fallthru
          _
        // Predicated region
        $region61: #{transformer_text_decoder_forward.1} parent=11 // pred_check
          %p619 = pneg %p332
        $region62: #{transformer_text_decoder_forward.1} parent=11 // pred_check_branch
          %621 = sbr.rel (%p619) target = $region64
        $region63: #{transformer_text_decoder_forward.1} parent=11 // pred_region
          _
        $region64: #{transformer_text_decoder_forward.1} parent=11 // pred_fallthru
          _
        // Predicated region
        $region65: #{transformer_text_decoder_forward.1} parent=11 // pred_check
          %p622 = pneg %p353
        $region66: #{transformer_text_decoder_forward.1} parent=11 // pred_check_branch
          %624 = sbr.rel (%p622) target = $region68
        $region67: #{transformer_text_decoder_forward.1} parent=11 // pred_region
          _
        $region68: #{transformer_text_decoder_forward.1} parent=11 // pred_fallthru
          _
        // Predicated region
        $region69: #{transformer_text_decoder_forward.1} parent=11 // pred_check
          %p625 = pneg %p374
        $region70: #{transformer_text_decoder_forward.1} parent=11 // pred_check_branch
          %627 = sbr.rel (%p625) target = $region72
        $region71: #{transformer_text_decoder_forward.1} parent=11 // pred_region
          _
        $region72: #{transformer_text_decoder_forward.1} parent=11 // pred_fallthru
          _
        // Predicated region
        $region73: #{transformer_text_decoder_forward.1} parent=11 // pred_check
          %p628 = pneg %p395
        $region74: #{transformer_text_decoder_forward.1} parent=11 // pred_check_branch
          %630 = sbr.rel (%p628) target = $region76
        $region75: #{transformer_text_decoder_forward.1} parent=11 // pred_region
          _
        $region76: #{transformer_text_decoder_forward.1} parent=11 // pred_fallthru
          _
        // Predicated region
        $region77: #{transformer_text_decoder_forward.1} parent=11 // pred_check
          %p631 = pneg %p416
        $region78: #{transformer_text_decoder_forward.1} parent=11 // pred_check_branch
          %633 = sbr.rel (%p631) target = $region80
        $region79: #{transformer_text_decoder_forward.1} parent=11 // pred_region
          _
        $region80: #{transformer_text_decoder_forward.1} parent=11 // pred_fallthru
          _
        // Predicated region
        $region81: #{transformer_text_decoder_forward.1} parent=11 // pred_check
          %p634 = pneg %p437
        $region82: #{transformer_text_decoder_forward.1} parent=11 // pred_check_branch
          %636 = sbr.rel (%p634) target = $region84
        $region83: #{transformer_text_decoder_forward.1} parent=11 // pred_region
          _
        $region84: #{transformer_text_decoder_forward.1} parent=11 // pred_fallthru
          _
        // Predicated region
        $region85: #{transformer_text_decoder_forward.1} parent=11 // pred_check
          %p637 = pneg %p458
        $region86: #{transformer_text_decoder_forward.1} parent=11 // pred_check_branch
          %639 = sbr.rel (%p637) target = $region88
        $region87: #{transformer_text_decoder_forward.1} parent=11 // pred_region
          _
        $region88: #{transformer_text_decoder_forward.1} parent=11 // pred_fallthru
          _
        // Predicated region
        $region89: #{transformer_text_decoder_forward.1} parent=11 // pred_check
          %p640 = pneg %p479
        $region90: #{transformer_text_decoder_forward.1} parent=11 // pred_check_branch
          %642 = sbr.rel (%p640) target = $region92
        $region91: #{transformer_text_decoder_forward.1} parent=11 // pred_region
          _
        $region92: #{transformer_text_decoder_forward.1} parent=11 // pred_fallthru
          _
        // Predicated region
        $region93: #{transformer_text_decoder_forward.1} parent=11 // pred_check
          %p643 = pneg %p500
        $region94: #{transformer_text_decoder_forward.1} parent=11 // pred_check_branch
          %645 = sbr.rel (%p643) target = $region96
        $region95: #{transformer_text_decoder_forward.1} parent=11 // pred_region
          _
        $region96: #{transformer_text_decoder_forward.1} parent=11 // pred_fallthru
          _
        // Predicated region
        $region97: #{transformer_text_decoder_forward.1} parent=11 // pred_check
          %p646 = pneg %p521
        $region98: #{transformer_text_decoder_forward.1} parent=11 // pred_check_branch
          %648 = sbr.rel (%p646) target = $region100
        $region99: #{transformer_text_decoder_forward.1} parent=11 // pred_region
          _
        $region100: #{transformer_text_decoder_forward.1} parent=11 // pred_fallthru
          _
        // Predicated region
        $region101: #{transformer_text_decoder_forward.1} parent=11 // pred_check
          %p649 = pneg %p542
        $region102: #{transformer_text_decoder_forward.1} parent=11 // pred_check_branch
          %651 = sbr.rel (%p649) target = $region104
        $region103: #{transformer_text_decoder_forward.1} parent=11 // pred_region
          _
        $region104: #{transformer_text_decoder_forward.1} parent=11 // pred_fallthru
          _
      $region12: #{transformer_text_decoder_forward.1} parent=5 // pred_fallthru
        _
      %p652 = scmp.lt.s32.totalorder %s33, 2
      // Predicated region
      $region105: #{transformer_text_decoder_forward.1} parent=5 // pred_check
        %p653 = pneg %p652
      $region106: #{transformer_text_decoder_forward.1} parent=5 // pred_check_branch
        %655 = sbr.rel (%p653) target = $region108
      $region107: #{transformer_text_decoder_forward.1} parent=5 // pred_region
        // Predicated region
        $region109: #{transformer_text_decoder_forward.1} parent=107 // pred_check
          %p656 = pneg %p53
        $region110: #{transformer_text_decoder_forward.1} parent=107 // pred_check_branch
          %658 = sbr.rel (%p656) target = $region112
        $region111: #{transformer_text_decoder_forward.1} parent=107 // pred_region
          %p659 = scmp.lt.s32.totalorder %s33, 1
          %s660 = scalar_select %p659, %s33, 1
          %s661 = scalar_lea.vmem %s0, %s660
        $region112: #{transformer_text_decoder_forward.1} parent=107 // pred_fallthru
          _
      $region108: #{transformer_text_decoder_forward.1} parent=5 // pred_fallthru
        _
      %p662 = scmp.le.s32.totalorder 1, %s33
      %p663 = scmp.lt.s32.totalorder %s33, 3
      %p664 = pnand %p662, %p663
      %p665 = pneg %p664
      // Predicated region
      $region113: #{transformer_text_decoder_forward.1} parent=5 // pred_check
        _
      $region114: #{transformer_text_decoder_forward.1} parent=5 // pred_check_branch
        %667 = sbr.rel (%p664) target = $region116
      $region115: #{transformer_text_decoder_forward.1} parent=5 // pred_region
        %s668 = ssub.s32 %s33, 1
        %p669 = scmp.lt.s32.totalorder %s38, 1
        %s670 = scalar_select %p669, %s38, 1
        %s671 = scalar_lea.vmem %s0, %s670
        %p672 = pneg %p59
        %p673 = pneg %p56
        %p674 = pneg %p80
        %p675 = pneg %p77
        %p676 = pneg %p101
        %p677 = pneg %p98
        %p678 = pneg %p122
        %p679 = pneg %p119
        %p680 = pneg %p143
        %p681 = pneg %p140
        %p682 = pneg %p164
        %p683 = pneg %p161
        %p684 = pneg %p185
        %p685 = pneg %p182
        %p686 = pneg %p206
        %p687 = pneg %p203
        %p688 = pneg %p227
        %p689 = pneg %p224
        %p690 = pneg %p248
        %p691 = pneg %p245
        %p692 = pneg %p269
        %p693 = pneg %p266
        %p694 = pneg %p290
        %p695 = pneg %p287
        %p696 = pneg %p311
        %p697 = pneg %p308
        %p698 = pneg %p332
        %p699 = pneg %p329
        %p700 = pneg %p353
        %p701 = pneg %p350
        %p702 = pneg %p374
        %p703 = pneg %p371
        %p704 = pneg %p395
        %p705 = pneg %p392
        %p706 = pneg %p416
        %p707 = pneg %p413
        %p708 = pneg %p437
        %p709 = pneg %p434
        %p710 = pneg %p458
        %p711 = pneg %p455
        %p712 = pneg %p479
        %p713 = pneg %p476
        %p714 = pneg %p500
        %p715 = pneg %p497
        %p716 = pneg %p521
        %p717 = pneg %p518
        %p718 = pneg %p542
        %p719 = pneg %p539
        %p720 = pneg %p568
        %p721 = pneg %p565
        %s722 = sand.u32 %s555, 1
        %s723 = scalar_lea.sflag [#allocation3], %s722
        %s724 = sand.u32 %s555, 1
        %s725 = smul.addr %s724, 32
        %s726 = scalar_lea.vmem [#allocation2], %s725
        %p727 = scmp.lt.s32.totalorder %s38, 1
        %s728 = scalar_select %p727, %s38, 1
        %s729 = scalar_lea.vmem %s0, %s728
        %v730 = vld [vmem:[%s729] sm:$0x1]
        %v731 = vld [vmem:[%s1] sm:$0xff]
        %v732 = vld [vmem:[%s1 + $0x8] sm:$0xff]
        %v733 = vld [vmem:[%s1 + $0x10] sm:$0xff]
        %v734 = vld [vmem:[%s1 + $0x18] sm:$0xff]
        %v735 = vld [vmem:[%s2] sm:$0x1]
        %vm736 = vcmask 261120
        %v738 = vsel %vm736, %v730, 0
        %740 = vmatprep.subr.mxu0 0.0
        %741 = vmatpush1.msra.mxu0 0.0
        %742 = vmatprep.subr.mxu0 0.0
        %743 = vmatpush1.msra.mxu0 0.0
        %744 = vmatprep.subr.mxu0 0.0
        %745 = vmatpush1.msra.mxu0 0.0
        %746 = vmatprep.subr.mxu0 0.0
        %747 = vmatpush1.msra.mxu0 0.0
        %748 = vmatprep.subr.mxu0 0.0
        %749 = vmatpush1.msra.mxu0 0.0
        %750 = vmatprep.subr.mxu0 0.0
        %751 = vmatpush1.msra.mxu0 0.0
        %752 = vmatprep.subr.mxu0 0.0
        %753 = vmatpush1.msra.mxu0 0.0
        %754 = vmatprep.subr.mxu0 0.0
        %755 = vmatpush1.msra.mxu0 0.0
        %756 = vmatprep.subr.mxu0 0.0
        %757 = vmatpush1.msra.mxu0 0.0
        %758 = vmatprep.subr.mxu0 0.0
        %759 = vmatpush1.msra.mxu0 0.0
        %760 = vmatprep.subr.mxu0 0.0
        %761 = vmatpush1.msra.mxu0 0.0
        %762 = vmatprep.subr.mxu0 0.0
        %763 = vmatpush1.msra.mxu0 0.0
        %764 = vmatprep.subr.mxu0 0.0
        %765 = vmatpush1.msra.mxu0 %v734
        %766 = vmatprep.subr.mxu0 0.0
        %767 = vmatpush1.msra.mxu0 %v733
        %768 = vmatprep.subr.mxu0 0.0
        %769 = vmatpush1.msra.mxu0 %v732
        %770 = vmatprep.subr.mxu0 0.0
        %771 = vmatpush1.msra.mxu0 %v731
        %772 = vmatprep.subr.mxu0 0.0
        %773 = vmatpush2.msra.mxu0 0.0
        %774 = vmatprep.subr.mxu0 0.0
        %775 = vmatpush2.msra.mxu0 0.0
        %776 = vmatprep.subr.mxu0 0.0
        %777 = vmatpush2.msra.mxu0 0.0
        %778 = vmatprep.subr.mxu0 0.0
        %779 = vmatpush2.msra.mxu0 0.0
        %780 = vmatprep.subr.mxu0 0.0
        %781 = vmatpush2.msra.mxu0 0.0
        %782 = vmatprep.subr.mxu0 0.0
        %783 = vmatpush2.msra.mxu0 0.0
        %784 = vmatprep.subr.mxu0 0.0
        %785 = vmatpush2.msra.mxu0 0.0
        %786 = vmatprep.subr.mxu0 0.0
        %787 = vmatpush2.msra.mxu0 0.0
        %788 = vmatprep.subr.mxu0 0.0
        %789 = vmatpush2.msra.mxu0 0.0
        %790 = vmatprep.subr.mxu0 0.0
        %791 = vmatpush2.msra.mxu0 0.0
        %792 = vmatprep.subr.mxu0 0.0
        %793 = vmatpush2.msra.mxu0 0.0
        %794 = vmatprep.subr.mxu0 0.0
        %795 = vmatpush2.msra.mxu0 0.0
        %796 = vmatprep.subr.mxu0 0.0
        %797 = vmatpush2.msra.mxu0 0.0
        %798 = vmatprep.subr.mxu0 0.0
        %799 = vmatpush2.msra.mxu0 0.0
        %800 = vmatprep.subr.mxu0 0.0
        %801 = vmatpush2.msra.mxu0 0.0
        %802 = vmatprep.subr.mxu0 0.0
        %803 = vmatpush2.msra.mxu0 0.0
        %804 = vmatprep.mubr.f32.mxu0 0.0
        %805 = vmatmul.mubr.f32.gmra.mxu0 %v738
        %v806 = vpop.f32.mrf.mxu0
        %v807 = vadd.f32 %v735, %v806
        %v808 = vpop.f32.mrf.mxu0
        %809 = vdwg.mxu0
        %s810 = scalar_lea.vmem %s1, 32
        %v811 = vld [vmem:[%s810] sm:$0xff]
        %v812 = vld [vmem:[%s810 + $0x8] sm:$0xff]
        %v813 = vld [vmem:[%s810 + $0x10] sm:$0xff]
        %v814 = vld [vmem:[%s810 + $0x18] sm:$0xff]
        %s815 = scalar_lea.vmem %s2, 1
        %v816 = vld [vmem:[%s815] sm:$0x1]
        %817 = vmatprep.subr.mxu0 0.0
        %818 = vmatpush1.msra.mxu0 0.0
        %819 = vmatprep.subr.mxu0 0.0
        %820 = vmatpush1.msra.mxu0 0.0
        %821 = vmatprep.subr.mxu0 0.0
        %822 = vmatpush1.msra.mxu0 0.0
        %823 = vmatprep.subr.mxu0 0.0
        %824 = vmatpush1.msra.mxu0 0.0
        %825 = vmatprep.subr.mxu0 0.0
        %826 = vmatpush1.msra.mxu0 0.0
        %827 = vmatprep.subr.mxu0 0.0
        %828 = vmatpush1.msra.mxu0 0.0
        %829 = vmatprep.subr.mxu0 0.0
        %830 = vmatpush1.msra.mxu0 0.0
        %831 = vmatprep.subr.mxu0 0.0
        %832 = vmatpush1.msra.mxu0 0.0
        %833 = vmatprep.subr.mxu0 0.0
        %834 = vmatpush1.msra.mxu0 0.0
        %835 = vmatprep.subr.mxu0 0.0
        %836 = vmatpush1.msra.mxu0 0.0
        %837 = vmatprep.subr.mxu0 0.0
        %838 = vmatpush1.msra.mxu0 0.0
        %839 = vmatprep.subr.mxu0 0.0
        %840 = vmatpush1.msra.mxu0 0.0
        %841 = vmatprep.subr.mxu0 0.0
        %842 = vmatpush1.msra.mxu0 %v814
        %843 = vmatprep.subr.mxu0 0.0
        %844 = vmatpush1.msra.mxu0 %v813
        %845 = vmatprep.subr.mxu0 0.0
        %846 = vmatpush1.msra.mxu0 %v812
        %847 = vmatprep.subr.mxu0 0.0
        %848 = vmatpush1.msra.mxu0 %v811
        %849 = vmatprep.subr.mxu0 0.0
        %850 = vmatpush2.msra.mxu0 0.0
        %851 = vmatprep.subr.mxu0 0.0
        %852 = vmatpush2.msra.mxu0 0.0
        %853 = vmatprep.subr.mxu0 0.0
        %854 = vmatpush2.msra.mxu0 0.0
        %855 = vmatprep.subr.mxu0 0.0
        %856 = vmatpush2.msra.mxu0 0.0
        %857 = vmatprep.subr.mxu0 0.0
        %858 = vmatpush2.msra.mxu0 0.0
        %859 = vmatprep.subr.mxu0 0.0
        %860 = vmatpush2.msra.mxu0 0.0
        %861 = vmatprep.subr.mxu0 0.0
        %862 = vmatpush2.msra.mxu0 0.0
        %863 = vmatprep.subr.mxu0 0.0
        %864 = vmatpush2.msra.mxu0 0.0
        %865 = vmatprep.subr.mxu0 0.0
        %866 = vmatpush2.msra.mxu0 0.0
        %867 = vmatprep.subr.mxu0 0.0
        %868 = vmatpush2.msra.mxu0 0.0
        %869 = vmatprep.subr.mxu0 0.0
        %870 = vmatpush2.msra.mxu0 0.0
        %871 = vmatprep.subr.mxu0 0.0
        %872 = vmatpush2.msra.mxu0 0.0
        %873 = vmatprep.subr.mxu0 0.0
        %874 = vmatpush2.msra.mxu0 0.0
        %875 = vmatprep.subr.mxu0 0.0
        %876 = vmatpush2.msra.mxu0 0.0
        %877 = vmatprep.subr.mxu0 0.0
        %878 = vmatpush2.msra.mxu0 0.0
        %879 = vmatprep.subr.mxu0 0.0
        %880 = vmatpush2.msra.mxu0 0.0
        %881 = vmatprep.mubr.f32.mxu0 0.0
        %882 = vmatmul.mubr.f32.gmra.mxu0 %v738
        %v883 = vpop.f32.mrf.mxu0
        %v884 = vadd.f32 %v816, %v883
        %v885 = vpop.f32.mrf.mxu0
        %886 = vdwg.mxu0
        %s887 = scalar_lea.vmem %s1, 64
        %v888 = vld [vmem:[%s887] sm:$0xff]
        %v889 = vld [vmem:[%s887 + $0x8] sm:$0xff]
        %v890 = vld [vmem:[%s887 + $0x10] sm:$0xff]
        %v891 = vld [vmem:[%s887 + $0x18] sm:$0xff]
        %s892 = scalar_lea.vmem %s2, 2
        %v893 = vld [vmem:[%s892] sm:$0x1]
        %894 = vmatprep.subr.mxu0 0.0
        %895 = vmatpush1.msra.mxu0 0.0
        %896 = vmatprep.subr.mxu0 0.0
        %897 = vmatpush1.msra.mxu0 0.0
        %898 = vmatprep.subr.mxu0 0.0
        %899 = vmatpush1.msra.mxu0 0.0
        %900 = vmatprep.subr.mxu0 0.0
        %901 = vmatpush1.msra.mxu0 0.0
        %902 = vmatprep.subr.mxu0 0.0
        %903 = vmatpush1.msra.mxu0 0.0
        %904 = vmatprep.subr.mxu0 0.0
        %905 = vmatpush1.msra.mxu0 0.0
        %906 = vmatprep.subr.mxu0 0.0
        %907 = vmatpush1.msra.mxu0 0.0
        %908 = vmatprep.subr.mxu0 0.0
        %909 = vmatpush1.msra.mxu0 0.0
        %910 = vmatprep.subr.mxu0 0.0
        %911 = vmatpush1.msra.mxu0 0.0
        %912 = vmatprep.subr.mxu0 0.0
        %913 = vmatpush1.msra.mxu0 0.0
        %914 = vmatprep.subr.mxu0 0.0
        %915 = vmatpush1.msra.mxu0 0.0
        %916 = vmatprep.subr.mxu0 0.0
        %917 = vmatpush1.msra.mxu0 0.0
        %918 = vmatprep.subr.mxu0 0.0
        %919 = vmatpush1.msra.mxu0 %v891
        %920 = vmatprep.subr.mxu0 0.0
        %921 = vmatpush1.msra.mxu0 %v890
        %922 = vmatprep.subr.mxu0 0.0
        %923 = vmatpush1.msra.mxu0 %v889
        %924 = vmatprep.subr.mxu0 0.0
        %925 = vmatpush1.msra.mxu0 %v888
        %926 = vmatprep.subr.mxu0 0.0
        %927 = vmatpush2.msra.mxu0 0.0
        %928 = vmatprep.subr.mxu0 0.0
        %929 = vmatpush2.msra.mxu0 0.0
        %930 = vmatprep.subr.mxu0 0.0
        %931 = vmatpush2.msra.mxu0 0.0
        %932 = vmatprep.subr.mxu0 0.0
        %933 = vmatpush2.msra.mxu0 0.0
        %934 = vmatprep.subr.mxu0 0.0
        %935 = vmatpush2.msra.mxu0 0.0
        %936 = vmatprep.subr.mxu0 0.0
        %937 = vmatpush2.msra.mxu0 0.0
        %938 = vmatprep.subr.mxu0 0.0
        %939 = vmatpush2.msra.mxu0 0.0
        %940 = vmatprep.subr.mxu0 0.0
        %941 = vmatpush2.msra.mxu0 0.0
        %942 = vmatprep.subr.mxu0 0.0
        %943 = vmatpush2.msra.mxu0 0.0
        %944 = vmatprep.subr.mxu0 0.0
        %945 = vmatpush2.msra.mxu0 0.0
        %946 = vmatprep.subr.mxu0 0.0
        %947 = vmatpush2.msra.mxu0 0.0
        %948 = vmatprep.subr.mxu0 0.0
        %949 = vmatpush2.msra.mxu0 0.0
        %950 = vmatprep.subr.mxu0 0.0
        %951 = vmatpush2.msra.mxu0 0.0
        %952 = vmatprep.subr.mxu0 0.0
        %953 = vmatpush2.msra.mxu0 0.0
        %954 = vmatprep.subr.mxu0 0.0
        %955 = vmatpush2.msra.mxu0 0.0
        %956 = vmatprep.subr.mxu0 0.0
        %957 = vmatpush2.msra.mxu0 0.0
        %958 = vmatprep.mubr.f32.mxu0 0.0
        %959 = vmatmul.mubr.f32.gmra.mxu0 %v738
        %v960 = vpop.f32.mrf.mxu0
        %v961 = vadd.f32 %v893, %v960
        %v962 = vpop.f32.mrf.mxu0
        %963 = vdwg.mxu0
        %s964 = scalar_lea.vmem %s1, 96
        %v965 = vld [vmem:[%s964] sm:$0xff]
        %v966 = vld [vmem:[%s964 + $0x8] sm:$0xff]
        %v967 = vld [vmem:[%s964 + $0x10] sm:$0xff]
        %v968 = vld [vmem:[%s964 + $0x18] sm:$0xff]
        %s969 = scalar_lea.vmem %s2, 3
        %v970 = vld [vmem:[%s969] sm:$0x1]
        %971 = vmatprep.subr.mxu0 0.0
        %972 = vmatpush1.msra.mxu0 0.0
        %973 = vmatprep.subr.mxu0 0.0
        %974 = vmatpush1.msra.mxu0 0.0
        %975 = vmatprep.subr.mxu0 0.0
        %976 = vmatpush1.msra.mxu0 0.0
        %977 = vmatprep.subr.mxu0 0.0
        %978 = vmatpush1.msra.mxu0 0.0
        %979 = vmatprep.subr.mxu0 0.0
        %980 = vmatpush1.msra.mxu0 0.0
        %981 = vmatprep.subr.mxu0 0.0
        %982 = vmatpush1.msra.mxu0 0.0
        %983 = vmatprep.subr.mxu0 0.0
        %984 = vmatpush1.msra.mxu0 0.0
        %985 = vmatprep.subr.mxu0 0.0
        %986 = vmatpush1.msra.mxu0 0.0
        %987 = vmatprep.subr.mxu0 0.0
        %988 = vmatpush1.msra.mxu0 0.0
        %989 = vmatprep.subr.mxu0 0.0
        %990 = vmatpush1.msra.mxu0 0.0
        %991 = vmatprep.subr.mxu0 0.0
        %992 = vmatpush1.msra.mxu0 0.0
        %993 = vmatprep.subr.mxu0 0.0
        %994 = vmatpush1.msra.mxu0 0.0
        %995 = vmatprep.subr.mxu0 0.0
        %996 = vmatpush1.msra.mxu0 %v968
        %997 = vmatprep.subr.mxu0 0.0
        %998 = vmatpush1.msra.mxu0 %v967
        %999 = vmatprep.subr.mxu0 0.0
        %1000 = vmatpush1.msra.mxu0 %v966
        %1001 = vmatprep.subr.mxu0 0.0
        %1002 = vmatpush1.msra.mxu0 %v965
        %1003 = vmatprep.subr.mxu0 0.0
        %1004 = vmatpush2.msra.mxu0 0.0
        %1005 = vmatprep.subr.mxu0 0.0
        %1006 = vmatpush2.msra.mxu0 0.0
        %1007 = vmatprep.subr.mxu0 0.0
        %1008 = vmatpush2.msra.mxu0 0.0
        %1009 = vmatprep.subr.mxu0 0.0
        %1010 = vmatpush2.msra.mxu0 0.0
        %1011 = vmatprep.subr.mxu0 0.0
        %1012 = vmatpush2.msra.mxu0 0.0
        %1013 = vmatprep.subr.mxu0 0.0
        %1014 = vmatpush2.msra.mxu0 0.0
        %1015 = vmatprep.subr.mxu0 0.0
        %1016 = vmatpush2.msra.mxu0 0.0
        %1017 = vmatprep.subr.mxu0 0.0
        %1018 = vmatpush2.msra.mxu0 0.0
        %1019 = vmatprep.subr.mxu0 0.0
        %1020 = vmatpush2.msra.mxu0 0.0
        %1021 = vmatprep.subr.mxu0 0.0
        %1022 = vmatpush2.msra.mxu0 0.0
        %1023 = vmatprep.subr.mxu0 0.0
        %1024 = vmatpush2.msra.mxu0 0.0
        %1025 = vmatprep.subr.mxu0 0.0
        %1026 = vmatpush2.msra.mxu0 0.0
        %1027 = vmatprep.subr.mxu0 0.0
        %1028 = vmatpush2.msra.mxu0 0.0
        %1029 = vmatprep.subr.mxu0 0.0
        %1030 = vmatpush2.msra.mxu0 0.0
        %1031 = vmatprep.subr.mxu0 0.0
        %1032 = vmatpush2.msra.mxu0 0.0
        %1033 = vmatprep.subr.mxu0 0.0
        %1034 = vmatpush2.msra.mxu0 0.0
        %1035 = vmatprep.mubr.f32.mxu0 0.0
        %1036 = vmatmul.mubr.f32.gmra.mxu0 %v738
        %v1037 = vpop.f32.mrf.mxu0
        %v1038 = vadd.f32 %v970, %v1037
        %v1039 = vpop.f32.mrf.mxu0
        %1040 = vdwg.mxu0
        %s1041 = scalar_lea.vmem %s1, 128
        %v1042 = vld [vmem:[%s1041] sm:$0xff]
        %v1043 = vld [vmem:[%s1041 + $0x8] sm:$0xff]
        %v1044 = vld [vmem:[%s1041 + $0x10] sm:$0xff]
        %v1045 = vld [vmem:[%s1041 + $0x18] sm:$0xff]
        %s1046 = scalar_lea.vmem %s2, 4
        %v1047 = vld [vmem:[%s1046] sm:$0x1]
        %1048 = vmatprep.subr.mxu0 0.0
        %1049 = vmatpush1.msra.mxu0 0.0
        %1050 = vmatprep.subr.mxu0 0.0
        %1051 = vmatpush1.msra.mxu0 0.0
        %1052 = vmatprep.subr.mxu0 0.0
        %1053 = vmatpush1.msra.mxu0 0.0
        %1054 = vmatprep.subr.mxu0 0.0
        %1055 = vmatpush1.msra.mxu0 0.0
        %1056 = vmatprep.subr.mxu0 0.0
        %1057 = vmatpush1.msra.mxu0 0.0
        %1058 = vmatprep.subr.mxu0 0.0
        %1059 = vmatpush1.msra.mxu0 0.0
        %1060 = vmatprep.subr.mxu0 0.0
        %1061 = vmatpush1.msra.mxu0 0.0
        %1062 = vmatprep.subr.mxu0 0.0
        %1063 = vmatpush1.msra.mxu0 0.0
        %1064 = vmatprep.subr.mxu0 0.0
        %1065 = vmatpush1.msra.mxu0 0.0
        %1066 = vmatprep.subr.mxu0 0.0
        %1067 = vmatpush1.msra.mxu0 0.0
        %1068 = vmatprep.subr.mxu0 0.0
        %1069 = vmatpush1.msra.mxu0 0.0
        %1070 = vmatprep.subr.mxu0 0.0
        %1071 = vmatpush1.msra.mxu0 0.0
        %1072 = vmatprep.subr.mxu0 0.0
        %1073 = vmatpush1.msra.mxu0 %v1045
        %1074 = vmatprep.subr.mxu0 0.0
        %1075 = vmatpush1.msra.mxu0 %v1044
        %1076 = vmatprep.subr.mxu0 0.0
        %1077 = vmatpush1.msra.mxu0 %v1043
        %1078 = vmatprep.subr.mxu0 0.0
        %1079 = vmatpush1.msra.mxu0 %v1042
        %1080 = vmatprep.subr.mxu0 0.0
        %1081 = vmatpush2.msra.mxu0 0.0
        %1082 = vmatprep.subr.mxu0 0.0
        %1083 = vmatpush2.msra.mxu0 0.0
        %1084 = vmatprep.subr.mxu0 0.0
        %1085 = vmatpush2.msra.mxu0 0.0
        %1086 = vmatprep.subr.mxu0 0.0
        %1087 = vmatpush2.msra.mxu0 0.0
        %1088 = vmatprep.subr.mxu0 0.0
        %1089 = vmatpush2.msra.mxu0 0.0
        %1090 = vmatprep.subr.mxu0 0.0
        %1091 = vmatpush2.msra.mxu0 0.0
        %1092 = vmatprep.subr.mxu0 0.0
        %1093 = vmatpush2.msra.mxu0 0.0
        %1094 = vmatprep.subr.mxu0 0.0
        %1095 = vmatpush2.msra.mxu0 0.0
        %1096 = vmatprep.subr.mxu0 0.0
        %1097 = vmatpush2.msra.mxu0 0.0
        %1098 = vmatprep.subr.mxu0 0.0
        %1099 = vmatpush2.msra.mxu0 0.0
        %1100 = vmatprep.subr.mxu0 0.0
        %1101 = vmatpush2.msra.mxu0 0.0
        %1102 = vmatprep.subr.mxu0 0.0
        %1103 = vmatpush2.msra.mxu0 0.0
        %1104 = vmatprep.subr.mxu0 0.0
        %1105 = vmatpush2.msra.mxu0 0.0
        %1106 = vmatprep.subr.mxu0 0.0
        %1107 = vmatpush2.msra.mxu0 0.0
        %1108 = vmatprep.subr.mxu0 0.0
        %1109 = vmatpush2.msra.mxu0 0.0
        %1110 = vmatprep.subr.mxu0 0.0
        %1111 = vmatpush2.msra.mxu0 0.0
        %1112 = vmatprep.mubr.f32.mxu0 0.0
        %1113 = vmatmul.mubr.f32.gmra.mxu0 %v738
        %v1114 = vpop.f32.mrf.mxu0
        %v1115 = vadd.f32 %v1047, %v1114
        %v1116 = vpop.f32.mrf.mxu0
        %1117 = vdwg.mxu0
        %s1118 = scalar_lea.vmem %s1, 160
        %v1119 = vld [vmem:[%s1118] sm:$0xff]
        %v1120 = vld [vmem:[%s1118 + $0x8] sm:$0xff]
        %v1121 = vld [vmem:[%s1118 + $0x10] sm:$0xff]
        %v1122 = vld [vmem:[%s1118 + $0x18] sm:$0xff]
        %s1123 = scalar_lea.vmem %s2, 5
        %v1124 = vld [vmem:[%s1123] sm:$0x1]
        %1125 = vmatprep.subr.mxu0 0.0
        %1126 = vmatpush1.msra.mxu0 0.0
        %1127 = vmatprep.subr.mxu0 0.0
        %1128 = vmatpush1.msra.mxu0 0.0
        %1129 = vmatprep.subr.mxu0 0.0
        %1130 = vmatpush1.msra.mxu0 0.0
        %1131 = vmatprep.subr.mxu0 0.0
        %1132 = vmatpush1.msra.mxu0 0.0
        %1133 = vmatprep.subr.mxu0 0.0
        %1134 = vmatpush1.msra.mxu0 0.0
        %1135 = vmatprep.subr.mxu0 0.0
        %1136 = vmatpush1.msra.mxu0 0.0
        %1137 = vmatprep.subr.mxu0 0.0
        %1138 = vmatpush1.msra.mxu0 0.0
        %1139 = vmatprep.subr.mxu0 0.0
        %1140 = vmatpush1.msra.mxu0 0.0
        %1141 = vmatprep.subr.mxu0 0.0
        %1142 = vmatpush1.msra.mxu0 0.0
        %1143 = vmatprep.subr.mxu0 0.0
        %1144 = vmatpush1.msra.mxu0 0.0
        %1145 = vmatprep.subr.mxu0 0.0
        %1146 = vmatpush1.msra.mxu0 0.0
        %1147 = vmatprep.subr.mxu0 0.0
        %1148 = vmatpush1.msra.mxu0 0.0
        %1149 = vmatprep.subr.mxu0 0.0
        %1150 = vmatpush1.msra.mxu0 %v1122
        %1151 = vmatprep.subr.mxu0 0.0
        %1152 = vmatpush1.msra.mxu0 %v1121
        %1153 = vmatprep.subr.mxu0 0.0
        %1154 = vmatpush1.msra.mxu0 %v1120
        %1155 = vmatprep.subr.mxu0 0.0
        %1156 = vmatpush1.msra.mxu0 %v1119
        %1157 = vmatprep.subr.mxu0 0.0
        %1158 = vmatpush2.msra.mxu0 0.0
        %1159 = vmatprep.subr.mxu0 0.0
        %1160 = vmatpush2.msra.mxu0 0.0
        %1161 = vmatprep.subr.mxu0 0.0
        %1162 = vmatpush2.msra.mxu0 0.0
        %1163 = vmatprep.subr.mxu0 0.0
        %1164 = vmatpush2.msra.mxu0 0.0
        %1165 = vmatprep.subr.mxu0 0.0
        %1166 = vmatpush2.msra.mxu0 0.0
        %1167 = vmatprep.subr.mxu0 0.0
        %1168 = vmatpush2.msra.mxu0 0.0
        %1169 = vmatprep.subr.mxu0 0.0
        %1170 = vmatpush2.msra.mxu0 0.0
        %1171 = vmatprep.subr.mxu0 0.0
        %1172 = vmatpush2.msra.mxu0 0.0
        %1173 = vmatprep.subr.mxu0 0.0
        %1174 = vmatpush2.msra.mxu0 0.0
        %1175 = vmatprep.subr.mxu0 0.0
        %1176 = vmatpush2.msra.mxu0 0.0
        %1177 = vmatprep.subr.mxu0 0.0
        %1178 = vmatpush2.msra.mxu0 0.0
        %1179 = vmatprep.subr.mxu0 0.0
        %1180 = vmatpush2.msra.mxu0 0.0
        %1181 = vmatprep.subr.mxu0 0.0
        %1182 = vmatpush2.msra.mxu0 0.0
        %1183 = vmatprep.subr.mxu0 0.0
        %1184 = vmatpush2.msra.mxu0 0.0
        %1185 = vmatprep.subr.mxu0 0.0
        %1186 = vmatpush2.msra.mxu0 0.0
        %1187 = vmatprep.subr.mxu0 0.0
        %1188 = vmatpush2.msra.mxu0 0.0
        %1189 = vmatprep.mubr.f32.mxu0 0.0
        %1190 = vmatmul.mubr.f32.gmra.mxu0 %v738
        %v1191 = vpop.f32.mrf.mxu0
        %v1192 = vadd.f32 %v1124, %v1191
        %v1193 = vpop.f32.mrf.mxu0
        %1194 = vdwg.mxu0
        %s1195 = scalar_lea.vmem %s1, 192
        %v1196 = vld [vmem:[%s1195] sm:$0xff]
        %v1197 = vld [vmem:[%s1195 + $0x8] sm:$0xff]
        %v1198 = vld [vmem:[%s1195 + $0x10] sm:$0xff]
        %v1199 = vld [vmem:[%s1195 + $0x18] sm:$0xff]
        %s1200 = scalar_lea.vmem %s2, 6
        %v1201 = vld [vmem:[%s1200] sm:$0x1]
        %1202 = vmatprep.subr.mxu0 0.0
        %1203 = vmatpush1.msra.mxu0 0.0
        %1204 = vmatprep.subr.mxu0 0.0
        %1205 = vmatpush1.msra.mxu0 0.0
        %1206 = vmatprep.subr.mxu0 0.0
        %1207 = vmatpush1.msra.mxu0 0.0
        %1208 = vmatprep.subr.mxu0 0.0
        %1209 = vmatpush1.msra.mxu0 0.0
        %1210 = vmatprep.subr.mxu0 0.0
        %1211 = vmatpush1.msra.mxu0 0.0
        %1212 = vmatprep.subr.mxu0 0.0
        %1213 = vmatpush1.msra.mxu0 0.0
        %1214 = vmatprep.subr.mxu0 0.0
        %1215 = vmatpush1.msra.mxu0 0.0
        %1216 = vmatprep.subr.mxu0 0.0
        %1217 = vmatpush1.msra.mxu0 0.0
        %1218 = vmatprep.subr.mxu0 0.0
        %1219 = vmatpush1.msra.mxu0 0.0
        %1220 = vmatprep.subr.mxu0 0.0
        %1221 = vmatpush1.msra.mxu0 0.0
        %1222 = vmatprep.subr.mxu0 0.0
        %1223 = vmatpush1.msra.mxu0 0.0
        %1224 = vmatprep.subr.mxu0 0.0
        %1225 = vmatpush1.msra.mxu0 0.0
        %1226 = vmatprep.subr.mxu0 0.0
        %1227 = vmatpush1.msra.mxu0 %v1199
        %1228 = vmatprep.subr.mxu0 0.0
        %1229 = vmatpush1.msra.mxu0 %v1198
        %1230 = vmatprep.subr.mxu0 0.0
        %1231 = vmatpush1.msra.mxu0 %v1197
        %1232 = vmatprep.subr.mxu0 0.0
        %1233 = vmatpush1.msra.mxu0 %v1196
        %1234 = vmatprep.subr.mxu0 0.0
        %1235 = vmatpush2.msra.mxu0 0.0
        %1236 = vmatprep.subr.mxu0 0.0
        %1237 = vmatpush2.msra.mxu0 0.0
        %1238 = vmatprep.subr.mxu0 0.0
        %1239 = vmatpush2.msra.mxu0 0.0
        %1240 = vmatprep.subr.mxu0 0.0
        %1241 = vmatpush2.msra.mxu0 0.0
        %1242 = vmatprep.subr.mxu0 0.0
        %1243 = vmatpush2.msra.mxu0 0.0
        %1244 = vmatprep.subr.mxu0 0.0
        %1245 = vmatpush2.msra.mxu0 0.0
        %1246 = vmatprep.subr.mxu0 0.0
        %1247 = vmatpush2.msra.mxu0 0.0
        %1248 = vmatprep.subr.mxu0 0.0
        %1249 = vmatpush2.msra.mxu0 0.0
        %1250 = vmatprep.subr.mxu0 0.0
        %1251 = vmatpush2.msra.mxu0 0.0
        %1252 = vmatprep.subr.mxu0 0.0
        %1253 = vmatpush2.msra.mxu0 0.0
        %1254 = vmatprep.subr.mxu0 0.0
        %1255 = vmatpush2.msra.mxu0 0.0
        %1256 = vmatprep.subr.mxu0 0.0
        %1257 = vmatpush2.msra.mxu0 0.0
        %1258 = vmatprep.subr.mxu0 0.0
        %1259 = vmatpush2.msra.mxu0 0.0
        %1260 = vmatprep.subr.mxu0 0.0
        %1261 = vmatpush2.msra.mxu0 0.0
        %1262 = vmatprep.subr.mxu0 0.0
        %1263 = vmatpush2.msra.mxu0 0.0
        %1264 = vmatprep.subr.mxu0 0.0
        %1265 = vmatpush2.msra.mxu0 0.0
        %1266 = vmatprep.mubr.f32.mxu0 0.0
        %1267 = vmatmul.mubr.f32.gmra.mxu0 %v738
        %v1268 = vpop.f32.mrf.mxu0
        %v1269 = vadd.f32 %v1201, %v1268
        %v1270 = vpop.f32.mrf.mxu0
        %1271 = vdwg.mxu0
        %s1272 = scalar_lea.vmem %s1, 224
        %v1273 = vld [vmem:[%s1272] sm:$0xff]
        %v1274 = vld [vmem:[%s1272 + $0x8] sm:$0xff]
        %v1275 = vld [vmem:[%s1272 + $0x10] sm:$0xff]
        %v1276 = vld [vmem:[%s1272 + $0x18] sm:$0xff]
        %s1277 = scalar_lea.vmem %s2, 7
        %v1278 = vld [vmem:[%s1277] sm:$0x1]
        %1279 = vmatprep.subr.mxu0 0.0
        %1280 = vmatpush1.msra.mxu0 0.0
        %1281 = vmatprep.subr.mxu0 0.0
        %1282 = vmatpush1.msra.mxu0 0.0
        %1283 = vmatprep.subr.mxu0 0.0
        %1284 = vmatpush1.msra.mxu0 0.0
        %1285 = vmatprep.subr.mxu0 0.0
        %1286 = vmatpush1.msra.mxu0 0.0
        %1287 = vmatprep.subr.mxu0 0.0
        %1288 = vmatpush1.msra.mxu0 0.0
        %1289 = vmatprep.subr.mxu0 0.0
        %1290 = vmatpush1.msra.mxu0 0.0
        %1291 = vmatprep.subr.mxu0 0.0
        %1292 = vmatpush1.msra.mxu0 0.0
        %1293 = vmatprep.subr.mxu0 0.0
        %1294 = vmatpush1.msra.mxu0 0.0
        %1295 = vmatprep.subr.mxu0 0.0
        %1296 = vmatpush1.msra.mxu0 0.0
        %1297 = vmatprep.subr.mxu0 0.0
        %1298 = vmatpush1.msra.mxu0 0.0
        %1299 = vmatprep.subr.mxu0 0.0
        %1300 = vmatpush1.msra.mxu0 0.0
        %1301 = vmatprep.subr.mxu0 0.0
        %1302 = vmatpush1.msra.mxu0 0.0
        %1303 = vmatprep.subr.mxu0 0.0
        %1304 = vmatpush1.msra.mxu0 %v1276
        %1305 = vmatprep.subr.mxu0 0.0
        %1306 = vmatpush1.msra.mxu0 %v1275
        %1307 = vmatprep.subr.mxu0 0.0
        %1308 = vmatpush1.msra.mxu0 %v1274
        %1309 = vmatprep.subr.mxu0 0.0
        %1310 = vmatpush1.msra.mxu0 %v1273
        %1311 = vmatprep.subr.mxu0 0.0
        %1312 = vmatpush2.msra.mxu0 0.0
        %1313 = vmatprep.subr.mxu0 0.0
        %1314 = vmatpush2.msra.mxu0 0.0
        %1315 = vmatprep.subr.mxu0 0.0
        %1316 = vmatpush2.msra.mxu0 0.0
        %1317 = vmatprep.subr.mxu0 0.0
        %1318 = vmatpush2.msra.mxu0 0.0
        %1319 = vmatprep.subr.mxu0 0.0
        %1320 = vmatpush2.msra.mxu0 0.0
        %1321 = vmatprep.subr.mxu0 0.0
        %1322 = vmatpush2.msra.mxu0 0.0
        %1323 = vmatprep.subr.mxu0 0.0
        %1324 = vmatpush2.msra.mxu0 0.0
        %1325 = vmatprep.subr.mxu0 0.0
        %1326 = vmatpush2.msra.mxu0 0.0
        %1327 = vmatprep.subr.mxu0 0.0
        %1328 = vmatpush2.msra.mxu0 0.0
        %1329 = vmatprep.subr.mxu0 0.0
        %1330 = vmatpush2.msra.mxu0 0.0
        %1331 = vmatprep.subr.mxu0 0.0
        %1332 = vmatpush2.msra.mxu0 0.0
        %1333 = vmatprep.subr.mxu0 0.0
        %1334 = vmatpush2.msra.mxu0 0.0
        %1335 = vmatprep.subr.mxu0 0.0
        %1336 = vmatpush2.msra.mxu0 0.0
        %1337 = vmatprep.subr.mxu0 0.0
        %1338 = vmatpush2.msra.mxu0 0.0
        %1339 = vmatprep.subr.mxu0 0.0
        %1340 = vmatpush2.msra.mxu0 0.0
        %1341 = vmatprep.subr.mxu0 0.0
        %1342 = vmatpush2.msra.mxu0 0.0
        %1343 = vmatprep.mubr.f32.mxu0 0.0
        %1344 = vmatmul.mubr.f32.gmra.mxu0 %v738
        %v1345 = vpop.f32.mrf.mxu0
        %v1346 = vadd.f32 %v1278, %v1345
        %v1347 = vpop.f32.mrf.mxu0
        %1348 = vdwg.mxu0
        %v1349 = vld [vmem:[%s3] sm:$0xff]
        %v1351 = vrot.slane %v884, 7
        %v1354 = vrot.slane %v961, 6
        %v1357 = vrot.slane %v1038, 5
        %v1360 = vrot.slane %v1115, 4
        %v1363 = vrot.slane %v1192, 3
        %v1366 = vrot.slane %v1269, 2
        %v1369 = vrot.slane %v1346, 1
        %vm1371 = vcmask 1040384
        %v1372 = vsel %vm1371, %v807, %v1351
        %vm1373 = vcmask 1041408
        %v1374 = vsel %vm1373, %v1372, %v1354
        %vm1375 = vcmask 1042432
        %v1376 = vsel %vm1375, %v1374, %v1357
        %vm1377 = vcmask 1043456
        %v1378 = vsel %vm1377, %v1376, %v1360
        %vm1379 = vcmask 1044480
        %v1380 = vsel %vm1379, %v1378, %v1363
        %vm1381 = vcmask 1045504
        %v1382 = vsel %vm1381, %v1380, %v1366
        %vm1383 = vcmask 1046528
        %v1384 = vsel %vm1383, %v1382, %v1369
        %v1385 = vld [vmem:[%s6] sm:$0xff]
        %v1386 = vld [vmem:[%s6 + $0x8] sm:$0xff]
        %v1387 = vld [vmem:[%s6 + $0x10] sm:$0xff]
        %v1388 = vld [vmem:[%s6 + $0x18] sm:$0xff]
        %v1389 = vld [vmem:[%s6 + $0x20] sm:$0xff]
        %v1390 = vld [vmem:[%s6 + $0x28] sm:$0xff]
        %v1391 = vld [vmem:[%s6 + $0x30] sm:$0xff]
        %v1392 = vld [vmem:[%s6 + $0x38] sm:$0xff]
        %v1393 = vld [vmem:[%s9] sm:$0x1]
        %v1395 = vlaneseq
        %v1396 = vshrl.u32 %v1395, 7
        %v1397 = vsub.s32 0, %v1396
        %v1398 = vrot.slane %v1393, %v1397
        %vm1400 = vcmask 523264
        %v1402 = vsel %vm1400, %v1384, 0
        %v1405 = vsel %vm1400, %v1349, 0
        %1407 = vmatprep.subr.mxu0 0.0
        %1408 = vmatpush1.msra.mxu0 0.0
        %1409 = vmatprep.subr.mxu0 0.0
        %1410 = vmatpush1.msra.mxu0 0.0
        %1411 = vmatprep.subr.mxu0 0.0
        %1412 = vmatpush1.msra.mxu0 0.0
        %1413 = vmatprep.subr.mxu0 0.0
        %1414 = vmatpush1.msra.mxu0 0.0
        %1415 = vmatprep.subr.mxu0 0.0
        %1416 = vmatpush1.msra.mxu0 0.0
        %1417 = vmatprep.subr.mxu0 0.0
        %1418 = vmatpush1.msra.mxu0 0.0
        %1419 = vmatprep.subr.mxu0 0.0
        %1420 = vmatpush1.msra.mxu0 0.0
        %1421 = vmatprep.subr.mxu0 0.0
        %1422 = vmatpush1.msra.mxu0 0.0
        %1423 = vmatprep.subr.mxu0 0.0
        %1424 = vmatpush1.msra.mxu0 %v1392
        %1425 = vmatprep.subr.mxu0 0.0
        %1426 = vmatpush1.msra.mxu0 %v1391
        %1427 = vmatprep.subr.mxu0 0.0
        %1428 = vmatpush1.msra.mxu0 %v1390
        %1429 = vmatprep.subr.mxu0 0.0
        %1430 = vmatpush1.msra.mxu0 %v1389
        %1431 = vmatprep.subr.mxu0 0.0
        %1432 = vmatpush1.msra.mxu0 %v1388
        %1433 = vmatprep.subr.mxu0 0.0
        %1434 = vmatpush1.msra.mxu0 %v1387
        %1435 = vmatprep.subr.mxu0 0.0
        %1436 = vmatpush1.msra.mxu0 %v1386
        %1437 = vmatprep.subr.mxu0 0.0
        %1438 = vmatpush1.msra.mxu0 %v1385
        %1439 = vmatprep.subr.mxu0 0.0
        %1440 = vmatpush2.msra.mxu0 0.0
        %1441 = vmatprep.subr.mxu0 0.0
        %1442 = vmatpush2.msra.mxu0 0.0
        %1443 = vmatprep.subr.mxu0 0.0
        %1444 = vmatpush2.msra.mxu0 0.0
        %1445 = vmatprep.subr.mxu0 0.0
        %1446 = vmatpush2.msra.mxu0 0.0
        %1447 = vmatprep.subr.mxu0 0.0
        %1448 = vmatpush2.msra.mxu0 0.0
        %1449 = vmatprep.subr.mxu0 0.0
        %1450 = vmatpush2.msra.mxu0 0.0
        %1451 = vmatprep.subr.mxu0 0.0
        %1452 = vmatpush2.msra.mxu0 0.0
        %1453 = vmatprep.subr.mxu0 0.0
        %1454 = vmatpush2.msra.mxu0 0.0
        %1455 = vmatprep.subr.mxu0 0.0
        %1456 = vmatpush2.msra.mxu0 0.0
        %1457 = vmatprep.subr.mxu0 0.0
        %1458 = vmatpush2.msra.mxu0 0.0
        %1459 = vmatprep.subr.mxu0 0.0
        %1460 = vmatpush2.msra.mxu0 0.0
        %1461 = vmatprep.subr.mxu0 0.0
        %1462 = vmatpush2.msra.mxu0 0.0
        %1463 = vmatprep.subr.mxu0 0.0
        %1464 = vmatpush2.msra.mxu0 0.0
        %1465 = vmatprep.subr.mxu0 0.0
        %1466 = vmatpush2.msra.mxu0 0.0
        %1467 = vmatprep.subr.mxu0 0.0
        %1468 = vmatpush2.msra.mxu0 0.0
        %1469 = vmatprep.subr.mxu0 0.0
        %1470 = vmatpush2.msra.mxu0 0.0
        %1471 = vmatprep.mubr.f32.mxu0 0.0
        %1472 = vmatmul.mubr.f32.gmra.mxu0 %v1402
        %v1473 = vpop.f32.mrf.mxu0
        %v1474 = vadd.f32 %v1398, %v1473
        %v1475 = vpop.f32.mrf.mxu0
        %1476 = vmatprep.mubr.f32.mxu0 0.0
        %1477 = vmatmul.mubr.f32.gmra.mxu0 %v1405
        %v1478 = vpop.f32.mrf.mxu0
        %v1479 = vadd.f32 %v1398, %v1478
        %v1480 = vpop.f32.mrf.mxu0
        %1481 = vdwg.mxu0
        %v1482 = vld [vmem:[%s7] sm:$0xff]
        %v1483 = vld [vmem:[%s7 + $0x8] sm:$0xff]
        %v1484 = vld [vmem:[%s7 + $0x10] sm:$0xff]
        %v1485 = vld [vmem:[%s7 + $0x18] sm:$0xff]
        %v1486 = vld [vmem:[%s7 + $0x20] sm:$0xff]
        %v1487 = vld [vmem:[%s7 + $0x28] sm:$0xff]
        %v1488 = vld [vmem:[%s7 + $0x30] sm:$0xff]
        %v1489 = vld [vmem:[%s7 + $0x38] sm:$0xff]
        %v1490 = vld [vmem:[%s10] sm:$0x1]
        %v1492 = vlaneseq
        %v1493 = vshrl.u32 %v1492, 7
        %v1494 = vsub.s32 0, %v1493
        %v1495 = vrot.slane %v1490, %v1494
        %1497 = vmatprep.subr.mxu0 0.0
        %1498 = vmatpush1.msra.mxu0 0.0
        %1499 = vmatprep.subr.mxu0 0.0
        %1500 = vmatpush1.msra.mxu0 0.0
        %1501 = vmatprep.subr.mxu0 0.0
        %1502 = vmatpush1.msra.mxu0 0.0
        %1503 = vmatprep.subr.mxu0 0.0
        %1504 = vmatpush1.msra.mxu0 0.0
        %1505 = vmatprep.subr.mxu0 0.0
        %1506 = vmatpush1.msra.mxu0 0.0
        %1507 = vmatprep.subr.mxu0 0.0
        %1508 = vmatpush1.msra.mxu0 0.0
        %1509 = vmatprep.subr.mxu0 0.0
        %1510 = vmatpush1.msra.mxu0 0.0
        %1511 = vmatprep.subr.mxu0 0.0
        %1512 = vmatpush1.msra.mxu0 0.0
        %1513 = vmatprep.subr.mxu0 0.0
        %1514 = vmatpush1.msra.mxu0 %v1489
        %1515 = vmatprep.subr.mxu0 0.0
        %1516 = vmatpush1.msra.mxu0 %v1488
        %1517 = vmatprep.subr.mxu0 0.0
        %1518 = vmatpush1.msra.mxu0 %v1487
        %1519 = vmatprep.subr.mxu0 0.0
        %1520 = vmatpush1.msra.mxu0 %v1486
        %1521 = vmatprep.subr.mxu0 0.0
        %1522 = vmatpush1.msra.mxu0 %v1485
        %1523 = vmatprep.subr.mxu0 0.0
        %1524 = vmatpush1.msra.mxu0 %v1484
        %1525 = vmatprep.subr.mxu0 0.0
        %1526 = vmatpush1.msra.mxu0 %v1483
        %1527 = vmatprep.subr.mxu0 0.0
        %1528 = vmatpush1.msra.mxu0 %v1482
        %1529 = vmatprep.subr.mxu0 0.0
        %1530 = vmatpush2.msra.mxu0 0.0
        %1531 = vmatprep.subr.mxu0 0.0
        %1532 = vmatpush2.msra.mxu0 0.0
        %1533 = vmatprep.subr.mxu0 0.0
        %1534 = vmatpush2.msra.mxu0 0.0
        %1535 = vmatprep.subr.mxu0 0.0
        %1536 = vmatpush2.msra.mxu0 0.0
        %1537 = vmatprep.subr.mxu0 0.0
        %1538 = vmatpush2.msra.mxu0 0.0
        %1539 = vmatprep.subr.mxu0 0.0
        %1540 = vmatpush2.msra.mxu0 0.0
        %1541 = vmatprep.subr.mxu0 0.0
        %1542 = vmatpush2.msra.mxu0 0.0
        %1543 = vmatprep.subr.mxu0 0.0
        %1544 = vmatpush2.msra.mxu0 0.0
        %1545 = vmatprep.subr.mxu0 0.0
        %1546 = vmatpush2.msra.mxu0 0.0
        %1547 = vmatprep.subr.mxu0 0.0
        %1548 = vmatpush2.msra.mxu0 0.0
        %1549 = vmatprep.subr.mxu0 0.0
        %1550 = vmatpush2.msra.mxu0 0.0
        %1551 = vmatprep.subr.mxu0 0.0
        %1552 = vmatpush2.msra.mxu0 0.0
        %1553 = vmatprep.subr.mxu0 0.0
        %1554 = vmatpush2.msra.mxu0 0.0
        %1555 = vmatprep.subr.mxu0 0.0
        %1556 = vmatpush2.msra.mxu0 0.0
        %1557 = vmatprep.subr.mxu0 0.0
        %1558 = vmatpush2.msra.mxu0 0.0
        %1559 = vmatprep.subr.mxu0 0.0
        %1560 = vmatpush2.msra.mxu0 0.0
        %1561 = vmatprep.mubr.f32.mxu0 0.0
        %1562 = vmatmul.mubr.f32.gmra.mxu0 %v1402
        %v1563 = vpop.f32.mrf.mxu0
        %v1564 = vadd.f32 %v1495, %v1563
        %v1565 = vpop.f32.mrf.mxu0
        %1566 = vmatprep.mubr.f32.mxu0 0.0
        %1567 = vmatmul.mubr.f32.gmra.mxu0 %v1405
        %v1568 = vpop.f32.mrf.mxu0
        %v1569 = vadd.f32 %v1495, %v1568
        %v1570 = vpop.f32.mrf.mxu0
        %1571 = vdwg.mxu0
        %v1572 = vld [vmem:[%s8] sm:$0xff]
        %v1573 = vld [vmem:[%s8 + $0x8] sm:$0xff]
        %v1574 = vld [vmem:[%s8 + $0x10] sm:$0xff]
        %v1575 = vld [vmem:[%s8 + $0x18] sm:$0xff]
        %v1576 = vld [vmem:[%s8 + $0x20] sm:$0xff]
        %v1577 = vld [vmem:[%s8 + $0x28] sm:$0xff]
        %v1578 = vld [vmem:[%s8 + $0x30] sm:$0xff]
        %v1579 = vld [vmem:[%s8 + $0x38] sm:$0xff]
        %v1580 = vld [vmem:[%s11] sm:$0x1]
        %v1582 = vlaneseq
        %v1583 = vshrl.u32 %v1582, 7
        %v1584 = vsub.s32 0, %v1583
        %v1585 = vrot.slane %v1580, %v1584
        %1587 = vmatprep.subr.mxu0 0.0
        %1588 = vmatpush1.msra.mxu0 0.0
        %1589 = vmatprep.subr.mxu0 0.0
        %1590 = vmatpush1.msra.mxu0 0.0
        %1591 = vmatprep.subr.mxu0 0.0
        %1592 = vmatpush1.msra.mxu0 0.0
        %1593 = vmatprep.subr.mxu0 0.0
        %1594 = vmatpush1.msra.mxu0 0.0
        %1595 = vmatprep.subr.mxu0 0.0
        %1596 = vmatpush1.msra.mxu0 0.0
        %1597 = vmatprep.subr.mxu0 0.0
        %1598 = vmatpush1.msra.mxu0 0.0
        %1599 = vmatprep.subr.mxu0 0.0
        %1600 = vmatpush1.msra.mxu0 0.0
        %1601 = vmatprep.subr.mxu0 0.0
        %1602 = vmatpush1.msra.mxu0 0.0
        %1603 = vmatprep.subr.mxu0 0.0
        %1604 = vmatpush1.msra.mxu0 %v1579
        %1605 = vmatprep.subr.mxu0 0.0
        %1606 = vmatpush1.msra.mxu0 %v1578
        %1607 = vmatprep.subr.mxu0 0.0
        %1608 = vmatpush1.msra.mxu0 %v1577
        %1609 = vmatprep.subr.mxu0 0.0
        %1610 = vmatpush1.msra.mxu0 %v1576
        %1611 = vmatprep.subr.mxu0 0.0
        %1612 = vmatpush1.msra.mxu0 %v1575
        %1613 = vmatprep.subr.mxu0 0.0
        %1614 = vmatpush1.msra.mxu0 %v1574
        %1615 = vmatprep.subr.mxu0 0.0
        %1616 = vmatpush1.msra.mxu0 %v1573
        %1617 = vmatprep.subr.mxu0 0.0
        %1618 = vmatpush1.msra.mxu0 %v1572
        %1619 = vmatprep.subr.mxu0 0.0
        %1620 = vmatpush2.msra.mxu0 0.0
        %1621 = vmatprep.subr.mxu0 0.0
        %1622 = vmatpush2.msra.mxu0 0.0
        %1623 = vmatprep.subr.mxu0 0.0
        %1624 = vmatpush2.msra.mxu0 0.0
        %1625 = vmatprep.subr.mxu0 0.0
        %1626 = vmatpush2.msra.mxu0 0.0
        %1627 = vmatprep.subr.mxu0 0.0
        %1628 = vmatpush2.msra.mxu0 0.0
        %1629 = vmatprep.subr.mxu0 0.0
        %1630 = vmatpush2.msra.mxu0 0.0
        %1631 = vmatprep.subr.mxu0 0.0
        %1632 = vmatpush2.msra.mxu0 0.0
        %1633 = vmatprep.subr.mxu0 0.0
        %1634 = vmatpush2.msra.mxu0 0.0
        %1635 = vmatprep.subr.mxu0 0.0
        %1636 = vmatpush2.msra.mxu0 0.0
        %1637 = vmatprep.subr.mxu0 0.0
        %1638 = vmatpush2.msra.mxu0 0.0
        %1639 = vmatprep.subr.mxu0 0.0
        %1640 = vmatpush2.msra.mxu0 0.0
        %1641 = vmatprep.subr.mxu0 0.0
        %1642 = vmatpush2.msra.mxu0 0.0
        %1643 = vmatprep.subr.mxu0 0.0
        %1644 = vmatpush2.msra.mxu0 0.0
        %1645 = vmatprep.subr.mxu0 0.0
        %1646 = vmatpush2.msra.mxu0 0.0
        %1647 = vmatprep.subr.mxu0 0.0
        %1648 = vmatpush2.msra.mxu0 0.0
        %1649 = vmatprep.subr.mxu0 0.0
        %1650 = vmatpush2.msra.mxu0 0.0
        %1651 = vmatprep.mubr.f32.mxu0 0.0
        %1652 = vmatmul.mubr.f32.gmra.mxu0 %v1402
        %v1653 = vpop.f32.mrf.mxu0
        %v1654 = vadd.f32 %v1585, %v1653
        %v1655 = vpop.f32.mrf.mxu0
        %1656 = vmatprep.mubr.f32.mxu0 0.0
        %1657 = vmatmul.mubr.f32.gmra.mxu0 %v1405
        %v1658 = vpop.f32.mrf.mxu0
        %v1659 = vadd.f32 %v1585, %v1658
        %v1660 = vpop.f32.mrf.mxu0
        %1661 = vdwg.mxu0
        %v1662 = vld [vmem:[%s4] sm:$0xff]
        %v1663 = vld [vmem:[%s4 + $0x8] sm:$0xff]
        %v1664 = vld [vmem:[%s4 + $0x10] sm:$0xff]
        %v1665 = vld [vmem:[%s4 + $0x18] sm:$0xff]
        %v1666 = vld [vmem:[%s4 + $0x20] sm:$0xff]
        %v1667 = vld [vmem:[%s4 + $0x28] sm:$0xff]
        %v1668 = vld [vmem:[%s4 + $0x30] sm:$0xff]
        %v1669 = vld [vmem:[%s4 + $0x38] sm:$0xff]
        %v1670 = vld [vmem:[%s4 + $0x40] sm:$0xff]
        %v1671 = vld [vmem:[%s4 + $0x48] sm:$0xff]
        %v1672 = vld [vmem:[%s4 + $0x50] sm:$0xff]
        %v1673 = vld [vmem:[%s4 + $0x58] sm:$0xff]
        %v1674 = vld [vmem:[%s4 + $0x60] sm:$0xff]
        %v1675 = vld [vmem:[%s4 + $0x68] sm:$0xff]
        %v1676 = vld [vmem:[%s4 + $0x70] sm:$0xff]
        %v1677 = vld [vmem:[%s4 + $0x78] sm:$0xff]
        %v1678 = vmul.f32 %v1564, %v1662
        %v1679 = vmul.f32 %v1569, %v1663
        %v1680 = vmul.f32 %v1564, %v1664
        %v1681 = vmul.f32 %v1569, %v1665
        %v1682 = vmul.f32 %v1564, %v1666
        %v1683 = vmul.f32 %v1569, %v1667
        %v1684 = vmul.f32 %v1564, %v1668
        %v1685 = vmul.f32 %v1569, %v1669
        %v1686 = vmul.f32 %v1564, %v1670
        %v1687 = vmul.f32 %v1569, %v1671
        %v1688 = vmul.f32 %v1564, %v1672
        %v1689 = vmul.f32 %v1569, %v1673
        %v1690 = vmul.f32 %v1564, %v1674
        %v1691 = vmul.f32 %v1569, %v1675
        %v1692 = vmul.f32 %v1564, %v1676
        %v1693 = vmul.f32 %v1569, %v1677
        %v1694 = vmul.f32 %v1654, %v1662
        %v1695 = vmul.f32 %v1659, %v1663
        %v1696 = vmul.f32 %v1654, %v1664
        %v1697 = vmul.f32 %v1659, %v1665
        %v1698 = vmul.f32 %v1654, %v1666
        %v1699 = vmul.f32 %v1659, %v1667
        %v1700 = vmul.f32 %v1654, %v1668
        %v1701 = vmul.f32 %v1659, %v1669
        %v1702 = vmul.f32 %v1654, %v1670
        %v1703 = vmul.f32 %v1659, %v1671
        %v1704 = vmul.f32 %v1654, %v1672
        %v1705 = vmul.f32 %v1659, %v1673
        %v1706 = vmul.f32 %v1654, %v1674
        %v1707 = vmul.f32 %v1659, %v1675
        %v1708 = vmul.f32 %v1654, %v1676
        %v1709 = vmul.f32 %v1659, %v1677
        %v1710 = vmul.f32 %v1474, 0.35355338
        %v1711 = vmul.f32 %v1479, 0.35355338
        %v1713 = vsel %vm1400, %v1710, 0
        %v1716 = vsel %vm1400, %v1711, 0
        %v1719 = vsel %vm1400, %v1678, 0
        %v1722 = vsel %vm1400, %v1679, 0
        %v1725 = vsel %vm1400, %v1680, 0
        %v1728 = vsel %vm1400, %v1681, 0
        %v1731 = vsel %vm1400, %v1682, 0
        %v1734 = vsel %vm1400, %v1683, 0
        %v1737 = vsel %vm1400, %v1684, 0
        %v1740 = vsel %vm1400, %v1685, 0
        %v1743 = vsel %vm1400, %v1686, 0
        %v1746 = vsel %vm1400, %v1687, 0
        %v1749 = vsel %vm1400, %v1688, 0
        %v1752 = vsel %vm1400, %v1689, 0
        %v1755 = vsel %vm1400, %v1690, 0
        %v1758 = vsel %vm1400, %v1691, 0
        %v1761 = vsel %vm1400, %v1692, 0
        %v1764 = vsel %vm1400, %v1693, 0
        %1766 = vmatprep.subr.mxu0 0.0
        %1767 = vmatpush1.xpose.msra.mxu0 %v1764
        %1768 = vmatprep.subr.mxu0 0.0
        %1769 = vmatpush1.xpose.msra.mxu0 %v1761
        %1770 = vmatprep.subr.mxu0 0.0
        %1771 = vmatpush1.xpose.msra.mxu0 %v1758
        %1772 = vmatprep.subr.mxu0 0.0
        %1773 = vmatpush1.xpose.msra.mxu0 %v1755
        %1774 = vmatprep.subr.mxu0 0.0
        %1775 = vmatpush1.xpose.msra.mxu0 %v1752
        %1776 = vmatprep.subr.mxu0 0.0
        %1777 = vmatpush1.xpose.msra.mxu0 %v1749
        %1778 = vmatprep.subr.mxu0 0.0
        %1779 = vmatpush1.xpose.msra.mxu0 %v1746
        %1780 = vmatprep.subr.mxu0 0.0
        %1781 = vmatpush1.xpose.msra.mxu0 %v1743
        %1782 = vmatprep.subr.mxu0 0.0
        %1783 = vmatpush1.xpose.msra.mxu0 %v1740
        %1784 = vmatprep.subr.mxu0 0.0
        %1785 = vmatpush1.xpose.msra.mxu0 %v1737
        %1786 = vmatprep.subr.mxu0 0.0
        %1787 = vmatpush1.xpose.msra.mxu0 %v1734
        %1788 = vmatprep.subr.mxu0 0.0
        %1789 = vmatpush1.xpose.msra.mxu0 %v1731
        %1790 = vmatprep.subr.mxu0 0.0
        %1791 = vmatpush1.xpose.msra.mxu0 %v1728
        %1792 = vmatprep.subr.mxu0 0.0
        %1793 = vmatpush1.xpose.msra.mxu0 %v1725
        %1794 = vmatprep.subr.mxu0 0.0
        %1795 = vmatpush1.xpose.msra.mxu0 %v1722
        %1796 = vmatprep.subr.mxu0 0.0
        %1797 = vmatpush1.xpose.msra.mxu0 %v1719
        %1798 = vmatprep.subr.mxu0 0.0
        %1799 = vmatpush2.xpose.msra.mxu0 0.0
        %1800 = vmatprep.subr.mxu0 0.0
        %1801 = vmatpush2.xpose.msra.mxu0 0.0
        %1802 = vmatprep.subr.mxu0 0.0
        %1803 = vmatpush2.xpose.msra.mxu0 0.0
        %1804 = vmatprep.subr.mxu0 0.0
        %1805 = vmatpush2.xpose.msra.mxu0 0.0
        %1806 = vmatprep.subr.mxu0 0.0
        %1807 = vmatpush2.xpose.msra.mxu0 0.0
        %1808 = vmatprep.subr.mxu0 0.0
        %1809 = vmatpush2.xpose.msra.mxu0 0.0
        %1810 = vmatprep.subr.mxu0 0.0
        %1811 = vmatpush2.xpose.msra.mxu0 0.0
        %1812 = vmatprep.subr.mxu0 0.0
        %1813 = vmatpush2.xpose.msra.mxu0 0.0
        %1814 = vmatprep.subr.mxu0 0.0
        %1815 = vmatpush2.xpose.msra.mxu0 0.0
        %1816 = vmatprep.subr.mxu0 0.0
        %1817 = vmatpush2.xpose.msra.mxu0 0.0
        %1818 = vmatprep.subr.mxu0 0.0
        %1819 = vmatpush2.xpose.msra.mxu0 0.0
        %1820 = vmatprep.subr.mxu0 0.0
        %1821 = vmatpush2.xpose.msra.mxu0 0.0
        %1822 = vmatprep.subr.mxu0 0.0
        %1823 = vmatpush2.xpose.msra.mxu0 0.0
        %1824 = vmatprep.subr.mxu0 0.0
        %1825 = vmatpush2.xpose.msra.mxu0 0.0
        %1826 = vmatprep.subr.mxu0 0.0
        %1827 = vmatpush2.xpose.msra.mxu0 0.0
        %1828 = vmatprep.subr.mxu0 0.0
        %1829 = vmatpush2.xpose.msra.mxu0 0.0
        %1830 = vmatprep.mubr.f32.mxu0 0.0
        %1831 = vmatmul.mubr.f32.gmra.mxu0 %v1713
        %v1832 = vpop.f32.mrf.mxu0
        %v1833 = vadd.f32 0.0, %v1832
        %v1834 = vpop.f32.mrf.mxu0
        %1835 = vmatprep.mubr.f32.mxu0 0.0
        %1836 = vmatmul.mubr.f32.gmra.mxu0 %v1716
        %v1837 = vpop.f32.mrf.mxu0
        %v1838 = vadd.f32 0.0, %v1837
        %v1839 = vpop.f32.mrf.mxu0
        %1840 = vdwg.mxu0
        %v1841 = vld [vmem:[%s5] sm:$0xff]
        %v1842 = vld [vmem:[%s5 + $0x8] sm:$0xff]
        %v1843 = vld [vmem:[%s5 + $0x10] sm:$0xff]
        %v1844 = vld [vmem:[%s5 + $0x18] sm:$0xff]
        %v1845 = vld [vmem:[%s5 + $0x20] sm:$0xff]
        %v1846 = vld [vmem:[%s5 + $0x28] sm:$0xff]
        %v1847 = vld [vmem:[%s5 + $0x30] sm:$0xff]
        %v1848 = vld [vmem:[%s5 + $0x38] sm:$0xff]
        %v1849 = vld [vmem:[%s5 + $0x40] sm:$0xff]
        %v1850 = vld [vmem:[%s5 + $0x48] sm:$0xff]
        %v1851 = vld [vmem:[%s5 + $0x50] sm:$0xff]
        %v1852 = vld [vmem:[%s5 + $0x58] sm:$0xff]
        %v1853 = vld [vmem:[%s5 + $0x60] sm:$0xff]
        %v1854 = vld [vmem:[%s5 + $0x68] sm:$0xff]
        %v1855 = vld [vmem:[%s5 + $0x70] sm:$0xff]
        %v1856 = vld [vmem:[%s5 + $0x78] sm:$0xff]
        %v1857 = vadd.f32 %v1833, %v1841
        %v1858 = vadd.f32 %v1838, %v1842
        %v1859 = vadd.f32 %v1833, %v1843
        %v1860 = vadd.f32 %v1838, %v1844
        %v1861 = vadd.f32 %v1833, %v1845
        %v1862 = vadd.f32 %v1838, %v1846
        %v1863 = vadd.f32 %v1833, %v1847
        %v1864 = vadd.f32 %v1838, %v1848
        %v1865 = vadd.f32 %v1833, %v1849
        %v1866 = vadd.f32 %v1838, %v1850
        %v1867 = vadd.f32 %v1833, %v1851
        %v1868 = vadd.f32 %v1838, %v1852
        %v1869 = vadd.f32 %v1833, %v1853
        %v1870 = vadd.f32 %v1838, %v1854
        %v1871 = vadd.f32 %v1833, %v1855
        %v1872 = vadd.f32 %v1838, %v1856
        %1873 = vmax.xlane.f32.xlu0 %v1857
        %v1874 = vpop.xlane.xlu0 %1873
        %1875 = vmax.xlane.f32.xlu0 %v1858
        %v1876 = vpop.xlane.xlu0 %1875
        %1877 = vmax.xlane.f32.xlu0 %v1859
        %v1878 = vpop.xlane.xlu0 %1877
        %1879 = vmax.xlane.f32.xlu0 %v1860
        %v1880 = vpop.xlane.xlu0 %1879
        %1881 = vmax.xlane.f32.xlu0 %v1861
        %v1882 = vpop.xlane.xlu0 %1881
        %1883 = vmax.xlane.f32.xlu0 %v1862
        %v1884 = vpop.xlane.xlu0 %1883
        %1885 = vmax.xlane.f32.xlu0 %v1863
        %v1886 = vpop.xlane.xlu0 %1885
        %1887 = vmax.xlane.f32.xlu0 %v1864
        %v1888 = vpop.xlane.xlu0 %1887
        %1889 = vmax.xlane.f32.xlu0 %v1865
        %v1890 = vpop.xlane.xlu0 %1889
        %1891 = vmax.xlane.f32.xlu0 %v1866
        %v1892 = vpop.xlane.xlu0 %1891
        %1893 = vmax.xlane.f32.xlu0 %v1867
        %v1894 = vpop.xlane.xlu0 %1893
        %1895 = vmax.xlane.f32.xlu0 %v1868
        %v1896 = vpop.xlane.xlu0 %1895
        %1897 = vmax.xlane.f32.xlu0 %v1869
        %v1898 = vpop.xlane.xlu0 %1897
        %1899 = vmax.xlane.f32.xlu0 %v1870
        %v1900 = vpop.xlane.xlu0 %1899
        %1901 = vmax.xlane.f32.xlu0 %v1871
        %v1902 = vpop.xlane.xlu0 %1901
        %1903 = vmax.xlane.f32.xlu0 %v1872
        %v1904 = vpop.xlane.xlu0 %1903
        %v1905 = vsub.f32 %v1857, %v1874
        %v1906 = vsub.f32 %v1858, %v1876
        %v1907 = vsub.f32 %v1859, %v1878
        %v1908 = vsub.f32 %v1860, %v1880
        %v1909 = vsub.f32 %v1861, %v1882
        %v1910 = vsub.f32 %v1862, %v1884
        %v1911 = vsub.f32 %v1863, %v1886
        %v1912 = vsub.f32 %v1864, %v1888
        %v1913 = vsub.f32 %v1865, %v1890
        %v1914 = vsub.f32 %v1866, %v1892
        %v1915 = vsub.f32 %v1867, %v1894
        %v1916 = vsub.f32 %v1868, %v1896
        %v1917 = vsub.f32 %v1869, %v1898
        %v1918 = vsub.f32 %v1870, %v1900
        %v1919 = vsub.f32 %v1871, %v1902
        %v1920 = vsub.f32 %v1872, %v1904
        %v1921 = vmul.f32 %v1905, 1.442695
        %v1922 = vpow.pop %v1921
        %v1923 = vmul.f32 %v1906, 1.442695
        %v1924 = vpow.pop %v1923
        %v1925 = vmul.f32 %v1907, 1.442695
        %v1926 = vpow.pop %v1925
        %v1927 = vmul.f32 %v1908, 1.442695
        %v1928 = vpow.pop %v1927
        %v1929 = vmul.f32 %v1909, 1.442695
        %v1930 = vpow.pop %v1929
        %v1931 = vmul.f32 %v1910, 1.442695
        %v1932 = vpow.pop %v1931
        %v1933 = vmul.f32 %v1911, 1.442695
        %v1934 = vpow.pop %v1933
        %v1935 = vmul.f32 %v1912, 1.442695
        %v1936 = vpow.pop %v1935
        %v1937 = vmul.f32 %v1913, 1.442695
        %v1938 = vpow.pop %v1937
        %v1939 = vmul.f32 %v1914, 1.442695
        %v1940 = vpow.pop %v1939
        %v1941 = vmul.f32 %v1915, 1.442695
        %v1942 = vpow.pop %v1941
        %v1943 = vmul.f32 %v1916, 1.442695
        %v1944 = vpow.pop %v1943
        %v1945 = vmul.f32 %v1917, 1.442695
        %v1946 = vpow.pop %v1945
        %v1947 = vmul.f32 %v1918, 1.442695
        %v1948 = vpow.pop %v1947
        %v1949 = vmul.f32 %v1919, 1.442695
        %v1950 = vpow.pop %v1949
        %v1951 = vmul.f32 %v1920, 1.442695
        %v1952 = vpow.pop %v1951
        %1953 = vadd.xlane.f32.xlu0 %v1922
        %v1954 = vpop.xlane.xlu0 %1953
        %1955 = vadd.xlane.f32.xlu0 %v1924
        %v1956 = vpop.xlane.xlu0 %1955
        %1957 = vadd.xlane.f32.xlu0 %v1926
        %v1958 = vpop.xlane.xlu0 %1957
        %1959 = vadd.xlane.f32.xlu0 %v1928
        %v1960 = vpop.xlane.xlu0 %1959
        %1961 = vadd.xlane.f32.xlu0 %v1930
        %v1962 = vpop.xlane.xlu0 %1961
        %1963 = vadd.xlane.f32.xlu0 %v1932
        %v1964 = vpop.xlane.xlu0 %1963
        %1965 = vadd.xlane.f32.xlu0 %v1934
        %v1966 = vpop.xlane.xlu0 %1965
        %1967 = vadd.xlane.f32.xlu0 %v1936
        %v1968 = vpop.xlane.xlu0 %1967
        %1969 = vadd.xlane.f32.xlu0 %v1938
        %v1970 = vpop.xlane.xlu0 %1969
        %1971 = vadd.xlane.f32.xlu0 %v1940
        %v1972 = vpop.xlane.xlu0 %1971
        %1973 = vadd.xlane.f32.xlu0 %v1942
        %v1974 = vpop.xlane.xlu0 %1973
        %1975 = vadd.xlane.f32.xlu0 %v1944
        %v1976 = vpop.xlane.xlu0 %1975
        %1977 = vadd.xlane.f32.xlu0 %v1946
        %v1978 = vpop.xlane.xlu0 %1977
        %1979 = vadd.xlane.f32.xlu0 %v1948
        %v1980 = vpop.xlane.xlu0 %1979
        %1981 = vadd.xlane.f32.xlu0 %v1950
        %v1982 = vpop.xlane.xlu0 %1981
        %1983 = vadd.xlane.f32.xlu0 %v1952
        %v1984 = vpop.xlane.xlu0 %1983
        %v1985 = vrcp.pop %v1954
        %v1986 = vrcp.pop %v1956
        %v1987 = vrcp.pop %v1958
        %v1988 = vrcp.pop %v1960
        %v1989 = vrcp.pop %v1962
        %v1990 = vrcp.pop %v1964
        %v1991 = vrcp.pop %v1966
        %v1992 = vrcp.pop %v1968
        %v1993 = vrcp.pop %v1970
        %v1994 = vrcp.pop %v1972
        %v1995 = vrcp.pop %v1974
        %v1996 = vrcp.pop %v1976
        %v1997 = vrcp.pop %v1978
        %v1998 = vrcp.pop %v1980
        %v1999 = vrcp.pop %v1982
        %v2000 = vrcp.pop %v1984
        %v2001 = vmul.f32 %v1922, %v1985
        %v2002 = vmul.f32 %v1924, %v1986
        %v2003 = vmul.f32 %v1926, %v1987
        %v2004 = vmul.f32 %v1928, %v1988
        %v2005 = vmul.f32 %v1930, %v1989
        %v2006 = vmul.f32 %v1932, %v1990
        %v2007 = vmul.f32 %v1934, %v1991
        %v2008 = vmul.f32 %v1936, %v1992
        %v2009 = vmul.f32 %v1938, %v1993
        %v2010 = vmul.f32 %v1940, %v1994
        %v2011 = vmul.f32 %v1942, %v1995
        %v2012 = vmul.f32 %v1944, %v1996
        %v2013 = vmul.f32 %v1946, %v1997
        %v2014 = vmul.f32 %v1948, %v1998
        %v2015 = vmul.f32 %v1950, %v1999
        %v2016 = vmul.f32 %v1952, %v2000
        %2017 = vmatprep.subr.mxu0 0.0
        %2018 = vmatpush1.msra.mxu0 %v1709
        %2019 = vmatprep.subr.mxu0 0.0
        %2020 = vmatpush1.msra.mxu0 %v1708
        %2021 = vmatprep.subr.mxu0 0.0
        %2022 = vmatpush1.msra.mxu0 %v1707
        %2023 = vmatprep.subr.mxu0 0.0
        %2024 = vmatpush1.msra.mxu0 %v1706
        %2025 = vmatprep.subr.mxu0 0.0
        %2026 = vmatpush1.msra.mxu0 %v1705
        %2027 = vmatprep.subr.mxu0 0.0
        %2028 = vmatpush1.msra.mxu0 %v1704
        %2029 = vmatprep.subr.mxu0 0.0
        %2030 = vmatpush1.msra.mxu0 %v1703
        %2031 = vmatprep.subr.mxu0 0.0
        %2032 = vmatpush1.msra.mxu0 %v1702
        %2033 = vmatprep.subr.mxu0 0.0
        %2034 = vmatpush1.msra.mxu0 %v1701
        %2035 = vmatprep.subr.mxu0 0.0
        %2036 = vmatpush1.msra.mxu0 %v1700
        %2037 = vmatprep.subr.mxu0 0.0
        %2038 = vmatpush1.msra.mxu0 %v1699
        %2039 = vmatprep.subr.mxu0 0.0
        %2040 = vmatpush1.msra.mxu0 %v1698
        %2041 = vmatprep.subr.mxu0 0.0
        %2042 = vmatpush1.msra.mxu0 %v1697
        %2043 = vmatprep.subr.mxu0 0.0
        %2044 = vmatpush1.msra.mxu0 %v1696
        %2045 = vmatprep.subr.mxu0 0.0
        %2046 = vmatpush1.msra.mxu0 %v1695
        %2047 = vmatprep.subr.mxu0 0.0
        %2048 = vmatpush1.msra.mxu0 %v1694
        %2049 = vmatprep.subr.mxu0 0.0
        %2050 = vmatpush2.msra.mxu0 0.0
        %2051 = vmatprep.subr.mxu0 0.0
        %2052 = vmatpush2.msra.mxu0 0.0
        %2053 = vmatprep.subr.mxu0 0.0
        %2054 = vmatpush2.msra.mxu0 0.0
        %2055 = vmatprep.subr.mxu0 0.0
        %2056 = vmatpush2.msra.mxu0 0.0
        %2057 = vmatprep.subr.mxu0 0.0
        %2058 = vmatpush2.msra.mxu0 0.0
        %2059 = vmatprep.subr.mxu0 0.0
        %2060 = vmatpush2.msra.mxu0 0.0
        %2061 = vmatprep.subr.mxu0 0.0
        %2062 = vmatpush2.msra.mxu0 0.0
        %2063 = vmatprep.subr.mxu0 0.0
        %2064 = vmatpush2.msra.mxu0 0.0
        %2065 = vmatprep.subr.mxu0 0.0
        %2066 = vmatpush2.msra.mxu0 0.0
        %2067 = vmatprep.subr.mxu0 0.0
        %2068 = vmatpush2.msra.mxu0 0.0
        %2069 = vmatprep.subr.mxu0 0.0
        %2070 = vmatpush2.msra.mxu0 0.0
        %2071 = vmatprep.subr.mxu0 0.0
        %2072 = vmatpush2.msra.mxu0 0.0
        %2073 = vmatprep.subr.mxu0 0.0
        %2074 = vmatpush2.msra.mxu0 0.0
        %2075 = vmatprep.subr.mxu0 0.0
        %2076 = vmatpush2.msra.mxu0 0.0
        %2077 = vmatprep.subr.mxu0 0.0
        %2078 = vmatpush2.msra.mxu0 0.0
        %2079 = vmatprep.subr.mxu0 0.0
        %2080 = vmatpush2.msra.mxu0 0.0
        %2081 = vmatprep.mubr.f32.mxu0 0.0
        %2082 = vmatmul.mubr.f32.gmra.mxu0 %v2001
        %v2083 = vpop.f32.mrf.mxu0
        %v2084 = vadd.f32 0.0, %v2083
        %v2085 = vpop.f32.mrf.mxu0
        %2086 = vmatprep.mubr.f32.mxu0 0.0
        %2087 = vmatmul.mubr.f32.gmra.mxu0 %v2002
        %v2088 = vpop.f32.mrf.mxu0
        %v2089 = vadd.f32 0.0, %v2088
        %v2090 = vpop.f32.mrf.mxu0
        %2091 = vmatprep.mubr.f32.mxu0 0.0
        %2092 = vmatmul.mubr.f32.gmra.mxu0 %v2003
        %v2093 = vpop.f32.mrf.mxu0
        %v2094 = vadd.f32 0.0, %v2093
        %v2095 = vpop.f32.mrf.mxu0
        %2096 = vmatprep.mubr.f32.mxu0 0.0
        %2097 = vmatmul.mubr.f32.gmra.mxu0 %v2004
        %v2098 = vpop.f32.mrf.mxu0
        %v2099 = vadd.f32 0.0, %v2098
        %v2100 = vpop.f32.mrf.mxu0
        %2101 = vmatprep.mubr.f32.mxu0 0.0
        %2102 = vmatmul.mubr.f32.gmra.mxu0 %v2005
        %v2103 = vpop.f32.mrf.mxu0
        %v2104 = vadd.f32 0.0, %v2103
        %v2105 = vpop.f32.mrf.mxu0
        %2106 = vmatprep.mubr.f32.mxu0 0.0
        %2107 = vmatmul.mubr.f32.gmra.mxu0 %v2006
        %v2108 = vpop.f32.mrf.mxu0
        %v2109 = vadd.f32 0.0, %v2108
        %v2110 = vpop.f32.mrf.mxu0
        %2111 = vmatprep.mubr.f32.mxu0 0.0
        %2112 = vmatmul.mubr.f32.gmra.mxu0 %v2007
        %v2113 = vpop.f32.mrf.mxu0
        %v2114 = vadd.f32 0.0, %v2113
        %v2115 = vpop.f32.mrf.mxu0
        %2116 = vmatprep.mubr.f32.mxu0 0.0
        %2117 = vmatmul.mubr.f32.gmra.mxu0 %v2008
        %v2118 = vpop.f32.mrf.mxu0
        %v2119 = vadd.f32 0.0, %v2118
        %v2120 = vpop.f32.mrf.mxu0
        %2121 = vmatprep.mubr.f32.mxu0 0.0
        %2122 = vmatmul.mubr.f32.gmra.mxu0 %v2009
        %v2123 = vpop.f32.mrf.mxu0
        %v2124 = vadd.f32 0.0, %v2123
        %v2125 = vpop.f32.mrf.mxu0
        %2126 = vmatprep.mubr.f32.mxu0 0.0
        %2127 = vmatmul.mubr.f32.gmra.mxu0 %v2010
        %v2128 = vpop.f32.mrf.mxu0
        %v2129 = vadd.f32 0.0, %v2128
        %v2130 = vpop.f32.mrf.mxu0
        %2131 = vmatprep.mubr.f32.mxu0 0.0
        %2132 = vmatmul.mubr.f32.gmra.mxu0 %v2011
        %v2133 = vpop.f32.mrf.mxu0
        %v2134 = vadd.f32 0.0, %v2133
        %v2135 = vpop.f32.mrf.mxu0
        %2136 = vmatprep.mubr.f32.mxu0 0.0
        %2137 = vmatmul.mubr.f32.gmra.mxu0 %v2012
        %v2138 = vpop.f32.mrf.mxu0
        %v2139 = vadd.f32 0.0, %v2138
        %v2140 = vpop.f32.mrf.mxu0
        %2141 = vmatprep.mubr.f32.mxu0 0.0
        %2142 = vmatmul.mubr.f32.gmra.mxu0 %v2013
        %v2143 = vpop.f32.mrf.mxu0
        %v2144 = vadd.f32 0.0, %v2143
        %v2145 = vpop.f32.mrf.mxu0
        %2146 = vmatprep.mubr.f32.mxu0 0.0
        %2147 = vmatmul.mubr.f32.gmra.mxu0 %v2014
        %v2148 = vpop.f32.mrf.mxu0
        %v2149 = vadd.f32 0.0, %v2148
        %v2150 = vpop.f32.mrf.mxu0
        %2151 = vmatprep.mubr.f32.mxu0 0.0
        %2152 = vmatmul.mubr.f32.gmra.mxu0 %v2015
        %v2153 = vpop.f32.mrf.mxu0
        %v2154 = vadd.f32 0.0, %v2153
        %v2155 = vpop.f32.mrf.mxu0
        %2156 = vmatprep.mubr.f32.mxu0 0.0
        %2157 = vmatmul.mubr.f32.gmra.mxu0 %v2016
        %v2158 = vpop.f32.mrf.mxu0
        %v2159 = vadd.f32 0.0, %v2158
        %v2160 = vpop.f32.mrf.mxu0
        %2161 = vdwg.mxu0
        %v2162 = vadd.f32 %v2084, %v2094
        %v2163 = vadd.f32 %v2089, %v2099
        %v2164 = vadd.f32 %v2162, %v2104
        %v2165 = vadd.f32 %v2163, %v2109
        %v2166 = vadd.f32 %v2164, %v2114
        %v2167 = vadd.f32 %v2165, %v2119
        %v2168 = vadd.f32 %v2166, %v2124
        %v2169 = vadd.f32 %v2167, %v2129
        %v2170 = vadd.f32 %v2168, %v2134
        %v2171 = vadd.f32 %v2169, %v2139
        %v2172 = vadd.f32 %v2170, %v2144
        %v2173 = vadd.f32 %v2171, %v2149
        %v2174 = vadd.f32 %v2172, %v2154
        %v2175 = vadd.f32 %v2173, %v2159
        %v2176 = vld [vmem:[%s12] sm:$0xff]
        %v2177 = vld [vmem:[%s12 + $0x8] sm:$0xff]
        %v2178 = vld [vmem:[%s12 + $0x10] sm:$0xff]
        %v2179 = vld [vmem:[%s12 + $0x18] sm:$0xff]
        %v2180 = vld [vmem:[%s12 + $0x20] sm:$0xff]
        %v2181 = vld [vmem:[%s12 + $0x28] sm:$0xff]
        %v2182 = vld [vmem:[%s12 + $0x30] sm:$0xff]
        %v2183 = vld [vmem:[%s12 + $0x38] sm:$0xff]
        %v2184 = vld [vmem:[%s13] sm:$0x1]
        %v2186 = vlaneseq
        %v2187 = vshrl.u32 %v2186, 7
        %v2188 = vsub.s32 0, %v2187
        %v2189 = vrot.slane %v2184, %v2188
        %v2192 = vsel %vm1400, %v2174, 0
        %v2195 = vsel %vm1400, %v2175, 0
        %2197 = vmatprep.subr.mxu0 0.0
        %2198 = vmatpush1.msra.mxu0 0.0
        %2199 = vmatprep.subr.mxu0 0.0
        %2200 = vmatpush1.msra.mxu0 0.0
        %2201 = vmatprep.subr.mxu0 0.0
        %2202 = vmatpush1.msra.mxu0 0.0
        %2203 = vmatprep.subr.mxu0 0.0
        %2204 = vmatpush1.msra.mxu0 0.0
        %2205 = vmatprep.subr.mxu0 0.0
        %2206 = vmatpush1.msra.mxu0 0.0
        %2207 = vmatprep.subr.mxu0 0.0
        %2208 = vmatpush1.msra.mxu0 0.0
        %2209 = vmatprep.subr.mxu0 0.0
        %2210 = vmatpush1.msra.mxu0 0.0
        %2211 = vmatprep.subr.mxu0 0.0
        %2212 = vmatpush1.msra.mxu0 0.0
        %2213 = vmatprep.subr.mxu0 0.0
        %2214 = vmatpush1.msra.mxu0 %v2183
        %2215 = vmatprep.subr.mxu0 0.0
        %2216 = vmatpush1.msra.mxu0 %v2182
        %2217 = vmatprep.subr.mxu0 0.0
        %2218 = vmatpush1.msra.mxu0 %v2181
        %2219 = vmatprep.subr.mxu0 0.0
        %2220 = vmatpush1.msra.mxu0 %v2180
        %2221 = vmatprep.subr.mxu0 0.0
        %2222 = vmatpush1.msra.mxu0 %v2179
        %2223 = vmatprep.subr.mxu0 0.0
        %2224 = vmatpush1.msra.mxu0 %v2178
        %2225 = vmatprep.subr.mxu0 0.0
        %2226 = vmatpush1.msra.mxu0 %v2177
        %2227 = vmatprep.subr.mxu0 0.0
        %2228 = vmatpush1.msra.mxu0 %v2176
        %2229 = vmatprep.subr.mxu0 0.0
        %2230 = vmatpush2.msra.mxu0 0.0
        %2231 = vmatprep.subr.mxu0 0.0
        %2232 = vmatpush2.msra.mxu0 0.0
        %2233 = vmatprep.subr.mxu0 0.0
        %2234 = vmatpush2.msra.mxu0 0.0
        %2235 = vmatprep.subr.mxu0 0.0
        %2236 = vmatpush2.msra.mxu0 0.0
        %2237 = vmatprep.subr.mxu0 0.0
        %2238 = vmatpush2.msra.mxu0 0.0
        %2239 = vmatprep.subr.mxu0 0.0
        %2240 = vmatpush2.msra.mxu0 0.0
        %2241 = vmatprep.subr.mxu0 0.0
        %2242 = vmatpush2.msra.mxu0 0.0
        %2243 = vmatprep.subr.mxu0 0.0
        %2244 = vmatpush2.msra.mxu0 0.0
        %2245 = vmatprep.subr.mxu0 0.0
        %2246 = vmatpush2.msra.mxu0 0.0
        %2247 = vmatprep.subr.mxu0 0.0
        %2248 = vmatpush2.msra.mxu0 0.0
        %2249 = vmatprep.subr.mxu0 0.0
        %2250 = vmatpush2.msra.mxu0 0.0
        %2251 = vmatprep.subr.mxu0 0.0
        %2252 = vmatpush2.msra.mxu0 0.0
        %2253 = vmatprep.subr.mxu0 0.0
        %2254 = vmatpush2.msra.mxu0 0.0
        %2255 = vmatprep.subr.mxu0 0.0
        %2256 = vmatpush2.msra.mxu0 0.0
        %2257 = vmatprep.subr.mxu0 0.0
        %2258 = vmatpush2.msra.mxu0 0.0
        %2259 = vmatprep.subr.mxu0 0.0
        %2260 = vmatpush2.msra.mxu0 0.0
        %2261 = vmatprep.mubr.f32.mxu0 0.0
        %2262 = vmatmul.mubr.f32.gmra.mxu0 %v2192
        %v2263 = vpop.f32.mrf.mxu0
        %v2264 = vadd.f32 %v2189, %v2263
        %v2265 = vpop.f32.mrf.mxu0
        %2266 = vmatprep.mubr.f32.mxu0 0.0
        %2267 = vmatmul.mubr.f32.gmra.mxu0 %v2195
        %v2268 = vpop.f32.mrf.mxu0
        %v2269 = vadd.f32 %v2189, %v2268
        %v2270 = vpop.f32.mrf.mxu0
        %2271 = vdwg.mxu0
        %v2272 = vadd.f32 %v1384, %v2264
        %v2273 = vadd.f32 %v1349, %v2269
        %v2274 = vld [vmem:[%s18] sm:$0x1]
        %v2275 = vld [vmem:[%s19] sm:$0x1]
        %v2276 = vsel %vm1400, %v2272, 0.0
        %2277 = vadd.xlane.f32.xlu0 %v2276
        %v2278 = vpop.xlane.xlu0 %2277
        %v2279 = vsel %vm1400, %v2273, 0.0
        %2280 = vadd.xlane.f32.xlu0 %v2279
        %v2281 = vpop.xlane.xlu0 %2280
        %v2282 = vrcp.pop 64.0
        %v2283 = vmul.f32 %v2278, %v2282
        %v2284 = vmul.f32 %v2281, %v2282
        %v2285 = vsub.f32 %v2272, %v2283
        %v2286 = vsub.f32 %v2273, %v2284
        %v2287 = vmul.f32 %v2285, %v2285
        %v2288 = vmul.f32 %v2286, %v2286
        %v2289 = vsel %vm1400, %v2287, 0.0
        %2290 = vadd.xlane.f32.xlu0 %v2289
        %v2291 = vpop.xlane.xlu0 %2290
        %v2292 = vsel %vm1400, %v2288, 0.0
        %2293 = vadd.xlane.f32.xlu0 %v2292
        %v2294 = vpop.xlane.xlu0 %2293
        %v2295 = vmul.f32 %v2291, %v2282
        %v2296 = vmul.f32 %v2294, %v2282
        %v2297 = vadd.f32 %v2295, 1e-05
        %v2298 = vadd.f32 %v2296, 1e-05
        %v2299 = vrsqrt.pop %v2297
        %v2300 = vrsqrt.pop %v2298
        %v2301 = vmul.f32 %v2285, %v2299
        %v2302 = vmul.f32 %v2286, %v2300
        %v2304 = vlaneseq
        %v2305 = vshrl.u32 %v2304, 7
        %v2306 = vsub.s32 0, %v2305
        %v2307 = vrot.slane %v2274, %v2306
        %v2309 = vmul.f32 %v2301, %v2307
        %v2310 = vmul.f32 %v2302, %v2307
        %v2312 = vlaneseq
        %v2313 = vshrl.u32 %v2312, 7
        %v2314 = vsub.s32 0, %v2313
        %v2315 = vrot.slane %v2275, %v2314
        %v2317 = vadd.f32 %v2309, %v2315
        %v2318 = vadd.f32 %v2310, %v2315
        %v2319 = vld [vmem:[%s14] sm:$0xff]
        %v2320 = vld [vmem:[%s14 + $0x8] sm:$0xff]
        %v2321 = vld [vmem:[%s14 + $0x10] sm:$0xff]
        %v2322 = vld [vmem:[%s14 + $0x18] sm:$0xff]
        %v2323 = vld [vmem:[%s14 + $0x20] sm:$0xff]
        %v2324 = vld [vmem:[%s14 + $0x28] sm:$0xff]
        %v2325 = vld [vmem:[%s14 + $0x30] sm:$0xff]
        %v2326 = vld [vmem:[%s14 + $0x38] sm:$0xff]
        %v2327 = vld [vmem:[%s14 + $0x40] sm:$0xff]
        %v2328 = vld [vmem:[%s14 + $0x48] sm:$0xff]
        %v2329 = vld [vmem:[%s14 + $0x50] sm:$0xff]
        %v2330 = vld [vmem:[%s14 + $0x58] sm:$0xff]
        %v2331 = vld [vmem:[%s14 + $0x60] sm:$0xff]
        %v2332 = vld [vmem:[%s14 + $0x68] sm:$0xff]
        %v2333 = vld [vmem:[%s14 + $0x70] sm:$0xff]
        %v2334 = vld [vmem:[%s14 + $0x78] sm:$0xff]
        %v2335 = vld [vmem:[%s15] sm:$0x3]
        %v2337 = vlaneseq
        %v2338 = vshrl.u32 %v2337, 7
        %v2339 = vsub.s32 0, %v2338
        %v2340 = vrot.slane %v2335, %v2339
        %v2341 = vlaneseq
        %v2342 = vshrl.u32 %v2341, 7
        %v2343 = vsub.s32 1, %v2342
        %v2344 = vrot.slane %v2335, %v2343
        %v2348 = vsel %vm1400, %v2317, 0
        %v2351 = vsel %vm1400, %v2318, 0
        %2353 = vmatprep.subr.mxu0 0.0
        %2354 = vmatpush1.msra.mxu0 0.0
        %2355 = vmatprep.subr.mxu0 0.0
        %2356 = vmatpush1.msra.mxu0 0.0
        %2357 = vmatprep.subr.mxu0 0.0
        %2358 = vmatpush1.msra.mxu0 0.0
        %2359 = vmatprep.subr.mxu0 0.0
        %2360 = vmatpush1.msra.mxu0 0.0
        %2361 = vmatprep.subr.mxu0 0.0
        %2362 = vmatpush1.msra.mxu0 0.0
        %2363 = vmatprep.subr.mxu0 0.0
        %2364 = vmatpush1.msra.mxu0 0.0
        %2365 = vmatprep.subr.mxu0 0.0
        %2366 = vmatpush1.msra.mxu0 0.0
        %2367 = vmatprep.subr.mxu0 0.0
        %2368 = vmatpush1.msra.mxu0 0.0
        %2369 = vmatprep.subr.mxu0 %v2334
        %2370 = vmatpush1.msra.mxu0 %v2333
        %2371 = vmatprep.subr.mxu0 %v2332
        %2372 = vmatpush1.msra.mxu0 %v2331
        %2373 = vmatprep.subr.mxu0 %v2330
        %2374 = vmatpush1.msra.mxu0 %v2329
        %2375 = vmatprep.subr.mxu0 %v2328
        %2376 = vmatpush1.msra.mxu0 %v2327
        %2377 = vmatprep.subr.mxu0 %v2326
        %2378 = vmatpush1.msra.mxu0 %v2325
        %2379 = vmatprep.subr.mxu0 %v2324
        %2380 = vmatpush1.msra.mxu0 %v2323
        %2381 = vmatprep.subr.mxu0 %v2322
        %2382 = vmatpush1.msra.mxu0 %v2321
        %2383 = vmatprep.subr.mxu0 %v2320
        %2384 = vmatpush1.msra.mxu0 %v2319
        %2385 = vmatprep.subr.mxu0 0.0
        %2386 = vmatpush2.msra.mxu0 0.0
        %2387 = vmatprep.subr.mxu0 0.0
        %2388 = vmatpush2.msra.mxu0 0.0
        %2389 = vmatprep.subr.mxu0 0.0
        %2390 = vmatpush2.msra.mxu0 0.0
        %2391 = vmatprep.subr.mxu0 0.0
        %2392 = vmatpush2.msra.mxu0 0.0
        %2393 = vmatprep.subr.mxu0 0.0
        %2394 = vmatpush2.msra.mxu0 0.0
        %2395 = vmatprep.subr.mxu0 0.0
        %2396 = vmatpush2.msra.mxu0 0.0
        %2397 = vmatprep.subr.mxu0 0.0
        %2398 = vmatpush2.msra.mxu0 0.0
        %2399 = vmatprep.subr.mxu0 0.0
        %2400 = vmatpush2.msra.mxu0 0.0
        %2401 = vmatprep.subr.mxu0 0.0
        %2402 = vmatpush2.msra.mxu0 0.0
        %2403 = vmatprep.subr.mxu0 0.0
        %2404 = vmatpush2.msra.mxu0 0.0
        %2405 = vmatprep.subr.mxu0 0.0
        %2406 = vmatpush2.msra.mxu0 0.0
        %2407 = vmatprep.subr.mxu0 0.0
        %2408 = vmatpush2.msra.mxu0 0.0
        %2409 = vmatprep.subr.mxu0 0.0
        %2410 = vmatpush2.msra.mxu0 0.0
        %2411 = vmatprep.subr.mxu0 0.0
        %2412 = vmatpush2.msra.mxu0 0.0
        %2413 = vmatprep.subr.mxu0 0.0
        %2414 = vmatpush2.msra.mxu0 0.0
        %2415 = vmatprep.subr.mxu0 0.0
        %2416 = vmatpush2.msra.mxu0 0.0
        %2417 = vmatprep.mubr.f32.mxu0 0.0
        %2418 = vmatmul.mubr.f32.gmra.mxu0 %v2348
        %v2419 = vpop.f32.mrf.mxu0
        %v2420 = vadd.f32 %v2340, %v2419
        %v2421 = vpop.f32.mrf.mxu0
        %v2422 = vadd.f32 %v2344, %v2421
        %2423 = vmatprep.mubr.f32.mxu0 0.0
        %2424 = vmatmul.mubr.f32.gmra.mxu0 %v2351
        %v2425 = vpop.f32.mrf.mxu0
        %v2426 = vadd.f32 %v2340, %v2425
        %v2427 = vpop.f32.mrf.mxu0
        %v2428 = vadd.f32 %v2344, %v2427
        %2429 = vdwg.mxu0
        %v2430 = vmax.f32 %v2420, 0.0
        %v2431 = vmax.f32 %v2422, 0.0
        %v2432 = vmax.f32 %v2426, 0.0
        %v2433 = vmax.f32 %v2428, 0.0
        %v2434 = vld [vmem:[%s16] sm:$0xff]
        %v2435 = vld [vmem:[%s16 + $0x8] sm:$0xff]
        %v2436 = vld [vmem:[%s16 + $0x10] sm:$0xff]
        %v2437 = vld [vmem:[%s16 + $0x18] sm:$0xff]
        %v2438 = vld [vmem:[%s16 + $0x20] sm:$0xff]
        %v2439 = vld [vmem:[%s16 + $0x28] sm:$0xff]
        %v2440 = vld [vmem:[%s16 + $0x30] sm:$0xff]
        %v2441 = vld [vmem:[%s16 + $0x38] sm:$0xff]
        %v2442 = vld [vmem:[%s16 + $0x40] sm:$0xff]
        %v2443 = vld [vmem:[%s16 + $0x48] sm:$0xff]
        %v2444 = vld [vmem:[%s16 + $0x50] sm:$0xff]
        %v2445 = vld [vmem:[%s16 + $0x58] sm:$0xff]
        %v2446 = vld [vmem:[%s16 + $0x60] sm:$0xff]
        %v2447 = vld [vmem:[%s16 + $0x68] sm:$0xff]
        %v2448 = vld [vmem:[%s16 + $0x70] sm:$0xff]
        %v2449 = vld [vmem:[%s16 + $0x78] sm:$0xff]
        %v2450 = vld [vmem:[%s16 + $0x80] sm:$0xff]
        %v2451 = vld [vmem:[%s16 + $0x88] sm:$0xff]
        %v2452 = vld [vmem:[%s16 + $0x90] sm:$0xff]
        %v2453 = vld [vmem:[%s16 + $0x98] sm:$0xff]
        %v2454 = vld [vmem:[%s16 + $0xa0] sm:$0xff]
        %v2455 = vld [vmem:[%s16 + $0xa8] sm:$0xff]
        %v2456 = vld [vmem:[%s16 + $0xb0] sm:$0xff]
        %v2457 = vld [vmem:[%s16 + $0xb8] sm:$0xff]
        %v2458 = vld [vmem:[%s16 + $0xc0] sm:$0xff]
        %v2459 = vld [vmem:[%s16 + $0xc8] sm:$0xff]
        %v2460 = vld [vmem:[%s16 + $0xd0] sm:$0xff]
        %v2461 = vld [vmem:[%s16 + $0xd8] sm:$0xff]
        %v2462 = vld [vmem:[%s16 + $0xe0] sm:$0xff]
        %v2463 = vld [vmem:[%s16 + $0xe8] sm:$0xff]
        %v2464 = vld [vmem:[%s16 + $0xf0] sm:$0xff]
        %v2465 = vld [vmem:[%s16 + $0xf8] sm:$0xff]
        %v2466 = vld [vmem:[%s17] sm:$0x1]
        %v2468 = vlaneseq
        %v2469 = vshrl.u32 %v2468, 7
        %v2470 = vsub.s32 0, %v2469
        %v2471 = vrot.slane %v2466, %v2470
        %2473 = vmatprep.subr.mxu0 0.0
        %2474 = vmatpush1.msra.mxu0 %v2449
        %2475 = vmatprep.subr.mxu0 0.0
        %2476 = vmatpush1.msra.mxu0 %v2448
        %2477 = vmatprep.subr.mxu0 0.0
        %2478 = vmatpush1.msra.mxu0 %v2447
        %2479 = vmatprep.subr.mxu0 0.0
        %2480 = vmatpush1.msra.mxu0 %v2446
        %2481 = vmatprep.subr.mxu0 0.0
        %2482 = vmatpush1.msra.mxu0 %v2445
        %2483 = vmatprep.subr.mxu0 0.0
        %2484 = vmatpush1.msra.mxu0 %v2444
        %2485 = vmatprep.subr.mxu0 0.0
        %2486 = vmatpush1.msra.mxu0 %v2443
        %2487 = vmatprep.subr.mxu0 0.0
        %2488 = vmatpush1.msra.mxu0 %v2442
        %2489 = vmatprep.subr.mxu0 0.0
        %2490 = vmatpush1.msra.mxu0 %v2441
        %2491 = vmatprep.subr.mxu0 0.0
        %2492 = vmatpush1.msra.mxu0 %v2440
        %2493 = vmatprep.subr.mxu0 0.0
        %2494 = vmatpush1.msra.mxu0 %v2439
        %2495 = vmatprep.subr.mxu0 0.0
        %2496 = vmatpush1.msra.mxu0 %v2438
        %2497 = vmatprep.subr.mxu0 0.0
        %2498 = vmatpush1.msra.mxu0 %v2437
        %2499 = vmatprep.subr.mxu0 0.0
        %2500 = vmatpush1.msra.mxu0 %v2436
        %2501 = vmatprep.subr.mxu0 0.0
        %2502 = vmatpush1.msra.mxu0 %v2435
        %2503 = vmatprep.subr.mxu0 0.0
        %2504 = vmatpush1.msra.mxu0 %v2434
        %2505 = vmatprep.subr.mxu0 0.0
        %2506 = vmatpush2.msra.mxu0 %v2465
        %2507 = vmatprep.subr.mxu0 0.0
        %2508 = vmatpush2.msra.mxu0 %v2464
        %2509 = vmatprep.subr.mxu0 0.0
        %2510 = vmatpush2.msra.mxu0 %v2463
        %2511 = vmatprep.subr.mxu0 0.0
        %2512 = vmatpush2.msra.mxu0 %v2462
        %2513 = vmatprep.subr.mxu0 0.0
        %2514 = vmatpush2.msra.mxu0 %v2461
        %2515 = vmatprep.subr.mxu0 0.0
        %2516 = vmatpush2.msra.mxu0 %v2460
        %2517 = vmatprep.subr.mxu0 0.0
        %2518 = vmatpush2.msra.mxu0 %v2459
        %2519 = vmatprep.subr.mxu0 0.0
        %2520 = vmatpush2.msra.mxu0 %v2458
        %2521 = vmatprep.subr.mxu0 0.0
        %2522 = vmatpush2.msra.mxu0 %v2457
        %2523 = vmatprep.subr.mxu0 0.0
        %2524 = vmatpush2.msra.mxu0 %v2456
        %2525 = vmatprep.subr.mxu0 0.0
        %2526 = vmatpush2.msra.mxu0 %v2455
        %2527 = vmatprep.subr.mxu0 0.0
        %2528 = vmatpush2.msra.mxu0 %v2454
        %2529 = vmatprep.subr.mxu0 0.0
        %2530 = vmatpush2.msra.mxu0 %v2453
        %2531 = vmatprep.subr.mxu0 0.0
        %2532 = vmatpush2.msra.mxu0 %v2452
        %2533 = vmatprep.subr.mxu0 0.0
        %2534 = vmatpush2.msra.mxu0 %v2451
        %2535 = vmatprep.subr.mxu0 0.0
        %2536 = vmatpush2.msra.mxu0 %v2450
        %2537 = vmatprep.mubr.f32.mxu0 %v2431
        %2538 = vmatmul.mubr.f32.gmra.mxu0 %v2430
        %v2539 = vpop.f32.mrf.mxu0
        %v2540 = vadd.f32 %v2471, %v2539
        %v2541 = vpop.f32.mrf.mxu0
        %2542 = vmatprep.mubr.f32.mxu0 %v2433
        %2543 = vmatmul.mubr.f32.gmra.mxu0 %v2432
        %v2544 = vpop.f32.mrf.mxu0
        %v2545 = vadd.f32 %v2471, %v2544
        %v2546 = vpop.f32.mrf.mxu0
        %2547 = vdwg.mxu0
        %v2548 = vadd.f32 %v2317, %v2540
        %v2549 = vadd.f32 %v2318, %v2545
        %v2550 = vld [vmem:[%s20] sm:$0x1]
        %v2551 = vld [vmem:[%s21] sm:$0x1]
        %v2552 = vsel %vm1400, %v2548, 0.0
        %2553 = vadd.xlane.f32.xlu0 %v2552
        %v2554 = vpop.xlane.xlu0 %2553
        %v2555 = vsel %vm1400, %v2549, 0.0
        %2556 = vadd.xlane.f32.xlu0 %v2555
        %v2557 = vpop.xlane.xlu0 %2556
        %v2558 = vmul.f32 %v2554, %v2282
        %v2559 = vmul.f32 %v2557, %v2282
        %v2560 = vsub.f32 %v2548, %v2558
        %v2561 = vsub.f32 %v2549, %v2559
        %v2562 = vmul.f32 %v2560, %v2560
        %v2563 = vmul.f32 %v2561, %v2561
        %v2564 = vsel %vm1400, %v2562, 0.0
        %2565 = vadd.xlane.f32.xlu0 %v2564
        %v2566 = vpop.xlane.xlu0 %2565
        %v2567 = vsel %vm1400, %v2563, 0.0
        %2568 = vadd.xlane.f32.xlu0 %v2567
        %v2569 = vpop.xlane.xlu0 %2568
        %v2570 = vmul.f32 %v2566, %v2282
        %v2571 = vmul.f32 %v2569, %v2282
        %v2572 = vadd.f32 %v2570, 1e-05
        %v2573 = vadd.f32 %v2571, 1e-05
        %v2574 = vrsqrt.pop %v2572
        %v2575 = vrsqrt.pop %v2573
        %v2576 = vmul.f32 %v2560, %v2574
        %v2577 = vmul.f32 %v2561, %v2575
        %v2579 = vlaneseq
        %v2580 = vshrl.u32 %v2579, 7
        %v2581 = vsub.s32 0, %v2580
        %v2582 = vrot.slane %v2550, %v2581
        %v2584 = vmul.f32 %v2576, %v2582
        %v2585 = vmul.f32 %v2577, %v2582
        %v2587 = vlaneseq
        %v2588 = vshrl.u32 %v2587, 7
        %v2589 = vsub.s32 0, %v2588
        %v2590 = vrot.slane %v2551, %v2589
        %v2592 = vadd.f32 %v2584, %v2590
        %v2593 = vadd.f32 %v2585, %v2590
        %s2594 = scalar_lea.vmem %s6, 64
        %v2595 = vld [vmem:[%s2594] sm:$0xff]
        %v2596 = vld [vmem:[%s2594 + $0x8] sm:$0xff]
        %v2597 = vld [vmem:[%s2594 + $0x10] sm:$0xff]
        %v2598 = vld [vmem:[%s2594 + $0x18] sm:$0xff]
        %v2599 = vld [vmem:[%s2594 + $0x20] sm:$0xff]
        %v2600 = vld [vmem:[%s2594 + $0x28] sm:$0xff]
        %v2601 = vld [vmem:[%s2594 + $0x30] sm:$0xff]
        %v2602 = vld [vmem:[%s2594 + $0x38] sm:$0xff]
        %s2603 = scalar_lea.vmem %s9, 1
        %v2604 = vld [vmem:[%s2603] sm:$0x1]
        %v2606 = vlaneseq
        %v2607 = vshrl.u32 %v2606, 7
        %v2608 = vsub.s32 0, %v2607
        %v2609 = vrot.slane %v2604, %v2608
        %v2612 = vsel %vm1400, %v2592, 0
        %v2615 = vsel %vm1400, %v2593, 0
        %2617 = vmatprep.subr.mxu0 0.0
        %2618 = vmatpush1.msra.mxu0 0.0
        %2619 = vmatprep.subr.mxu0 0.0
        %2620 = vmatpush1.msra.mxu0 0.0
        %2621 = vmatprep.subr.mxu0 0.0
        %2622 = vmatpush1.msra.mxu0 0.0
        %2623 = vmatprep.subr.mxu0 0.0
        %2624 = vmatpush1.msra.mxu0 0.0
        %2625 = vmatprep.subr.mxu0 0.0
        %2626 = vmatpush1.msra.mxu0 0.0
        %2627 = vmatprep.subr.mxu0 0.0
        %2628 = vmatpush1.msra.mxu0 0.0
        %2629 = vmatprep.subr.mxu0 0.0
        %2630 = vmatpush1.msra.mxu0 0.0
        %2631 = vmatprep.subr.mxu0 0.0
        %2632 = vmatpush1.msra.mxu0 0.0
        %2633 = vmatprep.subr.mxu0 0.0
        %2634 = vmatpush1.msra.mxu0 %v2602
        %2635 = vmatprep.subr.mxu0 0.0
        %2636 = vmatpush1.msra.mxu0 %v2601
        %2637 = vmatprep.subr.mxu0 0.0
        %2638 = vmatpush1.msra.mxu0 %v2600
        %2639 = vmatprep.subr.mxu0 0.0
        %2640 = vmatpush1.msra.mxu0 %v2599
        %2641 = vmatprep.subr.mxu0 0.0
        %2642 = vmatpush1.msra.mxu0 %v2598
        %2643 = vmatprep.subr.mxu0 0.0
        %2644 = vmatpush1.msra.mxu0 %v2597
        %2645 = vmatprep.subr.mxu0 0.0
        %2646 = vmatpush1.msra.mxu0 %v2596
        %2647 = vmatprep.subr.mxu0 0.0
        %2648 = vmatpush1.msra.mxu0 %v2595
        %2649 = vmatprep.subr.mxu0 0.0
        %2650 = vmatpush2.msra.mxu0 0.0
        %2651 = vmatprep.subr.mxu0 0.0
        %2652 = vmatpush2.msra.mxu0 0.0
        %2653 = vmatprep.subr.mxu0 0.0
        %2654 = vmatpush2.msra.mxu0 0.0
        %2655 = vmatprep.subr.mxu0 0.0
        %2656 = vmatpush2.msra.mxu0 0.0
        %2657 = vmatprep.subr.mxu0 0.0
        %2658 = vmatpush2.msra.mxu0 0.0
        %2659 = vmatprep.subr.mxu0 0.0
        %2660 = vmatpush2.msra.mxu0 0.0
        %2661 = vmatprep.subr.mxu0 0.0
        %2662 = vmatpush2.msra.mxu0 0.0
        %2663 = vmatprep.subr.mxu0 0.0
        %2664 = vmatpush2.msra.mxu0 0.0
        %2665 = vmatprep.subr.mxu0 0.0
        %2666 = vmatpush2.msra.mxu0 0.0
        %2667 = vmatprep.subr.mxu0 0.0
        %2668 = vmatpush2.msra.mxu0 0.0
        %2669 = vmatprep.subr.mxu0 0.0
        %2670 = vmatpush2.msra.mxu0 0.0
        %2671 = vmatprep.subr.mxu0 0.0
        %2672 = vmatpush2.msra.mxu0 0.0
        %2673 = vmatprep.subr.mxu0 0.0
        %2674 = vmatpush2.msra.mxu0 0.0
        %2675 = vmatprep.subr.mxu0 0.0
        %2676 = vmatpush2.msra.mxu0 0.0
        %2677 = vmatprep.subr.mxu0 0.0
        %2678 = vmatpush2.msra.mxu0 0.0
        %2679 = vmatprep.subr.mxu0 0.0
        %2680 = vmatpush2.msra.mxu0 0.0
        %2681 = vmatprep.mubr.f32.mxu0 0.0
        %2682 = vmatmul.mubr.f32.gmra.mxu0 %v2612
        %v2683 = vpop.f32.mrf.mxu0
        %v2684 = vadd.f32 %v2609, %v2683
        %v2685 = vpop.f32.mrf.mxu0
        %2686 = vmatprep.mubr.f32.mxu0 0.0
        %2687 = vmatmul.mubr.f32.gmra.mxu0 %v2615
        %v2688 = vpop.f32.mrf.mxu0
        %v2689 = vadd.f32 %v2609, %v2688
        %v2690 = vpop.f32.mrf.mxu0
        %2691 = vdwg.mxu0
        %s2692 = scalar_lea.vmem %s7, 64
        %v2693 = vld [vmem:[%s2692] sm:$0xff]
        %v2694 = vld [vmem:[%s2692 + $0x8] sm:$0xff]
        %v2695 = vld [vmem:[%s2692 + $0x10] sm:$0xff]
        %v2696 = vld [vmem:[%s2692 + $0x18] sm:$0xff]
        %v2697 = vld [vmem:[%s2692 + $0x20] sm:$0xff]
        %v2698 = vld [vmem:[%s2692 + $0x28] sm:$0xff]
        %v2699 = vld [vmem:[%s2692 + $0x30] sm:$0xff]
        %v2700 = vld [vmem:[%s2692 + $0x38] sm:$0xff]
        %s2701 = scalar_lea.vmem %s10, 1
        %v2702 = vld [vmem:[%s2701] sm:$0x1]
        %v2704 = vlaneseq
        %v2705 = vshrl.u32 %v2704, 7
        %v2706 = vsub.s32 0, %v2705
        %v2707 = vrot.slane %v2702, %v2706
        %2709 = vmatprep.subr.mxu0 0.0
        %2710 = vmatpush1.msra.mxu0 0.0
        %2711 = vmatprep.subr.mxu0 0.0
        %2712 = vmatpush1.msra.mxu0 0.0
        %2713 = vmatprep.subr.mxu0 0.0
        %2714 = vmatpush1.msra.mxu0 0.0
        %2715 = vmatprep.subr.mxu0 0.0
        %2716 = vmatpush1.msra.mxu0 0.0
        %2717 = vmatprep.subr.mxu0 0.0
        %2718 = vmatpush1.msra.mxu0 0.0
        %2719 = vmatprep.subr.mxu0 0.0
        %2720 = vmatpush1.msra.mxu0 0.0
        %2721 = vmatprep.subr.mxu0 0.0
        %2722 = vmatpush1.msra.mxu0 0.0
        %2723 = vmatprep.subr.mxu0 0.0
        %2724 = vmatpush1.msra.mxu0 0.0
        %2725 = vmatprep.subr.mxu0 0.0
        %2726 = vmatpush1.msra.mxu0 %v2700
        %2727 = vmatprep.subr.mxu0 0.0
        %2728 = vmatpush1.msra.mxu0 %v2699
        %2729 = vmatprep.subr.mxu0 0.0
        %2730 = vmatpush1.msra.mxu0 %v2698
        %2731 = vmatprep.subr.mxu0 0.0
        %2732 = vmatpush1.msra.mxu0 %v2697
        %2733 = vmatprep.subr.mxu0 0.0
        %2734 = vmatpush1.msra.mxu0 %v2696
        %2735 = vmatprep.subr.mxu0 0.0
        %2736 = vmatpush1.msra.mxu0 %v2695
        %2737 = vmatprep.subr.mxu0 0.0
        %2738 = vmatpush1.msra.mxu0 %v2694
        %2739 = vmatprep.subr.mxu0 0.0
        %2740 = vmatpush1.msra.mxu0 %v2693
        %2741 = vmatprep.subr.mxu0 0.0
        %2742 = vmatpush2.msra.mxu0 0.0
        %2743 = vmatprep.subr.mxu0 0.0
        %2744 = vmatpush2.msra.mxu0 0.0
        %2745 = vmatprep.subr.mxu0 0.0
        %2746 = vmatpush2.msra.mxu0 0.0
        %2747 = vmatprep.subr.mxu0 0.0
        %2748 = vmatpush2.msra.mxu0 0.0
        %2749 = vmatprep.subr.mxu0 0.0
        %2750 = vmatpush2.msra.mxu0 0.0
        %2751 = vmatprep.subr.mxu0 0.0
        %2752 = vmatpush2.msra.mxu0 0.0
        %2753 = vmatprep.subr.mxu0 0.0
        %2754 = vmatpush2.msra.mxu0 0.0
        %2755 = vmatprep.subr.mxu0 0.0
        %2756 = vmatpush2.msra.mxu0 0.0
        %2757 = vmatprep.subr.mxu0 0.0
        %2758 = vmatpush2.msra.mxu0 0.0
        %2759 = vmatprep.subr.mxu0 0.0
        %2760 = vmatpush2.msra.mxu0 0.0
        %2761 = vmatprep.subr.mxu0 0.0
        %2762 = vmatpush2.msra.mxu0 0.0
        %2763 = vmatprep.subr.mxu0 0.0
        %2764 = vmatpush2.msra.mxu0 0.0
        %2765 = vmatprep.subr.mxu0 0.0
        %2766 = vmatpush2.msra.mxu0 0.0
        %2767 = vmatprep.subr.mxu0 0.0
        %2768 = vmatpush2.msra.mxu0 0.0
        %2769 = vmatprep.subr.mxu0 0.0
        %2770 = vmatpush2.msra.mxu0 0.0
        %2771 = vmatprep.subr.mxu0 0.0
        %2772 = vmatpush2.msra.mxu0 0.0
        %2773 = vmatprep.mubr.f32.mxu0 0.0
        %2774 = vmatmul.mubr.f32.gmra.mxu0 %v2612
        %v2775 = vpop.f32.mrf.mxu0
        %v2776 = vadd.f32 %v2707, %v2775
        %v2777 = vpop.f32.mrf.mxu0
        %2778 = vmatprep.mubr.f32.mxu0 0.0
        %2779 = vmatmul.mubr.f32.gmra.mxu0 %v2615
        %v2780 = vpop.f32.mrf.mxu0
        %v2781 = vadd.f32 %v2707, %v2780
        %v2782 = vpop.f32.mrf.mxu0
        %2783 = vdwg.mxu0
        %s2784 = scalar_lea.vmem %s8, 64
        %v2785 = vld [vmem:[%s2784] sm:$0xff]
        %v2786 = vld [vmem:[%s2784 + $0x8] sm:$0xff]
        %v2787 = vld [vmem:[%s2784 + $0x10] sm:$0xff]
        %v2788 = vld [vmem:[%s2784 + $0x18] sm:$0xff]
        %v2789 = vld [vmem:[%s2784 + $0x20] sm:$0xff]
        %v2790 = vld [vmem:[%s2784 + $0x28] sm:$0xff]
        %v2791 = vld [vmem:[%s2784 + $0x30] sm:$0xff]
        %v2792 = vld [vmem:[%s2784 + $0x38] sm:$0xff]
        %s2793 = scalar_lea.vmem %s11, 1
        %v2794 = vld [vmem:[%s2793] sm:$0x1]
        %v2796 = vlaneseq
        %v2797 = vshrl.u32 %v2796, 7
        %v2798 = vsub.s32 0, %v2797
        %v2799 = vrot.slane %v2794, %v2798
        %2801 = vmatprep.subr.mxu0 0.0
        %2802 = vmatpush1.msra.mxu0 0.0
        %2803 = vmatprep.subr.mxu0 0.0
        %2804 = vmatpush1.msra.mxu0 0.0
        %2805 = vmatprep.subr.mxu0 0.0
        %2806 = vmatpush1.msra.mxu0 0.0
        %2807 = vmatprep.subr.mxu0 0.0
        %2808 = vmatpush1.msra.mxu0 0.0
        %2809 = vmatprep.subr.mxu0 0.0
        %2810 = vmatpush1.msra.mxu0 0.0
        %2811 = vmatprep.subr.mxu0 0.0
        %2812 = vmatpush1.msra.mxu0 0.0
        %2813 = vmatprep.subr.mxu0 0.0
        %2814 = vmatpush1.msra.mxu0 0.0
        %2815 = vmatprep.subr.mxu0 0.0
        %2816 = vmatpush1.msra.mxu0 0.0
        %2817 = vmatprep.subr.mxu0 0.0
        %2818 = vmatpush1.msra.mxu0 %v2792
        %2819 = vmatprep.subr.mxu0 0.0
        %2820 = vmatpush1.msra.mxu0 %v2791
        %2821 = vmatprep.subr.mxu0 0.0
        %2822 = vmatpush1.msra.mxu0 %v2790
        %2823 = vmatprep.subr.mxu0 0.0
        %2824 = vmatpush1.msra.mxu0 %v2789
        %2825 = vmatprep.subr.mxu0 0.0
        %2826 = vmatpush1.msra.mxu0 %v2788
        %2827 = vmatprep.subr.mxu0 0.0
        %2828 = vmatpush1.msra.mxu0 %v2787
        %2829 = vmatprep.subr.mxu0 0.0
        %2830 = vmatpush1.msra.mxu0 %v2786
        %2831 = vmatprep.subr.mxu0 0.0
        %2832 = vmatpush1.msra.mxu0 %v2785
        %2833 = vmatprep.subr.mxu0 0.0
        %2834 = vmatpush2.msra.mxu0 0.0
        %2835 = vmatprep.subr.mxu0 0.0
        %2836 = vmatpush2.msra.mxu0 0.0
        %2837 = vmatprep.subr.mxu0 0.0
        %2838 = vmatpush2.msra.mxu0 0.0
        %2839 = vmatprep.subr.mxu0 0.0
        %2840 = vmatpush2.msra.mxu0 0.0
        %2841 = vmatprep.subr.mxu0 0.0
        %2842 = vmatpush2.msra.mxu0 0.0
        %2843 = vmatprep.subr.mxu0 0.0
        %2844 = vmatpush2.msra.mxu0 0.0
        %2845 = vmatprep.subr.mxu0 0.0
        %2846 = vmatpush2.msra.mxu0 0.0
        %2847 = vmatprep.subr.mxu0 0.0
        %2848 = vmatpush2.msra.mxu0 0.0
        %2849 = vmatprep.subr.mxu0 0.0
        %2850 = vmatpush2.msra.mxu0 0.0
        %2851 = vmatprep.subr.mxu0 0.0
        %2852 = vmatpush2.msra.mxu0 0.0
        %2853 = vmatprep.subr.mxu0 0.0
        %2854 = vmatpush2.msra.mxu0 0.0
        %2855 = vmatprep.subr.mxu0 0.0
        %2856 = vmatpush2.msra.mxu0 0.0
        %2857 = vmatprep.subr.mxu0 0.0
        %2858 = vmatpush2.msra.mxu0 0.0
        %2859 = vmatprep.subr.mxu0 0.0
        %2860 = vmatpush2.msra.mxu0 0.0
        %2861 = vmatprep.subr.mxu0 0.0
        %2862 = vmatpush2.msra.mxu0 0.0
        %2863 = vmatprep.subr.mxu0 0.0
        %2864 = vmatpush2.msra.mxu0 0.0
        %2865 = vmatprep.mubr.f32.mxu0 0.0
        %2866 = vmatmul.mubr.f32.gmra.mxu0 %v2612
        %v2867 = vpop.f32.mrf.mxu0
        %v2868 = vadd.f32 %v2799, %v2867
        %v2869 = vpop.f32.mrf.mxu0
        %2870 = vmatprep.mubr.f32.mxu0 0.0
        %2871 = vmatmul.mubr.f32.gmra.mxu0 %v2615
        %v2872 = vpop.f32.mrf.mxu0
        %v2873 = vadd.f32 %v2799, %v2872
        %v2874 = vpop.f32.mrf.mxu0
        %2875 = vdwg.mxu0
        %v2876 = vmul.f32 %v2776, %v1662
        %v2877 = vmul.f32 %v2781, %v1663
        %v2878 = vmul.f32 %v2776, %v1664
        %v2879 = vmul.f32 %v2781, %v1665
        %v2880 = vmul.f32 %v2776, %v1666
        %v2881 = vmul.f32 %v2781, %v1667
        %v2882 = vmul.f32 %v2776, %v1668
        %v2883 = vmul.f32 %v2781, %v1669
        %v2884 = vmul.f32 %v2776, %v1670
        %v2885 = vmul.f32 %v2781, %v1671
        %v2886 = vmul.f32 %v2776, %v1672
        %v2887 = vmul.f32 %v2781, %v1673
        %v2888 = vmul.f32 %v2776, %v1674
        %v2889 = vmul.f32 %v2781, %v1675
        %v2890 = vmul.f32 %v2776, %v1676
        %v2891 = vmul.f32 %v2781, %v1677
        %v2892 = vmul.f32 %v2868, %v1662
        %v2893 = vmul.f32 %v2873, %v1663
        %v2894 = vmul.f32 %v2868, %v1664
        %v2895 = vmul.f32 %v2873, %v1665
        %v2896 = vmul.f32 %v2868, %v1666
        %v2897 = vmul.f32 %v2873, %v1667
        %v2898 = vmul.f32 %v2868, %v1668
        %v2899 = vmul.f32 %v2873, %v1669
        %v2900 = vmul.f32 %v2868, %v1670
        %v2901 = vmul.f32 %v2873, %v1671
        %v2902 = vmul.f32 %v2868, %v1672
        %v2903 = vmul.f32 %v2873, %v1673
        %v2904 = vmul.f32 %v2868, %v1674
        %v2905 = vmul.f32 %v2873, %v1675
        %v2906 = vmul.f32 %v2868, %v1676
        %v2907 = vmul.f32 %v2873, %v1677
        %v2908 = vmul.f32 %v2684, 0.35355338
        %v2909 = vmul.f32 %v2689, 0.35355338
        %v2911 = vsel %vm1400, %v2908, 0
        %v2914 = vsel %vm1400, %v2909, 0
        %v2917 = vsel %vm1400, %v2876, 0
        %v2920 = vsel %vm1400, %v2877, 0
        %v2923 = vsel %vm1400, %v2878, 0
        %v2926 = vsel %vm1400, %v2879, 0
        %v2929 = vsel %vm1400, %v2880, 0
        %v2932 = vsel %vm1400, %v2881, 0
        %v2935 = vsel %vm1400, %v2882, 0
        %v2938 = vsel %vm1400, %v2883, 0
        %v2941 = vsel %vm1400, %v2884, 0
        %v2944 = vsel %vm1400, %v2885, 0
        %v2947 = vsel %vm1400, %v2886, 0
        %v2950 = vsel %vm1400, %v2887, 0
        %v2953 = vsel %vm1400, %v2888, 0
        %v2956 = vsel %vm1400, %v2889, 0
        %v2959 = vsel %vm1400, %v2890, 0
        %v2962 = vsel %vm1400, %v2891, 0
        %2964 = vmatprep.subr.mxu0 0.0
        %2965 = vmatpush1.xpose.msra.mxu0 %v2962
        %2966 = vmatprep.subr.mxu0 0.0
        %2967 = vmatpush1.xpose.msra.mxu0 %v2959
        %2968 = vmatprep.subr.mxu0 0.0
        %2969 = vmatpush1.xpose.msra.mxu0 %v2956
        %2970 = vmatprep.subr.mxu0 0.0
        %2971 = vmatpush1.xpose.msra.mxu0 %v2953
        %2972 = vmatprep.subr.mxu0 0.0
        %2973 = vmatpush1.xpose.msra.mxu0 %v2950
        %2974 = vmatprep.subr.mxu0 0.0
        %2975 = vmatpush1.xpose.msra.mxu0 %v2947
        %2976 = vmatprep.subr.mxu0 0.0
        %2977 = vmatpush1.xpose.msra.mxu0 %v2944
        %2978 = vmatprep.subr.mxu0 0.0
        %2979 = vmatpush1.xpose.msra.mxu0 %v2941
        %2980 = vmatprep.subr.mxu0 0.0
        %2981 = vmatpush1.xpose.msra.mxu0 %v2938
        %2982 = vmatprep.subr.mxu0 0.0
        %2983 = vmatpush1.xpose.msra.mxu0 %v2935
        %2984 = vmatprep.subr.mxu0 0.0
        %2985 = vmatpush1.xpose.msra.mxu0 %v2932
        %2986 = vmatprep.subr.mxu0 0.0
        %2987 = vmatpush1.xpose.msra.mxu0 %v2929
        %2988 = vmatprep.subr.mxu0 0.0
        %2989 = vmatpush1.xpose.msra.mxu0 %v2926
        %2990 = vmatprep.subr.mxu0 0.0
        %2991 = vmatpush1.xpose.msra.mxu0 %v2923
        %2992 = vmatprep.subr.mxu0 0.0
        %2993 = vmatpush1.xpose.msra.mxu0 %v2920
        %2994 = vmatprep.subr.mxu0 0.0
        %2995 = vmatpush1.xpose.msra.mxu0 %v2917
        %2996 = vmatprep.subr.mxu0 0.0
        %2997 = vmatpush2.xpose.msra.mxu0 0.0
        %2998 = vmatprep.subr.mxu0 0.0
        %2999 = vmatpush2.xpose.msra.mxu0 0.0
        %3000 = vmatprep.subr.mxu0 0.0
        %3001 = vmatpush2.xpose.msra.mxu0 0.0
        %3002 = vmatprep.subr.mxu0 0.0
        %3003 = vmatpush2.xpose.msra.mxu0 0.0
        %3004 = vmatprep.subr.mxu0 0.0
        %3005 = vmatpush2.xpose.msra.mxu0 0.0
        %3006 = vmatprep.subr.mxu0 0.0
        %3007 = vmatpush2.xpose.msra.mxu0 0.0
        %3008 = vmatprep.subr.mxu0 0.0
        %3009 = vmatpush2.xpose.msra.mxu0 0.0
        %3010 = vmatprep.subr.mxu0 0.0
        %3011 = vmatpush2.xpose.msra.mxu0 0.0
        %3012 = vmatprep.subr.mxu0 0.0
        %3013 = vmatpush2.xpose.msra.mxu0 0.0
        %3014 = vmatprep.subr.mxu0 0.0
        %3015 = vmatpush2.xpose.msra.mxu0 0.0
        %3016 = vmatprep.subr.mxu0 0.0
        %3017 = vmatpush2.xpose.msra.mxu0 0.0
        %3018 = vmatprep.subr.mxu0 0.0
        %3019 = vmatpush2.xpose.msra.mxu0 0.0
        %3020 = vmatprep.subr.mxu0 0.0
        %3021 = vmatpush2.xpose.msra.mxu0 0.0
        %3022 = vmatprep.subr.mxu0 0.0
        %3023 = vmatpush2.xpose.msra.mxu0 0.0
        %3024 = vmatprep.subr.mxu0 0.0
        %3025 = vmatpush2.xpose.msra.mxu0 0.0
        %3026 = vmatprep.subr.mxu0 0.0
        %3027 = vmatpush2.xpose.msra.mxu0 0.0
        %3028 = vmatprep.mubr.f32.mxu0 0.0
        %3029 = vmatmul.mubr.f32.gmra.mxu0 %v2911
        %v3030 = vpop.f32.mrf.mxu0
        %v3031 = vadd.f32 0.0, %v3030
        %v3032 = vpop.f32.mrf.mxu0
        %3033 = vmatprep.mubr.f32.mxu0 0.0
        %3034 = vmatmul.mubr.f32.gmra.mxu0 %v2914
        %v3035 = vpop.f32.mrf.mxu0
        %v3036 = vadd.f32 0.0, %v3035
        %v3037 = vpop.f32.mrf.mxu0
        %3038 = vdwg.mxu0
        %v3039 = vadd.f32 %v3031, %v1841
        %v3040 = vadd.f32 %v3036, %v1842
        %v3041 = vadd.f32 %v3031, %v1843
        %v3042 = vadd.f32 %v3036, %v1844
        %v3043 = vadd.f32 %v3031, %v1845
        %v3044 = vadd.f32 %v3036, %v1846
        %v3045 = vadd.f32 %v3031, %v1847
        %v3046 = vadd.f32 %v3036, %v1848
        %v3047 = vadd.f32 %v3031, %v1849
        %v3048 = vadd.f32 %v3036, %v1850
        %v3049 = vadd.f32 %v3031, %v1851
        %v3050 = vadd.f32 %v3036, %v1852
        %v3051 = vadd.f32 %v3031, %v1853
        %v3052 = vadd.f32 %v3036, %v1854
        %v3053 = vadd.f32 %v3031, %v1855
        %v3054 = vadd.f32 %v3036, %v1856
        %3055 = vmax.xlane.f32.xlu0 %v3039
        %v3056 = vpop.xlane.xlu0 %3055
        %3057 = vmax.xlane.f32.xlu0 %v3040
        %v3058 = vpop.xlane.xlu0 %3057
        %3059 = vmax.xlane.f32.xlu0 %v3041
        %v3060 = vpop.xlane.xlu0 %3059
        %3061 = vmax.xlane.f32.xlu0 %v3042
        %v3062 = vpop.xlane.xlu0 %3061
        %3063 = vmax.xlane.f32.xlu0 %v3043
        %v3064 = vpop.xlane.xlu0 %3063
        %3065 = vmax.xlane.f32.xlu0 %v3044
        %v3066 = vpop.xlane.xlu0 %3065
        %3067 = vmax.xlane.f32.xlu0 %v3045
        %v3068 = vpop.xlane.xlu0 %3067
        %3069 = vmax.xlane.f32.xlu0 %v3046
        %v3070 = vpop.xlane.xlu0 %3069
        %3071 = vmax.xlane.f32.xlu0 %v3047
        %v3072 = vpop.xlane.xlu0 %3071
        %3073 = vmax.xlane.f32.xlu0 %v3048
        %v3074 = vpop.xlane.xlu0 %3073
        %3075 = vmax.xlane.f32.xlu0 %v3049
        %v3076 = vpop.xlane.xlu0 %3075
        %3077 = vmax.xlane.f32.xlu0 %v3050
        %v3078 = vpop.xlane.xlu0 %3077
        %3079 = vmax.xlane.f32.xlu0 %v3051
        %v3080 = vpop.xlane.xlu0 %3079
        %3081 = vmax.xlane.f32.xlu0 %v3052
        %v3082 = vpop.xlane.xlu0 %3081
        %3083 = vmax.xlane.f32.xlu0 %v3053
        %v3084 = vpop.xlane.xlu0 %3083
        %3085 = vmax.xlane.f32.xlu0 %v3054
        %v3086 = vpop.xlane.xlu0 %3085
        %v3087 = vsub.f32 %v3039, %v3056
        %v3088 = vsub.f32 %v3040, %v3058
        %v3089 = vsub.f32 %v3041, %v3060
        %v3090 = vsub.f32 %v3042, %v3062
        %v3091 = vsub.f32 %v3043, %v3064
        %v3092 = vsub.f32 %v3044, %v3066
        %v3093 = vsub.f32 %v3045, %v3068
        %v3094 = vsub.f32 %v3046, %v3070
        %v3095 = vsub.f32 %v3047, %v3072
        %v3096 = vsub.f32 %v3048, %v3074
        %v3097 = vsub.f32 %v3049, %v3076
        %v3098 = vsub.f32 %v3050, %v3078
        %v3099 = vsub.f32 %v3051, %v3080
        %v3100 = vsub.f32 %v3052, %v3082
        %v3101 = vsub.f32 %v3053, %v3084
        %v3102 = vsub.f32 %v3054, %v3086
        %v3103 = vmul.f32 %v3087, 1.442695
        %v3104 = vpow.pop %v3103
        %v3105 = vmul.f32 %v3088, 1.442695
        %v3106 = vpow.pop %v3105
        %v3107 = vmul.f32 %v3089, 1.442695
        %v3108 = vpow.pop %v3107
        %v3109 = vmul.f32 %v3090, 1.442695
        %v3110 = vpow.pop %v3109
        %v3111 = vmul.f32 %v3091, 1.442695
        %v3112 = vpow.pop %v3111
        %v3113 = vmul.f32 %v3092, 1.442695
        %v3114 = vpow.pop %v3113
        %v3115 = vmul.f32 %v3093, 1.442695
        %v3116 = vpow.pop %v3115
        %v3117 = vmul.f32 %v3094, 1.442695
        %v3118 = vpow.pop %v3117
        %v3119 = vmul.f32 %v3095, 1.442695
        %v3120 = vpow.pop %v3119
        %v3121 = vmul.f32 %v3096, 1.442695
        %v3122 = vpow.pop %v3121
        %v3123 = vmul.f32 %v3097, 1.442695
        %v3124 = vpow.pop %v3123
        %v3125 = vmul.f32 %v3098, 1.442695
        %v3126 = vpow.pop %v3125
        %v3127 = vmul.f32 %v3099, 1.442695
        %v3128 = vpow.pop %v3127
        %v3129 = vmul.f32 %v3100, 1.442695
        %v3130 = vpow.pop %v3129
        %v3131 = vmul.f32 %v3101, 1.442695
        %v3132 = vpow.pop %v3131
        %v3133 = vmul.f32 %v3102, 1.442695
        %v3134 = vpow.pop %v3133
        %3135 = vadd.xlane.f32.xlu0 %v3104
        %v3136 = vpop.xlane.xlu0 %3135
        %3137 = vadd.xlane.f32.xlu0 %v3106
        %v3138 = vpop.xlane.xlu0 %3137
        %3139 = vadd.xlane.f32.xlu0 %v3108
        %v3140 = vpop.xlane.xlu0 %3139
        %3141 = vadd.xlane.f32.xlu0 %v3110
        %v3142 = vpop.xlane.xlu0 %3141
        %3143 = vadd.xlane.f32.xlu0 %v3112
        %v3144 = vpop.xlane.xlu0 %3143
        %3145 = vadd.xlane.f32.xlu0 %v3114
        %v3146 = vpop.xlane.xlu0 %3145
        %3147 = vadd.xlane.f32.xlu0 %v3116
        %v3148 = vpop.xlane.xlu0 %3147
        %3149 = vadd.xlane.f32.xlu0 %v3118
        %v3150 = vpop.xlane.xlu0 %3149
        %3151 = vadd.xlane.f32.xlu0 %v3120
        %v3152 = vpop.xlane.xlu0 %3151
        %3153 = vadd.xlane.f32.xlu0 %v3122
        %v3154 = vpop.xlane.xlu0 %3153
        %3155 = vadd.xlane.f32.xlu0 %v3124
        %v3156 = vpop.xlane.xlu0 %3155
        %3157 = vadd.xlane.f32.xlu0 %v3126
        %v3158 = vpop.xlane.xlu0 %3157
        %3159 = vadd.xlane.f32.xlu0 %v3128
        %v3160 = vpop.xlane.xlu0 %3159
        %3161 = vadd.xlane.f32.xlu0 %v3130
        %v3162 = vpop.xlane.xlu0 %3161
        %3163 = vadd.xlane.f32.xlu0 %v3132
        %v3164 = vpop.xlane.xlu0 %3163
        %3165 = vadd.xlane.f32.xlu0 %v3134
        %v3166 = vpop.xlane.xlu0 %3165
        %v3167 = vrcp.pop %v3136
        %v3168 = vrcp.pop %v3138
        %v3169 = vrcp.pop %v3140
        %v3170 = vrcp.pop %v3142
        %v3171 = vrcp.pop %v3144
        %v3172 = vrcp.pop %v3146
        %v3173 = vrcp.pop %v3148
        %v3174 = vrcp.pop %v3150
        %v3175 = vrcp.pop %v3152
        %v3176 = vrcp.pop %v3154
        %v3177 = vrcp.pop %v3156
        %v3178 = vrcp.pop %v3158
        %v3179 = vrcp.pop %v3160
        %v3180 = vrcp.pop %v3162
        %v3181 = vrcp.pop %v3164
        %v3182 = vrcp.pop %v3166
        %v3183 = vmul.f32 %v3104, %v3167
        %v3184 = vmul.f32 %v3106, %v3168
        %v3185 = vmul.f32 %v3108, %v3169
        %v3186 = vmul.f32 %v3110, %v3170
        %v3187 = vmul.f32 %v3112, %v3171
        %v3188 = vmul.f32 %v3114, %v3172
        %v3189 = vmul.f32 %v3116, %v3173
        %v3190 = vmul.f32 %v3118, %v3174
        %v3191 = vmul.f32 %v3120, %v3175
        %v3192 = vmul.f32 %v3122, %v3176
        %v3193 = vmul.f32 %v3124, %v3177
        %v3194 = vmul.f32 %v3126, %v3178
        %v3195 = vmul.f32 %v3128, %v3179
        %v3196 = vmul.f32 %v3130, %v3180
        %v3197 = vmul.f32 %v3132, %v3181
        %v3198 = vmul.f32 %v3134, %v3182
        %3199 = vmatprep.subr.mxu0 0.0
        %3200 = vmatpush1.msra.mxu0 %v2907
        %3201 = vmatprep.subr.mxu0 0.0
        %3202 = vmatpush1.msra.mxu0 %v2906
        %3203 = vmatprep.subr.mxu0 0.0
        %3204 = vmatpush1.msra.mxu0 %v2905
        %3205 = vmatprep.subr.mxu0 0.0
        %3206 = vmatpush1.msra.mxu0 %v2904
        %3207 = vmatprep.subr.mxu0 0.0
        %3208 = vmatpush1.msra.mxu0 %v2903
        %3209 = vmatprep.subr.mxu0 0.0
        %3210 = vmatpush1.msra.mxu0 %v2902
        %3211 = vmatprep.subr.mxu0 0.0
        %3212 = vmatpush1.msra.mxu0 %v2901
        %3213 = vmatprep.subr.mxu0 0.0
        %3214 = vmatpush1.msra.mxu0 %v2900
        %3215 = vmatprep.subr.mxu0 0.0
        %3216 = vmatpush1.msra.mxu0 %v2899
        %3217 = vmatprep.subr.mxu0 0.0
        %3218 = vmatpush1.msra.mxu0 %v2898
        %3219 = vmatprep.subr.mxu0 0.0
        %3220 = vmatpush1.msra.mxu0 %v2897
        %3221 = vmatprep.subr.mxu0 0.0
        %3222 = vmatpush1.msra.mxu0 %v2896
        %3223 = vmatprep.subr.mxu0 0.0
        %3224 = vmatpush1.msra.mxu0 %v2895
        %3225 = vmatprep.subr.mxu0 0.0
        %3226 = vmatpush1.msra.mxu0 %v2894
        %3227 = vmatprep.subr.mxu0 0.0
        %3228 = vmatpush1.msra.mxu0 %v2893
        %3229 = vmatprep.subr.mxu0 0.0
        %3230 = vmatpush1.msra.mxu0 %v2892
        %3231 = vmatprep.subr.mxu0 0.0
        %3232 = vmatpush2.msra.mxu0 0.0
        %3233 = vmatprep.subr.mxu0 0.0
        %3234 = vmatpush2.msra.mxu0 0.0
        %3235 = vmatprep.subr.mxu0 0.0
        %3236 = vmatpush2.msra.mxu0 0.0
        %3237 = vmatprep.subr.mxu0 0.0
        %3238 = vmatpush2.msra.mxu0 0.0
        %3239 = vmatprep.subr.mxu0 0.0
        %3240 = vmatpush2.msra.mxu0 0.0
        %3241 = vmatprep.subr.mxu0 0.0
        %3242 = vmatpush2.msra.mxu0 0.0
        %3243 = vmatprep.subr.mxu0 0.0
        %3244 = vmatpush2.msra.mxu0 0.0
        %3245 = vmatprep.subr.mxu0 0.0
        %3246 = vmatpush2.msra.mxu0 0.0
        %3247 = vmatprep.subr.mxu0 0.0
        %3248 = vmatpush2.msra.mxu0 0.0
        %3249 = vmatprep.subr.mxu0 0.0
        %3250 = vmatpush2.msra.mxu0 0.0
        %3251 = vmatprep.subr.mxu0 0.0
        %3252 = vmatpush2.msra.mxu0 0.0
        %3253 = vmatprep.subr.mxu0 0.0
        %3254 = vmatpush2.msra.mxu0 0.0
        %3255 = vmatprep.subr.mxu0 0.0
        %3256 = vmatpush2.msra.mxu0 0.0
        %3257 = vmatprep.subr.mxu0 0.0
        %3258 = vmatpush2.msra.mxu0 0.0
        %3259 = vmatprep.subr.mxu0 0.0
        %3260 = vmatpush2.msra.mxu0 0.0
        %3261 = vmatprep.subr.mxu0 0.0
        %3262 = vmatpush2.msra.mxu0 0.0
        %3263 = vmatprep.mubr.f32.mxu0 0.0
        %3264 = vmatmul.mubr.f32.gmra.mxu0 %v3183
        %v3265 = vpop.f32.mrf.mxu0
        %v3266 = vadd.f32 0.0, %v3265
        %v3267 = vpop.f32.mrf.mxu0
        %3268 = vmatprep.mubr.f32.mxu0 0.0
        %3269 = vmatmul.mubr.f32.gmra.mxu0 %v3184
        %v3270 = vpop.f32.mrf.mxu0
        %v3271 = vadd.f32 0.0, %v3270
        %v3272 = vpop.f32.mrf.mxu0
        %3273 = vmatprep.mubr.f32.mxu0 0.0
        %3274 = vmatmul.mubr.f32.gmra.mxu0 %v3185
        %v3275 = vpop.f32.mrf.mxu0
        %v3276 = vadd.f32 0.0, %v3275
        %v3277 = vpop.f32.mrf.mxu0
        %3278 = vmatprep.mubr.f32.mxu0 0.0
        %3279 = vmatmul.mubr.f32.gmra.mxu0 %v3186
        %v3280 = vpop.f32.mrf.mxu0
        %v3281 = vadd.f32 0.0, %v3280
        %v3282 = vpop.f32.mrf.mxu0
        %3283 = vmatprep.mubr.f32.mxu0 0.0
        %3284 = vmatmul.mubr.f32.gmra.mxu0 %v3187
        %v3285 = vpop.f32.mrf.mxu0
        %v3286 = vadd.f32 0.0, %v3285
        %v3287 = vpop.f32.mrf.mxu0
        %3288 = vmatprep.mubr.f32.mxu0 0.0
        %3289 = vmatmul.mubr.f32.gmra.mxu0 %v3188
        %v3290 = vpop.f32.mrf.mxu0
        %v3291 = vadd.f32 0.0, %v3290
        %v3292 = vpop.f32.mrf.mxu0
        %3293 = vmatprep.mubr.f32.mxu0 0.0
        %3294 = vmatmul.mubr.f32.gmra.mxu0 %v3189
        %v3295 = vpop.f32.mrf.mxu0
        %v3296 = vadd.f32 0.0, %v3295
        %v3297 = vpop.f32.mrf.mxu0
        %3298 = vmatprep.mubr.f32.mxu0 0.0
        %3299 = vmatmul.mubr.f32.gmra.mxu0 %v3190
        %v3300 = vpop.f32.mrf.mxu0
        %v3301 = vadd.f32 0.0, %v3300
        %v3302 = vpop.f32.mrf.mxu0
        %3303 = vmatprep.mubr.f32.mxu0 0.0
        %3304 = vmatmul.mubr.f32.gmra.mxu0 %v3191
        %v3305 = vpop.f32.mrf.mxu0
        %v3306 = vadd.f32 0.0, %v3305
        %v3307 = vpop.f32.mrf.mxu0
        %3308 = vmatprep.mubr.f32.mxu0 0.0
        %3309 = vmatmul.mubr.f32.gmra.mxu0 %v3192
        %v3310 = vpop.f32.mrf.mxu0
        %v3311 = vadd.f32 0.0, %v3310
        %v3312 = vpop.f32.mrf.mxu0
        %3313 = vmatprep.mubr.f32.mxu0 0.0
        %3314 = vmatmul.mubr.f32.gmra.mxu0 %v3193
        %v3315 = vpop.f32.mrf.mxu0
        %v3316 = vadd.f32 0.0, %v3315
        %v3317 = vpop.f32.mrf.mxu0
        %3318 = vmatprep.mubr.f32.mxu0 0.0
        %3319 = vmatmul.mubr.f32.gmra.mxu0 %v3194
        %v3320 = vpop.f32.mrf.mxu0
        %v3321 = vadd.f32 0.0, %v3320
        %v3322 = vpop.f32.mrf.mxu0
        %3323 = vmatprep.mubr.f32.mxu0 0.0
        %3324 = vmatmul.mubr.f32.gmra.mxu0 %v3195
        %v3325 = vpop.f32.mrf.mxu0
        %v3326 = vadd.f32 0.0, %v3325
        %v3327 = vpop.f32.mrf.mxu0
        %3328 = vmatprep.mubr.f32.mxu0 0.0
        %3329 = vmatmul.mubr.f32.gmra.mxu0 %v3196
        %v3330 = vpop.f32.mrf.mxu0
        %v3331 = vadd.f32 0.0, %v3330
        %v3332 = vpop.f32.mrf.mxu0
        %3333 = vmatprep.mubr.f32.mxu0 0.0
        %3334 = vmatmul.mubr.f32.gmra.mxu0 %v3197
        %v3335 = vpop.f32.mrf.mxu0
        %v3336 = vadd.f32 0.0, %v3335
        %v3337 = vpop.f32.mrf.mxu0
        %3338 = vmatprep.mubr.f32.mxu0 0.0
        %3339 = vmatmul.mubr.f32.gmra.mxu0 %v3198
        %v3340 = vpop.f32.mrf.mxu0
        %v3341 = vadd.f32 0.0, %v3340
        %v3342 = vpop.f32.mrf.mxu0
        %3343 = vdwg.mxu0
        %v3344 = vadd.f32 %v3266, %v3276
        %v3345 = vadd.f32 %v3271, %v3281
        %v3346 = vadd.f32 %v3344, %v3286
        %v3347 = vadd.f32 %v3345, %v3291
        %v3348 = vadd.f32 %v3346, %v3296
        %v3349 = vadd.f32 %v3347, %v3301
        %v3350 = vadd.f32 %v3348, %v3306
        %v3351 = vadd.f32 %v3349, %v3311
        %v3352 = vadd.f32 %v3350, %v3316
        %v3353 = vadd.f32 %v3351, %v3321
        %v3354 = vadd.f32 %v3352, %v3326
        %v3355 = vadd.f32 %v3353, %v3331
        %v3356 = vadd.f32 %v3354, %v3336
        %v3357 = vadd.f32 %v3355, %v3341
        %s3358 = scalar_lea.vmem %s12, 64
        %v3359 = vld [vmem:[%s3358] sm:$0xff]
        %v3360 = vld [vmem:[%s3358 + $0x8] sm:$0xff]
        %v3361 = vld [vmem:[%s3358 + $0x10] sm:$0xff]
        %v3362 = vld [vmem:[%s3358 + $0x18] sm:$0xff]
        %v3363 = vld [vmem:[%s3358 + $0x20] sm:$0xff]
        %v3364 = vld [vmem:[%s3358 + $0x28] sm:$0xff]
        %v3365 = vld [vmem:[%s3358 + $0x30] sm:$0xff]
        %v3366 = vld [vmem:[%s3358 + $0x38] sm:$0xff]
        %s3367 = scalar_lea.vmem %s13, 1
        %v3368 = vld [vmem:[%s3367] sm:$0x1]
        %v3370 = vlaneseq
        %v3371 = vshrl.u32 %v3370, 7
        %v3372 = vsub.s32 0, %v3371
        %v3373 = vrot.slane %v3368, %v3372
        %v3376 = vsel %vm1400, %v3356, 0
        %v3379 = vsel %vm1400, %v3357, 0
        %3381 = vmatprep.subr.mxu0 0.0
        %3382 = vmatpush1.msra.mxu0 0.0
        %3383 = vmatprep.subr.mxu0 0.0
        %3384 = vmatpush1.msra.mxu0 0.0
        %3385 = vmatprep.subr.mxu0 0.0
        %3386 = vmatpush1.msra.mxu0 0.0
        %3387 = vmatprep.subr.mxu0 0.0
        %3388 = vmatpush1.msra.mxu0 0.0
        %3389 = vmatprep.subr.mxu0 0.0
        %3390 = vmatpush1.msra.mxu0 0.0
        %3391 = vmatprep.subr.mxu0 0.0
        %3392 = vmatpush1.msra.mxu0 0.0
        %3393 = vmatprep.subr.mxu0 0.0
        %3394 = vmatpush1.msra.mxu0 0.0
        %3395 = vmatprep.subr.mxu0 0.0
        %3396 = vmatpush1.msra.mxu0 0.0
        %3397 = vmatprep.subr.mxu0 0.0
        %3398 = vmatpush1.msra.mxu0 %v3366
        %3399 = vmatprep.subr.mxu0 0.0
        %3400 = vmatpush1.msra.mxu0 %v3365
        %3401 = vmatprep.subr.mxu0 0.0
        %3402 = vmatpush1.msra.mxu0 %v3364
        %3403 = vmatprep.subr.mxu0 0.0
        %3404 = vmatpush1.msra.mxu0 %v3363
        %3405 = vmatprep.subr.mxu0 0.0
        %3406 = vmatpush1.msra.mxu0 %v3362
        %3407 = vmatprep.subr.mxu0 0.0
        %3408 = vmatpush1.msra.mxu0 %v3361
        %3409 = vmatprep.subr.mxu0 0.0
        %3410 = vmatpush1.msra.mxu0 %v3360
        %3411 = vmatprep.subr.mxu0 0.0
        %3412 = vmatpush1.msra.mxu0 %v3359
        %3413 = vmatprep.subr.mxu0 0.0
        %3414 = vmatpush2.msra.mxu0 0.0
        %3415 = vmatprep.subr.mxu0 0.0
        %3416 = vmatpush2.msra.mxu0 0.0
        %3417 = vmatprep.subr.mxu0 0.0
        %3418 = vmatpush2.msra.mxu0 0.0
        %3419 = vmatprep.subr.mxu0 0.0
        %3420 = vmatpush2.msra.mxu0 0.0
        %3421 = vmatprep.subr.mxu0 0.0
        %3422 = vmatpush2.msra.mxu0 0.0
        %3423 = vmatprep.subr.mxu0 0.0
        %3424 = vmatpush2.msra.mxu0 0.0
        %3425 = vmatprep.subr.mxu0 0.0
        %3426 = vmatpush2.msra.mxu0 0.0
        %3427 = vmatprep.subr.mxu0 0.0
        %3428 = vmatpush2.msra.mxu0 0.0
        %3429 = vmatprep.subr.mxu0 0.0
        %3430 = vmatpush2.msra.mxu0 0.0
        %3431 = vmatprep.subr.mxu0 0.0
        %3432 = vmatpush2.msra.mxu0 0.0
        %3433 = vmatprep.subr.mxu0 0.0
        %3434 = vmatpush2.msra.mxu0 0.0
        %3435 = vmatprep.subr.mxu0 0.0
        %3436 = vmatpush2.msra.mxu0 0.0
        %3437 = vmatprep.subr.mxu0 0.0
        %3438 = vmatpush2.msra.mxu0 0.0
        %3439 = vmatprep.subr.mxu0 0.0
        %3440 = vmatpush2.msra.mxu0 0.0
        %3441 = vmatprep.subr.mxu0 0.0
        %3442 = vmatpush2.msra.mxu0 0.0
        %3443 = vmatprep.subr.mxu0 0.0
        %3444 = vmatpush2.msra.mxu0 0.0
        %3445 = vmatprep.mubr.f32.mxu0 0.0
        %3446 = vmatmul.mubr.f32.gmra.mxu0 %v3376
        %v3447 = vpop.f32.mrf.mxu0
        %v3448 = vadd.f32 %v3373, %v3447
        %v3449 = vpop.f32.mrf.mxu0
        %3450 = vmatprep.mubr.f32.mxu0 0.0
        %3451 = vmatmul.mubr.f32.gmra.mxu0 %v3379
        %v3452 = vpop.f32.mrf.mxu0
        %v3453 = vadd.f32 %v3373, %v3452
        %v3454 = vpop.f32.mrf.mxu0
        %3455 = vdwg.mxu0
        %v3456 = vadd.f32 %v2592, %v3448
        %v3457 = vadd.f32 %v2593, %v3453
        %s3458 = scalar_lea.vmem %s18, 1
        %v3459 = vld [vmem:[%s3458] sm:$0x1]
        %s3460 = scalar_lea.vmem %s19, 1
        %v3461 = vld [vmem:[%s3460] sm:$0x1]
        %v3462 = vsel %vm1400, %v3456, 0.0
        %3463 = vadd.xlane.f32.xlu0 %v3462
        %v3464 = vpop.xlane.xlu0 %3463
        %v3465 = vsel %vm1400, %v3457, 0.0
        %3466 = vadd.xlane.f32.xlu0 %v3465
        %v3467 = vpop.xlane.xlu0 %3466
        %v3468 = vmul.f32 %v3464, %v2282
        %v3469 = vmul.f32 %v3467, %v2282
        %v3470 = vsub.f32 %v3456, %v3468
        %v3471 = vsub.f32 %v3457, %v3469
        %v3472 = vmul.f32 %v3470, %v3470
        %v3473 = vmul.f32 %v3471, %v3471
        %v3474 = vsel %vm1400, %v3472, 0.0
        %3475 = vadd.xlane.f32.xlu0 %v3474
        %v3476 = vpop.xlane.xlu0 %3475
        %v3477 = vsel %vm1400, %v3473, 0.0
        %3478 = vadd.xlane.f32.xlu0 %v3477
        %v3479 = vpop.xlane.xlu0 %3478
        %v3480 = vmul.f32 %v3476, %v2282
        %v3481 = vmul.f32 %v3479, %v2282
        %v3482 = vadd.f32 %v3480, 1e-05
        %v3483 = vadd.f32 %v3481, 1e-05
        %v3484 = vrsqrt.pop %v3482
        %v3485 = vrsqrt.pop %v3483
        %v3486 = vmul.f32 %v3470, %v3484
        %v3487 = vmul.f32 %v3471, %v3485
        %v3489 = vlaneseq
        %v3490 = vshrl.u32 %v3489, 7
        %v3491 = vsub.s32 0, %v3490
        %v3492 = vrot.slane %v3459, %v3491
        %v3494 = vmul.f32 %v3486, %v3492
        %v3495 = vmul.f32 %v3487, %v3492
        %v3497 = vlaneseq
        %v3498 = vshrl.u32 %v3497, 7
        %v3499 = vsub.s32 0, %v3498
        %v3500 = vrot.slane %v3461, %v3499
        %v3502 = vadd.f32 %v3494, %v3500
        %v3503 = vadd.f32 %v3495, %v3500
        %s3504 = scalar_lea.vmem %s14, 128
        %v3505 = vld [vmem:[%s3504] sm:$0xff]
        %v3506 = vld [vmem:[%s3504 + $0x8] sm:$0xff]
        %v3507 = vld [vmem:[%s3504 + $0x10] sm:$0xff]
        %v3508 = vld [vmem:[%s3504 + $0x18] sm:$0xff]
        %v3509 = vld [vmem:[%s3504 + $0x20] sm:$0xff]
        %v3510 = vld [vmem:[%s3504 + $0x28] sm:$0xff]
        %v3511 = vld [vmem:[%s3504 + $0x30] sm:$0xff]
        %v3512 = vld [vmem:[%s3504 + $0x38] sm:$0xff]
        %v3513 = vld [vmem:[%s3504 + $0x40] sm:$0xff]
        %v3514 = vld [vmem:[%s3504 + $0x48] sm:$0xff]
        %v3515 = vld [vmem:[%s3504 + $0x50] sm:$0xff]
        %v3516 = vld [vmem:[%s3504 + $0x58] sm:$0xff]
        %v3517 = vld [vmem:[%s3504 + $0x60] sm:$0xff]
        %v3518 = vld [vmem:[%s3504 + $0x68] sm:$0xff]
        %v3519 = vld [vmem:[%s3504 + $0x70] sm:$0xff]
        %v3520 = vld [vmem:[%s3504 + $0x78] sm:$0xff]
        %s3521 = scalar_lea.vmem %s15, 2
        %v3522 = vld [vmem:[%s3521] sm:$0x3]
        %v3524 = vlaneseq
        %v3525 = vshrl.u32 %v3524, 7
        %v3526 = vsub.s32 0, %v3525
        %v3527 = vrot.slane %v3522, %v3526
        %v3528 = vlaneseq
        %v3529 = vshrl.u32 %v3528, 7
        %v3530 = vsub.s32 1, %v3529
        %v3531 = vrot.slane %v3522, %v3530
        %v3535 = vsel %vm1400, %v3502, 0
        %v3538 = vsel %vm1400, %v3503, 0
        %3540 = vmatprep.subr.mxu0 0.0
        %3541 = vmatpush1.msra.mxu0 0.0
        %3542 = vmatprep.subr.mxu0 0.0
        %3543 = vmatpush1.msra.mxu0 0.0
        %3544 = vmatprep.subr.mxu0 0.0
        %3545 = vmatpush1.msra.mxu0 0.0
        %3546 = vmatprep.subr.mxu0 0.0
        %3547 = vmatpush1.msra.mxu0 0.0
        %3548 = vmatprep.subr.mxu0 0.0
        %3549 = vmatpush1.msra.mxu0 0.0
        %3550 = vmatprep.subr.mxu0 0.0
        %3551 = vmatpush1.msra.mxu0 0.0
        %3552 = vmatprep.subr.mxu0 0.0
        %3553 = vmatpush1.msra.mxu0 0.0
        %3554 = vmatprep.subr.mxu0 0.0
        %3555 = vmatpush1.msra.mxu0 0.0
        %3556 = vmatprep.subr.mxu0 %v3520
        %3557 = vmatpush1.msra.mxu0 %v3519
        %3558 = vmatprep.subr.mxu0 %v3518
        %3559 = vmatpush1.msra.mxu0 %v3517
        %3560 = vmatprep.subr.mxu0 %v3516
        %3561 = vmatpush1.msra.mxu0 %v3515
        %3562 = vmatprep.subr.mxu0 %v3514
        %3563 = vmatpush1.msra.mxu0 %v3513
        %3564 = vmatprep.subr.mxu0 %v3512
        %3565 = vmatpush1.msra.mxu0 %v3511
        %3566 = vmatprep.subr.mxu0 %v3510
        %3567 = vmatpush1.msra.mxu0 %v3509
        %3568 = vmatprep.subr.mxu0 %v3508
        %3569 = vmatpush1.msra.mxu0 %v3507
        %3570 = vmatprep.subr.mxu0 %v3506
        %3571 = vmatpush1.msra.mxu0 %v3505
        %3572 = vmatprep.subr.mxu0 0.0
        %3573 = vmatpush2.msra.mxu0 0.0
        %3574 = vmatprep.subr.mxu0 0.0
        %3575 = vmatpush2.msra.mxu0 0.0
        %3576 = vmatprep.subr.mxu0 0.0
        %3577 = vmatpush2.msra.mxu0 0.0
        %3578 = vmatprep.subr.mxu0 0.0
        %3579 = vmatpush2.msra.mxu0 0.0
        %3580 = vmatprep.subr.mxu0 0.0
        %3581 = vmatpush2.msra.mxu0 0.0
        %3582 = vmatprep.subr.mxu0 0.0
        %3583 = vmatpush2.msra.mxu0 0.0
        %3584 = vmatprep.subr.mxu0 0.0
        %3585 = vmatpush2.msra.mxu0 0.0
        %3586 = vmatprep.subr.mxu0 0.0
        %3587 = vmatpush2.msra.mxu0 0.0
        %3588 = vmatprep.subr.mxu0 0.0
        %3589 = vmatpush2.msra.mxu0 0.0
        %3590 = vmatprep.subr.mxu0 0.0
        %3591 = vmatpush2.msra.mxu0 0.0
        %3592 = vmatprep.subr.mxu0 0.0
        %3593 = vmatpush2.msra.mxu0 0.0
        %3594 = vmatprep.subr.mxu0 0.0
        %3595 = vmatpush2.msra.mxu0 0.0
        %3596 = vmatprep.subr.mxu0 0.0
        %3597 = vmatpush2.msra.mxu0 0.0
        %3598 = vmatprep.subr.mxu0 0.0
        %3599 = vmatpush2.msra.mxu0 0.0
        %3600 = vmatprep.subr.mxu0 0.0
        %3601 = vmatpush2.msra.mxu0 0.0
        %3602 = vmatprep.subr.mxu0 0.0
        %3603 = vmatpush2.msra.mxu0 0.0
        %3604 = vmatprep.mubr.f32.mxu0 0.0
        %3605 = vmatmul.mubr.f32.gmra.mxu0 %v3535
        %v3606 = vpop.f32.mrf.mxu0
        %v3607 = vadd.f32 %v3527, %v3606
        %v3608 = vpop.f32.mrf.mxu0
        %v3609 = vadd.f32 %v3531, %v3608
        %3610 = vmatprep.mubr.f32.mxu0 0.0
        %3611 = vmatmul.mubr.f32.gmra.mxu0 %v3538
        %v3612 = vpop.f32.mrf.mxu0
        %v3613 = vadd.f32 %v3527, %v3612
        %v3614 = vpop.f32.mrf.mxu0
        %v3615 = vadd.f32 %v3531, %v3614
        %3616 = vdwg.mxu0
        %v3617 = vmax.f32 %v3607, 0.0
        %v3618 = vmax.f32 %v3609, 0.0
        %v3619 = vmax.f32 %v3613, 0.0
        %v3620 = vmax.f32 %v3615, 0.0
        %s3621 = scalar_lea.vmem %s16, 256
        %v3622 = vld [vmem:[%s3621] sm:$0xff]
        %v3623 = vld [vmem:[%s3621 + $0x8] sm:$0xff]
        %v3624 = vld [vmem:[%s3621 + $0x10] sm:$0xff]
        %v3625 = vld [vmem:[%s3621 + $0x18] sm:$0xff]
        %v3626 = vld [vmem:[%s3621 + $0x20] sm:$0xff]
        %v3627 = vld [vmem:[%s3621 + $0x28] sm:$0xff]
        %v3628 = vld [vmem:[%s3621 + $0x30] sm:$0xff]
        %v3629 = vld [vmem:[%s3621 + $0x38] sm:$0xff]
        %v3630 = vld [vmem:[%s3621 + $0x40] sm:$0xff]
        %v3631 = vld [vmem:[%s3621 + $0x48] sm:$0xff]
        %v3632 = vld [vmem:[%s3621 + $0x50] sm:$0xff]
        %v3633 = vld [vmem:[%s3621 + $0x58] sm:$0xff]
        %v3634 = vld [vmem:[%s3621 + $0x60] sm:$0xff]
        %v3635 = vld [vmem:[%s3621 + $0x68] sm:$0xff]
        %v3636 = vld [vmem:[%s3621 + $0x70] sm:$0xff]
        %v3637 = vld [vmem:[%s3621 + $0x78] sm:$0xff]
        %v3638 = vld [vmem:[%s3621 + $0x80] sm:$0xff]
        %v3639 = vld [vmem:[%s3621 + $0x88] sm:$0xff]
        %v3640 = vld [vmem:[%s3621 + $0x90] sm:$0xff]
        %v3641 = vld [vmem:[%s3621 + $0x98] sm:$0xff]
        %v3642 = vld [vmem:[%s3621 + $0xa0] sm:$0xff]
        %v3643 = vld [vmem:[%s3621 + $0xa8] sm:$0xff]
        %v3644 = vld [vmem:[%s3621 + $0xb0] sm:$0xff]
        %v3645 = vld [vmem:[%s3621 + $0xb8] sm:$0xff]
        %v3646 = vld [vmem:[%s3621 + $0xc0] sm:$0xff]
        %v3647 = vld [vmem:[%s3621 + $0xc8] sm:$0xff]
        %v3648 = vld [vmem:[%s3621 + $0xd0] sm:$0xff]
        %v3649 = vld [vmem:[%s3621 + $0xd8] sm:$0xff]
        %v3650 = vld [vmem:[%s3621 + $0xe0] sm:$0xff]
        %v3651 = vld [vmem:[%s3621 + $0xe8] sm:$0xff]
        %v3652 = vld [vmem:[%s3621 + $0xf0] sm:$0xff]
        %v3653 = vld [vmem:[%s3621 + $0xf8] sm:$0xff]
        %s3654 = scalar_lea.vmem %s17, 1
        %v3655 = vld [vmem:[%s3654] sm:$0x1]
        %v3657 = vlaneseq
        %v3658 = vshrl.u32 %v3657, 7
        %v3659 = vsub.s32 0, %v3658
        %v3660 = vrot.slane %v3655, %v3659
        %3662 = vmatprep.subr.mxu0 0.0
        %3663 = vmatpush1.msra.mxu0 %v3637
        %3664 = vmatprep.subr.mxu0 0.0
        %3665 = vmatpush1.msra.mxu0 %v3636
        %3666 = vmatprep.subr.mxu0 0.0
        %3667 = vmatpush1.msra.mxu0 %v3635
        %3668 = vmatprep.subr.mxu0 0.0
        %3669 = vmatpush1.msra.mxu0 %v3634
        %3670 = vmatprep.subr.mxu0 0.0
        %3671 = vmatpush1.msra.mxu0 %v3633
        %3672 = vmatprep.subr.mxu0 0.0
        %3673 = vmatpush1.msra.mxu0 %v3632
        %3674 = vmatprep.subr.mxu0 0.0
        %3675 = vmatpush1.msra.mxu0 %v3631
        %3676 = vmatprep.subr.mxu0 0.0
        %3677 = vmatpush1.msra.mxu0 %v3630
        %3678 = vmatprep.subr.mxu0 0.0
        %3679 = vmatpush1.msra.mxu0 %v3629
        %3680 = vmatprep.subr.mxu0 0.0
        %3681 = vmatpush1.msra.mxu0 %v3628
        %3682 = vmatprep.subr.mxu0 0.0
        %3683 = vmatpush1.msra.mxu0 %v3627
        %3684 = vmatprep.subr.mxu0 0.0
        %3685 = vmatpush1.msra.mxu0 %v3626
        %3686 = vmatprep.subr.mxu0 0.0
        %3687 = vmatpush1.msra.mxu0 %v3625
        %3688 = vmatprep.subr.mxu0 0.0
        %3689 = vmatpush1.msra.mxu0 %v3624
        %3690 = vmatprep.subr.mxu0 0.0
        %3691 = vmatpush1.msra.mxu0 %v3623
        %3692 = vmatprep.subr.mxu0 0.0
        %3693 = vmatpush1.msra.mxu0 %v3622
        %3694 = vmatprep.subr.mxu0 0.0
        %3695 = vmatpush2.msra.mxu0 %v3653
        %3696 = vmatprep.subr.mxu0 0.0
        %3697 = vmatpush2.msra.mxu0 %v3652
        %3698 = vmatprep.subr.mxu0 0.0
        %3699 = vmatpush2.msra.mxu0 %v3651
        %3700 = vmatprep.subr.mxu0 0.0
        %3701 = vmatpush2.msra.mxu0 %v3650
        %3702 = vmatprep.subr.mxu0 0.0
        %3703 = vmatpush2.msra.mxu0 %v3649
        %3704 = vmatprep.subr.mxu0 0.0
        %3705 = vmatpush2.msra.mxu0 %v3648
        %3706 = vmatprep.subr.mxu0 0.0
        %3707 = vmatpush2.msra.mxu0 %v3647
        %3708 = vmatprep.subr.mxu0 0.0
        %3709 = vmatpush2.msra.mxu0 %v3646
        %3710 = vmatprep.subr.mxu0 0.0
        %3711 = vmatpush2.msra.mxu0 %v3645
        %3712 = vmatprep.subr.mxu0 0.0
        %3713 = vmatpush2.msra.mxu0 %v3644
        %3714 = vmatprep.subr.mxu0 0.0
        %3715 = vmatpush2.msra.mxu0 %v3643
        %3716 = vmatprep.subr.mxu0 0.0
        %3717 = vmatpush2.msra.mxu0 %v3642
        %3718 = vmatprep.subr.mxu0 0.0
        %3719 = vmatpush2.msra.mxu0 %v3641
        %3720 = vmatprep.subr.mxu0 0.0
        %3721 = vmatpush2.msra.mxu0 %v3640
        %3722 = vmatprep.subr.mxu0 0.0
        %3723 = vmatpush2.msra.mxu0 %v3639
        %3724 = vmatprep.subr.mxu0 0.0
        %3725 = vmatpush2.msra.mxu0 %v3638
        %3726 = vmatprep.mubr.f32.mxu0 %v3618
        %3727 = vmatmul.mubr.f32.gmra.mxu0 %v3617
        %v3728 = vpop.f32.mrf.mxu0
        %v3729 = vadd.f32 %v3660, %v3728
        %v3730 = vpop.f32.mrf.mxu0
        %3731 = vmatprep.mubr.f32.mxu0 %v3620
        %3732 = vmatmul.mubr.f32.gmra.mxu0 %v3619
        %v3733 = vpop.f32.mrf.mxu0
        %v3734 = vadd.f32 %v3660, %v3733
        %v3735 = vpop.f32.mrf.mxu0
        %3736 = vdwg.mxu0
        %v3737 = vadd.f32 %v3502, %v3729
        %v3738 = vadd.f32 %v3503, %v3734
        %s3739 = scalar_lea.vmem %s20, 1
        %v3740 = vld [vmem:[%s3739] sm:$0x1]
        %s3741 = scalar_lea.vmem %s21, 1
        %v3742 = vld [vmem:[%s3741] sm:$0x1]
        %v3743 = vsel %vm1400, %v3737, 0.0
        %3744 = vadd.xlane.f32.xlu0 %v3743
        %v3745 = vpop.xlane.xlu0 %3744
        %v3746 = vsel %vm1400, %v3738, 0.0
        %3747 = vadd.xlane.f32.xlu0 %v3746
        %v3748 = vpop.xlane.xlu0 %3747
        %v3749 = vmul.f32 %v3745, %v2282
        %v3750 = vmul.f32 %v3748, %v2282
        %v3751 = vsub.f32 %v3737, %v3749
        %v3752 = vsub.f32 %v3738, %v3750
        %v3753 = vmul.f32 %v3751, %v3751
        %v3754 = vmul.f32 %v3752, %v3752
        %v3755 = vsel %vm1400, %v3753, 0.0
        %3756 = vadd.xlane.f32.xlu0 %v3755
        %v3757 = vpop.xlane.xlu0 %3756
        %v3758 = vsel %vm1400, %v3754, 0.0
        %3759 = vadd.xlane.f32.xlu0 %v3758
        %v3760 = vpop.xlane.xlu0 %3759
        %v3761 = vmul.f32 %v3757, %v2282
        %v3762 = vmul.f32 %v3760, %v2282
        %v3763 = vadd.f32 %v3761, 1e-05
        %v3764 = vadd.f32 %v3762, 1e-05
        %v3765 = vrsqrt.pop %v3763
        %v3766 = vrsqrt.pop %v3764
        %v3767 = vmul.f32 %v3751, %v3765
        %v3768 = vmul.f32 %v3752, %v3766
        %v3770 = vlaneseq
        %v3771 = vshrl.u32 %v3770, 7
        %v3772 = vsub.s32 0, %v3771
        %v3773 = vrot.slane %v3740, %v3772
        %v3775 = vmul.f32 %v3767, %v3773
        %v3776 = vmul.f32 %v3768, %v3773
        %v3778 = vlaneseq
        %v3779 = vshrl.u32 %v3778, 7
        %v3780 = vsub.s32 0, %v3779
        %v3781 = vrot.slane %v3742, %v3780
        %v3783 = vadd.f32 %v3775, %v3781
        %v3784 = vadd.f32 %v3776, %v3781
        %s3785 = scalar_lea.vmem %s6, 128
        %v3786 = vld [vmem:[%s3785] sm:$0xff]
        %v3787 = vld [vmem:[%s3785 + $0x8] sm:$0xff]
        %v3788 = vld [vmem:[%s3785 + $0x10] sm:$0xff]
        %v3789 = vld [vmem:[%s3785 + $0x18] sm:$0xff]
        %v3790 = vld [vmem:[%s3785 + $0x20] sm:$0xff]
        %v3791 = vld [vmem:[%s3785 + $0x28] sm:$0xff]
        %v3792 = vld [vmem:[%s3785 + $0x30] sm:$0xff]
        %v3793 = vld [vmem:[%s3785 + $0x38] sm:$0xff]
        %s3794 = scalar_lea.vmem %s9, 2
        %v3795 = vld [vmem:[%s3794] sm:$0x1]
        %v3797 = vlaneseq
        %v3798 = vshrl.u32 %v3797, 7
        %v3799 = vsub.s32 0, %v3798
        %v3800 = vrot.slane %v3795, %v3799
        %v3803 = vsel %vm1400, %v3783, 0
        %v3806 = vsel %vm1400, %v3784, 0
        %3808 = vmatprep.subr.mxu0 0.0
        %3809 = vmatpush1.msra.mxu0 0.0
        %3810 = vmatprep.subr.mxu0 0.0
        %3811 = vmatpush1.msra.mxu0 0.0
        %3812 = vmatprep.subr.mxu0 0.0
        %3813 = vmatpush1.msra.mxu0 0.0
        %3814 = vmatprep.subr.mxu0 0.0
        %3815 = vmatpush1.msra.mxu0 0.0
        %3816 = vmatprep.subr.mxu0 0.0
        %3817 = vmatpush1.msra.mxu0 0.0
        %3818 = vmatprep.subr.mxu0 0.0
        %3819 = vmatpush1.msra.mxu0 0.0
        %3820 = vmatprep.subr.mxu0 0.0
        %3821 = vmatpush1.msra.mxu0 0.0
        %3822 = vmatprep.subr.mxu0 0.0
        %3823 = vmatpush1.msra.mxu0 0.0
        %3824 = vmatprep.subr.mxu0 0.0
        %3825 = vmatpush1.msra.mxu0 %v3793
        %3826 = vmatprep.subr.mxu0 0.0
        %3827 = vmatpush1.msra.mxu0 %v3792
        %3828 = vmatprep.subr.mxu0 0.0
        %3829 = vmatpush1.msra.mxu0 %v3791
        %3830 = vmatprep.subr.mxu0 0.0
        %3831 = vmatpush1.msra.mxu0 %v3790
        %3832 = vmatprep.subr.mxu0 0.0
        %3833 = vmatpush1.msra.mxu0 %v3789
        %3834 = vmatprep.subr.mxu0 0.0
        %3835 = vmatpush1.msra.mxu0 %v3788
        %3836 = vmatprep.subr.mxu0 0.0
        %3837 = vmatpush1.msra.mxu0 %v3787
        %3838 = vmatprep.subr.mxu0 0.0
        %3839 = vmatpush1.msra.mxu0 %v3786
        %3840 = vmatprep.subr.mxu0 0.0
        %3841 = vmatpush2.msra.mxu0 0.0
        %3842 = vmatprep.subr.mxu0 0.0
        %3843 = vmatpush2.msra.mxu0 0.0
        %3844 = vmatprep.subr.mxu0 0.0
        %3845 = vmatpush2.msra.mxu0 0.0
        %3846 = vmatprep.subr.mxu0 0.0
        %3847 = vmatpush2.msra.mxu0 0.0
        %3848 = vmatprep.subr.mxu0 0.0
        %3849 = vmatpush2.msra.mxu0 0.0
        %3850 = vmatprep.subr.mxu0 0.0
        %3851 = vmatpush2.msra.mxu0 0.0
        %3852 = vmatprep.subr.mxu0 0.0
        %3853 = vmatpush2.msra.mxu0 0.0
        %3854 = vmatprep.subr.mxu0 0.0
        %3855 = vmatpush2.msra.mxu0 0.0
        %3856 = vmatprep.subr.mxu0 0.0
        %3857 = vmatpush2.msra.mxu0 0.0
        %3858 = vmatprep.subr.mxu0 0.0
        %3859 = vmatpush2.msra.mxu0 0.0
        %3860 = vmatprep.subr.mxu0 0.0
        %3861 = vmatpush2.msra.mxu0 0.0
        %3862 = vmatprep.subr.mxu0 0.0
        %3863 = vmatpush2.msra.mxu0 0.0
        %3864 = vmatprep.subr.mxu0 0.0
        %3865 = vmatpush2.msra.mxu0 0.0
        %3866 = vmatprep.subr.mxu0 0.0
        %3867 = vmatpush2.msra.mxu0 0.0
        %3868 = vmatprep.subr.mxu0 0.0
        %3869 = vmatpush2.msra.mxu0 0.0
        %3870 = vmatprep.subr.mxu0 0.0
        %3871 = vmatpush2.msra.mxu0 0.0
        %3872 = vmatprep.mubr.f32.mxu0 0.0
        %3873 = vmatmul.mubr.f32.gmra.mxu0 %v3803
        %v3874 = vpop.f32.mrf.mxu0
        %v3875 = vadd.f32 %v3800, %v3874
        %v3876 = vpop.f32.mrf.mxu0
        %3877 = vmatprep.mubr.f32.mxu0 0.0
        %3878 = vmatmul.mubr.f32.gmra.mxu0 %v3806
        %v3879 = vpop.f32.mrf.mxu0
        %v3880 = vadd.f32 %v3800, %v3879
        %v3881 = vpop.f32.mrf.mxu0
        %3882 = vdwg.mxu0
        %s3883 = scalar_lea.vmem %s7, 128
        %v3884 = vld [vmem:[%s3883] sm:$0xff]
        %v3885 = vld [vmem:[%s3883 + $0x8] sm:$0xff]
        %v3886 = vld [vmem:[%s3883 + $0x10] sm:$0xff]
        %v3887 = vld [vmem:[%s3883 + $0x18] sm:$0xff]
        %v3888 = vld [vmem:[%s3883 + $0x20] sm:$0xff]
        %v3889 = vld [vmem:[%s3883 + $0x28] sm:$0xff]
        %v3890 = vld [vmem:[%s3883 + $0x30] sm:$0xff]
        %v3891 = vld [vmem:[%s3883 + $0x38] sm:$0xff]
        %s3892 = scalar_lea.vmem %s10, 2
        %v3893 = vld [vmem:[%s3892] sm:$0x1]
        %v3895 = vlaneseq
        %v3896 = vshrl.u32 %v3895, 7
        %v3897 = vsub.s32 0, %v3896
        %v3898 = vrot.slane %v3893, %v3897
        %3900 = vmatprep.subr.mxu0 0.0
        %3901 = vmatpush1.msra.mxu0 0.0
        %3902 = vmatprep.subr.mxu0 0.0
        %3903 = vmatpush1.msra.mxu0 0.0
        %3904 = vmatprep.subr.mxu0 0.0
        %3905 = vmatpush1.msra.mxu0 0.0
        %3906 = vmatprep.subr.mxu0 0.0
        %3907 = vmatpush1.msra.mxu0 0.0
        %3908 = vmatprep.subr.mxu0 0.0
        %3909 = vmatpush1.msra.mxu0 0.0
        %3910 = vmatprep.subr.mxu0 0.0
        %3911 = vmatpush1.msra.mxu0 0.0
        %3912 = vmatprep.subr.mxu0 0.0
        %3913 = vmatpush1.msra.mxu0 0.0
        %3914 = vmatprep.subr.mxu0 0.0
        %3915 = vmatpush1.msra.mxu0 0.0
        %3916 = vmatprep.subr.mxu0 0.0
        %3917 = vmatpush1.msra.mxu0 %v3891
        %3918 = vmatprep.subr.mxu0 0.0
        %3919 = vmatpush1.msra.mxu0 %v3890
        %3920 = vmatprep.subr.mxu0 0.0
        %3921 = vmatpush1.msra.mxu0 %v3889
        %3922 = vmatprep.subr.mxu0 0.0
        %3923 = vmatpush1.msra.mxu0 %v3888
        %3924 = vmatprep.subr.mxu0 0.0
        %3925 = vmatpush1.msra.mxu0 %v3887
        %3926 = vmatprep.subr.mxu0 0.0
        %3927 = vmatpush1.msra.mxu0 %v3886
        %3928 = vmatprep.subr.mxu0 0.0
        %3929 = vmatpush1.msra.mxu0 %v3885
        %3930 = vmatprep.subr.mxu0 0.0
        %3931 = vmatpush1.msra.mxu0 %v3884
        %3932 = vmatprep.subr.mxu0 0.0
        %3933 = vmatpush2.msra.mxu0 0.0
        %3934 = vmatprep.subr.mxu0 0.0
        %3935 = vmatpush2.msra.mxu0 0.0
        %3936 = vmatprep.subr.mxu0 0.0
        %3937 = vmatpush2.msra.mxu0 0.0
        %3938 = vmatprep.subr.mxu0 0.0
        %3939 = vmatpush2.msra.mxu0 0.0
        %3940 = vmatprep.subr.mxu0 0.0
        %3941 = vmatpush2.msra.mxu0 0.0
        %3942 = vmatprep.subr.mxu0 0.0
        %3943 = vmatpush2.msra.mxu0 0.0
        %3944 = vmatprep.subr.mxu0 0.0
        %3945 = vmatpush2.msra.mxu0 0.0
        %3946 = vmatprep.subr.mxu0 0.0
        %3947 = vmatpush2.msra.mxu0 0.0
        %3948 = vmatprep.subr.mxu0 0.0
        %3949 = vmatpush2.msra.mxu0 0.0
        %3950 = vmatprep.subr.mxu0 0.0
        %3951 = vmatpush2.msra.mxu0 0.0
        %3952 = vmatprep.subr.mxu0 0.0
        %3953 = vmatpush2.msra.mxu0 0.0
        %3954 = vmatprep.subr.mxu0 0.0
        %3955 = vmatpush2.msra.mxu0 0.0
        %3956 = vmatprep.subr.mxu0 0.0
        %3957 = vmatpush2.msra.mxu0 0.0
        %3958 = vmatprep.subr.mxu0 0.0
        %3959 = vmatpush2.msra.mxu0 0.0
        %3960 = vmatprep.subr.mxu0 0.0
        %3961 = vmatpush2.msra.mxu0 0.0
        %3962 = vmatprep.subr.mxu0 0.0
        %3963 = vmatpush2.msra.mxu0 0.0
        %3964 = vmatprep.mubr.f32.mxu0 0.0
        %3965 = vmatmul.mubr.f32.gmra.mxu0 %v3803
        %v3966 = vpop.f32.mrf.mxu0
        %v3967 = vadd.f32 %v3898, %v3966
        %v3968 = vpop.f32.mrf.mxu0
        %3969 = vmatprep.mubr.f32.mxu0 0.0
        %3970 = vmatmul.mubr.f32.gmra.mxu0 %v3806
        %v3971 = vpop.f32.mrf.mxu0
        %v3972 = vadd.f32 %v3898, %v3971
        %v3973 = vpop.f32.mrf.mxu0
        %3974 = vdwg.mxu0
        %s3975 = scalar_lea.vmem %s8, 128
        %v3976 = vld [vmem:[%s3975] sm:$0xff]
        %v3977 = vld [vmem:[%s3975 + $0x8] sm:$0xff]
        %v3978 = vld [vmem:[%s3975 + $0x10] sm:$0xff]
        %v3979 = vld [vmem:[%s3975 + $0x18] sm:$0xff]
        %v3980 = vld [vmem:[%s3975 + $0x20] sm:$0xff]
        %v3981 = vld [vmem:[%s3975 + $0x28] sm:$0xff]
        %v3982 = vld [vmem:[%s3975 + $0x30] sm:$0xff]
        %v3983 = vld [vmem:[%s3975 + $0x38] sm:$0xff]
        %s3984 = scalar_lea.vmem %s11, 2
        %v3985 = vld [vmem:[%s3984] sm:$0x1]
        %v3987 = vlaneseq
        %v3988 = vshrl.u32 %v3987, 7
        %v3989 = vsub.s32 0, %v3988
        %v3990 = vrot.slane %v3985, %v3989
        %3992 = vmatprep.subr.mxu0 0.0
        %3993 = vmatpush1.msra.mxu0 0.0
        %3994 = vmatprep.subr.mxu0 0.0
        %3995 = vmatpush1.msra.mxu0 0.0
        %3996 = vmatprep.subr.mxu0 0.0
        %3997 = vmatpush1.msra.mxu0 0.0
        %3998 = vmatprep.subr.mxu0 0.0
        %3999 = vmatpush1.msra.mxu0 0.0
        %4000 = vmatprep.subr.mxu0 0.0
        %4001 = vmatpush1.msra.mxu0 0.0
        %4002 = vmatprep.subr.mxu0 0.0
        %4003 = vmatpush1.msra.mxu0 0.0
        %4004 = vmatprep.subr.mxu0 0.0
        %4005 = vmatpush1.msra.mxu0 0.0
        %4006 = vmatprep.subr.mxu0 0.0
        %4007 = vmatpush1.msra.mxu0 0.0
        %4008 = vmatprep.subr.mxu0 0.0
        %4009 = vmatpush1.msra.mxu0 %v3983
        %4010 = vmatprep.subr.mxu0 0.0
        %4011 = vmatpush1.msra.mxu0 %v3982
        %4012 = vmatprep.subr.mxu0 0.0
        %4013 = vmatpush1.msra.mxu0 %v3981
        %4014 = vmatprep.subr.mxu0 0.0
        %4015 = vmatpush1.msra.mxu0 %v3980
        %4016 = vmatprep.subr.mxu0 0.0
        %4017 = vmatpush1.msra.mxu0 %v3979
        %4018 = vmatprep.subr.mxu0 0.0
        %4019 = vmatpush1.msra.mxu0 %v3978
        %4020 = vmatprep.subr.mxu0 0.0
        %4021 = vmatpush1.msra.mxu0 %v3977
        %4022 = vmatprep.subr.mxu0 0.0
        %4023 = vmatpush1.msra.mxu0 %v3976
        %4024 = vmatprep.subr.mxu0 0.0
        %4025 = vmatpush2.msra.mxu0 0.0
        %4026 = vmatprep.subr.mxu0 0.0
        %4027 = vmatpush2.msra.mxu0 0.0
        %4028 = vmatprep.subr.mxu0 0.0
        %4029 = vmatpush2.msra.mxu0 0.0
        %4030 = vmatprep.subr.mxu0 0.0
        %4031 = vmatpush2.msra.mxu0 0.0
        %4032 = vmatprep.subr.mxu0 0.0
        %4033 = vmatpush2.msra.mxu0 0.0
        %4034 = vmatprep.subr.mxu0 0.0
        %4035 = vmatpush2.msra.mxu0 0.0
        %4036 = vmatprep.subr.mxu0 0.0
        %4037 = vmatpush2.msra.mxu0 0.0
        %4038 = vmatprep.subr.mxu0 0.0
        %4039 = vmatpush2.msra.mxu0 0.0
        %4040 = vmatprep.subr.mxu0 0.0
        %4041 = vmatpush2.msra.mxu0 0.0
        %4042 = vmatprep.subr.mxu0 0.0
        %4043 = vmatpush2.msra.mxu0 0.0
        %4044 = vmatprep.subr.mxu0 0.0
        %4045 = vmatpush2.msra.mxu0 0.0
        %4046 = vmatprep.subr.mxu0 0.0
        %4047 = vmatpush2.msra.mxu0 0.0
        %4048 = vmatprep.subr.mxu0 0.0
        %4049 = vmatpush2.msra.mxu0 0.0
        %4050 = vmatprep.subr.mxu0 0.0
        %4051 = vmatpush2.msra.mxu0 0.0
        %4052 = vmatprep.subr.mxu0 0.0
        %4053 = vmatpush2.msra.mxu0 0.0
        %4054 = vmatprep.subr.mxu0 0.0
        %4055 = vmatpush2.msra.mxu0 0.0
        %4056 = vmatprep.mubr.f32.mxu0 0.0
        %4057 = vmatmul.mubr.f32.gmra.mxu0 %v3803
        %v4058 = vpop.f32.mrf.mxu0
        %v4059 = vadd.f32 %v3990, %v4058
        %v4060 = vpop.f32.mrf.mxu0
        %4061 = vmatprep.mubr.f32.mxu0 0.0
        %4062 = vmatmul.mubr.f32.gmra.mxu0 %v3806
        %v4063 = vpop.f32.mrf.mxu0
        %v4064 = vadd.f32 %v3990, %v4063
        %v4065 = vpop.f32.mrf.mxu0
        %4066 = vdwg.mxu0
        %v4067 = vmul.f32 %v3967, %v1662
        %v4068 = vmul.f32 %v3972, %v1663
        %v4069 = vmul.f32 %v3967, %v1664
        %v4070 = vmul.f32 %v3972, %v1665
        %v4071 = vmul.f32 %v3967, %v1666
        %v4072 = vmul.f32 %v3972, %v1667
        %v4073 = vmul.f32 %v3967, %v1668
        %v4074 = vmul.f32 %v3972, %v1669
        %v4075 = vmul.f32 %v3967, %v1670
        %v4076 = vmul.f32 %v3972, %v1671
        %v4077 = vmul.f32 %v3967, %v1672
        %v4078 = vmul.f32 %v3972, %v1673
        %v4079 = vmul.f32 %v3967, %v1674
        %v4080 = vmul.f32 %v3972, %v1675
        %v4081 = vmul.f32 %v3967, %v1676
        %v4082 = vmul.f32 %v3972, %v1677
        %v4083 = vmul.f32 %v4059, %v1662
        %v4084 = vmul.f32 %v4064, %v1663
        %v4085 = vmul.f32 %v4059, %v1664
        %v4086 = vmul.f32 %v4064, %v1665
        %v4087 = vmul.f32 %v4059, %v1666
        %v4088 = vmul.f32 %v4064, %v1667
        %v4089 = vmul.f32 %v4059, %v1668
        %v4090 = vmul.f32 %v4064, %v1669
        %v4091 = vmul.f32 %v4059, %v1670
        %v4092 = vmul.f32 %v4064, %v1671
        %v4093 = vmul.f32 %v4059, %v1672
        %v4094 = vmul.f32 %v4064, %v1673
        %v4095 = vmul.f32 %v4059, %v1674
        %v4096 = vmul.f32 %v4064, %v1675
        %v4097 = vmul.f32 %v4059, %v1676
        %v4098 = vmul.f32 %v4064, %v1677
        %v4099 = vmul.f32 %v3875, 0.35355338
        %v4100 = vmul.f32 %v3880, 0.35355338
        %v4102 = vsel %vm1400, %v4099, 0
        %v4105 = vsel %vm1400, %v4100, 0
        %v4108 = vsel %vm1400, %v4067, 0
        %v4111 = vsel %vm1400, %v4068, 0
        %v4114 = vsel %vm1400, %v4069, 0
        %v4117 = vsel %vm1400, %v4070, 0
        %v4120 = vsel %vm1400, %v4071, 0
        %v4123 = vsel %vm1400, %v4072, 0
        %v4126 = vsel %vm1400, %v4073, 0
        %v4129 = vsel %vm1400, %v4074, 0
        %v4132 = vsel %vm1400, %v4075, 0
        %v4135 = vsel %vm1400, %v4076, 0
        %v4138 = vsel %vm1400, %v4077, 0
        %v4141 = vsel %vm1400, %v4078, 0
        %v4144 = vsel %vm1400, %v4079, 0
        %v4147 = vsel %vm1400, %v4080, 0
        %v4150 = vsel %vm1400, %v4081, 0
        %v4153 = vsel %vm1400, %v4082, 0
        %4155 = vmatprep.subr.mxu0 0.0
        %4156 = vmatpush1.xpose.msra.mxu0 %v4153
        %4157 = vmatprep.subr.mxu0 0.0
        %4158 = vmatpush1.xpose.msra.mxu0 %v4150
        %4159 = vmatprep.subr.mxu0 0.0
        %4160 = vmatpush1.xpose.msra.mxu0 %v4147
        %4161 = vmatprep.subr.mxu0 0.0
        %4162 = vmatpush1.xpose.msra.mxu0 %v4144
        %4163 = vmatprep.subr.mxu0 0.0
        %4164 = vmatpush1.xpose.msra.mxu0 %v4141
        %4165 = vmatprep.subr.mxu0 0.0
        %4166 = vmatpush1.xpose.msra.mxu0 %v4138
        %4167 = vmatprep.subr.mxu0 0.0
        %4168 = vmatpush1.xpose.msra.mxu0 %v4135
        %4169 = vmatprep.subr.mxu0 0.0
        %4170 = vmatpush1.xpose.msra.mxu0 %v4132
        %4171 = vmatprep.subr.mxu0 0.0
        %4172 = vmatpush1.xpose.msra.mxu0 %v4129
        %4173 = vmatprep.subr.mxu0 0.0
        %4174 = vmatpush1.xpose.msra.mxu0 %v4126
        %4175 = vmatprep.subr.mxu0 0.0
        %4176 = vmatpush1.xpose.msra.mxu0 %v4123
        %4177 = vmatprep.subr.mxu0 0.0
        %4178 = vmatpush1.xpose.msra.mxu0 %v4120
        %4179 = vmatprep.subr.mxu0 0.0
        %4180 = vmatpush1.xpose.msra.mxu0 %v4117
        %4181 = vmatprep.subr.mxu0 0.0
        %4182 = vmatpush1.xpose.msra.mxu0 %v4114
        %4183 = vmatprep.subr.mxu0 0.0
        %4184 = vmatpush1.xpose.msra.mxu0 %v4111
        %4185 = vmatprep.subr.mxu0 0.0
        %4186 = vmatpush1.xpose.msra.mxu0 %v4108
        %4187 = vmatprep.subr.mxu0 0.0
        %4188 = vmatpush2.xpose.msra.mxu0 0.0
        %4189 = vmatprep.subr.mxu0 0.0
        %4190 = vmatpush2.xpose.msra.mxu0 0.0
        %4191 = vmatprep.subr.mxu0 0.0
        %4192 = vmatpush2.xpose.msra.mxu0 0.0
        %4193 = vmatprep.subr.mxu0 0.0
        %4194 = vmatpush2.xpose.msra.mxu0 0.0
        %4195 = vmatprep.subr.mxu0 0.0
        %4196 = vmatpush2.xpose.msra.mxu0 0.0
        %4197 = vmatprep.subr.mxu0 0.0
        %4198 = vmatpush2.xpose.msra.mxu0 0.0
        %4199 = vmatprep.subr.mxu0 0.0
        %4200 = vmatpush2.xpose.msra.mxu0 0.0
        %4201 = vmatprep.subr.mxu0 0.0
        %4202 = vmatpush2.xpose.msra.mxu0 0.0
        %4203 = vmatprep.subr.mxu0 0.0
        %4204 = vmatpush2.xpose.msra.mxu0 0.0
        %4205 = vmatprep.subr.mxu0 0.0
        %4206 = vmatpush2.xpose.msra.mxu0 0.0
        %4207 = vmatprep.subr.mxu0 0.0
        %4208 = vmatpush2.xpose.msra.mxu0 0.0
        %4209 = vmatprep.subr.mxu0 0.0
        %4210 = vmatpush2.xpose.msra.mxu0 0.0
        %4211 = vmatprep.subr.mxu0 0.0
        %4212 = vmatpush2.xpose.msra.mxu0 0.0
        %4213 = vmatprep.subr.mxu0 0.0
        %4214 = vmatpush2.xpose.msra.mxu0 0.0
        %4215 = vmatprep.subr.mxu0 0.0
        %4216 = vmatpush2.xpose.msra.mxu0 0.0
        %4217 = vmatprep.subr.mxu0 0.0
        %4218 = vmatpush2.xpose.msra.mxu0 0.0
        %4219 = vmatprep.mubr.f32.mxu0 0.0
        %4220 = vmatmul.mubr.f32.gmra.mxu0 %v4102
        %v4221 = vpop.f32.mrf.mxu0
        %v4222 = vadd.f32 0.0, %v4221
        %v4223 = vpop.f32.mrf.mxu0
        %4224 = vmatprep.mubr.f32.mxu0 0.0
        %4225 = vmatmul.mubr.f32.gmra.mxu0 %v4105
        %v4226 = vpop.f32.mrf.mxu0
        %v4227 = vadd.f32 0.0, %v4226
        %v4228 = vpop.f32.mrf.mxu0
        %4229 = vdwg.mxu0
        %v4230 = vadd.f32 %v4222, %v1841
        %v4231 = vadd.f32 %v4227, %v1842
        %v4232 = vadd.f32 %v4222, %v1843
        %v4233 = vadd.f32 %v4227, %v1844
        %v4234 = vadd.f32 %v4222, %v1845
        %v4235 = vadd.f32 %v4227, %v1846
        %v4236 = vadd.f32 %v4222, %v1847
        %v4237 = vadd.f32 %v4227, %v1848
        %v4238 = vadd.f32 %v4222, %v1849
        %v4239 = vadd.f32 %v4227, %v1850
        %v4240 = vadd.f32 %v4222, %v1851
        %v4241 = vadd.f32 %v4227, %v1852
        %v4242 = vadd.f32 %v4222, %v1853
        %v4243 = vadd.f32 %v4227, %v1854
        %v4244 = vadd.f32 %v4222, %v1855
        %v4245 = vadd.f32 %v4227, %v1856
        %4246 = vmax.xlane.f32.xlu0 %v4230
        %v4247 = vpop.xlane.xlu0 %4246
        %4248 = vmax.xlane.f32.xlu0 %v4231
        %v4249 = vpop.xlane.xlu0 %4248
        %4250 = vmax.xlane.f32.xlu0 %v4232
        %v4251 = vpop.xlane.xlu0 %4250
        %4252 = vmax.xlane.f32.xlu0 %v4233
        %v4253 = vpop.xlane.xlu0 %4252
        %4254 = vmax.xlane.f32.xlu0 %v4234
        %v4255 = vpop.xlane.xlu0 %4254
        %4256 = vmax.xlane.f32.xlu0 %v4235
        %v4257 = vpop.xlane.xlu0 %4256
        %4258 = vmax.xlane.f32.xlu0 %v4236
        %v4259 = vpop.xlane.xlu0 %4258
        %4260 = vmax.xlane.f32.xlu0 %v4237
        %v4261 = vpop.xlane.xlu0 %4260
        %4262 = vmax.xlane.f32.xlu0 %v4238
        %v4263 = vpop.xlane.xlu0 %4262
        %4264 = vmax.xlane.f32.xlu0 %v4239
        %v4265 = vpop.xlane.xlu0 %4264
        %4266 = vmax.xlane.f32.xlu0 %v4240
        %v4267 = vpop.xlane.xlu0 %4266
        %4268 = vmax.xlane.f32.xlu0 %v4241
        %v4269 = vpop.xlane.xlu0 %4268
        %4270 = vmax.xlane.f32.xlu0 %v4242
        %v4271 = vpop.xlane.xlu0 %4270
        %4272 = vmax.xlane.f32.xlu0 %v4243
        %v4273 = vpop.xlane.xlu0 %4272
        %4274 = vmax.xlane.f32.xlu0 %v4244
        %v4275 = vpop.xlane.xlu0 %4274
        %4276 = vmax.xlane.f32.xlu0 %v4245
        %v4277 = vpop.xlane.xlu0 %4276
        %v4278 = vsub.f32 %v4230, %v4247
        %v4279 = vsub.f32 %v4231, %v4249
        %v4280 = vsub.f32 %v4232, %v4251
        %v4281 = vsub.f32 %v4233, %v4253
        %v4282 = vsub.f32 %v4234, %v4255
        %v4283 = vsub.f32 %v4235, %v4257
        %v4284 = vsub.f32 %v4236, %v4259
        %v4285 = vsub.f32 %v4237, %v4261
        %v4286 = vsub.f32 %v4238, %v4263
        %v4287 = vsub.f32 %v4239, %v4265
        %v4288 = vsub.f32 %v4240, %v4267
        %v4289 = vsub.f32 %v4241, %v4269
        %v4290 = vsub.f32 %v4242, %v4271
        %v4291 = vsub.f32 %v4243, %v4273
        %v4292 = vsub.f32 %v4244, %v4275
        %v4293 = vsub.f32 %v4245, %v4277
        %v4294 = vmul.f32 %v4278, 1.442695
        %v4295 = vpow.pop %v4294
        %v4296 = vmul.f32 %v4279, 1.442695
        %v4297 = vpow.pop %v4296
        %v4298 = vmul.f32 %v4280, 1.442695
        %v4299 = vpow.pop %v4298
        %v4300 = vmul.f32 %v4281, 1.442695
        %v4301 = vpow.pop %v4300
        %v4302 = vmul.f32 %v4282, 1.442695
        %v4303 = vpow.pop %v4302
        %v4304 = vmul.f32 %v4283, 1.442695
        %v4305 = vpow.pop %v4304
        %v4306 = vmul.f32 %v4284, 1.442695
        %v4307 = vpow.pop %v4306
        %v4308 = vmul.f32 %v4285, 1.442695
        %v4309 = vpow.pop %v4308
        %v4310 = vmul.f32 %v4286, 1.442695
        %v4311 = vpow.pop %v4310
        %v4312 = vmul.f32 %v4287, 1.442695
        %v4313 = vpow.pop %v4312
        %v4314 = vmul.f32 %v4288, 1.442695
        %v4315 = vpow.pop %v4314
        %v4316 = vmul.f32 %v4289, 1.442695
        %v4317 = vpow.pop %v4316
        %v4318 = vmul.f32 %v4290, 1.442695
        %v4319 = vpow.pop %v4318
        %v4320 = vmul.f32 %v4291, 1.442695
        %v4321 = vpow.pop %v4320
        %v4322 = vmul.f32 %v4292, 1.442695
        %v4323 = vpow.pop %v4322
        %v4324 = vmul.f32 %v4293, 1.442695
        %v4325 = vpow.pop %v4324
        %4326 = vadd.xlane.f32.xlu0 %v4295
        %v4327 = vpop.xlane.xlu0 %4326
        %4328 = vadd.xlane.f32.xlu0 %v4297
        %v4329 = vpop.xlane.xlu0 %4328
        %4330 = vadd.xlane.f32.xlu0 %v4299
        %v4331 = vpop.xlane.xlu0 %4330
        %4332 = vadd.xlane.f32.xlu0 %v4301
        %v4333 = vpop.xlane.xlu0 %4332
        %4334 = vadd.xlane.f32.xlu0 %v4303
        %v4335 = vpop.xlane.xlu0 %4334
        %4336 = vadd.xlane.f32.xlu0 %v4305
        %v4337 = vpop.xlane.xlu0 %4336
        %4338 = vadd.xlane.f32.xlu0 %v4307
        %v4339 = vpop.xlane.xlu0 %4338
        %4340 = vadd.xlane.f32.xlu0 %v4309
        %v4341 = vpop.xlane.xlu0 %4340
        %4342 = vadd.xlane.f32.xlu0 %v4311
        %v4343 = vpop.xlane.xlu0 %4342
        %4344 = vadd.xlane.f32.xlu0 %v4313
        %v4345 = vpop.xlane.xlu0 %4344
        %4346 = vadd.xlane.f32.xlu0 %v4315
        %v4347 = vpop.xlane.xlu0 %4346
        %4348 = vadd.xlane.f32.xlu0 %v4317
        %v4349 = vpop.xlane.xlu0 %4348
        %4350 = vadd.xlane.f32.xlu0 %v4319
        %v4351 = vpop.xlane.xlu0 %4350
        %4352 = vadd.xlane.f32.xlu0 %v4321
        %v4353 = vpop.xlane.xlu0 %4352
        %4354 = vadd.xlane.f32.xlu0 %v4323
        %v4355 = vpop.xlane.xlu0 %4354
        %4356 = vadd.xlane.f32.xlu0 %v4325
        %v4357 = vpop.xlane.xlu0 %4356
        %v4358 = vrcp.pop %v4327
        %v4359 = vrcp.pop %v4329
        %v4360 = vrcp.pop %v4331
        %v4361 = vrcp.pop %v4333
        %v4362 = vrcp.pop %v4335
        %v4363 = vrcp.pop %v4337
        %v4364 = vrcp.pop %v4339
        %v4365 = vrcp.pop %v4341
        %v4366 = vrcp.pop %v4343
        %v4367 = vrcp.pop %v4345
        %v4368 = vrcp.pop %v4347
        %v4369 = vrcp.pop %v4349
        %v4370 = vrcp.pop %v4351
        %v4371 = vrcp.pop %v4353
        %v4372 = vrcp.pop %v4355
        %v4373 = vrcp.pop %v4357
        %v4374 = vmul.f32 %v4295, %v4358
        %v4375 = vmul.f32 %v4297, %v4359
        %v4376 = vmul.f32 %v4299, %v4360
        %v4377 = vmul.f32 %v4301, %v4361
        %v4378 = vmul.f32 %v4303, %v4362
        %v4379 = vmul.f32 %v4305, %v4363
        %v4380 = vmul.f32 %v4307, %v4364
        %v4381 = vmul.f32 %v4309, %v4365
        %v4382 = vmul.f32 %v4311, %v4366
        %v4383 = vmul.f32 %v4313, %v4367
        %v4384 = vmul.f32 %v4315, %v4368
        %v4385 = vmul.f32 %v4317, %v4369
        %v4386 = vmul.f32 %v4319, %v4370
        %v4387 = vmul.f32 %v4321, %v4371
        %v4388 = vmul.f32 %v4323, %v4372
        %v4389 = vmul.f32 %v4325, %v4373
        %4390 = vmatprep.subr.mxu0 0.0
        %4391 = vmatpush1.msra.mxu0 %v4098
        %4392 = vmatprep.subr.mxu0 0.0
        %4393 = vmatpush1.msra.mxu0 %v4097
        %4394 = vmatprep.subr.mxu0 0.0
        %4395 = vmatpush1.msra.mxu0 %v4096
        %4396 = vmatprep.subr.mxu0 0.0
        %4397 = vmatpush1.msra.mxu0 %v4095
        %4398 = vmatprep.subr.mxu0 0.0
        %4399 = vmatpush1.msra.mxu0 %v4094
        %4400 = vmatprep.subr.mxu0 0.0
        %4401 = vmatpush1.msra.mxu0 %v4093
        %4402 = vmatprep.subr.mxu0 0.0
        %4403 = vmatpush1.msra.mxu0 %v4092
        %4404 = vmatprep.subr.mxu0 0.0
        %4405 = vmatpush1.msra.mxu0 %v4091
        %4406 = vmatprep.subr.mxu0 0.0
        %4407 = vmatpush1.msra.mxu0 %v4090
        %4408 = vmatprep.subr.mxu0 0.0
        %4409 = vmatpush1.msra.mxu0 %v4089
        %4410 = vmatprep.subr.mxu0 0.0
        %4411 = vmatpush1.msra.mxu0 %v4088
        %4412 = vmatprep.subr.mxu0 0.0
        %4413 = vmatpush1.msra.mxu0 %v4087
        %4414 = vmatprep.subr.mxu0 0.0
        %4415 = vmatpush1.msra.mxu0 %v4086
        %4416 = vmatprep.subr.mxu0 0.0
        %4417 = vmatpush1.msra.mxu0 %v4085
        %4418 = vmatprep.subr.mxu0 0.0
        %4419 = vmatpush1.msra.mxu0 %v4084
        %4420 = vmatprep.subr.mxu0 0.0
        %4421 = vmatpush1.msra.mxu0 %v4083
        %4422 = vmatprep.subr.mxu0 0.0
        %4423 = vmatpush2.msra.mxu0 0.0
        %4424 = vmatprep.subr.mxu0 0.0
        %4425 = vmatpush2.msra.mxu0 0.0
        %4426 = vmatprep.subr.mxu0 0.0
        %4427 = vmatpush2.msra.mxu0 0.0
        %4428 = vmatprep.subr.mxu0 0.0
        %4429 = vmatpush2.msra.mxu0 0.0
        %4430 = vmatprep.subr.mxu0 0.0
        %4431 = vmatpush2.msra.mxu0 0.0
        %4432 = vmatprep.subr.mxu0 0.0
        %4433 = vmatpush2.msra.mxu0 0.0
        %4434 = vmatprep.subr.mxu0 0.0
        %4435 = vmatpush2.msra.mxu0 0.0
        %4436 = vmatprep.subr.mxu0 0.0
        %4437 = vmatpush2.msra.mxu0 0.0
        %4438 = vmatprep.subr.mxu0 0.0
        %4439 = vmatpush2.msra.mxu0 0.0
        %4440 = vmatprep.subr.mxu0 0.0
        %4441 = vmatpush2.msra.mxu0 0.0
        %4442 = vmatprep.subr.mxu0 0.0
        %4443 = vmatpush2.msra.mxu0 0.0
        %4444 = vmatprep.subr.mxu0 0.0
        %4445 = vmatpush2.msra.mxu0 0.0
        %4446 = vmatprep.subr.mxu0 0.0
        %4447 = vmatpush2.msra.mxu0 0.0
        %4448 = vmatprep.subr.mxu0 0.0
        %4449 = vmatpush2.msra.mxu0 0.0
        %4450 = vmatprep.subr.mxu0 0.0
        %4451 = vmatpush2.msra.mxu0 0.0
        %4452 = vmatprep.subr.mxu0 0.0
        %4453 = vmatpush2.msra.mxu0 0.0
        %4454 = vmatprep.mubr.f32.mxu0 0.0
        %4455 = vmatmul.mubr.f32.gmra.mxu0 %v4374
        %v4456 = vpop.f32.mrf.mxu0
        %v4457 = vadd.f32 0.0, %v4456
        %v4458 = vpop.f32.mrf.mxu0
        %4459 = vmatprep.mubr.f32.mxu0 0.0
        %4460 = vmatmul.mubr.f32.gmra.mxu0 %v4375
        %v4461 = vpop.f32.mrf.mxu0
        %v4462 = vadd.f32 0.0, %v4461
        %v4463 = vpop.f32.mrf.mxu0
        %4464 = vmatprep.mubr.f32.mxu0 0.0
        %4465 = vmatmul.mubr.f32.gmra.mxu0 %v4376
        %v4466 = vpop.f32.mrf.mxu0
        %v4467 = vadd.f32 0.0, %v4466
        %v4468 = vpop.f32.mrf.mxu0
        %4469 = vmatprep.mubr.f32.mxu0 0.0
        %4470 = vmatmul.mubr.f32.gmra.mxu0 %v4377
        %v4471 = vpop.f32.mrf.mxu0
        %v4472 = vadd.f32 0.0, %v4471
        %v4473 = vpop.f32.mrf.mxu0
        %4474 = vmatprep.mubr.f32.mxu0 0.0
        %4475 = vmatmul.mubr.f32.gmra.mxu0 %v4378
        %v4476 = vpop.f32.mrf.mxu0
        %v4477 = vadd.f32 0.0, %v4476
        %v4478 = vpop.f32.mrf.mxu0
        %4479 = vmatprep.mubr.f32.mxu0 0.0
        %4480 = vmatmul.mubr.f32.gmra.mxu0 %v4379
        %v4481 = vpop.f32.mrf.mxu0
        %v4482 = vadd.f32 0.0, %v4481
        %v4483 = vpop.f32.mrf.mxu0
        %4484 = vmatprep.mubr.f32.mxu0 0.0
        %4485 = vmatmul.mubr.f32.gmra.mxu0 %v4380
        %v4486 = vpop.f32.mrf.mxu0
        %v4487 = vadd.f32 0.0, %v4486
        %v4488 = vpop.f32.mrf.mxu0
        %4489 = vmatprep.mubr.f32.mxu0 0.0
        %4490 = vmatmul.mubr.f32.gmra.mxu0 %v4381
        %v4491 = vpop.f32.mrf.mxu0
        %v4492 = vadd.f32 0.0, %v4491
        %v4493 = vpop.f32.mrf.mxu0
        %4494 = vmatprep.mubr.f32.mxu0 0.0
        %4495 = vmatmul.mubr.f32.gmra.mxu0 %v4382
        %v4496 = vpop.f32.mrf.mxu0
        %v4497 = vadd.f32 0.0, %v4496
        %v4498 = vpop.f32.mrf.mxu0
        %4499 = vmatprep.mubr.f32.mxu0 0.0
        %4500 = vmatmul.mubr.f32.gmra.mxu0 %v4383
        %v4501 = vpop.f32.mrf.mxu0
        %v4502 = vadd.f32 0.0, %v4501
        %v4503 = vpop.f32.mrf.mxu0
        %4504 = vmatprep.mubr.f32.mxu0 0.0
        %4505 = vmatmul.mubr.f32.gmra.mxu0 %v4384
        %v4506 = vpop.f32.mrf.mxu0
        %v4507 = vadd.f32 0.0, %v4506
        %v4508 = vpop.f32.mrf.mxu0
        %4509 = vmatprep.mubr.f32.mxu0 0.0
        %4510 = vmatmul.mubr.f32.gmra.mxu0 %v4385
        %v4511 = vpop.f32.mrf.mxu0
        %v4512 = vadd.f32 0.0, %v4511
        %v4513 = vpop.f32.mrf.mxu0
        %4514 = vmatprep.mubr.f32.mxu0 0.0
        %4515 = vmatmul.mubr.f32.gmra.mxu0 %v4386
        %v4516 = vpop.f32.mrf.mxu0
        %v4517 = vadd.f32 0.0, %v4516
        %v4518 = vpop.f32.mrf.mxu0
        %4519 = vmatprep.mubr.f32.mxu0 0.0
        %4520 = vmatmul.mubr.f32.gmra.mxu0 %v4387
        %v4521 = vpop.f32.mrf.mxu0
        %v4522 = vadd.f32 0.0, %v4521
        %v4523 = vpop.f32.mrf.mxu0
        %4524 = vmatprep.mubr.f32.mxu0 0.0
        %4525 = vmatmul.mubr.f32.gmra.mxu0 %v4388
        %v4526 = vpop.f32.mrf.mxu0
        %v4527 = vadd.f32 0.0, %v4526
        %v4528 = vpop.f32.mrf.mxu0
        %4529 = vmatprep.mubr.f32.mxu0 0.0
        %4530 = vmatmul.mubr.f32.gmra.mxu0 %v4389
        %v4531 = vpop.f32.mrf.mxu0
        %v4532 = vadd.f32 0.0, %v4531
        %v4533 = vpop.f32.mrf.mxu0
        %4534 = vdwg.mxu0
        %v4535 = vadd.f32 %v4457, %v4467
        %v4536 = vadd.f32 %v4462, %v4472
        %v4537 = vadd.f32 %v4535, %v4477
        %v4538 = vadd.f32 %v4536, %v4482
        %v4539 = vadd.f32 %v4537, %v4487
        %v4540 = vadd.f32 %v4538, %v4492
        %v4541 = vadd.f32 %v4539, %v4497
        %v4542 = vadd.f32 %v4540, %v4502
        %v4543 = vadd.f32 %v4541, %v4507
        %v4544 = vadd.f32 %v4542, %v4512
        %v4545 = vadd.f32 %v4543, %v4517
        %v4546 = vadd.f32 %v4544, %v4522
        %v4547 = vadd.f32 %v4545, %v4527
        %v4548 = vadd.f32 %v4546, %v4532
        %s4549 = scalar_lea.vmem %s12, 128
        %v4550 = vld [vmem:[%s4549] sm:$0xff]
        %v4551 = vld [vmem:[%s4549 + $0x8] sm:$0xff]
        %v4552 = vld [vmem:[%s4549 + $0x10] sm:$0xff]
        %v4553 = vld [vmem:[%s4549 + $0x18] sm:$0xff]
        %v4554 = vld [vmem:[%s4549 + $0x20] sm:$0xff]
        %v4555 = vld [vmem:[%s4549 + $0x28] sm:$0xff]
        %v4556 = vld [vmem:[%s4549 + $0x30] sm:$0xff]
        %v4557 = vld [vmem:[%s4549 + $0x38] sm:$0xff]
        %s4558 = scalar_lea.vmem %s13, 2
        %v4559 = vld [vmem:[%s4558] sm:$0x1]
        %v4561 = vlaneseq
        %v4562 = vshrl.u32 %v4561, 7
        %v4563 = vsub.s32 0, %v4562
        %v4564 = vrot.slane %v4559, %v4563
        %v4567 = vsel %vm1400, %v4547, 0
        %v4570 = vsel %vm1400, %v4548, 0
        %4572 = vmatprep.subr.mxu0 0.0
        %4573 = vmatpush1.msra.mxu0 0.0
        %4574 = vmatprep.subr.mxu0 0.0
        %4575 = vmatpush1.msra.mxu0 0.0
        %4576 = vmatprep.subr.mxu0 0.0
        %4577 = vmatpush1.msra.mxu0 0.0
        %4578 = vmatprep.subr.mxu0 0.0
        %4579 = vmatpush1.msra.mxu0 0.0
        %4580 = vmatprep.subr.mxu0 0.0
        %4581 = vmatpush1.msra.mxu0 0.0
        %4582 = vmatprep.subr.mxu0 0.0
        %4583 = vmatpush1.msra.mxu0 0.0
        %4584 = vmatprep.subr.mxu0 0.0
        %4585 = vmatpush1.msra.mxu0 0.0
        %4586 = vmatprep.subr.mxu0 0.0
        %4587 = vmatpush1.msra.mxu0 0.0
        %4588 = vmatprep.subr.mxu0 0.0
        %4589 = vmatpush1.msra.mxu0 %v4557
        %4590 = vmatprep.subr.mxu0 0.0
        %4591 = vmatpush1.msra.mxu0 %v4556
        %4592 = vmatprep.subr.mxu0 0.0
        %4593 = vmatpush1.msra.mxu0 %v4555
        %4594 = vmatprep.subr.mxu0 0.0
        %4595 = vmatpush1.msra.mxu0 %v4554
        %4596 = vmatprep.subr.mxu0 0.0
        %4597 = vmatpush1.msra.mxu0 %v4553
        %4598 = vmatprep.subr.mxu0 0.0
        %4599 = vmatpush1.msra.mxu0 %v4552
        %4600 = vmatprep.subr.mxu0 0.0
        %4601 = vmatpush1.msra.mxu0 %v4551
        %4602 = vmatprep.subr.mxu0 0.0
        %4603 = vmatpush1.msra.mxu0 %v4550
        %4604 = vmatprep.subr.mxu0 0.0
        %4605 = vmatpush2.msra.mxu0 0.0
        %4606 = vmatprep.subr.mxu0 0.0
        %4607 = vmatpush2.msra.mxu0 0.0
        %4608 = vmatprep.subr.mxu0 0.0
        %4609 = vmatpush2.msra.mxu0 0.0
        %4610 = vmatprep.subr.mxu0 0.0
        %4611 = vmatpush2.msra.mxu0 0.0
        %4612 = vmatprep.subr.mxu0 0.0
        %4613 = vmatpush2.msra.mxu0 0.0
        %4614 = vmatprep.subr.mxu0 0.0
        %4615 = vmatpush2.msra.mxu0 0.0
        %4616 = vmatprep.subr.mxu0 0.0
        %4617 = vmatpush2.msra.mxu0 0.0
        %4618 = vmatprep.subr.mxu0 0.0
        %4619 = vmatpush2.msra.mxu0 0.0
        %4620 = vmatprep.subr.mxu0 0.0
        %4621 = vmatpush2.msra.mxu0 0.0
        %4622 = vmatprep.subr.mxu0 0.0
        %4623 = vmatpush2.msra.mxu0 0.0
        %4624 = vmatprep.subr.mxu0 0.0
        %4625 = vmatpush2.msra.mxu0 0.0
        %4626 = vmatprep.subr.mxu0 0.0
        %4627 = vmatpush2.msra.mxu0 0.0
        %4628 = vmatprep.subr.mxu0 0.0
        %4629 = vmatpush2.msra.mxu0 0.0
        %4630 = vmatprep.subr.mxu0 0.0
        %4631 = vmatpush2.msra.mxu0 0.0
        %4632 = vmatprep.subr.mxu0 0.0
        %4633 = vmatpush2.msra.mxu0 0.0
        %4634 = vmatprep.subr.mxu0 0.0
        %4635 = vmatpush2.msra.mxu0 0.0
        %4636 = vmatprep.mubr.f32.mxu0 0.0
        %4637 = vmatmul.mubr.f32.gmra.mxu0 %v4567
        %v4638 = vpop.f32.mrf.mxu0
        %v4639 = vadd.f32 %v4564, %v4638
        %v4640 = vpop.f32.mrf.mxu0
        %4641 = vmatprep.mubr.f32.mxu0 0.0
        %4642 = vmatmul.mubr.f32.gmra.mxu0 %v4570
        %v4643 = vpop.f32.mrf.mxu0
        %v4644 = vadd.f32 %v4564, %v4643
        %v4645 = vpop.f32.mrf.mxu0
        %4646 = vdwg.mxu0
        %v4647 = vadd.f32 %v3783, %v4639
        %v4648 = vadd.f32 %v3784, %v4644
        %s4649 = scalar_lea.vmem %s18, 2
        %v4650 = vld [vmem:[%s4649] sm:$0x1]
        %s4651 = scalar_lea.vmem %s19, 2
        %v4652 = vld [vmem:[%s4651] sm:$0x1]
        %v4653 = vsel %vm1400, %v4647, 0.0
        %4654 = vadd.xlane.f32.xlu0 %v4653
        %v4655 = vpop.xlane.xlu0 %4654
        %v4656 = vsel %vm1400, %v4648, 0.0
        %4657 = vadd.xlane.f32.xlu0 %v4656
        %v4658 = vpop.xlane.xlu0 %4657
        %v4659 = vmul.f32 %v4655, %v2282
        %v4660 = vmul.f32 %v4658, %v2282
        %v4661 = vsub.f32 %v4647, %v4659
        %v4662 = vsub.f32 %v4648, %v4660
        %v4663 = vmul.f32 %v4661, %v4661
        %v4664 = vmul.f32 %v4662, %v4662
        %v4665 = vsel %vm1400, %v4663, 0.0
        %4666 = vadd.xlane.f32.xlu0 %v4665
        %v4667 = vpop.xlane.xlu0 %4666
        %v4668 = vsel %vm1400, %v4664, 0.0
        %4669 = vadd.xlane.f32.xlu0 %v4668
        %v4670 = vpop.xlane.xlu0 %4669
        %v4671 = vmul.f32 %v4667, %v2282
        %v4672 = vmul.f32 %v4670, %v2282
        %v4673 = vadd.f32 %v4671, 1e-05
        %v4674 = vadd.f32 %v4672, 1e-05
        %v4675 = vrsqrt.pop %v4673
        %v4676 = vrsqrt.pop %v4674
        %v4677 = vmul.f32 %v4661, %v4675
        %v4678 = vmul.f32 %v4662, %v4676
        %v4680 = vlaneseq
        %v4681 = vshrl.u32 %v4680, 7
        %v4682 = vsub.s32 0, %v4681
        %v4683 = vrot.slane %v4650, %v4682
        %v4685 = vmul.f32 %v4677, %v4683
        %v4686 = vmul.f32 %v4678, %v4683
        %v4688 = vlaneseq
        %v4689 = vshrl.u32 %v4688, 7
        %v4690 = vsub.s32 0, %v4689
        %v4691 = vrot.slane %v4652, %v4690
        %v4693 = vadd.f32 %v4685, %v4691
        %v4694 = vadd.f32 %v4686, %v4691
        %s4695 = scalar_lea.vmem %s14, 256
        %v4696 = vld [vmem:[%s4695] sm:$0xff]
        %v4697 = vld [vmem:[%s4695 + $0x8] sm:$0xff]
        %v4698 = vld [vmem:[%s4695 + $0x10] sm:$0xff]
        %v4699 = vld [vmem:[%s4695 + $0x18] sm:$0xff]
        %v4700 = vld [vmem:[%s4695 + $0x20] sm:$0xff]
        %v4701 = vld [vmem:[%s4695 + $0x28] sm:$0xff]
        %v4702 = vld [vmem:[%s4695 + $0x30] sm:$0xff]
        %v4703 = vld [vmem:[%s4695 + $0x38] sm:$0xff]
        %v4704 = vld [vmem:[%s4695 + $0x40] sm:$0xff]
        %v4705 = vld [vmem:[%s4695 + $0x48] sm:$0xff]
        %v4706 = vld [vmem:[%s4695 + $0x50] sm:$0xff]
        %v4707 = vld [vmem:[%s4695 + $0x58] sm:$0xff]
        %v4708 = vld [vmem:[%s4695 + $0x60] sm:$0xff]
        %v4709 = vld [vmem:[%s4695 + $0x68] sm:$0xff]
        %v4710 = vld [vmem:[%s4695 + $0x70] sm:$0xff]
        %v4711 = vld [vmem:[%s4695 + $0x78] sm:$0xff]
        %s4712 = scalar_lea.vmem %s15, 4
        %v4713 = vld [vmem:[%s4712] sm:$0x3]
        %v4715 = vlaneseq
        %v4716 = vshrl.u32 %v4715, 7
        %v4717 = vsub.s32 0, %v4716
        %v4718 = vrot.slane %v4713, %v4717
        %v4719 = vlaneseq
        %v4720 = vshrl.u32 %v4719, 7
        %v4721 = vsub.s32 1, %v4720
        %v4722 = vrot.slane %v4713, %v4721
        %v4726 = vsel %vm1400, %v4693, 0
        %v4729 = vsel %vm1400, %v4694, 0
        %4731 = vmatprep.subr.mxu0 0.0
        %4732 = vmatpush1.msra.mxu0 0.0
        %4733 = vmatprep.subr.mxu0 0.0
        %4734 = vmatpush1.msra.mxu0 0.0
        %4735 = vmatprep.subr.mxu0 0.0
        %4736 = vmatpush1.msra.mxu0 0.0
        %4737 = vmatprep.subr.mxu0 0.0
        %4738 = vmatpush1.msra.mxu0 0.0
        %4739 = vmatprep.subr.mxu0 0.0
        %4740 = vmatpush1.msra.mxu0 0.0
        %4741 = vmatprep.subr.mxu0 0.0
        %4742 = vmatpush1.msra.mxu0 0.0
        %4743 = vmatprep.subr.mxu0 0.0
        %4744 = vmatpush1.msra.mxu0 0.0
        %4745 = vmatprep.subr.mxu0 0.0
        %4746 = vmatpush1.msra.mxu0 0.0
        %4747 = vmatprep.subr.mxu0 %v4711
        %4748 = vmatpush1.msra.mxu0 %v4710
        %4749 = vmatprep.subr.mxu0 %v4709
        %4750 = vmatpush1.msra.mxu0 %v4708
        %4751 = vmatprep.subr.mxu0 %v4707
        %4752 = vmatpush1.msra.mxu0 %v4706
        %4753 = vmatprep.subr.mxu0 %v4705
        %4754 = vmatpush1.msra.mxu0 %v4704
        %4755 = vmatprep.subr.mxu0 %v4703
        %4756 = vmatpush1.msra.mxu0 %v4702
        %4757 = vmatprep.subr.mxu0 %v4701
        %4758 = vmatpush1.msra.mxu0 %v4700
        %4759 = vmatprep.subr.mxu0 %v4699
        %4760 = vmatpush1.msra.mxu0 %v4698
        %4761 = vmatprep.subr.mxu0 %v4697
        %4762 = vmatpush1.msra.mxu0 %v4696
        %4763 = vmatprep.subr.mxu0 0.0
        %4764 = vmatpush2.msra.mxu0 0.0
        %4765 = vmatprep.subr.mxu0 0.0
        %4766 = vmatpush2.msra.mxu0 0.0
        %4767 = vmatprep.subr.mxu0 0.0
        %4768 = vmatpush2.msra.mxu0 0.0
        %4769 = vmatprep.subr.mxu0 0.0
        %4770 = vmatpush2.msra.mxu0 0.0
        %4771 = vmatprep.subr.mxu0 0.0
        %4772 = vmatpush2.msra.mxu0 0.0
        %4773 = vmatprep.subr.mxu0 0.0
        %4774 = vmatpush2.msra.mxu0 0.0
        %4775 = vmatprep.subr.mxu0 0.0
        %4776 = vmatpush2.msra.mxu0 0.0
        %4777 = vmatprep.subr.mxu0 0.0
        %4778 = vmatpush2.msra.mxu0 0.0
        %4779 = vmatprep.subr.mxu0 0.0
        %4780 = vmatpush2.msra.mxu0 0.0
        %4781 = vmatprep.subr.mxu0 0.0
        %4782 = vmatpush2.msra.mxu0 0.0
        %4783 = vmatprep.subr.mxu0 0.0
        %4784 = vmatpush2.msra.mxu0 0.0
        %4785 = vmatprep.subr.mxu0 0.0
        %4786 = vmatpush2.msra.mxu0 0.0
        %4787 = vmatprep.subr.mxu0 0.0
        %4788 = vmatpush2.msra.mxu0 0.0
        %4789 = vmatprep.subr.mxu0 0.0
        %4790 = vmatpush2.msra.mxu0 0.0
        %4791 = vmatprep.subr.mxu0 0.0
        %4792 = vmatpush2.msra.mxu0 0.0
        %4793 = vmatprep.subr.mxu0 0.0
        %4794 = vmatpush2.msra.mxu0 0.0
        %4795 = vmatprep.mubr.f32.mxu0 0.0
        %4796 = vmatmul.mubr.f32.gmra.mxu0 %v4726
        %v4797 = vpop.f32.mrf.mxu0
        %v4798 = vadd.f32 %v4718, %v4797
        %v4799 = vpop.f32.mrf.mxu0
        %v4800 = vadd.f32 %v4722, %v4799
        %4801 = vmatprep.mubr.f32.mxu0 0.0
        %4802 = vmatmul.mubr.f32.gmra.mxu0 %v4729
        %v4803 = vpop.f32.mrf.mxu0
        %v4804 = vadd.f32 %v4718, %v4803
        %v4805 = vpop.f32.mrf.mxu0
        %v4806 = vadd.f32 %v4722, %v4805
        %4807 = vdwg.mxu0
        %v4808 = vmax.f32 %v4798, 0.0
        %v4809 = vmax.f32 %v4800, 0.0
        %v4810 = vmax.f32 %v4804, 0.0
        %v4811 = vmax.f32 %v4806, 0.0
        %s4812 = scalar_lea.vmem %s16, 512
        %v4813 = vld [vmem:[%s4812] sm:$0xff]
        %v4814 = vld [vmem:[%s4812 + $0x8] sm:$0xff]
        %v4815 = vld [vmem:[%s4812 + $0x10] sm:$0xff]
        %v4816 = vld [vmem:[%s4812 + $0x18] sm:$0xff]
        %v4817 = vld [vmem:[%s4812 + $0x20] sm:$0xff]
        %v4818 = vld [vmem:[%s4812 + $0x28] sm:$0xff]
        %v4819 = vld [vmem:[%s4812 + $0x30] sm:$0xff]
        %v4820 = vld [vmem:[%s4812 + $0x38] sm:$0xff]
        %v4821 = vld [vmem:[%s4812 + $0x40] sm:$0xff]
        %v4822 = vld [vmem:[%s4812 + $0x48] sm:$0xff]
        %v4823 = vld [vmem:[%s4812 + $0x50] sm:$0xff]
        %v4824 = vld [vmem:[%s4812 + $0x58] sm:$0xff]
        %v4825 = vld [vmem:[%s4812 + $0x60] sm:$0xff]
        %v4826 = vld [vmem:[%s4812 + $0x68] sm:$0xff]
        %v4827 = vld [vmem:[%s4812 + $0x70] sm:$0xff]
        %v4828 = vld [vmem:[%s4812 + $0x78] sm:$0xff]
        %v4829 = vld [vmem:[%s4812 + $0x80] sm:$0xff]
        %v4830 = vld [vmem:[%s4812 + $0x88] sm:$0xff]
        %v4831 = vld [vmem:[%s4812 + $0x90] sm:$0xff]
        %v4832 = vld [vmem:[%s4812 + $0x98] sm:$0xff]
        %v4833 = vld [vmem:[%s4812 + $0xa0] sm:$0xff]
        %v4834 = vld [vmem:[%s4812 + $0xa8] sm:$0xff]
        %v4835 = vld [vmem:[%s4812 + $0xb0] sm:$0xff]
        %v4836 = vld [vmem:[%s4812 + $0xb8] sm:$0xff]
        %v4837 = vld [vmem:[%s4812 + $0xc0] sm:$0xff]
        %v4838 = vld [vmem:[%s4812 + $0xc8] sm:$0xff]
        %v4839 = vld [vmem:[%s4812 + $0xd0] sm:$0xff]
        %v4840 = vld [vmem:[%s4812 + $0xd8] sm:$0xff]
        %v4841 = vld [vmem:[%s4812 + $0xe0] sm:$0xff]
        %v4842 = vld [vmem:[%s4812 + $0xe8] sm:$0xff]
        %v4843 = vld [vmem:[%s4812 + $0xf0] sm:$0xff]
        %v4844 = vld [vmem:[%s4812 + $0xf8] sm:$0xff]
        %s4845 = scalar_lea.vmem %s17, 2
        %v4846 = vld [vmem:[%s4845] sm:$0x1]
        %v4848 = vlaneseq
        %v4849 = vshrl.u32 %v4848, 7
        %v4850 = vsub.s32 0, %v4849
        %v4851 = vrot.slane %v4846, %v4850
        %4853 = vmatprep.subr.mxu0 0.0
        %4854 = vmatpush1.msra.mxu0 %v4828
        %4855 = vmatprep.subr.mxu0 0.0
        %4856 = vmatpush1.msra.mxu0 %v4827
        %4857 = vmatprep.subr.mxu0 0.0
        %4858 = vmatpush1.msra.mxu0 %v4826
        %4859 = vmatprep.subr.mxu0 0.0
        %4860 = vmatpush1.msra.mxu0 %v4825
        %4861 = vmatprep.subr.mxu0 0.0
        %4862 = vmatpush1.msra.mxu0 %v4824
        %4863 = vmatprep.subr.mxu0 0.0
        %4864 = vmatpush1.msra.mxu0 %v4823
        %4865 = vmatprep.subr.mxu0 0.0
        %4866 = vmatpush1.msra.mxu0 %v4822
        %4867 = vmatprep.subr.mxu0 0.0
        %4868 = vmatpush1.msra.mxu0 %v4821
        %4869 = vmatprep.subr.mxu0 0.0
        %4870 = vmatpush1.msra.mxu0 %v4820
        %4871 = vmatprep.subr.mxu0 0.0
        %4872 = vmatpush1.msra.mxu0 %v4819
        %4873 = vmatprep.subr.mxu0 0.0
        %4874 = vmatpush1.msra.mxu0 %v4818
        %4875 = vmatprep.subr.mxu0 0.0
        %4876 = vmatpush1.msra.mxu0 %v4817
        %4877 = vmatprep.subr.mxu0 0.0
        %4878 = vmatpush1.msra.mxu0 %v4816
        %4879 = vmatprep.subr.mxu0 0.0
        %4880 = vmatpush1.msra.mxu0 %v4815
        %4881 = vmatprep.subr.mxu0 0.0
        %4882 = vmatpush1.msra.mxu0 %v4814
        %4883 = vmatprep.subr.mxu0 0.0
        %4884 = vmatpush1.msra.mxu0 %v4813
        %4885 = vmatprep.subr.mxu0 0.0
        %4886 = vmatpush2.msra.mxu0 %v4844
        %4887 = vmatprep.subr.mxu0 0.0
        %4888 = vmatpush2.msra.mxu0 %v4843
        %4889 = vmatprep.subr.mxu0 0.0
        %4890 = vmatpush2.msra.mxu0 %v4842
        %4891 = vmatprep.subr.mxu0 0.0
        %4892 = vmatpush2.msra.mxu0 %v4841
        %4893 = vmatprep.subr.mxu0 0.0
        %4894 = vmatpush2.msra.mxu0 %v4840
        %4895 = vmatprep.subr.mxu0 0.0
        %4896 = vmatpush2.msra.mxu0 %v4839
        %4897 = vmatprep.subr.mxu0 0.0
        %4898 = vmatpush2.msra.mxu0 %v4838
        %4899 = vmatprep.subr.mxu0 0.0
        %4900 = vmatpush2.msra.mxu0 %v4837
        %4901 = vmatprep.subr.mxu0 0.0
        %4902 = vmatpush2.msra.mxu0 %v4836
        %4903 = vmatprep.subr.mxu0 0.0
        %4904 = vmatpush2.msra.mxu0 %v4835
        %4905 = vmatprep.subr.mxu0 0.0
        %4906 = vmatpush2.msra.mxu0 %v4834
        %4907 = vmatprep.subr.mxu0 0.0
        %4908 = vmatpush2.msra.mxu0 %v4833
        %4909 = vmatprep.subr.mxu0 0.0
        %4910 = vmatpush2.msra.mxu0 %v4832
        %4911 = vmatprep.subr.mxu0 0.0
        %4912 = vmatpush2.msra.mxu0 %v4831
        %4913 = vmatprep.subr.mxu0 0.0
        %4914 = vmatpush2.msra.mxu0 %v4830
        %4915 = vmatprep.subr.mxu0 0.0
        %4916 = vmatpush2.msra.mxu0 %v4829
        %4917 = vmatprep.mubr.f32.mxu0 %v4809
        %4918 = vmatmul.mubr.f32.gmra.mxu0 %v4808
        %v4919 = vpop.f32.mrf.mxu0
        %v4920 = vadd.f32 %v4851, %v4919
        %v4921 = vpop.f32.mrf.mxu0
        %4922 = vmatprep.mubr.f32.mxu0 %v4811
        %4923 = vmatmul.mubr.f32.gmra.mxu0 %v4810
        %v4924 = vpop.f32.mrf.mxu0
        %v4925 = vadd.f32 %v4851, %v4924
        %v4926 = vpop.f32.mrf.mxu0
        %4927 = vdwg.mxu0
        %v4928 = vadd.f32 %v4693, %v4920
        %v4929 = vadd.f32 %v4694, %v4925
        %s4930 = scalar_lea.vmem %s20, 2
        %v4931 = vld [vmem:[%s4930] sm:$0x1]
        %s4932 = scalar_lea.vmem %s21, 2
        %v4933 = vld [vmem:[%s4932] sm:$0x1]
        %v4934 = vsel %vm1400, %v4928, 0.0
        %4935 = vadd.xlane.f32.xlu0 %v4934
        %v4936 = vpop.xlane.xlu0 %4935
        %v4937 = vsel %vm1400, %v4929, 0.0
        %4938 = vadd.xlane.f32.xlu0 %v4937
        %v4939 = vpop.xlane.xlu0 %4938
        %v4940 = vmul.f32 %v4936, %v2282
        %v4941 = vmul.f32 %v4939, %v2282
        %v4942 = vsub.f32 %v4928, %v4940
        %v4943 = vsub.f32 %v4929, %v4941
        %v4944 = vmul.f32 %v4942, %v4942
        %v4945 = vmul.f32 %v4943, %v4943
        %v4946 = vsel %vm1400, %v4944, 0.0
        %4947 = vadd.xlane.f32.xlu0 %v4946
        %v4948 = vpop.xlane.xlu0 %4947
        %v4949 = vsel %vm1400, %v4945, 0.0
        %4950 = vadd.xlane.f32.xlu0 %v4949
        %v4951 = vpop.xlane.xlu0 %4950
        %v4952 = vmul.f32 %v4948, %v2282
        %v4953 = vmul.f32 %v4951, %v2282
        %v4954 = vadd.f32 %v4952, 1e-05
        %v4955 = vadd.f32 %v4953, 1e-05
        %v4956 = vrsqrt.pop %v4954
        %v4957 = vrsqrt.pop %v4955
        %v4958 = vmul.f32 %v4942, %v4956
        %v4959 = vmul.f32 %v4943, %v4957
        %v4961 = vlaneseq
        %v4962 = vshrl.u32 %v4961, 7
        %v4963 = vsub.s32 0, %v4962
        %v4964 = vrot.slane %v4931, %v4963
        %v4966 = vmul.f32 %v4958, %v4964
        %v4967 = vmul.f32 %v4959, %v4964
        %v4969 = vlaneseq
        %v4970 = vshrl.u32 %v4969, 7
        %v4971 = vsub.s32 0, %v4970
        %v4972 = vrot.slane %v4933, %v4971
        %v4974 = vadd.f32 %v4966, %v4972
        %v4975 = vadd.f32 %v4967, %v4972
        %s4976 = scalar_lea.vmem %s6, 192
        %v4977 = vld [vmem:[%s4976] sm:$0xff]
        %v4978 = vld [vmem:[%s4976 + $0x8] sm:$0xff]
        %v4979 = vld [vmem:[%s4976 + $0x10] sm:$0xff]
        %v4980 = vld [vmem:[%s4976 + $0x18] sm:$0xff]
        %v4981 = vld [vmem:[%s4976 + $0x20] sm:$0xff]
        %v4982 = vld [vmem:[%s4976 + $0x28] sm:$0xff]
        %v4983 = vld [vmem:[%s4976 + $0x30] sm:$0xff]
        %v4984 = vld [vmem:[%s4976 + $0x38] sm:$0xff]
        %s4985 = scalar_lea.vmem %s9, 3
        %v4986 = vld [vmem:[%s4985] sm:$0x1]
        %v4988 = vlaneseq
        %v4989 = vshrl.u32 %v4988, 7
        %v4990 = vsub.s32 0, %v4989
        %v4991 = vrot.slane %v4986, %v4990
        %v4994 = vsel %vm1400, %v4974, 0
        %v4997 = vsel %vm1400, %v4975, 0
        %4999 = vmatprep.subr.mxu0 0.0
        %5000 = vmatpush1.msra.mxu0 0.0
        %5001 = vmatprep.subr.mxu0 0.0
        %5002 = vmatpush1.msra.mxu0 0.0
        %5003 = vmatprep.subr.mxu0 0.0
        %5004 = vmatpush1.msra.mxu0 0.0
        %5005 = vmatprep.subr.mxu0 0.0
        %5006 = vmatpush1.msra.mxu0 0.0
        %5007 = vmatprep.subr.mxu0 0.0
        %5008 = vmatpush1.msra.mxu0 0.0
        %5009 = vmatprep.subr.mxu0 0.0
        %5010 = vmatpush1.msra.mxu0 0.0
        %5011 = vmatprep.subr.mxu0 0.0
        %5012 = vmatpush1.msra.mxu0 0.0
        %5013 = vmatprep.subr.mxu0 0.0
        %5014 = vmatpush1.msra.mxu0 0.0
        %5015 = vmatprep.subr.mxu0 0.0
        %5016 = vmatpush1.msra.mxu0 %v4984
        %5017 = vmatprep.subr.mxu0 0.0
        %5018 = vmatpush1.msra.mxu0 %v4983
        %5019 = vmatprep.subr.mxu0 0.0
        %5020 = vmatpush1.msra.mxu0 %v4982
        %5021 = vmatprep.subr.mxu0 0.0
        %5022 = vmatpush1.msra.mxu0 %v4981
        %5023 = vmatprep.subr.mxu0 0.0
        %5024 = vmatpush1.msra.mxu0 %v4980
        %5025 = vmatprep.subr.mxu0 0.0
        %5026 = vmatpush1.msra.mxu0 %v4979
        %5027 = vmatprep.subr.mxu0 0.0
        %5028 = vmatpush1.msra.mxu0 %v4978
        %5029 = vmatprep.subr.mxu0 0.0
        %5030 = vmatpush1.msra.mxu0 %v4977
        %5031 = vmatprep.subr.mxu0 0.0
        %5032 = vmatpush2.msra.mxu0 0.0
        %5033 = vmatprep.subr.mxu0 0.0
        %5034 = vmatpush2.msra.mxu0 0.0
        %5035 = vmatprep.subr.mxu0 0.0
        %5036 = vmatpush2.msra.mxu0 0.0
        %5037 = vmatprep.subr.mxu0 0.0
        %5038 = vmatpush2.msra.mxu0 0.0
        %5039 = vmatprep.subr.mxu0 0.0
        %5040 = vmatpush2.msra.mxu0 0.0
        %5041 = vmatprep.subr.mxu0 0.0
        %5042 = vmatpush2.msra.mxu0 0.0
        %5043 = vmatprep.subr.mxu0 0.0
        %5044 = vmatpush2.msra.mxu0 0.0
        %5045 = vmatprep.subr.mxu0 0.0
        %5046 = vmatpush2.msra.mxu0 0.0
        %5047 = vmatprep.subr.mxu0 0.0
        %5048 = vmatpush2.msra.mxu0 0.0
        %5049 = vmatprep.subr.mxu0 0.0
        %5050 = vmatpush2.msra.mxu0 0.0
        %5051 = vmatprep.subr.mxu0 0.0
        %5052 = vmatpush2.msra.mxu0 0.0
        %5053 = vmatprep.subr.mxu0 0.0
        %5054 = vmatpush2.msra.mxu0 0.0
        %5055 = vmatprep.subr.mxu0 0.0
        %5056 = vmatpush2.msra.mxu0 0.0
        %5057 = vmatprep.subr.mxu0 0.0
        %5058 = vmatpush2.msra.mxu0 0.0
        %5059 = vmatprep.subr.mxu0 0.0
        %5060 = vmatpush2.msra.mxu0 0.0
        %5061 = vmatprep.subr.mxu0 0.0
        %5062 = vmatpush2.msra.mxu0 0.0
        %5063 = vmatprep.mubr.f32.mxu0 0.0
        %5064 = vmatmul.mubr.f32.gmra.mxu0 %v4994
        %v5065 = vpop.f32.mrf.mxu0
        %v5066 = vadd.f32 %v4991, %v5065
        %v5067 = vpop.f32.mrf.mxu0
        %5068 = vmatprep.mubr.f32.mxu0 0.0
        %5069 = vmatmul.mubr.f32.gmra.mxu0 %v4997
        %v5070 = vpop.f32.mrf.mxu0
        %v5071 = vadd.f32 %v4991, %v5070
        %v5072 = vpop.f32.mrf.mxu0
        %5073 = vdwg.mxu0
        %s5074 = scalar_lea.vmem %s7, 192
        %v5075 = vld [vmem:[%s5074] sm:$0xff]
        %v5076 = vld [vmem:[%s5074 + $0x8] sm:$0xff]
        %v5077 = vld [vmem:[%s5074 + $0x10] sm:$0xff]
        %v5078 = vld [vmem:[%s5074 + $0x18] sm:$0xff]
        %v5079 = vld [vmem:[%s5074 + $0x20] sm:$0xff]
        %v5080 = vld [vmem:[%s5074 + $0x28] sm:$0xff]
        %v5081 = vld [vmem:[%s5074 + $0x30] sm:$0xff]
        %v5082 = vld [vmem:[%s5074 + $0x38] sm:$0xff]
        %s5083 = scalar_lea.vmem %s10, 3
        %v5084 = vld [vmem:[%s5083] sm:$0x1]
        %v5086 = vlaneseq
        %v5087 = vshrl.u32 %v5086, 7
        %v5088 = vsub.s32 0, %v5087
        %v5089 = vrot.slane %v5084, %v5088
        %5091 = vmatprep.subr.mxu0 0.0
        %5092 = vmatpush1.msra.mxu0 0.0
        %5093 = vmatprep.subr.mxu0 0.0
        %5094 = vmatpush1.msra.mxu0 0.0
        %5095 = vmatprep.subr.mxu0 0.0
        %5096 = vmatpush1.msra.mxu0 0.0
        %5097 = vmatprep.subr.mxu0 0.0
        %5098 = vmatpush1.msra.mxu0 0.0
        %5099 = vmatprep.subr.mxu0 0.0
        %5100 = vmatpush1.msra.mxu0 0.0
        %5101 = vmatprep.subr.mxu0 0.0
        %5102 = vmatpush1.msra.mxu0 0.0
        %5103 = vmatprep.subr.mxu0 0.0
        %5104 = vmatpush1.msra.mxu0 0.0
        %5105 = vmatprep.subr.mxu0 0.0
        %5106 = vmatpush1.msra.mxu0 0.0
        %5107 = vmatprep.subr.mxu0 0.0
        %5108 = vmatpush1.msra.mxu0 %v5082
        %5109 = vmatprep.subr.mxu0 0.0
        %5110 = vmatpush1.msra.mxu0 %v5081
        %5111 = vmatprep.subr.mxu0 0.0
        %5112 = vmatpush1.msra.mxu0 %v5080
        %5113 = vmatprep.subr.mxu0 0.0
        %5114 = vmatpush1.msra.mxu0 %v5079
        %5115 = vmatprep.subr.mxu0 0.0
        %5116 = vmatpush1.msra.mxu0 %v5078
        %5117 = vmatprep.subr.mxu0 0.0
        %5118 = vmatpush1.msra.mxu0 %v5077
        %5119 = vmatprep.subr.mxu0 0.0
        %5120 = vmatpush1.msra.mxu0 %v5076
        %5121 = vmatprep.subr.mxu0 0.0
        %5122 = vmatpush1.msra.mxu0 %v5075
        %5123 = vmatprep.subr.mxu0 0.0
        %5124 = vmatpush2.msra.mxu0 0.0
        %5125 = vmatprep.subr.mxu0 0.0
        %5126 = vmatpush2.msra.mxu0 0.0
        %5127 = vmatprep.subr.mxu0 0.0
        %5128 = vmatpush2.msra.mxu0 0.0
        %5129 = vmatprep.subr.mxu0 0.0
        %5130 = vmatpush2.msra.mxu0 0.0
        %5131 = vmatprep.subr.mxu0 0.0
        %5132 = vmatpush2.msra.mxu0 0.0
        %5133 = vmatprep.subr.mxu0 0.0
        %5134 = vmatpush2.msra.mxu0 0.0
        %5135 = vmatprep.subr.mxu0 0.0
        %5136 = vmatpush2.msra.mxu0 0.0
        %5137 = vmatprep.subr.mxu0 0.0
        %5138 = vmatpush2.msra.mxu0 0.0
        %5139 = vmatprep.subr.mxu0 0.0
        %5140 = vmatpush2.msra.mxu0 0.0
        %5141 = vmatprep.subr.mxu0 0.0
        %5142 = vmatpush2.msra.mxu0 0.0
        %5143 = vmatprep.subr.mxu0 0.0
        %5144 = vmatpush2.msra.mxu0 0.0
        %5145 = vmatprep.subr.mxu0 0.0
        %5146 = vmatpush2.msra.mxu0 0.0
        %5147 = vmatprep.subr.mxu0 0.0
        %5148 = vmatpush2.msra.mxu0 0.0
        %5149 = vmatprep.subr.mxu0 0.0
        %5150 = vmatpush2.msra.mxu0 0.0
        %5151 = vmatprep.subr.mxu0 0.0
        %5152 = vmatpush2.msra.mxu0 0.0
        %5153 = vmatprep.subr.mxu0 0.0
        %5154 = vmatpush2.msra.mxu0 0.0
        %5155 = vmatprep.mubr.f32.mxu0 0.0
        %5156 = vmatmul.mubr.f32.gmra.mxu0 %v4994
        %v5157 = vpop.f32.mrf.mxu0
        %v5158 = vadd.f32 %v5089, %v5157
        %v5159 = vpop.f32.mrf.mxu0
        %5160 = vmatprep.mubr.f32.mxu0 0.0
        %5161 = vmatmul.mubr.f32.gmra.mxu0 %v4997
        %v5162 = vpop.f32.mrf.mxu0
        %v5163 = vadd.f32 %v5089, %v5162
        %v5164 = vpop.f32.mrf.mxu0
        %5165 = vdwg.mxu0
        %s5166 = scalar_lea.vmem %s8, 192
        %v5167 = vld [vmem:[%s5166] sm:$0xff]
        %v5168 = vld [vmem:[%s5166 + $0x8] sm:$0xff]
        %v5169 = vld [vmem:[%s5166 + $0x10] sm:$0xff]
        %v5170 = vld [vmem:[%s5166 + $0x18] sm:$0xff]
        %v5171 = vld [vmem:[%s5166 + $0x20] sm:$0xff]
        %v5172 = vld [vmem:[%s5166 + $0x28] sm:$0xff]
        %v5173 = vld [vmem:[%s5166 + $0x30] sm:$0xff]
        %v5174 = vld [vmem:[%s5166 + $0x38] sm:$0xff]
        %s5175 = scalar_lea.vmem %s11, 3
        %v5176 = vld [vmem:[%s5175] sm:$0x1]
        %v5178 = vlaneseq
        %v5179 = vshrl.u32 %v5178, 7
        %v5180 = vsub.s32 0, %v5179
        %v5181 = vrot.slane %v5176, %v5180
        %5183 = vmatprep.subr.mxu0 0.0
        %5184 = vmatpush1.msra.mxu0 0.0
        %5185 = vmatprep.subr.mxu0 0.0
        %5186 = vmatpush1.msra.mxu0 0.0
        %5187 = vmatprep.subr.mxu0 0.0
        %5188 = vmatpush1.msra.mxu0 0.0
        %5189 = vmatprep.subr.mxu0 0.0
        %5190 = vmatpush1.msra.mxu0 0.0
        %5191 = vmatprep.subr.mxu0 0.0
        %5192 = vmatpush1.msra.mxu0 0.0
        %5193 = vmatprep.subr.mxu0 0.0
        %5194 = vmatpush1.msra.mxu0 0.0
        %5195 = vmatprep.subr.mxu0 0.0
        %5196 = vmatpush1.msra.mxu0 0.0
        %5197 = vmatprep.subr.mxu0 0.0
        %5198 = vmatpush1.msra.mxu0 0.0
        %5199 = vmatprep.subr.mxu0 0.0
        %5200 = vmatpush1.msra.mxu0 %v5174
        %5201 = vmatprep.subr.mxu0 0.0
        %5202 = vmatpush1.msra.mxu0 %v5173
        %5203 = vmatprep.subr.mxu0 0.0
        %5204 = vmatpush1.msra.mxu0 %v5172
        %5205 = vmatprep.subr.mxu0 0.0
        %5206 = vmatpush1.msra.mxu0 %v5171
        %5207 = vmatprep.subr.mxu0 0.0
        %5208 = vmatpush1.msra.mxu0 %v5170
        %5209 = vmatprep.subr.mxu0 0.0
        %5210 = vmatpush1.msra.mxu0 %v5169
        %5211 = vmatprep.subr.mxu0 0.0
        %5212 = vmatpush1.msra.mxu0 %v5168
        %5213 = vmatprep.subr.mxu0 0.0
        %5214 = vmatpush1.msra.mxu0 %v5167
        %5215 = vmatprep.subr.mxu0 0.0
        %5216 = vmatpush2.msra.mxu0 0.0
        %5217 = vmatprep.subr.mxu0 0.0
        %5218 = vmatpush2.msra.mxu0 0.0
        %5219 = vmatprep.subr.mxu0 0.0
        %5220 = vmatpush2.msra.mxu0 0.0
        %5221 = vmatprep.subr.mxu0 0.0
        %5222 = vmatpush2.msra.mxu0 0.0
        %5223 = vmatprep.subr.mxu0 0.0
        %5224 = vmatpush2.msra.mxu0 0.0
        %5225 = vmatprep.subr.mxu0 0.0
        %5226 = vmatpush2.msra.mxu0 0.0
        %5227 = vmatprep.subr.mxu0 0.0
        %5228 = vmatpush2.msra.mxu0 0.0
        %5229 = vmatprep.subr.mxu0 0.0
        %5230 = vmatpush2.msra.mxu0 0.0
        %5231 = vmatprep.subr.mxu0 0.0
        %5232 = vmatpush2.msra.mxu0 0.0
        %5233 = vmatprep.subr.mxu0 0.0
        %5234 = vmatpush2.msra.mxu0 0.0
        %5235 = vmatprep.subr.mxu0 0.0
        %5236 = vmatpush2.msra.mxu0 0.0
        %5237 = vmatprep.subr.mxu0 0.0
        %5238 = vmatpush2.msra.mxu0 0.0
        %5239 = vmatprep.subr.mxu0 0.0
        %5240 = vmatpush2.msra.mxu0 0.0
        %5241 = vmatprep.subr.mxu0 0.0
        %5242 = vmatpush2.msra.mxu0 0.0
        %5243 = vmatprep.subr.mxu0 0.0
        %5244 = vmatpush2.msra.mxu0 0.0
        %5245 = vmatprep.subr.mxu0 0.0
        %5246 = vmatpush2.msra.mxu0 0.0
        %5247 = vmatprep.mubr.f32.mxu0 0.0
        %5248 = vmatmul.mubr.f32.gmra.mxu0 %v4994
        %v5249 = vpop.f32.mrf.mxu0
        %v5250 = vadd.f32 %v5181, %v5249
        %v5251 = vpop.f32.mrf.mxu0
        %5252 = vmatprep.mubr.f32.mxu0 0.0
        %5253 = vmatmul.mubr.f32.gmra.mxu0 %v4997
        %v5254 = vpop.f32.mrf.mxu0
        %v5255 = vadd.f32 %v5181, %v5254
        %v5256 = vpop.f32.mrf.mxu0
        %5257 = vdwg.mxu0
        %v5258 = vmul.f32 %v5158, %v1662
        %v5259 = vmul.f32 %v5163, %v1663
        %v5260 = vmul.f32 %v5158, %v1664
        %v5261 = vmul.f32 %v5163, %v1665
        %v5262 = vmul.f32 %v5158, %v1666
        %v5263 = vmul.f32 %v5163, %v1667
        %v5264 = vmul.f32 %v5158, %v1668
        %v5265 = vmul.f32 %v5163, %v1669
        %v5266 = vmul.f32 %v5158, %v1670
        %v5267 = vmul.f32 %v5163, %v1671
        %v5268 = vmul.f32 %v5158, %v1672
        %v5269 = vmul.f32 %v5163, %v1673
        %v5270 = vmul.f32 %v5158, %v1674
        %v5271 = vmul.f32 %v5163, %v1675
        %v5272 = vmul.f32 %v5158, %v1676
        %v5273 = vmul.f32 %v5163, %v1677
        %v5274 = vmul.f32 %v5250, %v1662
        %v5275 = vmul.f32 %v5255, %v1663
        %v5276 = vmul.f32 %v5250, %v1664
        %v5277 = vmul.f32 %v5255, %v1665
        %v5278 = vmul.f32 %v5250, %v1666
        %v5279 = vmul.f32 %v5255, %v1667
        %v5280 = vmul.f32 %v5250, %v1668
        %v5281 = vmul.f32 %v5255, %v1669
        %v5282 = vmul.f32 %v5250, %v1670
        %v5283 = vmul.f32 %v5255, %v1671
        %v5284 = vmul.f32 %v5250, %v1672
        %v5285 = vmul.f32 %v5255, %v1673
        %v5286 = vmul.f32 %v5250, %v1674
        %v5287 = vmul.f32 %v5255, %v1675
        %v5288 = vmul.f32 %v5250, %v1676
        %v5289 = vmul.f32 %v5255, %v1677
        %v5290 = vmul.f32 %v5066, 0.35355338
        %v5291 = vmul.f32 %v5071, 0.35355338
        %v5293 = vsel %vm1400, %v5290, 0
        %v5296 = vsel %vm1400, %v5291, 0
        %v5299 = vsel %vm1400, %v5258, 0
        %v5302 = vsel %vm1400, %v5259, 0
        %v5305 = vsel %vm1400, %v5260, 0
        %v5308 = vsel %vm1400, %v5261, 0
        %v5311 = vsel %vm1400, %v5262, 0
        %v5314 = vsel %vm1400, %v5263, 0
        %v5317 = vsel %vm1400, %v5264, 0
        %v5320 = vsel %vm1400, %v5265, 0
        %v5323 = vsel %vm1400, %v5266, 0
        %v5326 = vsel %vm1400, %v5267, 0
        %v5329 = vsel %vm1400, %v5268, 0
        %v5332 = vsel %vm1400, %v5269, 0
        %v5335 = vsel %vm1400, %v5270, 0
        %v5338 = vsel %vm1400, %v5271, 0
        %v5341 = vsel %vm1400, %v5272, 0
        %v5344 = vsel %vm1400, %v5273, 0
        %5346 = vmatprep.subr.mxu0 0.0
        %5347 = vmatpush1.xpose.msra.mxu0 %v5344
        %5348 = vmatprep.subr.mxu0 0.0
        %5349 = vmatpush1.xpose.msra.mxu0 %v5341
        %5350 = vmatprep.subr.mxu0 0.0
        %5351 = vmatpush1.xpose.msra.mxu0 %v5338
        %5352 = vmatprep.subr.mxu0 0.0
        %5353 = vmatpush1.xpose.msra.mxu0 %v5335
        %5354 = vmatprep.subr.mxu0 0.0
        %5355 = vmatpush1.xpose.msra.mxu0 %v5332
        %5356 = vmatprep.subr.mxu0 0.0
        %5357 = vmatpush1.xpose.msra.mxu0 %v5329
        %5358 = vmatprep.subr.mxu0 0.0
        %5359 = vmatpush1.xpose.msra.mxu0 %v5326
        %5360 = vmatprep.subr.mxu0 0.0
        %5361 = vmatpush1.xpose.msra.mxu0 %v5323
        %5362 = vmatprep.subr.mxu0 0.0
        %5363 = vmatpush1.xpose.msra.mxu0 %v5320
        %5364 = vmatprep.subr.mxu0 0.0
        %5365 = vmatpush1.xpose.msra.mxu0 %v5317
        %5366 = vmatprep.subr.mxu0 0.0
        %5367 = vmatpush1.xpose.msra.mxu0 %v5314
        %5368 = vmatprep.subr.mxu0 0.0
        %5369 = vmatpush1.xpose.msra.mxu0 %v5311
        %5370 = vmatprep.subr.mxu0 0.0
        %5371 = vmatpush1.xpose.msra.mxu0 %v5308
        %5372 = vmatprep.subr.mxu0 0.0
        %5373 = vmatpush1.xpose.msra.mxu0 %v5305
        %5374 = vmatprep.subr.mxu0 0.0
        %5375 = vmatpush1.xpose.msra.mxu0 %v5302
        %5376 = vmatprep.subr.mxu0 0.0
        %5377 = vmatpush1.xpose.msra.mxu0 %v5299
        %5378 = vmatprep.subr.mxu0 0.0
        %5379 = vmatpush2.xpose.msra.mxu0 0.0
        %5380 = vmatprep.subr.mxu0 0.0
        %5381 = vmatpush2.xpose.msra.mxu0 0.0
        %5382 = vmatprep.subr.mxu0 0.0
        %5383 = vmatpush2.xpose.msra.mxu0 0.0
        %5384 = vmatprep.subr.mxu0 0.0
        %5385 = vmatpush2.xpose.msra.mxu0 0.0
        %5386 = vmatprep.subr.mxu0 0.0
        %5387 = vmatpush2.xpose.msra.mxu0 0.0
        %5388 = vmatprep.subr.mxu0 0.0
        %5389 = vmatpush2.xpose.msra.mxu0 0.0
        %5390 = vmatprep.subr.mxu0 0.0
        %5391 = vmatpush2.xpose.msra.mxu0 0.0
        %5392 = vmatprep.subr.mxu0 0.0
        %5393 = vmatpush2.xpose.msra.mxu0 0.0
        %5394 = vmatprep.subr.mxu0 0.0
        %5395 = vmatpush2.xpose.msra.mxu0 0.0
        %5396 = vmatprep.subr.mxu0 0.0
        %5397 = vmatpush2.xpose.msra.mxu0 0.0
        %5398 = vmatprep.subr.mxu0 0.0
        %5399 = vmatpush2.xpose.msra.mxu0 0.0
        %5400 = vmatprep.subr.mxu0 0.0
        %5401 = vmatpush2.xpose.msra.mxu0 0.0
        %5402 = vmatprep.subr.mxu0 0.0
        %5403 = vmatpush2.xpose.msra.mxu0 0.0
        %5404 = vmatprep.subr.mxu0 0.0
        %5405 = vmatpush2.xpose.msra.mxu0 0.0
        %5406 = vmatprep.subr.mxu0 0.0
        %5407 = vmatpush2.xpose.msra.mxu0 0.0
        %5408 = vmatprep.subr.mxu0 0.0
        %5409 = vmatpush2.xpose.msra.mxu0 0.0
        %5410 = vmatprep.mubr.f32.mxu0 0.0
        %5411 = vmatmul.mubr.f32.gmra.mxu0 %v5293
        %v5412 = vpop.f32.mrf.mxu0
        %v5413 = vadd.f32 0.0, %v5412
        %v5414 = vpop.f32.mrf.mxu0
        %5415 = vmatprep.mubr.f32.mxu0 0.0
        %5416 = vmatmul.mubr.f32.gmra.mxu0 %v5296
        %v5417 = vpop.f32.mrf.mxu0
        %v5418 = vadd.f32 0.0, %v5417
        %v5419 = vpop.f32.mrf.mxu0
        %5420 = vdwg.mxu0
        %v5421 = vadd.f32 %v5413, %v1841
        %v5422 = vadd.f32 %v5418, %v1842
        %v5423 = vadd.f32 %v5413, %v1843
        %v5424 = vadd.f32 %v5418, %v1844
        %v5425 = vadd.f32 %v5413, %v1845
        %v5426 = vadd.f32 %v5418, %v1846
        %v5427 = vadd.f32 %v5413, %v1847
        %v5428 = vadd.f32 %v5418, %v1848
        %v5429 = vadd.f32 %v5413, %v1849
        %v5430 = vadd.f32 %v5418, %v1850
        %v5431 = vadd.f32 %v5413, %v1851
        %v5432 = vadd.f32 %v5418, %v1852
        %v5433 = vadd.f32 %v5413, %v1853
        %v5434 = vadd.f32 %v5418, %v1854
        %v5435 = vadd.f32 %v5413, %v1855
        %v5436 = vadd.f32 %v5418, %v1856
        %5437 = vmax.xlane.f32.xlu0 %v5421
        %v5438 = vpop.xlane.xlu0 %5437
        %5439 = vmax.xlane.f32.xlu0 %v5422
        %v5440 = vpop.xlane.xlu0 %5439
        %5441 = vmax.xlane.f32.xlu0 %v5423
        %v5442 = vpop.xlane.xlu0 %5441
        %5443 = vmax.xlane.f32.xlu0 %v5424
        %v5444 = vpop.xlane.xlu0 %5443
        %5445 = vmax.xlane.f32.xlu0 %v5425
        %v5446 = vpop.xlane.xlu0 %5445
        %5447 = vmax.xlane.f32.xlu0 %v5426
        %v5448 = vpop.xlane.xlu0 %5447
        %5449 = vmax.xlane.f32.xlu0 %v5427
        %v5450 = vpop.xlane.xlu0 %5449
        %5451 = vmax.xlane.f32.xlu0 %v5428
        %v5452 = vpop.xlane.xlu0 %5451
        %5453 = vmax.xlane.f32.xlu0 %v5429
        %v5454 = vpop.xlane.xlu0 %5453
        %5455 = vmax.xlane.f32.xlu0 %v5430
        %v5456 = vpop.xlane.xlu0 %5455
        %5457 = vmax.xlane.f32.xlu0 %v5431
        %v5458 = vpop.xlane.xlu0 %5457
        %5459 = vmax.xlane.f32.xlu0 %v5432
        %v5460 = vpop.xlane.xlu0 %5459
        %5461 = vmax.xlane.f32.xlu0 %v5433
        %v5462 = vpop.xlane.xlu0 %5461
        %5463 = vmax.xlane.f32.xlu0 %v5434
        %v5464 = vpop.xlane.xlu0 %5463
        %5465 = vmax.xlane.f32.xlu0 %v5435
        %v5466 = vpop.xlane.xlu0 %5465
        %5467 = vmax.xlane.f32.xlu0 %v5436
        %v5468 = vpop.xlane.xlu0 %5467
        %v5469 = vsub.f32 %v5421, %v5438
        %v5470 = vsub.f32 %v5422, %v5440
        %v5471 = vsub.f32 %v5423, %v5442
        %v5472 = vsub.f32 %v5424, %v5444
        %v5473 = vsub.f32 %v5425, %v5446
        %v5474 = vsub.f32 %v5426, %v5448
        %v5475 = vsub.f32 %v5427, %v5450
        %v5476 = vsub.f32 %v5428, %v5452
        %v5477 = vsub.f32 %v5429, %v5454
        %v5478 = vsub.f32 %v5430, %v5456
        %v5479 = vsub.f32 %v5431, %v5458
        %v5480 = vsub.f32 %v5432, %v5460
        %v5481 = vsub.f32 %v5433, %v5462
        %v5482 = vsub.f32 %v5434, %v5464
        %v5483 = vsub.f32 %v5435, %v5466
        %v5484 = vsub.f32 %v5436, %v5468
        %v5485 = vmul.f32 %v5469, 1.442695
        %v5486 = vpow.pop %v5485
        %v5487 = vmul.f32 %v5470, 1.442695
        %v5488 = vpow.pop %v5487
        %v5489 = vmul.f32 %v5471, 1.442695
        %v5490 = vpow.pop %v5489
        %v5491 = vmul.f32 %v5472, 1.442695
        %v5492 = vpow.pop %v5491
        %v5493 = vmul.f32 %v5473, 1.442695
        %v5494 = vpow.pop %v5493
        %v5495 = vmul.f32 %v5474, 1.442695
        %v5496 = vpow.pop %v5495
        %v5497 = vmul.f32 %v5475, 1.442695
        %v5498 = vpow.pop %v5497
        %v5499 = vmul.f32 %v5476, 1.442695
        %v5500 = vpow.pop %v5499
        %v5501 = vmul.f32 %v5477, 1.442695
        %v5502 = vpow.pop %v5501
        %v5503 = vmul.f32 %v5478, 1.442695
        %v5504 = vpow.pop %v5503
        %v5505 = vmul.f32 %v5479, 1.442695
        %v5506 = vpow.pop %v5505
        %v5507 = vmul.f32 %v5480, 1.442695
        %v5508 = vpow.pop %v5507
        %v5509 = vmul.f32 %v5481, 1.442695
        %v5510 = vpow.pop %v5509
        %v5511 = vmul.f32 %v5482, 1.442695
        %v5512 = vpow.pop %v5511
        %v5513 = vmul.f32 %v5483, 1.442695
        %v5514 = vpow.pop %v5513
        %v5515 = vmul.f32 %v5484, 1.442695
        %v5516 = vpow.pop %v5515
        %5517 = vadd.xlane.f32.xlu0 %v5486
        %v5518 = vpop.xlane.xlu0 %5517
        %5519 = vadd.xlane.f32.xlu0 %v5488
        %v5520 = vpop.xlane.xlu0 %5519
        %5521 = vadd.xlane.f32.xlu0 %v5490
        %v5522 = vpop.xlane.xlu0 %5521
        %5523 = vadd.xlane.f32.xlu0 %v5492
        %v5524 = vpop.xlane.xlu0 %5523
        %5525 = vadd.xlane.f32.xlu0 %v5494
        %v5526 = vpop.xlane.xlu0 %5525
        %5527 = vadd.xlane.f32.xlu0 %v5496
        %v5528 = vpop.xlane.xlu0 %5527
        %5529 = vadd.xlane.f32.xlu0 %v5498
        %v5530 = vpop.xlane.xlu0 %5529
        %5531 = vadd.xlane.f32.xlu0 %v5500
        %v5532 = vpop.xlane.xlu0 %5531
        %5533 = vadd.xlane.f32.xlu0 %v5502
        %v5534 = vpop.xlane.xlu0 %5533
        %5535 = vadd.xlane.f32.xlu0 %v5504
        %v5536 = vpop.xlane.xlu0 %5535
        %5537 = vadd.xlane.f32.xlu0 %v5506
        %v5538 = vpop.xlane.xlu0 %5537
        %5539 = vadd.xlane.f32.xlu0 %v5508
        %v5540 = vpop.xlane.xlu0 %5539
        %5541 = vadd.xlane.f32.xlu0 %v5510
        %v5542 = vpop.xlane.xlu0 %5541
        %5543 = vadd.xlane.f32.xlu0 %v5512
        %v5544 = vpop.xlane.xlu0 %5543
        %5545 = vadd.xlane.f32.xlu0 %v5514
        %v5546 = vpop.xlane.xlu0 %5545
        %5547 = vadd.xlane.f32.xlu0 %v5516
        %v5548 = vpop.xlane.xlu0 %5547
        %v5549 = vrcp.pop %v5518
        %v5550 = vrcp.pop %v5520
        %v5551 = vrcp.pop %v5522
        %v5552 = vrcp.pop %v5524
        %v5553 = vrcp.pop %v5526
        %v5554 = vrcp.pop %v5528
        %v5555 = vrcp.pop %v5530
        %v5556 = vrcp.pop %v5532
        %v5557 = vrcp.pop %v5534
        %v5558 = vrcp.pop %v5536
        %v5559 = vrcp.pop %v5538
        %v5560 = vrcp.pop %v5540
        %v5561 = vrcp.pop %v5542
        %v5562 = vrcp.pop %v5544
        %v5563 = vrcp.pop %v5546
        %v5564 = vrcp.pop %v5548
        %v5565 = vmul.f32 %v5486, %v5549
        %v5566 = vmul.f32 %v5488, %v5550
        %v5567 = vmul.f32 %v5490, %v5551
        %v5568 = vmul.f32 %v5492, %v5552
        %v5569 = vmul.f32 %v5494, %v5553
        %v5570 = vmul.f32 %v5496, %v5554
        %v5571 = vmul.f32 %v5498, %v5555
        %v5572 = vmul.f32 %v5500, %v5556
        %v5573 = vmul.f32 %v5502, %v5557
        %v5574 = vmul.f32 %v5504, %v5558
        %v5575 = vmul.f32 %v5506, %v5559
        %v5576 = vmul.f32 %v5508, %v5560
        %v5577 = vmul.f32 %v5510, %v5561
        %v5578 = vmul.f32 %v5512, %v5562
        %v5579 = vmul.f32 %v5514, %v5563
        %v5580 = vmul.f32 %v5516, %v5564
        %5581 = vmatprep.subr.mxu0 0.0
        %5582 = vmatpush1.msra.mxu0 %v5289
        %5583 = vmatprep.subr.mxu0 0.0
        %5584 = vmatpush1.msra.mxu0 %v5288
        %5585 = vmatprep.subr.mxu0 0.0
        %5586 = vmatpush1.msra.mxu0 %v5287
        %5587 = vmatprep.subr.mxu0 0.0
        %5588 = vmatpush1.msra.mxu0 %v5286
        %5589 = vmatprep.subr.mxu0 0.0
        %5590 = vmatpush1.msra.mxu0 %v5285
        %5591 = vmatprep.subr.mxu0 0.0
        %5592 = vmatpush1.msra.mxu0 %v5284
        %5593 = vmatprep.subr.mxu0 0.0
        %5594 = vmatpush1.msra.mxu0 %v5283
        %5595 = vmatprep.subr.mxu0 0.0
        %5596 = vmatpush1.msra.mxu0 %v5282
        %5597 = vmatprep.subr.mxu0 0.0
        %5598 = vmatpush1.msra.mxu0 %v5281
        %5599 = vmatprep.subr.mxu0 0.0
        %5600 = vmatpush1.msra.mxu0 %v5280
        %5601 = vmatprep.subr.mxu0 0.0
        %5602 = vmatpush1.msra.mxu0 %v5279
        %5603 = vmatprep.subr.mxu0 0.0
        %5604 = vmatpush1.msra.mxu0 %v5278
        %5605 = vmatprep.subr.mxu0 0.0
        %5606 = vmatpush1.msra.mxu0 %v5277
        %5607 = vmatprep.subr.mxu0 0.0
        %5608 = vmatpush1.msra.mxu0 %v5276
        %5609 = vmatprep.subr.mxu0 0.0
        %5610 = vmatpush1.msra.mxu0 %v5275
        %5611 = vmatprep.subr.mxu0 0.0
        %5612 = vmatpush1.msra.mxu0 %v5274
        %5613 = vmatprep.subr.mxu0 0.0
        %5614 = vmatpush2.msra.mxu0 0.0
        %5615 = vmatprep.subr.mxu0 0.0
        %5616 = vmatpush2.msra.mxu0 0.0
        %5617 = vmatprep.subr.mxu0 0.0
        %5618 = vmatpush2.msra.mxu0 0.0
        %5619 = vmatprep.subr.mxu0 0.0
        %5620 = vmatpush2.msra.mxu0 0.0
        %5621 = vmatprep.subr.mxu0 0.0
        %5622 = vmatpush2.msra.mxu0 0.0
        %5623 = vmatprep.subr.mxu0 0.0
        %5624 = vmatpush2.msra.mxu0 0.0
        %5625 = vmatprep.subr.mxu0 0.0
        %5626 = vmatpush2.msra.mxu0 0.0
        %5627 = vmatprep.subr.mxu0 0.0
        %5628 = vmatpush2.msra.mxu0 0.0
        %5629 = vmatprep.subr.mxu0 0.0
        %5630 = vmatpush2.msra.mxu0 0.0
        %5631 = vmatprep.subr.mxu0 0.0
        %5632 = vmatpush2.msra.mxu0 0.0
        %5633 = vmatprep.subr.mxu0 0.0
        %5634 = vmatpush2.msra.mxu0 0.0
        %5635 = vmatprep.subr.mxu0 0.0
        %5636 = vmatpush2.msra.mxu0 0.0
        %5637 = vmatprep.subr.mxu0 0.0
        %5638 = vmatpush2.msra.mxu0 0.0
        %5639 = vmatprep.subr.mxu0 0.0
        %5640 = vmatpush2.msra.mxu0 0.0
        %5641 = vmatprep.subr.mxu0 0.0
        %5642 = vmatpush2.msra.mxu0 0.0
        %5643 = vmatprep.subr.mxu0 0.0
        %5644 = vmatpush2.msra.mxu0 0.0
        %5645 = vmatprep.mubr.f32.mxu0 0.0
        %5646 = vmatmul.mubr.f32.gmra.mxu0 %v5565
        %v5647 = vpop.f32.mrf.mxu0
        %v5648 = vadd.f32 0.0, %v5647
        %v5649 = vpop.f32.mrf.mxu0
        %5650 = vmatprep.mubr.f32.mxu0 0.0
        %5651 = vmatmul.mubr.f32.gmra.mxu0 %v5566
        %v5652 = vpop.f32.mrf.mxu0
        %v5653 = vadd.f32 0.0, %v5652
        %v5654 = vpop.f32.mrf.mxu0
        %5655 = vmatprep.mubr.f32.mxu0 0.0
        %5656 = vmatmul.mubr.f32.gmra.mxu0 %v5567
        %v5657 = vpop.f32.mrf.mxu0
        %v5658 = vadd.f32 0.0, %v5657
        %v5659 = vpop.f32.mrf.mxu0
        %5660 = vmatprep.mubr.f32.mxu0 0.0
        %5661 = vmatmul.mubr.f32.gmra.mxu0 %v5568
        %v5662 = vpop.f32.mrf.mxu0
        %v5663 = vadd.f32 0.0, %v5662
        %v5664 = vpop.f32.mrf.mxu0
        %5665 = vmatprep.mubr.f32.mxu0 0.0
        %5666 = vmatmul.mubr.f32.gmra.mxu0 %v5569
        %v5667 = vpop.f32.mrf.mxu0
        %v5668 = vadd.f32 0.0, %v5667
        %v5669 = vpop.f32.mrf.mxu0
        %5670 = vmatprep.mubr.f32.mxu0 0.0
        %5671 = vmatmul.mubr.f32.gmra.mxu0 %v5570
        %v5672 = vpop.f32.mrf.mxu0
        %v5673 = vadd.f32 0.0, %v5672
        %v5674 = vpop.f32.mrf.mxu0
        %5675 = vmatprep.mubr.f32.mxu0 0.0
        %5676 = vmatmul.mubr.f32.gmra.mxu0 %v5571
        %v5677 = vpop.f32.mrf.mxu0
        %v5678 = vadd.f32 0.0, %v5677
        %v5679 = vpop.f32.mrf.mxu0
        %5680 = vmatprep.mubr.f32.mxu0 0.0
        %5681 = vmatmul.mubr.f32.gmra.mxu0 %v5572
        %v5682 = vpop.f32.mrf.mxu0
        %v5683 = vadd.f32 0.0, %v5682
        %v5684 = vpop.f32.mrf.mxu0
        %5685 = vmatprep.mubr.f32.mxu0 0.0
        %5686 = vmatmul.mubr.f32.gmra.mxu0 %v5573
        %v5687 = vpop.f32.mrf.mxu0
        %v5688 = vadd.f32 0.0, %v5687
        %v5689 = vpop.f32.mrf.mxu0
        %5690 = vmatprep.mubr.f32.mxu0 0.0
        %5691 = vmatmul.mubr.f32.gmra.mxu0 %v5574
        %v5692 = vpop.f32.mrf.mxu0
        %v5693 = vadd.f32 0.0, %v5692
        %v5694 = vpop.f32.mrf.mxu0
        %5695 = vmatprep.mubr.f32.mxu0 0.0
        %5696 = vmatmul.mubr.f32.gmra.mxu0 %v5575
        %v5697 = vpop.f32.mrf.mxu0
        %v5698 = vadd.f32 0.0, %v5697
        %v5699 = vpop.f32.mrf.mxu0
        %5700 = vmatprep.mubr.f32.mxu0 0.0
        %5701 = vmatmul.mubr.f32.gmra.mxu0 %v5576
        %v5702 = vpop.f32.mrf.mxu0
        %v5703 = vadd.f32 0.0, %v5702
        %v5704 = vpop.f32.mrf.mxu0
        %5705 = vmatprep.mubr.f32.mxu0 0.0
        %5706 = vmatmul.mubr.f32.gmra.mxu0 %v5577
        %v5707 = vpop.f32.mrf.mxu0
        %v5708 = vadd.f32 0.0, %v5707
        %v5709 = vpop.f32.mrf.mxu0
        %5710 = vmatprep.mubr.f32.mxu0 0.0
        %5711 = vmatmul.mubr.f32.gmra.mxu0 %v5578
        %v5712 = vpop.f32.mrf.mxu0
        %v5713 = vadd.f32 0.0, %v5712
        %v5714 = vpop.f32.mrf.mxu0
        %5715 = vmatprep.mubr.f32.mxu0 0.0
        %5716 = vmatmul.mubr.f32.gmra.mxu0 %v5579
        %v5717 = vpop.f32.mrf.mxu0
        %v5718 = vadd.f32 0.0, %v5717
        %v5719 = vpop.f32.mrf.mxu0
        %5720 = vmatprep.mubr.f32.mxu0 0.0
        %5721 = vmatmul.mubr.f32.gmra.mxu0 %v5580
        %v5722 = vpop.f32.mrf.mxu0
        %v5723 = vadd.f32 0.0, %v5722
        %v5724 = vpop.f32.mrf.mxu0
        %5725 = vdwg.mxu0
        %v5726 = vadd.f32 %v5648, %v5658
        %v5727 = vadd.f32 %v5653, %v5663
        %v5728 = vadd.f32 %v5726, %v5668
        %v5729 = vadd.f32 %v5727, %v5673
        %v5730 = vadd.f32 %v5728, %v5678
        %v5731 = vadd.f32 %v5729, %v5683
        %v5732 = vadd.f32 %v5730, %v5688
        %v5733 = vadd.f32 %v5731, %v5693
        %v5734 = vadd.f32 %v5732, %v5698
        %v5735 = vadd.f32 %v5733, %v5703
        %v5736 = vadd.f32 %v5734, %v5708
        %v5737 = vadd.f32 %v5735, %v5713
        %v5738 = vadd.f32 %v5736, %v5718
        %v5739 = vadd.f32 %v5737, %v5723
        %s5740 = scalar_lea.vmem %s12, 192
        %v5741 = vld [vmem:[%s5740] sm:$0xff]
        %v5742 = vld [vmem:[%s5740 + $0x8] sm:$0xff]
        %v5743 = vld [vmem:[%s5740 + $0x10] sm:$0xff]
        %v5744 = vld [vmem:[%s5740 + $0x18] sm:$0xff]
        %v5745 = vld [vmem:[%s5740 + $0x20] sm:$0xff]
        %v5746 = vld [vmem:[%s5740 + $0x28] sm:$0xff]
        %v5747 = vld [vmem:[%s5740 + $0x30] sm:$0xff]
        %v5748 = vld [vmem:[%s5740 + $0x38] sm:$0xff]
        %s5749 = scalar_lea.vmem %s13, 3
        %v5750 = vld [vmem:[%s5749] sm:$0x1]
        %v5752 = vlaneseq
        %v5753 = vshrl.u32 %v5752, 7
        %v5754 = vsub.s32 0, %v5753
        %v5755 = vrot.slane %v5750, %v5754
        %v5758 = vsel %vm1400, %v5738, 0
        %v5761 = vsel %vm1400, %v5739, 0
        %5763 = vmatprep.subr.mxu0 0.0
        %5764 = vmatpush1.msra.mxu0 0.0
        %5765 = vmatprep.subr.mxu0 0.0
        %5766 = vmatpush1.msra.mxu0 0.0
        %5767 = vmatprep.subr.mxu0 0.0
        %5768 = vmatpush1.msra.mxu0 0.0
        %5769 = vmatprep.subr.mxu0 0.0
        %5770 = vmatpush1.msra.mxu0 0.0
        %5771 = vmatprep.subr.mxu0 0.0
        %5772 = vmatpush1.msra.mxu0 0.0
        %5773 = vmatprep.subr.mxu0 0.0
        %5774 = vmatpush1.msra.mxu0 0.0
        %5775 = vmatprep.subr.mxu0 0.0
        %5776 = vmatpush1.msra.mxu0 0.0
        %5777 = vmatprep.subr.mxu0 0.0
        %5778 = vmatpush1.msra.mxu0 0.0
        %5779 = vmatprep.subr.mxu0 0.0
        %5780 = vmatpush1.msra.mxu0 %v5748
        %5781 = vmatprep.subr.mxu0 0.0
        %5782 = vmatpush1.msra.mxu0 %v5747
        %5783 = vmatprep.subr.mxu0 0.0
        %5784 = vmatpush1.msra.mxu0 %v5746
        %5785 = vmatprep.subr.mxu0 0.0
        %5786 = vmatpush1.msra.mxu0 %v5745
        %5787 = vmatprep.subr.mxu0 0.0
        %5788 = vmatpush1.msra.mxu0 %v5744
        %5789 = vmatprep.subr.mxu0 0.0
        %5790 = vmatpush1.msra.mxu0 %v5743
        %5791 = vmatprep.subr.mxu0 0.0
        %5792 = vmatpush1.msra.mxu0 %v5742
        %5793 = vmatprep.subr.mxu0 0.0
        %5794 = vmatpush1.msra.mxu0 %v5741
        %5795 = vmatprep.subr.mxu0 0.0
        %5796 = vmatpush2.msra.mxu0 0.0
        %5797 = vmatprep.subr.mxu0 0.0
        %5798 = vmatpush2.msra.mxu0 0.0
        %5799 = vmatprep.subr.mxu0 0.0
        %5800 = vmatpush2.msra.mxu0 0.0
        %5801 = vmatprep.subr.mxu0 0.0
        %5802 = vmatpush2.msra.mxu0 0.0
        %5803 = vmatprep.subr.mxu0 0.0
        %5804 = vmatpush2.msra.mxu0 0.0
        %5805 = vmatprep.subr.mxu0 0.0
        %5806 = vmatpush2.msra.mxu0 0.0
        %5807 = vmatprep.subr.mxu0 0.0
        %5808 = vmatpush2.msra.mxu0 0.0
        %5809 = vmatprep.subr.mxu0 0.0
        %5810 = vmatpush2.msra.mxu0 0.0
        %5811 = vmatprep.subr.mxu0 0.0
        %5812 = vmatpush2.msra.mxu0 0.0
        %5813 = vmatprep.subr.mxu0 0.0
        %5814 = vmatpush2.msra.mxu0 0.0
        %5815 = vmatprep.subr.mxu0 0.0
        %5816 = vmatpush2.msra.mxu0 0.0
        %5817 = vmatprep.subr.mxu0 0.0
        %5818 = vmatpush2.msra.mxu0 0.0
        %5819 = vmatprep.subr.mxu0 0.0
        %5820 = vmatpush2.msra.mxu0 0.0
        %5821 = vmatprep.subr.mxu0 0.0
        %5822 = vmatpush2.msra.mxu0 0.0
        %5823 = vmatprep.subr.mxu0 0.0
        %5824 = vmatpush2.msra.mxu0 0.0
        %5825 = vmatprep.subr.mxu0 0.0
        %5826 = vmatpush2.msra.mxu0 0.0
        %5827 = vmatprep.mubr.f32.mxu0 0.0
        %5828 = vmatmul.mubr.f32.gmra.mxu0 %v5758
        %v5829 = vpop.f32.mrf.mxu0
        %v5830 = vadd.f32 %v5755, %v5829
        %v5831 = vpop.f32.mrf.mxu0
        %5832 = vmatprep.mubr.f32.mxu0 0.0
        %5833 = vmatmul.mubr.f32.gmra.mxu0 %v5761
        %v5834 = vpop.f32.mrf.mxu0
        %v5835 = vadd.f32 %v5755, %v5834
        %v5836 = vpop.f32.mrf.mxu0
        %5837 = vdwg.mxu0
        %v5838 = vadd.f32 %v4974, %v5830
        %v5839 = vadd.f32 %v4975, %v5835
        %s5840 = scalar_lea.vmem %s18, 3
        %v5841 = vld [vmem:[%s5840] sm:$0x1]
        %s5842 = scalar_lea.vmem %s19, 3
        %v5843 = vld [vmem:[%s5842] sm:$0x1]
        %v5844 = vsel %vm1400, %v5838, 0.0
        %5845 = vadd.xlane.f32.xlu0 %v5844
        %v5846 = vpop.xlane.xlu0 %5845
        %v5847 = vsel %vm1400, %v5839, 0.0
        %5848 = vadd.xlane.f32.xlu0 %v5847
        %v5849 = vpop.xlane.xlu0 %5848
        %v5850 = vmul.f32 %v5846, %v2282
        %v5851 = vmul.f32 %v5849, %v2282
        %v5852 = vsub.f32 %v5838, %v5850
        %v5853 = vsub.f32 %v5839, %v5851
        %v5854 = vmul.f32 %v5852, %v5852
        %v5855 = vmul.f32 %v5853, %v5853
        %v5856 = vsel %vm1400, %v5854, 0.0
        %5857 = vadd.xlane.f32.xlu0 %v5856
        %v5858 = vpop.xlane.xlu0 %5857
        %v5859 = vsel %vm1400, %v5855, 0.0
        %5860 = vadd.xlane.f32.xlu0 %v5859
        %v5861 = vpop.xlane.xlu0 %5860
        %v5862 = vmul.f32 %v5858, %v2282
        %v5863 = vmul.f32 %v5861, %v2282
        %v5864 = vadd.f32 %v5862, 1e-05
        %v5865 = vadd.f32 %v5863, 1e-05
        %v5866 = vrsqrt.pop %v5864
        %v5867 = vrsqrt.pop %v5865
        %v5868 = vmul.f32 %v5852, %v5866
        %v5869 = vmul.f32 %v5853, %v5867
        %v5871 = vlaneseq
        %v5872 = vshrl.u32 %v5871, 7
        %v5873 = vsub.s32 0, %v5872
        %v5874 = vrot.slane %v5841, %v5873
        %v5876 = vmul.f32 %v5868, %v5874
        %v5877 = vmul.f32 %v5869, %v5874
        %v5879 = vlaneseq
        %v5880 = vshrl.u32 %v5879, 7
        %v5881 = vsub.s32 0, %v5880
        %v5882 = vrot.slane %v5843, %v5881
        %v5884 = vadd.f32 %v5876, %v5882
        %v5885 = vadd.f32 %v5877, %v5882
        %s5886 = scalar_lea.vmem %s14, 384
        %v5887 = vld [vmem:[%s5886] sm:$0xff]
        %v5888 = vld [vmem:[%s5886 + $0x8] sm:$0xff]
        %v5889 = vld [vmem:[%s5886 + $0x10] sm:$0xff]
        %v5890 = vld [vmem:[%s5886 + $0x18] sm:$0xff]
        %v5891 = vld [vmem:[%s5886 + $0x20] sm:$0xff]
        %v5892 = vld [vmem:[%s5886 + $0x28] sm:$0xff]
        %v5893 = vld [vmem:[%s5886 + $0x30] sm:$0xff]
        %v5894 = vld [vmem:[%s5886 + $0x38] sm:$0xff]
        %v5895 = vld [vmem:[%s5886 + $0x40] sm:$0xff]
        %v5896 = vld [vmem:[%s5886 + $0x48] sm:$0xff]
        %v5897 = vld [vmem:[%s5886 + $0x50] sm:$0xff]
        %v5898 = vld [vmem:[%s5886 + $0x58] sm:$0xff]
        %v5899 = vld [vmem:[%s5886 + $0x60] sm:$0xff]
        %v5900 = vld [vmem:[%s5886 + $0x68] sm:$0xff]
        %v5901 = vld [vmem:[%s5886 + $0x70] sm:$0xff]
        %v5902 = vld [vmem:[%s5886 + $0x78] sm:$0xff]
        %s5903 = scalar_lea.vmem %s15, 6
        %v5904 = vld [vmem:[%s5903] sm:$0x3]
        %v5906 = vlaneseq
        %v5907 = vshrl.u32 %v5906, 7
        %v5908 = vsub.s32 0, %v5907
        %v5909 = vrot.slane %v5904, %v5908
        %v5910 = vlaneseq
        %v5911 = vshrl.u32 %v5910, 7
        %v5912 = vsub.s32 1, %v5911
        %v5913 = vrot.slane %v5904, %v5912
        %v5917 = vsel %vm1400, %v5884, 0
        %v5920 = vsel %vm1400, %v5885, 0
        %5922 = vmatprep.subr.mxu0 0.0
        %5923 = vmatpush1.msra.mxu0 0.0
        %5924 = vmatprep.subr.mxu0 0.0
        %5925 = vmatpush1.msra.mxu0 0.0
        %5926 = vmatprep.subr.mxu0 0.0
        %5927 = vmatpush1.msra.mxu0 0.0
        %5928 = vmatprep.subr.mxu0 0.0
        %5929 = vmatpush1.msra.mxu0 0.0
        %5930 = vmatprep.subr.mxu0 0.0
        %5931 = vmatpush1.msra.mxu0 0.0
        %5932 = vmatprep.subr.mxu0 0.0
        %5933 = vmatpush1.msra.mxu0 0.0
        %5934 = vmatprep.subr.mxu0 0.0
        %5935 = vmatpush1.msra.mxu0 0.0
        %5936 = vmatprep.subr.mxu0 0.0
        %5937 = vmatpush1.msra.mxu0 0.0
        %5938 = vmatprep.subr.mxu0 %v5902
        %5939 = vmatpush1.msra.mxu0 %v5901
        %5940 = vmatprep.subr.mxu0 %v5900
        %5941 = vmatpush1.msra.mxu0 %v5899
        %5942 = vmatprep.subr.mxu0 %v5898
        %5943 = vmatpush1.msra.mxu0 %v5897
        %5944 = vmatprep.subr.mxu0 %v5896
        %5945 = vmatpush1.msra.mxu0 %v5895
        %5946 = vmatprep.subr.mxu0 %v5894
        %5947 = vmatpush1.msra.mxu0 %v5893
        %5948 = vmatprep.subr.mxu0 %v5892
        %5949 = vmatpush1.msra.mxu0 %v5891
        %5950 = vmatprep.subr.mxu0 %v5890
        %5951 = vmatpush1.msra.mxu0 %v5889
        %5952 = vmatprep.subr.mxu0 %v5888
        %5953 = vmatpush1.msra.mxu0 %v5887
        %5954 = vmatprep.subr.mxu0 0.0
        %5955 = vmatpush2.msra.mxu0 0.0
        %5956 = vmatprep.subr.mxu0 0.0
        %5957 = vmatpush2.msra.mxu0 0.0
        %5958 = vmatprep.subr.mxu0 0.0
        %5959 = vmatpush2.msra.mxu0 0.0
        %5960 = vmatprep.subr.mxu0 0.0
        %5961 = vmatpush2.msra.mxu0 0.0
        %5962 = vmatprep.subr.mxu0 0.0
        %5963 = vmatpush2.msra.mxu0 0.0
        %5964 = vmatprep.subr.mxu0 0.0
        %5965 = vmatpush2.msra.mxu0 0.0
        %5966 = vmatprep.subr.mxu0 0.0
        %5967 = vmatpush2.msra.mxu0 0.0
        %5968 = vmatprep.subr.mxu0 0.0
        %5969 = vmatpush2.msra.mxu0 0.0
        %5970 = vmatprep.subr.mxu0 0.0
        %5971 = vmatpush2.msra.mxu0 0.0
        %5972 = vmatprep.subr.mxu0 0.0
        %5973 = vmatpush2.msra.mxu0 0.0
        %5974 = vmatprep.subr.mxu0 0.0
        %5975 = vmatpush2.msra.mxu0 0.0
        %5976 = vmatprep.subr.mxu0 0.0
        %5977 = vmatpush2.msra.mxu0 0.0
        %5978 = vmatprep.subr.mxu0 0.0
        %5979 = vmatpush2.msra.mxu0 0.0
        %5980 = vmatprep.subr.mxu0 0.0
        %5981 = vmatpush2.msra.mxu0 0.0
        %5982 = vmatprep.subr.mxu0 0.0
        %5983 = vmatpush2.msra.mxu0 0.0
        %5984 = vmatprep.subr.mxu0 0.0
        %5985 = vmatpush2.msra.mxu0 0.0
        %5986 = vmatprep.mubr.f32.mxu0 0.0
        %5987 = vmatmul.mubr.f32.gmra.mxu0 %v5917
        %v5988 = vpop.f32.mrf.mxu0
        %v5989 = vadd.f32 %v5909, %v5988
        %v5990 = vpop.f32.mrf.mxu0
        %v5991 = vadd.f32 %v5913, %v5990
        %5992 = vmatprep.mubr.f32.mxu0 0.0
        %5993 = vmatmul.mubr.f32.gmra.mxu0 %v5920
        %v5994 = vpop.f32.mrf.mxu0
        %v5995 = vadd.f32 %v5909, %v5994
        %v5996 = vpop.f32.mrf.mxu0
        %v5997 = vadd.f32 %v5913, %v5996
        %5998 = vdwg.mxu0
        %v5999 = vmax.f32 %v5989, 0.0
        %v6000 = vmax.f32 %v5991, 0.0
        %v6001 = vmax.f32 %v5995, 0.0
        %v6002 = vmax.f32 %v5997, 0.0
        %s6003 = scalar_lea.vmem %s16, 768
        %v6004 = vld [vmem:[%s6003] sm:$0xff]
        %v6005 = vld [vmem:[%s6003 + $0x8] sm:$0xff]
        %v6006 = vld [vmem:[%s6003 + $0x10] sm:$0xff]
        %v6007 = vld [vmem:[%s6003 + $0x18] sm:$0xff]
        %v6008 = vld [vmem:[%s6003 + $0x20] sm:$0xff]
        %v6009 = vld [vmem:[%s6003 + $0x28] sm:$0xff]
        %v6010 = vld [vmem:[%s6003 + $0x30] sm:$0xff]
        %v6011 = vld [vmem:[%s6003 + $0x38] sm:$0xff]
        %v6012 = vld [vmem:[%s6003 + $0x40] sm:$0xff]
        %v6013 = vld [vmem:[%s6003 + $0x48] sm:$0xff]
        %v6014 = vld [vmem:[%s6003 + $0x50] sm:$0xff]
        %v6015 = vld [vmem:[%s6003 + $0x58] sm:$0xff]
        %v6016 = vld [vmem:[%s6003 + $0x60] sm:$0xff]
        %v6017 = vld [vmem:[%s6003 + $0x68] sm:$0xff]
        %v6018 = vld [vmem:[%s6003 + $0x70] sm:$0xff]
        %v6019 = vld [vmem:[%s6003 + $0x78] sm:$0xff]
        %v6020 = vld [vmem:[%s6003 + $0x80] sm:$0xff]
        %v6021 = vld [vmem:[%s6003 + $0x88] sm:$0xff]
        %v6022 = vld [vmem:[%s6003 + $0x90] sm:$0xff]
        %v6023 = vld [vmem:[%s6003 + $0x98] sm:$0xff]
        %v6024 = vld [vmem:[%s6003 + $0xa0] sm:$0xff]
        %v6025 = vld [vmem:[%s6003 + $0xa8] sm:$0xff]
        %v6026 = vld [vmem:[%s6003 + $0xb0] sm:$0xff]
        %v6027 = vld [vmem:[%s6003 + $0xb8] sm:$0xff]
        %v6028 = vld [vmem:[%s6003 + $0xc0] sm:$0xff]
        %v6029 = vld [vmem:[%s6003 + $0xc8] sm:$0xff]
        %v6030 = vld [vmem:[%s6003 + $0xd0] sm:$0xff]
        %v6031 = vld [vmem:[%s6003 + $0xd8] sm:$0xff]
        %v6032 = vld [vmem:[%s6003 + $0xe0] sm:$0xff]
        %v6033 = vld [vmem:[%s6003 + $0xe8] sm:$0xff]
        %v6034 = vld [vmem:[%s6003 + $0xf0] sm:$0xff]
        %v6035 = vld [vmem:[%s6003 + $0xf8] sm:$0xff]
        %s6036 = scalar_lea.vmem %s17, 3
        %v6037 = vld [vmem:[%s6036] sm:$0x1]
        %v6039 = vlaneseq
        %v6040 = vshrl.u32 %v6039, 7
        %v6041 = vsub.s32 0, %v6040
        %v6042 = vrot.slane %v6037, %v6041
        %6044 = vmatprep.subr.mxu0 0.0
        %6045 = vmatpush1.msra.mxu0 %v6019
        %6046 = vmatprep.subr.mxu0 0.0
        %6047 = vmatpush1.msra.mxu0 %v6018
        %6048 = vmatprep.subr.mxu0 0.0
        %6049 = vmatpush1.msra.mxu0 %v6017
        %6050 = vmatprep.subr.mxu0 0.0
        %6051 = vmatpush1.msra.mxu0 %v6016
        %6052 = vmatprep.subr.mxu0 0.0
        %6053 = vmatpush1.msra.mxu0 %v6015
        %6054 = vmatprep.subr.mxu0 0.0
        %6055 = vmatpush1.msra.mxu0 %v6014
        %6056 = vmatprep.subr.mxu0 0.0
        %6057 = vmatpush1.msra.mxu0 %v6013
        %6058 = vmatprep.subr.mxu0 0.0
        %6059 = vmatpush1.msra.mxu0 %v6012
        %6060 = vmatprep.subr.mxu0 0.0
        %6061 = vmatpush1.msra.mxu0 %v6011
        %6062 = vmatprep.subr.mxu0 0.0
        %6063 = vmatpush1.msra.mxu0 %v6010
        %6064 = vmatprep.subr.mxu0 0.0
        %6065 = vmatpush1.msra.mxu0 %v6009
        %6066 = vmatprep.subr.mxu0 0.0
        %6067 = vmatpush1.msra.mxu0 %v6008
        %6068 = vmatprep.subr.mxu0 0.0
        %6069 = vmatpush1.msra.mxu0 %v6007
        %6070 = vmatprep.subr.mxu0 0.0
        %6071 = vmatpush1.msra.mxu0 %v6006
        %6072 = vmatprep.subr.mxu0 0.0
        %6073 = vmatpush1.msra.mxu0 %v6005
        %6074 = vmatprep.subr.mxu0 0.0
        %6075 = vmatpush1.msra.mxu0 %v6004
        %6076 = vmatprep.subr.mxu0 0.0
        %6077 = vmatpush2.msra.mxu0 %v6035
        %6078 = vmatprep.subr.mxu0 0.0
        %6079 = vmatpush2.msra.mxu0 %v6034
        %6080 = vmatprep.subr.mxu0 0.0
        %6081 = vmatpush2.msra.mxu0 %v6033
        %6082 = vmatprep.subr.mxu0 0.0
        %6083 = vmatpush2.msra.mxu0 %v6032
        %6084 = vmatprep.subr.mxu0 0.0
        %6085 = vmatpush2.msra.mxu0 %v6031
        %6086 = vmatprep.subr.mxu0 0.0
        %6087 = vmatpush2.msra.mxu0 %v6030
        %6088 = vmatprep.subr.mxu0 0.0
        %6089 = vmatpush2.msra.mxu0 %v6029
        %6090 = vmatprep.subr.mxu0 0.0
        %6091 = vmatpush2.msra.mxu0 %v6028
        %6092 = vmatprep.subr.mxu0 0.0
        %6093 = vmatpush2.msra.mxu0 %v6027
        %6094 = vmatprep.subr.mxu0 0.0
        %6095 = vmatpush2.msra.mxu0 %v6026
        %6096 = vmatprep.subr.mxu0 0.0
        %6097 = vmatpush2.msra.mxu0 %v6025
        %6098 = vmatprep.subr.mxu0 0.0
        %6099 = vmatpush2.msra.mxu0 %v6024
        %6100 = vmatprep.subr.mxu0 0.0
        %6101 = vmatpush2.msra.mxu0 %v6023
        %6102 = vmatprep.subr.mxu0 0.0
        %6103 = vmatpush2.msra.mxu0 %v6022
        %6104 = vmatprep.subr.mxu0 0.0
        %6105 = vmatpush2.msra.mxu0 %v6021
        %6106 = vmatprep.subr.mxu0 0.0
        %6107 = vmatpush2.msra.mxu0 %v6020
        %6108 = vmatprep.mubr.f32.mxu0 %v6000
        %6109 = vmatmul.mubr.f32.gmra.mxu0 %v5999
        %v6110 = vpop.f32.mrf.mxu0
        %v6111 = vadd.f32 %v6042, %v6110
        %v6112 = vpop.f32.mrf.mxu0
        %6113 = vmatprep.mubr.f32.mxu0 %v6002
        %6114 = vmatmul.mubr.f32.gmra.mxu0 %v6001
        %v6115 = vpop.f32.mrf.mxu0
        %v6116 = vadd.f32 %v6042, %v6115
        %v6117 = vpop.f32.mrf.mxu0
        %6118 = vdwg.mxu0
        %v6119 = vadd.f32 %v5884, %v6111
        %v6120 = vadd.f32 %v5885, %v6116
        %s6121 = scalar_lea.vmem %s20, 3
        %v6122 = vld [vmem:[%s6121] sm:$0x1]
        %s6123 = scalar_lea.vmem %s21, 3
        %v6124 = vld [vmem:[%s6123] sm:$0x1]
        %v6125 = vsel %vm1400, %v6119, 0.0
        %6126 = vadd.xlane.f32.xlu0 %v6125
        %v6127 = vpop.xlane.xlu0 %6126
        %v6128 = vsel %vm1400, %v6120, 0.0
        %6129 = vadd.xlane.f32.xlu0 %v6128
        %v6130 = vpop.xlane.xlu0 %6129
        %v6131 = vmul.f32 %v6127, %v2282
        %v6132 = vmul.f32 %v6130, %v2282
        %v6133 = vsub.f32 %v6119, %v6131
        %v6134 = vsub.f32 %v6120, %v6132
        %v6135 = vmul.f32 %v6133, %v6133
        %v6136 = vmul.f32 %v6134, %v6134
        %v6137 = vsel %vm1400, %v6135, 0.0
        %6138 = vadd.xlane.f32.xlu0 %v6137
        %v6139 = vpop.xlane.xlu0 %6138
        %v6140 = vsel %vm1400, %v6136, 0.0
        %6141 = vadd.xlane.f32.xlu0 %v6140
        %v6142 = vpop.xlane.xlu0 %6141
        %v6143 = vmul.f32 %v6139, %v2282
        %v6144 = vmul.f32 %v6142, %v2282
        %v6145 = vadd.f32 %v6143, 1e-05
        %v6146 = vadd.f32 %v6144, 1e-05
        %v6147 = vrsqrt.pop %v6145
        %v6148 = vrsqrt.pop %v6146
        %v6149 = vmul.f32 %v6133, %v6147
        %v6150 = vmul.f32 %v6134, %v6148
        %v6152 = vlaneseq
        %v6153 = vshrl.u32 %v6152, 7
        %v6154 = vsub.s32 0, %v6153
        %v6155 = vrot.slane %v6122, %v6154
        %v6157 = vmul.f32 %v6149, %v6155
        %v6158 = vmul.f32 %v6150, %v6155
        %v6160 = vlaneseq
        %v6161 = vshrl.u32 %v6160, 7
        %v6162 = vsub.s32 0, %v6161
        %v6163 = vrot.slane %v6124, %v6162
        %v6165 = vadd.f32 %v6157, %v6163
        %v6166 = vadd.f32 %v6158, %v6163
        %v6167 = vld [vmem:[%s22] sm:$0xff]
        %v6168 = vld [vmem:[%s22 + $0x8] sm:$0xff]
        %v6169 = vld [vmem:[%s22 + $0x10] sm:$0xff]
        %v6170 = vld [vmem:[%s22 + $0x18] sm:$0xff]
        %v6171 = vld [vmem:[%s22 + $0x20] sm:$0xff]
        %v6172 = vld [vmem:[%s22 + $0x28] sm:$0xff]
        %v6173 = vld [vmem:[%s22 + $0x30] sm:$0xff]
        %v6174 = vld [vmem:[%s22 + $0x38] sm:$0xff]
        %v6175 = vld [vmem:[%s22 + $0x40] sm:$0xff]
        %v6176 = vld [vmem:[%s22 + $0x48] sm:$0xff]
        %v6177 = vld [vmem:[%s22 + $0x50] sm:$0xff]
        %v6178 = vld [vmem:[%s22 + $0x58] sm:$0xff]
        %v6179 = vld [vmem:[%s22 + $0x60] sm:$0xff]
        %v6180 = vld [vmem:[%s22 + $0x68] sm:$0xff]
        %v6181 = vld [vmem:[%s22 + $0x70] sm:$0xff]
        %v6182 = vld [vmem:[%s22 + $0x78] sm:$0xff]
        %v6183 = vld [vmem:[%s23] sm:$0x3]
        %v6185 = vlaneseq
        %v6186 = vshrl.u32 %v6185, 7
        %v6187 = vsub.s32 0, %v6186
        %v6188 = vrot.slane %v6183, %v6187
        %v6189 = vlaneseq
        %v6190 = vshrl.u32 %v6189, 7
        %v6191 = vsub.s32 1, %v6190
        %v6192 = vrot.slane %v6183, %v6191
        %v6196 = vsel %vm1400, %v6165, 0
        %v6199 = vsel %vm1400, %v6166, 0
        %6201 = vmatprep.subr.mxu0 0.0
        %6202 = vmatpush1.msra.mxu0 0.0
        %6203 = vmatprep.subr.mxu0 0.0
        %6204 = vmatpush1.msra.mxu0 0.0
        %6205 = vmatprep.subr.mxu0 0.0
        %6206 = vmatpush1.msra.mxu0 0.0
        %6207 = vmatprep.subr.mxu0 0.0
        %6208 = vmatpush1.msra.mxu0 0.0
        %6209 = vmatprep.subr.mxu0 0.0
        %6210 = vmatpush1.msra.mxu0 0.0
        %6211 = vmatprep.subr.mxu0 0.0
        %6212 = vmatpush1.msra.mxu0 0.0
        %6213 = vmatprep.subr.mxu0 0.0
        %6214 = vmatpush1.msra.mxu0 0.0
        %6215 = vmatprep.subr.mxu0 0.0
        %6216 = vmatpush1.msra.mxu0 0.0
        %6217 = vmatprep.subr.mxu0 %v6182
        %6218 = vmatpush1.msra.mxu0 %v6181
        %6219 = vmatprep.subr.mxu0 %v6180
        %6220 = vmatpush1.msra.mxu0 %v6179
        %6221 = vmatprep.subr.mxu0 %v6178
        %6222 = vmatpush1.msra.mxu0 %v6177
        %6223 = vmatprep.subr.mxu0 %v6176
        %6224 = vmatpush1.msra.mxu0 %v6175
        %6225 = vmatprep.subr.mxu0 %v6174
        %6226 = vmatpush1.msra.mxu0 %v6173
        %6227 = vmatprep.subr.mxu0 %v6172
        %6228 = vmatpush1.msra.mxu0 %v6171
        %6229 = vmatprep.subr.mxu0 %v6170
        %6230 = vmatpush1.msra.mxu0 %v6169
        %6231 = vmatprep.subr.mxu0 %v6168
        %6232 = vmatpush1.msra.mxu0 %v6167
        %6233 = vmatprep.subr.mxu0 0.0
        %6234 = vmatpush2.msra.mxu0 0.0
        %6235 = vmatprep.subr.mxu0 0.0
        %6236 = vmatpush2.msra.mxu0 0.0
        %6237 = vmatprep.subr.mxu0 0.0
        %6238 = vmatpush2.msra.mxu0 0.0
        %6239 = vmatprep.subr.mxu0 0.0
        %6240 = vmatpush2.msra.mxu0 0.0
        %6241 = vmatprep.subr.mxu0 0.0
        %6242 = vmatpush2.msra.mxu0 0.0
        %6243 = vmatprep.subr.mxu0 0.0
        %6244 = vmatpush2.msra.mxu0 0.0
        %6245 = vmatprep.subr.mxu0 0.0
        %6246 = vmatpush2.msra.mxu0 0.0
        %6247 = vmatprep.subr.mxu0 0.0
        %6248 = vmatpush2.msra.mxu0 0.0
        %6249 = vmatprep.subr.mxu0 0.0
        %6250 = vmatpush2.msra.mxu0 0.0
        %6251 = vmatprep.subr.mxu0 0.0
        %6252 = vmatpush2.msra.mxu0 0.0
        %6253 = vmatprep.subr.mxu0 0.0
        %6254 = vmatpush2.msra.mxu0 0.0
        %6255 = vmatprep.subr.mxu0 0.0
        %6256 = vmatpush2.msra.mxu0 0.0
        %6257 = vmatprep.subr.mxu0 0.0
        %6258 = vmatpush2.msra.mxu0 0.0
        %6259 = vmatprep.subr.mxu0 0.0
        %6260 = vmatpush2.msra.mxu0 0.0
        %6261 = vmatprep.subr.mxu0 0.0
        %6262 = vmatpush2.msra.mxu0 0.0
        %6263 = vmatprep.subr.mxu0 0.0
        %6264 = vmatpush2.msra.mxu0 0.0
        %6265 = vmatprep.mubr.f32.mxu0 0.0
        %6266 = vmatmul.mubr.f32.gmra.mxu0 %v6196
        %v6267 = vpop.f32.mrf.mxu0
        %v6268 = vadd.f32 %v6188, %v6267
        %v6269 = vpop.f32.mrf.mxu0
        %v6270 = vadd.f32 %v6192, %v6269
        %6271 = vmatprep.mubr.f32.mxu0 0.0
        %6272 = vmatmul.mubr.f32.gmra.mxu0 %v6199
        %v6273 = vpop.f32.mrf.mxu0
        %v6274 = vadd.f32 %v6188, %v6273
        %v6275 = vpop.f32.mrf.mxu0
        %v6276 = vadd.f32 %v6192, %v6275
        %6277 = vdwg.mxu0
        %6278 = vst [vmem:[%s726] sm:$0xff] %v6268
        %6279 = vst [vmem:[%s726 + $0x8] sm:$0xff] %v6270
        %6280 = vst [vmem:[%s726 + $0x10] sm:$0xff] %v6274
        %6281 = vst [vmem:[%s726 + $0x18] sm:$0xff] %v6276
        %s6282 = sand.u32 %s555, 1
        %s6283 = scalar_lea.sflag [#allocation3], %s6282
        %s6284 = sand.u32 %s555, 1
        %s6285 = smul.addr %s6284, 32
        %s6286 = scalar_lea.vmem [#allocation2], %s6285
        // Predicated region
        $region117: #{transformer_text_decoder_forward.1} parent=115 // pred_check
          %p6287 = pneg %p565
        $region118: #{transformer_text_decoder_forward.1} parent=115 // pred_check_branch
          %6289 = sbr.rel (%p6287) target = $region120
        $region119: #{transformer_text_decoder_forward.1} parent=115 // pred_region
          %s6291 = ssub.s32 512, 512
          %6292 = vsyncadd %s6283, %s6291
          %s6293 = smul.addr %s38, 4
          %s6294 = smul.addr %s6293, 128
          %s6295 = scalar_lea.hbm %s24, %s6294
          %s6296 = sshll.u32 %s6286, 4
          %s6297 = int_to_ptr.vmem [resolvable:$true] %s6296
          %6302 = dma.vmem_to_hbm [thread:$0]  %s6297, 512, %s6295, %s6283, 256, 256, 16
        $region120: #{transformer_text_decoder_forward.1} parent=115 // pred_fallthru
          _
      $region116: #{transformer_text_decoder_forward.1} parent=5 // pred_fallthru
        _
      %p6303 = scmp.le.s32.totalorder 2, %s33
      // Predicated region
      $region121: #{transformer_text_decoder_forward.1} parent=5 // pred_check
        %p6304 = pneg %p6303
      $region122: #{transformer_text_decoder_forward.1} parent=5 // pred_check_branch
        %6306 = sbr.rel (%p6304) target = $region124
      $region123: #{transformer_text_decoder_forward.1} parent=5 // pred_region
        %s6307 = ssub.s32 %s33, 2
        // Predicated region
        $region125: #{transformer_text_decoder_forward.1} parent=123 // pred_check
          %p6308 = pneg %p571
        $region126: #{transformer_text_decoder_forward.1} parent=123 // pred_check_branch
          %6310 = sbr.rel (%p6308) target = $region128
        $region127: #{transformer_text_decoder_forward.1} parent=123 // pred_region
          %s6311 = sand.u32 %s556, 1
          %s6312 = scalar_lea.sflag [#allocation3], %s6311
          %s6313 = sand.u32 %s556, 1
          %s6314 = smul.addr %s6313, 32
          %s6315 = scalar_lea.vmem [#allocation2], %s6314
          %6316 = dma.done %s6312, 512
        $region128: #{transformer_text_decoder_forward.1} parent=123 // pred_fallthru
          _
      $region124: #{transformer_text_decoder_forward.1} parent=5 // pred_fallthru
        _
    $region6: #{transformer_text_decoder_forward.1} parent=1 // loop_footer
      %s37 = sadd.s32 1, %s33
    $region7: #{transformer_text_decoder_forward.1} parent=1 // loop_footer_branch
      %32 = sbr.rel target = $region3
    $region8: #{transformer_text_decoder_forward.1} parent=1 // loop_exit
      _
    %6317 = vsyncpa [#allocation3], 1
    %s6318 = scalar_lea.sflag [#allocation3], 1
    %6319 = vsyncpa %s6318, 1

</llo_original>
